<compile_context>
chip_gen: v7x
topology: tpu7x:2x2x1
jax: 0.10.0
libtpu: 0.0.40
codegen_flags: <defaults>
</compile_context>

<pallas_src>
import jax
import jax.numpy as jnp
import numpy as np
from jax import lax
from jax.experimental import pallas as pl
from jax.experimental.pallas import tpu as pltpu

B = 8                 # batch
INPUT_DIM = 128       # module default input_dim=128
C1, C2 = 16, 32       # conv channel counts
L1 = INPUT_DIM        # 128
L2 = INPUT_DIM // 2   # 64  (after first MaxPool1d(2))
L3 = INPUT_DIM // 4   # 32  (after second MaxPool1d(2))
FLAT = C2 * L3        # 1024
HID = 64


def _dot(a, b):
    return jnp.dot(a, b, preferred_element_type=jnp.float32)


# ----------------------------------------------------------------------------
# Single fused kernel: conv1+relu+pool1+conv2+relu+pool2+flatten+fc1+relu+fc2+sigmoid
# ----------------------------------------------------------------------------
def fused_cnn_kernel(x_ref, eye_ref, w1_ref, b1_ref, w2_ref, b2_ref,
                     wa_ref, ba_ref, wb_ref, bb_ref, o_ref,
                     h1_scr, h2_scr):
    bsz, l1 = x_ref.shape
    c1 = w1_ref.shape[1]
    c2 = w2_ref.shape[1]
    l2, l3 = l1 // 2, l1 // 4

    # -- x (B, L1) -> (L1, B): identity matmul in A @ B^T form (MXU) ----------
    xt = lax.dot_general(eye_ref[...], x_ref[...],
                         (((1,), (1,)), ((), ())),
                         preferred_element_type=jnp.float32)        # (L1, B)

    zrow = jnp.zeros((1, bsz), jnp.float32)
    xtp = jnp.concatenate([zrow, xt[:l1 - 1, :]], axis=0)           # x[l-1], zero pad
    xtn = jnp.concatenate([xt[1:, :], zrow], axis=0)                # x[l+1], zero pad

    w1 = w1_ref[...]                                                # (3, C1)
    b1 = b1_ref[...]                                                # (1, C1)

    # -- Conv1d(1->C1, k3, p1) + ReLU; fill h1 scratch as (B*L1, C1) ---------
    for b in range(bsz):
        x3b = jnp.concatenate(
            [xtp[:, b:b + 1], xt[:, b:b + 1], xtn[:, b:b + 1]], axis=1)   # (L1, 3)
        h1b = jnp.maximum(_dot(x3b, w1) + b1, 0.0)                        # (L1, C1)
        h1_scr[pl.ds(b * l1, l1), :] = h1b

    # -- MaxPool1d(2): stride-2 sublane reads --------------------------------
    p1 = jnp.maximum(h1_scr[pl.ds(0, bsz * l2, stride=2), :],
                     h1_scr[pl.ds(1, bsz * l2, stride=2), :])             # (B*L2, C1)

    # -- Conv1d(C1->C2, k3, p1): three taps fused into one K=3*C1 matmul -----
    rows = lax.broadcasted_iota(jnp.int32, (bsz * l2, c1), 0)
    zr = jnp.zeros((1, c1), jnp.float32)
    prev = jnp.concatenate([zr, p1[:bsz * l2 - 1, :]], axis=0)
    prev = jnp.where(rows % l2 == 0, 0.0, prev)          # zero at each batch's l=0
    nxt = jnp.concatenate([p1[1:, :], zr], axis=0)
    nxt = jnp.where(rows % l2 == l2 - 1, 0.0, nxt)       # zero at each batch's l=L2-1
    x2 = jnp.concatenate([prev, p1, nxt], axis=1)                         # (B*L2, 3*C1)
    h2 = jnp.maximum(_dot(x2, w2_ref[...]) + b2_ref[...], 0.0)            # (B*L2, C2)
    h2_scr[...] = h2

    # -- MaxPool1d(2) fused with flatten: lane-dense (B, L3*C2) slab ---------
    blocks = []
    for k in range(l3):
        ev = h2_scr[pl.ds(2 * k, bsz, stride=l2), :]     # (B, C2) at pooled pos k
        od = h2_scr[pl.ds(2 * k + 1, bsz, stride=l2), :]
        blocks.append(jnp.maximum(ev, od))
    flat = jnp.concatenate(blocks, axis=1)               # (B, L3*C2), f = l3*C2 + c2

    # -- Linear(1024,64) -> ReLU -> Linear(64,1) -> Sigmoid ------------------
    h = jnp.maximum(_dot(flat, wa_ref[...]) + ba_ref[...], 0.0)           # (B, HID)
    z = _dot(h, wb_ref[...]) + bb_ref[...]                                # (B, 1)
    o_ref[...] = 0.5 * (jnp.tanh(0.5 * z) + 1.0)         # numerically stable sigmoid


# ----------------------------------------------------------------------------
# Host-side wrapper: parameter repacking only (flatten order folded into fc1 w)
# ----------------------------------------------------------------------------
def simple_1d_cnn_v2_forward(x, p):
    b, l1 = x.shape
    l2, l3 = l1 // 2, l1 // 4

    w1 = jnp.transpose(p['conv1_w'][:, 0, :])                             # (3, C1)
    b1 = p['conv1_b'].reshape(1, C1)
    # conv2 taps stacked along K: row = tap*C1 + c1
    w2 = jnp.transpose(p['conv2_w'], (2, 1, 0)).reshape(3 * C1, C2)       # (48, C2)
    b2 = p['conv2_b'].reshape(1, C2)
    # torch flattens (B, C2, L3) channel-major (f = c2*L3 + l3); the kernel
    # emits f = l3*C2 + c2, so permute fc1 weight rows host-side.
    wa = jnp.transpose(p['fc1_w'].reshape(HID, C2, l3), (2, 1, 0)).reshape(C2 * l3, HID)
    ba = p['fc1_b'].reshape(1, HID)
    wb = jnp.transpose(p['fc2_w'])                                        # (HID, 1)
    bb = p['fc2_b'].reshape(1, 1)

    eye = np.eye(l1, dtype=np.float32)   # trace-time numpy constant (in-kernel transpose)

    return pl.pallas_call(
        fused_cnn_kernel,
        out_shape=jax.ShapeDtypeStruct((b, 1), jnp.float32),
        scratch_shapes=[
            pltpu.VMEM((b * l1, C1), jnp.float32),   # conv1 activations
            pltpu.VMEM((b * l2, C2), jnp.float32),   # conv2 activations
        ],
    )(x.astype(jnp.float32), eye, w1, b1, w2, b2, wa, ba, wb, bb)


# ----------------------------------------------------------------------------
# Deterministic parameter init (torch module shapes) + pure-JAX reference.
# ----------------------------------------------------------------------------
def init_params(key):
    ks = jax.random.split(key, 9)
    p = dict(
        conv1_w=jax.random.normal(ks[0], (C1, 1, 3), jnp.float32) * 0.3,
        conv1_b=jax.random.normal(ks[1], (C1,), jnp.float32) * 0.1,
        conv2_w=jax.random.normal(ks[2], (C2, C1, 3), jnp.float32) * 0.1,
        conv2_b=jax.random.normal(ks[3], (C2,), jnp.float32) * 0.1,
        fc1_w=jax.random.normal(ks[4], (HID, FLAT), jnp.float32) * 0.03,
        fc1_b=jax.random.normal(ks[5], (HID,), jnp.float32) * 0.1,
        fc2_w=jax.random.normal(ks[6], (1, HID), jnp.float32) * 0.1,
        fc2_b=jax.random.normal(ks[7], (1,), jnp.float32) * 0.1,
    )
    return p, ks[8]


def reference_forward(x, p):
    h = x[:, None, :]                                   # (B, 1, L)  NCH
    h = lax.conv_general_dilated(h, p['conv1_w'], (1,), [(1, 1)],
                                 dimension_numbers=('NCH', 'OIH', 'NCH'))
    h = jax.nn.relu(h + p['conv1_b'][None, :, None])
    h = h.reshape(h.shape[0], h.shape[1], -1, 2).max(axis=-1)
    h = lax.conv_general_dilated(h, p['conv2_w'], (1,), [(1, 1)],
                                 dimension_numbers=('NCH', 'OIH', 'NCH'))
    h = jax.nn.relu(h + p['conv2_b'][None, :, None])
    h = h.reshape(h.shape[0], h.shape[1], -1, 2).max(axis=-1)
    flat = h.reshape(h.shape[0], -1)
    y = jax.nn.relu(flat @ p['fc1_w'].T + p['fc1_b'][None, :])
    z = y @ p['fc2_w'].T + p['fc2_b'][None, :]
    return jax.nn.sigmoid(z)


if __name__ == "__main__":
    params, xkey = init_params(jax.random.PRNGKey(0))
    x = jax.random.normal(xkey, (B, INPUT_DIM), jnp.float32)

    fwd = jax.jit(simple_1d_cnn_v2_forward)
    out = jax.block_until_ready(fwd(x, params))

    ref = reference_forward(x, params)
    assert out.shape == (B, 1), out.shape
    if not np.allclose(np.asarray(out), np.asarray(ref), atol=2e-3, rtol=2e-3):
        raise AssertionError(
            f"Pallas output mismatch:\n{np.asarray(out)}\nvs ref\n{np.asarray(ref)}")
    print("KERNEL_OK")
</pallas_src>

<mosaic_0001>
module attributes {stable_mosaic.version = 11 : i64} {
  func.func @fused_cnn_kernel(%arg0: memref<8x128xf32, #tpu.memory_space<vmem>>, %arg1: memref<128x128xf32, #tpu.memory_space<vmem>>, %arg2: memref<3x16xf32, #tpu.memory_space<vmem>>, %arg3: memref<1x16xf32, #tpu.memory_space<vmem>>, %arg4: memref<48x32xf32, #tpu.memory_space<vmem>>, %arg5: memref<1x32xf32, #tpu.memory_space<vmem>>, %arg6: memref<1024x64xf32, #tpu.memory_space<vmem>>, %arg7: memref<1x64xf32, #tpu.memory_space<vmem>>, %arg8: memref<64x1xf32, #tpu.memory_space<vmem>>, %arg9: memref<1x1xf32, #tpu.memory_space<vmem>>, %arg10: memref<8x1xf32, #tpu.memory_space<vmem>>, %arg11: memref<1024x16xf32, #tpu.memory_space<vmem>>, %arg12: memref<512x32xf32, #tpu.memory_space<vmem>>) attributes {dimension_semantics = [], scalar_prefetch = 0 : i64, scratch_operands = 2 : i64, tpu.core_type = #tpu.core_type<tc>} {
    %c0 = arith.constant 0 : index
    %c0_0 = arith.constant 0 : index
    %0 = vector.load %arg1[%c0, %c0_0] : memref<128x128xf32, #tpu.memory_space<vmem>>, vector<128x128xf32>
    %c0_1 = arith.constant 0 : index
    %c0_2 = arith.constant 0 : index
    %1 = vector.load %arg0[%c0_1, %c0_2] : memref<8x128xf32, #tpu.memory_space<vmem>>, vector<8x128xf32>
    %cst = arith.constant dense<0.000000e+00> : vector<128x8xf32>
    %2 = tpu.matmul %0, %1, %cst {dimension_numbers = #tpu.dot_dimension_numbers<[1], [1], [0], [0], [0, 0, 1, 0], [], []>} : vector<128x128xf32>, vector<8x128xf32>, vector<128x8xf32> -> vector<128x8xf32>
    %cst_3 = arith.constant 0.000000e+00 : f32
    %3 = vector.broadcast %cst_3 : f32 to vector<1x8xf32>
    %4 = vector.extract_strided_slice %2 {offsets = [0, 0], sizes = [127, 8], strides = [1, 1]} : vector<128x8xf32> to vector<127x8xf32>
    %5 = tpu.concatenate %3, %4 in 0 : vector<1x8xf32>, vector<127x8xf32> -> vector<128x8xf32>
    %6 = vector.extract_strided_slice %2 {offsets = [1, 0], sizes = [127, 8], strides = [1, 1]} : vector<128x8xf32> to vector<127x8xf32>
    %7 = tpu.concatenate %6, %3 in 0 : vector<127x8xf32>, vector<1x8xf32> -> vector<128x8xf32>
    %c0_4 = arith.constant 0 : index
    %c0_5 = arith.constant 0 : index
    %8 = vector.load %arg2[%c0_4, %c0_5] : memref<3x16xf32, #tpu.memory_space<vmem>>, vector<3x16xf32>
    %c0_6 = arith.constant 0 : index
    %c0_7 = arith.constant 0 : index
    %9 = vector.load %arg3[%c0_6, %c0_7] : memref<1x16xf32, #tpu.memory_space<vmem>>, vector<1x16xf32>
    %10 = vector.extract_strided_slice %5 {offsets = [0, 0], sizes = [128, 1], strides = [1, 1]} : vector<128x8xf32> to vector<128x1xf32>
    %11 = vector.extract_strided_slice %2 {offsets = [0, 0], sizes = [128, 1], strides = [1, 1]} : vector<128x8xf32> to vector<128x1xf32>
    %12 = vector.extract_strided_slice %7 {offsets = [0, 0], sizes = [128, 1], strides = [1, 1]} : vector<128x8xf32> to vector<128x1xf32>
    %13 = tpu.concatenate %10, %11, %12 in 1 : vector<128x1xf32>, vector<128x1xf32>, vector<128x1xf32> -> vector<128x3xf32>
    %cst_8 = arith.constant dense<0.000000e+00> : vector<128x16xf32>
    %14 = tpu.matmul %13, %8, %cst_8 {dimension_numbers = #tpu.dot_dimension_numbers<[1], [0], [0], [1], [0, 0, 1, 1], [], []>} : vector<128x3xf32>, vector<3x16xf32>, vector<128x16xf32> -> vector<128x16xf32>
    %15 = vector.broadcast %9 : vector<1x16xf32> to vector<128x16xf32>
    %16 = arith.addf %14, %15 : vector<128x16xf32>
    %cst_9 = arith.constant 0.000000e+00 : f32
    %17 = vector.broadcast %cst_9 : f32 to vector<128x16xf32>
    %18 = arith.maximumf %16, %17 : vector<128x16xf32>
    %c0_10 = arith.constant 0 : index
    %c0_11 = arith.constant 0 : index
    %19 = vector.load %arg11[%c0_10, %c0_11] : memref<1024x16xf32, #tpu.memory_space<vmem>>, vector<128x16xf32>
    tpu.vector_store %arg11[%c0_10, %c0_11], %18 {strides = array<i32>} : memref<1024x16xf32, #tpu.memory_space<vmem>>, vector<128x16xf32>,
    %20 = vector.extract_strided_slice %5 {offsets = [0, 1], sizes = [128, 1], strides = [1, 1]} : vector<128x8xf32> to vector<128x1xf32>
    %21 = vector.extract_strided_slice %2 {offsets = [0, 1], sizes = [128, 1], strides = [1, 1]} : vector<128x8xf32> to vector<128x1xf32>
    %22 = vector.extract_strided_slice %7 {offsets = [0, 1], sizes = [128, 1], strides = [1, 1]} : vector<128x8xf32> to vector<128x1xf32>
    %23 = tpu.concatenate %20, %21, %22 in 1 : vector<128x1xf32>, vector<128x1xf32>, vector<128x1xf32> -> vector<128x3xf32>
    %cst_12 = arith.constant dense<0.000000e+00> : vector<128x16xf32>
    %24 = tpu.matmul %23, %8, %cst_12 {dimension_numbers = #tpu.dot_dimension_numbers<[1], [0], [0], [1], [0, 0, 1, 1], [], []>} : vector<128x3xf32>, vector<3x16xf32>, vector<128x16xf32> -> vector<128x16xf32>
    %25 = vector.broadcast %9 : vector<1x16xf32> to vector<128x16xf32>
    %26 = arith.addf %24, %25 : vector<128x16xf32>
    %cst_13 = arith.constant 0.000000e+00 : f32
    %27 = vector.broadcast %cst_13 : f32 to vector<128x16xf32>
    %28 = arith.maximumf %26, %27 : vector<128x16xf32>
    %c128 = arith.constant 128 : index
    %c0_14 = arith.constant 0 : index
    %29 = vector.load %arg11[%c128, %c0_14] : memref<1024x16xf32, #tpu.memory_space<vmem>>, vector<128x16xf32>
    tpu.vector_store %arg11[%c128, %c0_14], %28 {strides = array<i32>} : memref<1024x16xf32, #tpu.memory_space<vmem>>, vector<128x16xf32>,
    %30 = vector.extract_strided_slice %5 {offsets = [0, 2], sizes = [128, 1], strides = [1, 1]} : vector<128x8xf32> to vector<128x1xf32>
    %31 = vector.extract_strided_slice %2 {offsets = [0, 2], sizes = [128, 1], strides = [1, 1]} : vector<128x8xf32> to vector<128x1xf32>
    %32 = vector.extract_strided_slice %7 {offsets = [0, 2], sizes = [128, 1], strides = [1, 1]} : vector<128x8xf32> to vector<128x1xf32>
    %33 = tpu.concatenate %30, %31, %32 in 1 : vector<128x1xf32>, vector<128x1xf32>, vector<128x1xf32> -> vector<128x3xf32>
    %cst_15 = arith.constant dense<0.000000e+00> : vector<128x16xf32>
    %34 = tpu.matmul %33, %8, %cst_15 {dimension_numbers = #tpu.dot_dimension_numbers<[1], [0], [0], [1], [0, 0, 1, 1], [], []>} : vector<128x3xf32>, vector<3x16xf32>, vector<128x16xf32> -> vector<128x16xf32>
    %35 = vector.broadcast %9 : vector<1x16xf32> to vector<128x16xf32>
    %36 = arith.addf %34, %35 : vector<128x16xf32>
    %cst_16 = arith.constant 0.000000e+00 : f32
    %37 = vector.broadcast %cst_16 : f32 to vector<128x16xf32>
    %38 = arith.maximumf %36, %37 : vector<128x16xf32>
    %c256 = arith.constant 256 : index
    %c0_17 = arith.constant 0 : index
    %39 = vector.load %arg11[%c256, %c0_17] : memref<1024x16xf32, #tpu.memory_space<vmem>>, vector<128x16xf32>
    tpu.vector_store %arg11[%c256, %c0_17], %38 {strides = array<i32>} : memref<1024x16xf32, #tpu.memory_space<vmem>>, vector<128x16xf32>,
    %40 = vector.extract_strided_slice %5 {offsets = [0, 3], sizes = [128, 1], strides = [1, 1]} : vector<128x8xf32> to vector<128x1xf32>
    %41 = vector.extract_strided_slice %2 {offsets = [0, 3], sizes = [128, 1], strides = [1, 1]} : vector<128x8xf32> to vector<128x1xf32>
    %42 = vector.extract_strided_slice %7 {offsets = [0, 3], sizes = [128, 1], strides = [1, 1]} : vector<128x8xf32> to vector<128x1xf32>
    %43 = tpu.concatenate %40, %41, %42 in 1 : vector<128x1xf32>, vector<128x1xf32>, vector<128x1xf32> -> vector<128x3xf32>
    %cst_18 = arith.constant dense<0.000000e+00> : vector<128x16xf32>
    %44 = tpu.matmul %43, %8, %cst_18 {dimension_numbers = #tpu.dot_dimension_numbers<[1], [0], [0], [1], [0, 0, 1, 1], [], []>} : vector<128x3xf32>, vector<3x16xf32>, vector<128x16xf32> -> vector<128x16xf32>
    %45 = vector.broadcast %9 : vector<1x16xf32> to vector<128x16xf32>
    %46 = arith.addf %44, %45 : vector<128x16xf32>
    %cst_19 = arith.constant 0.000000e+00 : f32
    %47 = vector.broadcast %cst_19 : f32 to vector<128x16xf32>
    %48 = arith.maximumf %46, %47 : vector<128x16xf32>
    %c384 = arith.constant 384 : index
    %c0_20 = arith.constant 0 : index
    %49 = vector.load %arg11[%c384, %c0_20] : memref<1024x16xf32, #tpu.memory_space<vmem>>, vector<128x16xf32>
    tpu.vector_store %arg11[%c384, %c0_20], %48 {strides = array<i32>} : memref<1024x16xf32, #tpu.memory_space<vmem>>, vector<128x16xf32>,
    %50 = vector.extract_strided_slice %5 {offsets = [0, 4], sizes = [128, 1], strides = [1, 1]} : vector<128x8xf32> to vector<128x1xf32>
    %51 = vector.extract_strided_slice %2 {offsets = [0, 4], sizes = [128, 1], strides = [1, 1]} : vector<128x8xf32> to vector<128x1xf32>
    %52 = vector.extract_strided_slice %7 {offsets = [0, 4], sizes = [128, 1], strides = [1, 1]} : vector<128x8xf32> to vector<128x1xf32>
    %53 = tpu.concatenate %50, %51, %52 in 1 : vector<128x1xf32>, vector<128x1xf32>, vector<128x1xf32> -> vector<128x3xf32>
    %cst_21 = arith.constant dense<0.000000e+00> : vector<128x16xf32>
    %54 = tpu.matmul %53, %8, %cst_21 {dimension_numbers = #tpu.dot_dimension_numbers<[1], [0], [0], [1], [0, 0, 1, 1], [], []>} : vector<128x3xf32>, vector<3x16xf32>, vector<128x16xf32> -> vector<128x16xf32>
    %55 = vector.broadcast %9 : vector<1x16xf32> to vector<128x16xf32>
    %56 = arith.addf %54, %55 : vector<128x16xf32>
    %cst_22 = arith.constant 0.000000e+00 : f32
    %57 = vector.broadcast %cst_22 : f32 to vector<128x16xf32>
    %58 = arith.maximumf %56, %57 : vector<128x16xf32>
    %c512 = arith.constant 512 : index
    %c0_23 = arith.constant 0 : index
    %59 = vector.load %arg11[%c512, %c0_23] : memref<1024x16xf32, #tpu.memory_space<vmem>>, vector<128x16xf32>
    tpu.vector_store %arg11[%c512, %c0_23], %58 {strides = array<i32>} : memref<1024x16xf32, #tpu.memory_space<vmem>>, vector<128x16xf32>,
    %60 = vector.extract_strided_slice %5 {offsets = [0, 5], sizes = [128, 1], strides = [1, 1]} : vector<128x8xf32> to vector<128x1xf32>
    %61 = vector.extract_strided_slice %2 {offsets = [0, 5], sizes = [128, 1], strides = [1, 1]} : vector<128x8xf32> to vector<128x1xf32>
    %62 = vector.extract_strided_slice %7 {offsets = [0, 5], sizes = [128, 1], strides = [1, 1]} : vector<128x8xf32> to vector<128x1xf32>
    %63 = tpu.concatenate %60, %61, %62 in 1 : vector<128x1xf32>, vector<128x1xf32>, vector<128x1xf32> -> vector<128x3xf32>
    %cst_24 = arith.constant dense<0.000000e+00> : vector<128x16xf32>
    %64 = tpu.matmul %63, %8, %cst_24 {dimension_numbers = #tpu.dot_dimension_numbers<[1], [0], [0], [1], [0, 0, 1, 1], [], []>} : vector<128x3xf32>, vector<3x16xf32>, vector<128x16xf32> -> vector<128x16xf32>
    %65 = vector.broadcast %9 : vector<1x16xf32> to vector<128x16xf32>
    %66 = arith.addf %64, %65 : vector<128x16xf32>
    %cst_25 = arith.constant 0.000000e+00 : f32
    %67 = vector.broadcast %cst_25 : f32 to vector<128x16xf32>
    %68 = arith.maximumf %66, %67 : vector<128x16xf32>
    %c640 = arith.constant 640 : index
    %c0_26 = arith.constant 0 : index
    %69 = vector.load %arg11[%c640, %c0_26] : memref<1024x16xf32, #tpu.memory_space<vmem>>, vector<128x16xf32>
    tpu.vector_store %arg11[%c640, %c0_26], %68 {strides = array<i32>} : memref<1024x16xf32, #tpu.memory_space<vmem>>, vector<128x16xf32>,
    %70 = vector.extract_strided_slice %5 {offsets = [0, 6], sizes = [128, 1], strides = [1, 1]} : vector<128x8xf32> to vector<128x1xf32>
    %71 = vector.extract_strided_slice %2 {offsets = [0, 6], sizes = [128, 1], strides = [1, 1]} : vector<128x8xf32> to vector<128x1xf32>
    %72 = vector.extract_strided_slice %7 {offsets = [0, 6], sizes = [128, 1], strides = [1, 1]} : vector<128x8xf32> to vector<128x1xf32>
    %73 = tpu.concatenate %70, %71, %72 in 1 : vector<128x1xf32>, vector<128x1xf32>, vector<128x1xf32> -> vector<128x3xf32>
    %cst_27 = arith.constant dense<0.000000e+00> : vector<128x16xf32>
    %74 = tpu.matmul %73, %8, %cst_27 {dimension_numbers = #tpu.dot_dimension_numbers<[1], [0], [0], [1], [0, 0, 1, 1], [], []>} : vector<128x3xf32>, vector<3x16xf32>, vector<128x16xf32> -> vector<128x16xf32>
    %75 = vector.broadcast %9 : vector<1x16xf32> to vector<128x16xf32>
    %76 = arith.addf %74, %75 : vector<128x16xf32>
    %cst_28 = arith.constant 0.000000e+00 : f32
    %77 = vector.broadcast %cst_28 : f32 to vector<128x16xf32>
    %78 = arith.maximumf %76, %77 : vector<128x16xf32>
    %c768 = arith.constant 768 : index
    %c0_29 = arith.constant 0 : index
    %79 = vector.load %arg11[%c768, %c0_29] : memref<1024x16xf32, #tpu.memory_space<vmem>>, vector<128x16xf32>
    tpu.vector_store %arg11[%c768, %c0_29], %78 {strides = array<i32>} : memref<1024x16xf32, #tpu.memory_space<vmem>>, vector<128x16xf32>,
    %80 = vector.extract_strided_slice %5 {offsets = [0, 7], sizes = [128, 1], strides = [1, 1]} : vector<128x8xf32> to vector<128x1xf32>
    %81 = vector.extract_strided_slice %2 {offsets = [0, 7], sizes = [128, 1], strides = [1, 1]} : vector<128x8xf32> to vector<128x1xf32>
    %82 = vector.extract_strided_slice %7 {offsets = [0, 7], sizes = [128, 1], strides = [1, 1]} : vector<128x8xf32> to vector<128x1xf32>
    %83 = tpu.concatenate %80, %81, %82 in 1 : vector<128x1xf32>, vector<128x1xf32>, vector<128x1xf32> -> vector<128x3xf32>
    %cst_30 = arith.constant dense<0.000000e+00> : vector<128x16xf32>
    %84 = tpu.matmul %83, %8, %cst_30 {dimension_numbers = #tpu.dot_dimension_numbers<[1], [0], [0], [1], [0, 0, 1, 1], [], []>} : vector<128x3xf32>, vector<3x16xf32>, vector<128x16xf32> -> vector<128x16xf32>
    %85 = vector.broadcast %9 : vector<1x16xf32> to vector<128x16xf32>
    %86 = arith.addf %84, %85 : vector<128x16xf32>
    %cst_31 = arith.constant 0.000000e+00 : f32
    %87 = vector.broadcast %cst_31 : f32 to vector<128x16xf32>
    %88 = arith.maximumf %86, %87 : vector<128x16xf32>
    %c896 = arith.constant 896 : index
    %c0_32 = arith.constant 0 : index
    %89 = vector.load %arg11[%c896, %c0_32] : memref<1024x16xf32, #tpu.memory_space<vmem>>, vector<128x16xf32>
    tpu.vector_store %arg11[%c896, %c0_32], %88 {strides = array<i32>} : memref<1024x16xf32, #tpu.memory_space<vmem>>, vector<128x16xf32>,
    %c0_33 = arith.constant 0 : index
    %c0_34 = arith.constant 0 : index
    %90 = tpu.strided_load %arg11[%c0_33, %c0_34] {strides = array<i32: 2, 1>} : memref<1024x16xf32, #tpu.memory_space<vmem>>, vector<512x16xf32>
    %c1 = arith.constant 1 : index
    %c0_35 = arith.constant 0 : index
    %91 = tpu.strided_load %arg11[%c1, %c0_35] {strides = array<i32: 2, 1>} : memref<1024x16xf32, #tpu.memory_space<vmem>>, vector<512x16xf32>
    %92 = arith.maximumf %90, %91 : vector<512x16xf32>
    %93 = tpu.iota {dimensions = array<i32: 0>} : vector<512x16xi32>
    %cst_36 = arith.constant 0.000000e+00 : f32
    %94 = vector.broadcast %cst_36 : f32 to vector<1x16xf32>
    %95 = vector.extract_strided_slice %92 {offsets = [0, 0], sizes = [511, 16], strides = [1, 1]} : vector<512x16xf32> to vector<511x16xf32>
    %96 = tpu.concatenate %94, %95 in 0 : vector<1x16xf32>, vector<511x16xf32> -> vector<512x16xf32>
    %c64_i32 = arith.constant 64 : i32
    %c0_i32 = arith.constant 0 : i32
    %97 = arith.cmpi eq, %c64_i32, %c0_i32 : i32
    %c1_i32 = arith.constant 1 : i32
    %98 = arith.select %97, %c1_i32, %c64_i32 : i32
    %99 = vector.broadcast %98 : i32 to vector<512x16xi32>
    %100 = arith.remsi %93, %99 : vector<512x16xi32>
    %c0_i32_37 = arith.constant 0 : i32
    %101 = vector.broadcast %c0_i32_37 : i32 to vector<512x16xi32>
    %102 = arith.cmpi ne, %100, %101 : vector<512x16xi32>
    %c0_i32_38 = arith.constant 0 : i32
    %103 = vector.broadcast %c0_i32_38 : i32 to vector<512x16xi32>
    %104 = arith.cmpi slt, %100, %103 : vector<512x16xi32>
    %c0_i32_39 = arith.constant 0 : i32
    %105 = arith.cmpi slt, %98, %c0_i32_39 : i32
    %106 = vector.broadcast %105 : i1 to vector<512x16xi1>
    %107 = vector.broadcast %106 : vector<512x16xi1> to vector<512x16xi1>
    %108 = arith.xori %104, %107 : vector<512x16xi1>
    %109 = arith.andi %108, %102 : vector<512x16xi1>
    %110 = vector.broadcast %98 : i32 to vector<512x16xi32>
    %111 = arith.addi %100, %110 : vector<512x16xi32>
    %112 = arith.select %109, %111, %100 : vector<512x16xi1>, vector<512x16xi32>
    %c0_i32_40 = arith.constant 0 : i32
    %113 = vector.broadcast %c0_i32_40 : i32 to vector<512x16xi32>
    %114 = arith.cmpi eq, %112, %113 : vector<512x16xi32>
    %cst_41 = arith.constant 0.000000e+00 : f32
    %115 = vector.broadcast %cst_41 : f32 to vector<512x16xf32>
    %116 = arith.select %114, %115, %96 : vector<512x16xi1>, vector<512x16xf32>
    %117 = vector.extract_strided_slice %92 {offsets = [1, 0], sizes = [511, 16], strides = [1, 1]} : vector<512x16xf32> to vector<511x16xf32>
    %118 = tpu.concatenate %117, %94 in 0 : vector<511x16xf32>, vector<1x16xf32> -> vector<512x16xf32>
    %c64_i32_42 = arith.constant 64 : i32
    %c0_i32_43 = arith.constant 0 : i32
    %119 = arith.cmpi eq, %c64_i32_42, %c0_i32_43 : i32
    %c1_i32_44 = arith.constant 1 : i32
    %120 = arith.select %119, %c1_i32_44, %c64_i32_42 : i32
    %121 = vector.broadcast %120 : i32 to vector<512x16xi32>
    %122 = arith.remsi %93, %121 : vector<512x16xi32>
    %c0_i32_45 = arith.constant 0 : i32
    %123 = vector.broadcast %c0_i32_45 : i32 to vector<512x16xi32>
    %124 = arith.cmpi ne, %122, %123 : vector<512x16xi32>
    %c0_i32_46 = arith.constant 0 : i32
    %125 = vector.broadcast %c0_i32_46 : i32 to vector<512x16xi32>
    %126 = arith.cmpi slt, %122, %125 : vector<512x16xi32>
    %c0_i32_47 = arith.constant 0 : i32
    %127 = arith.cmpi slt, %120, %c0_i32_47 : i32
    %128 = vector.broadcast %127 : i1 to vector<512x16xi1>
    %129 = vector.broadcast %128 : vector<512x16xi1> to vector<512x16xi1>
    %130 = arith.xori %126, %129 : vector<512x16xi1>
    %131 = arith.andi %130, %124 : vector<512x16xi1>
    %132 = vector.broadcast %120 : i32 to vector<512x16xi32>
    %133 = arith.addi %122, %132 : vector<512x16xi32>
    %134 = arith.select %131, %133, %122 : vector<512x16xi1>, vector<512x16xi32>
    %c63_i32 = arith.constant 63 : i32
    %135 = vector.broadcast %c63_i32 : i32 to vector<512x16xi32>
    %136 = arith.cmpi eq, %134, %135 : vector<512x16xi32>
    %cst_48 = arith.constant 0.000000e+00 : f32
    %137 = vector.broadcast %cst_48 : f32 to vector<512x16xf32>
    %138 = arith.select %136, %137, %118 : vector<512x16xi1>, vector<512x16xf32>
    %139 = tpu.concatenate %116, %92, %138 in 1 : vector<512x16xf32>, vector<512x16xf32>, vector<512x16xf32> -> vector<512x48xf32>
    %c0_49 = arith.constant 0 : index
    %c0_50 = arith.constant 0 : index
    %140 = vector.load %arg4[%c0_49, %c0_50] : memref<48x32xf32, #tpu.memory_space<vmem>>, vector<48x32xf32>
    %cst_51 = arith.constant dense<0.000000e+00> : vector<512x32xf32>
    %141 = tpu.matmul %139, %140, %cst_51 {dimension_numbers = #tpu.dot_dimension_numbers<[1], [0], [0], [1], [0, 0, 1, 1], [], []>} : vector<512x48xf32>, vector<48x32xf32>, vector<512x32xf32> -> vector<512x32xf32>
    %c0_52 = arith.constant 0 : index
    %c0_53 = arith.constant 0 : index
    %142 = vector.load %arg5[%c0_52, %c0_53] : memref<1x32xf32, #tpu.memory_space<vmem>>, vector<1x32xf32>
    %143 = vector.broadcast %142 : vector<1x32xf32> to vector<512x32xf32>
    %144 = arith.addf %141, %143 : vector<512x32xf32>
    %cst_54 = arith.constant 0.000000e+00 : f32
    %145 = vector.broadcast %cst_54 : f32 to vector<512x32xf32>
    %146 = arith.maximumf %144, %145 : vector<512x32xf32>
    %c0_55 = arith.constant 0 : index
    %c0_56 = arith.constant 0 : index
    %147 = vector.load %arg12[%c0_55, %c0_56] : memref<512x32xf32, #tpu.memory_space<vmem>>, vector<512x32xf32>
    tpu.vector_store %arg12[%c0_55, %c0_56], %146 {strides = array<i32>} : memref<512x32xf32, #tpu.memory_space<vmem>>, vector<512x32xf32>,
    %c0_57 = arith.constant 0 : index
    %c0_58 = arith.constant 0 : index
    %148 = tpu.strided_load %arg12[%c0_57, %c0_58] {strides = array<i32: 64, 1>} : memref<512x32xf32, #tpu.memory_space<vmem>>, vector<8x32xf32>
    %c1_59 = arith.constant 1 : index
    %c0_60 = arith.constant 0 : index
    %149 = tpu.strided_load %arg12[%c1_59, %c0_60] {strides = array<i32: 64, 1>} : memref<512x32xf32, #tpu.memory_space<vmem>>, vector<8x32xf32>
    %150 = arith.maximumf %148, %149 : vector<8x32xf32>
    %c2 = arith.constant 2 : index
    %c0_61 = arith.constant 0 : index
    %151 = tpu.strided_load %arg12[%c2, %c0_61] {strides = array<i32: 64, 1>} : memref<512x32xf32, #tpu.memory_space<vmem>>, vector<8x32xf32>
    %c3 = arith.constant 3 : index
    %c0_62 = arith.constant 0 : index
    %152 = tpu.strided_load %arg12[%c3, %c0_62] {strides = array<i32: 64, 1>} : memref<512x32xf32, #tpu.memory_space<vmem>>, vector<8x32xf32>
    %153 = arith.maximumf %151, %152 : vector<8x32xf32>
    %c4 = arith.constant 4 : index
    %c0_63 = arith.constant 0 : index
    %154 = tpu.strided_load %arg12[%c4, %c0_63] {strides = array<i32: 64, 1>} : memref<512x32xf32, #tpu.memory_space<vmem>>, vector<8x32xf32>
    %c5 = arith.constant 5 : index
    %c0_64 = arith.constant 0 : index
    %155 = tpu.strided_load %arg12[%c5, %c0_64] {strides = array<i32: 64, 1>} : memref<512x32xf32, #tpu.memory_space<vmem>>, vector<8x32xf32>
    %156 = arith.maximumf %154, %155 : vector<8x32xf32>
    %c6 = arith.constant 6 : index
    %c0_65 = arith.constant 0 : index
    %157 = tpu.strided_load %arg12[%c6, %c0_65] {strides = array<i32: 64, 1>} : memref<512x32xf32, #tpu.memory_space<vmem>>, vector<8x32xf32>
    %c7 = arith.constant 7 : index
    %c0_66 = arith.constant 0 : index
    %158 = tpu.strided_load %arg12[%c7, %c0_66] {strides = array<i32: 64, 1>} : memref<512x32xf32, #tpu.memory_space<vmem>>, vector<8x32xf32>
    %159 = arith.maximumf %157, %158 : vector<8x32xf32>
    %c8 = arith.constant 8 : index
    %c0_67 = arith.constant 0 : index
    %160 = tpu.strided_load %arg12[%c8, %c0_67] {strides = array<i32: 64, 1>} : memref<512x32xf32, #tpu.memory_space<vmem>>, vector<8x32xf32>
    %c9 = arith.constant 9 : index
    %c0_68 = arith.constant 0 : index
    %161 = tpu.strided_load %arg12[%c9, %c0_68] {strides = array<i32: 64, 1>} : memref<512x32xf32, #tpu.memory_space<vmem>>, vector<8x32xf32>
    %162 = arith.maximumf %160, %161 : vector<8x32xf32>
    %c10 = arith.constant 10 : index
    %c0_69 = arith.constant 0 : index
    %163 = tpu.strided_load %arg12[%c10, %c0_69] {strides = array<i32: 64, 1>} : memref<512x32xf32, #tpu.memory_space<vmem>>, vector<8x32xf32>
    %c11 = arith.constant 11 : index
    %c0_70 = arith.constant 0 : index
    %164 = tpu.strided_load %arg12[%c11, %c0_70] {strides = array<i32: 64, 1>} : memref<512x32xf32, #tpu.memory_space<vmem>>, vector<8x32xf32>
    %165 = arith.maximumf %163, %164 : vector<8x32xf32>
    %c12 = arith.constant 12 : index
    %c0_71 = arith.constant 0 : index
    %166 = tpu.strided_load %arg12[%c12, %c0_71] {strides = array<i32: 64, 1>} : memref<512x32xf32, #tpu.memory_space<vmem>>, vector<8x32xf32>
    %c13 = arith.constant 13 : index
    %c0_72 = arith.constant 0 : index
    %167 = tpu.strided_load %arg12[%c13, %c0_72] {strides = array<i32: 64, 1>} : memref<512x32xf32, #tpu.memory_space<vmem>>, vector<8x32xf32>
    %168 = arith.maximumf %166, %167 : vector<8x32xf32>
    %c14 = arith.constant 14 : index
    %c0_73 = arith.constant 0 : index
    %169 = tpu.strided_load %arg12[%c14, %c0_73] {strides = array<i32: 64, 1>} : memref<512x32xf32, #tpu.memory_space<vmem>>, vector<8x32xf32>
    %c15 = arith.constant 15 : index
    %c0_74 = arith.constant 0 : index
    %170 = tpu.strided_load %arg12[%c15, %c0_74] {strides = array<i32: 64, 1>} : memref<512x32xf32, #tpu.memory_space<vmem>>, vector<8x32xf32>
    %171 = arith.maximumf %169, %170 : vector<8x32xf32>
    %c16 = arith.constant 16 : index
    %c0_75 = arith.constant 0 : index
    %172 = tpu.strided_load %arg12[%c16, %c0_75] {strides = array<i32: 64, 1>} : memref<512x32xf32, #tpu.memory_space<vmem>>, vector<8x32xf32>
    %c17 = arith.constant 17 : index
    %c0_76 = arith.constant 0 : index
    %173 = tpu.strided_load %arg12[%c17, %c0_76] {strides = array<i32: 64, 1>} : memref<512x32xf32, #tpu.memory_space<vmem>>, vector<8x32xf32>
    %174 = arith.maximumf %172, %173 : vector<8x32xf32>
    %c18 = arith.constant 18 : index
    %c0_77 = arith.constant 0 : index
    %175 = tpu.strided_load %arg12[%c18, %c0_77] {strides = array<i32: 64, 1>} : memref<512x32xf32, #tpu.memory_space<vmem>>, vector<8x32xf32>
    %c19 = arith.constant 19 : index
    %c0_78 = arith.constant 0 : index
    %176 = tpu.strided_load %arg12[%c19, %c0_78] {strides = array<i32: 64, 1>} : memref<512x32xf32, #tpu.memory_space<vmem>>, vector<8x32xf32>
    %177 = arith.maximumf %175, %176 : vector<8x32xf32>
    %c20 = arith.constant 20 : index
    %c0_79 = arith.constant 0 : index
    %178 = tpu.strided_load %arg12[%c20, %c0_79] {strides = array<i32: 64, 1>} : memref<512x32xf32, #tpu.memory_space<vmem>>, vector<8x32xf32>
    %c21 = arith.constant 21 : index
    %c0_80 = arith.constant 0 : index
    %179 = tpu.strided_load %arg12[%c21, %c0_80] {strides = array<i32: 64, 1>} : memref<512x32xf32, #tpu.memory_space<vmem>>, vector<8x32xf32>
    %180 = arith.maximumf %178, %179 : vector<8x32xf32>
    %c22 = arith.constant 22 : index
    %c0_81 = arith.constant 0 : index
    %181 = tpu.strided_load %arg12[%c22, %c0_81] {strides = array<i32: 64, 1>} : memref<512x32xf32, #tpu.memory_space<vmem>>, vector<8x32xf32>
    %c23 = arith.constant 23 : index
    %c0_82 = arith.constant 0 : index
    %182 = tpu.strided_load %arg12[%c23, %c0_82] {strides = array<i32: 64, 1>} : memref<512x32xf32, #tpu.memory_space<vmem>>, vector<8x32xf32>
    %183 = arith.maximumf %181, %182 : vector<8x32xf32>
    %c24 = arith.constant 24 : index
    %c0_83 = arith.constant 0 : index
    %184 = tpu.strided_load %arg12[%c24, %c0_83] {strides = array<i32: 64, 1>} : memref<512x32xf32, #tpu.memory_space<vmem>>, vector<8x32xf32>
    %c25 = arith.constant 25 : index
    %c0_84 = arith.constant 0 : index
    %185 = tpu.strided_load %arg12[%c25, %c0_84] {strides = array<i32: 64, 1>} : memref<512x32xf32, #tpu.memory_space<vmem>>, vector<8x32xf32>
    %186 = arith.maximumf %184, %185 : vector<8x32xf32>
    %c26 = arith.constant 26 : index
    %c0_85 = arith.constant 0 : index
    %187 = tpu.strided_load %arg12[%c26, %c0_85] {strides = array<i32: 64, 1>} : memref<512x32xf32, #tpu.memory_space<vmem>>, vector<8x32xf32>
    %c27 = arith.constant 27 : index
    %c0_86 = arith.constant 0 : index
    %188 = tpu.strided_load %arg12[%c27, %c0_86] {strides = array<i32: 64, 1>} : memref<512x32xf32, #tpu.memory_space<vmem>>, vector<8x32xf32>
    %189 = arith.maximumf %187, %188 : vector<8x32xf32>
    %c28 = arith.constant 28 : index
    %c0_87 = arith.constant 0 : index
    %190 = tpu.strided_load %arg12[%c28, %c0_87] {strides = array<i32: 64, 1>} : memref<512x32xf32, #tpu.memory_space<vmem>>, vector<8x32xf32>
    %c29 = arith.constant 29 : index
    %c0_88 = arith.constant 0 : index
    %191 = tpu.strided_load %arg12[%c29, %c0_88] {strides = array<i32: 64, 1>} : memref<512x32xf32, #tpu.memory_space<vmem>>, vector<8x32xf32>
    %192 = arith.maximumf %190, %191 : vector<8x32xf32>
    %c30 = arith.constant 30 : index
    %c0_89 = arith.constant 0 : index
    %193 = tpu.strided_load %arg12[%c30, %c0_89] {strides = array<i32: 64, 1>} : memref<512x32xf32, #tpu.memory_space<vmem>>, vector<8x32xf32>
    %c31 = arith.constant 31 : index
    %c0_90 = arith.constant 0 : index
    %194 = tpu.strided_load %arg12[%c31, %c0_90] {strides = array<i32: 64, 1>} : memref<512x32xf32, #tpu.memory_space<vmem>>, vector<8x32xf32>
    %195 = arith.maximumf %193, %194 : vector<8x32xf32>
    %c32 = arith.constant 32 : index
    %c0_91 = arith.constant 0 : index
    %196 = tpu.strided_load %arg12[%c32, %c0_91] {strides = array<i32: 64, 1>} : memref<512x32xf32, #tpu.memory_space<vmem>>, vector<8x32xf32>
    %c33 = arith.constant 33 : index
    %c0_92 = arith.constant 0 : index
    %197 = tpu.strided_load %arg12[%c33, %c0_92] {strides = array<i32: 64, 1>} : memref<512x32xf32, #tpu.memory_space<vmem>>, vector<8x32xf32>
    %198 = arith.maximumf %196, %197 : vector<8x32xf32>
    %c34 = arith.constant 34 : index
    %c0_93 = arith.constant 0 : index
    %199 = tpu.strided_load %arg12[%c34, %c0_93] {strides = array<i32: 64, 1>} : memref<512x32xf32, #tpu.memory_space<vmem>>, vector<8x32xf32>
    %c35 = arith.constant 35 : index
    %c0_94 = arith.constant 0 : index
    %200 = tpu.strided_load %arg12[%c35, %c0_94] {strides = array<i32: 64, 1>} : memref<512x32xf32, #tpu.memory_space<vmem>>, vector<8x32xf32>
    %201 = arith.maximumf %199, %200 : vector<8x32xf32>
    %c36 = arith.constant 36 : index
    %c0_95 = arith.constant 0 : index
    %202 = tpu.strided_load %arg12[%c36, %c0_95] {strides = array<i32: 64, 1>} : memref<512x32xf32, #tpu.memory_space<vmem>>, vector<8x32xf32>
    %c37 = arith.constant 37 : index
    %c0_96 = arith.constant 0 : index
    %203 = tpu.strided_load %arg12[%c37, %c0_96] {strides = array<i32: 64, 1>} : memref<512x32xf32, #tpu.memory_space<vmem>>, vector<8x32xf32>
    %204 = arith.maximumf %202, %203 : vector<8x32xf32>
    %c38 = arith.constant 38 : index
    %c0_97 = arith.constant 0 : index
    %205 = tpu.strided_load %arg12[%c38, %c0_97] {strides = array<i32: 64, 1>} : memref<512x32xf32, #tpu.memory_space<vmem>>, vector<8x32xf32>
    %c39 = arith.constant 39 : index
    %c0_98 = arith.constant 0 : index
    %206 = tpu.strided_load %arg12[%c39, %c0_98] {strides = array<i32: 64, 1>} : memref<512x32xf32, #tpu.memory_space<vmem>>, vector<8x32xf32>
    %207 = arith.maximumf %205, %206 : vector<8x32xf32>
    %c40 = arith.constant 40 : index
    %c0_99 = arith.constant 0 : index
    %208 = tpu.strided_load %arg12[%c40, %c0_99] {strides = array<i32: 64, 1>} : memref<512x32xf32, #tpu.memory_space<vmem>>, vector<8x32xf32>
    %c41 = arith.constant 41 : index
    %c0_100 = arith.constant 0 : index
    %209 = tpu.strided_load %arg12[%c41, %c0_100] {strides = array<i32: 64, 1>} : memref<512x32xf32, #tpu.memory_space<vmem>>, vector<8x32xf32>
    %210 = arith.maximumf %208, %209 : vector<8x32xf32>
    %c42 = arith.constant 42 : index
    %c0_101 = arith.constant 0 : index
    %211 = tpu.strided_load %arg12[%c42, %c0_101] {strides = array<i32: 64, 1>} : memref<512x32xf32, #tpu.memory_space<vmem>>, vector<8x32xf32>
    %c43 = arith.constant 43 : index
    %c0_102 = arith.constant 0 : index
    %212 = tpu.strided_load %arg12[%c43, %c0_102] {strides = array<i32: 64, 1>} : memref<512x32xf32, #tpu.memory_space<vmem>>, vector<8x32xf32>
    %213 = arith.maximumf %211, %212 : vector<8x32xf32>
    %c44 = arith.constant 44 : index
    %c0_103 = arith.constant 0 : index
    %214 = tpu.strided_load %arg12[%c44, %c0_103] {strides = array<i32: 64, 1>} : memref<512x32xf32, #tpu.memory_space<vmem>>, vector<8x32xf32>
    %c45 = arith.constant 45 : index
    %c0_104 = arith.constant 0 : index
    %215 = tpu.strided_load %arg12[%c45, %c0_104] {strides = array<i32: 64, 1>} : memref<512x32xf32, #tpu.memory_space<vmem>>, vector<8x32xf32>
    %216 = arith.maximumf %214, %215 : vector<8x32xf32>
    %c46 = arith.constant 46 : index
    %c0_105 = arith.constant 0 : index
    %217 = tpu.strided_load %arg12[%c46, %c0_105] {strides = array<i32: 64, 1>} : memref<512x32xf32, #tpu.memory_space<vmem>>, vector<8x32xf32>
    %c47 = arith.constant 47 : index
    %c0_106 = arith.constant 0 : index
    %218 = tpu.strided_load %arg12[%c47, %c0_106] {strides = array<i32: 64, 1>} : memref<512x32xf32, #tpu.memory_space<vmem>>, vector<8x32xf32>
    %219 = arith.maximumf %217, %218 : vector<8x32xf32>
    %c48 = arith.constant 48 : index
    %c0_107 = arith.constant 0 : index
    %220 = tpu.strided_load %arg12[%c48, %c0_107] {strides = array<i32: 64, 1>} : memref<512x32xf32, #tpu.memory_space<vmem>>, vector<8x32xf32>
    %c49 = arith.constant 49 : index
    %c0_108 = arith.constant 0 : index
    %221 = tpu.strided_load %arg12[%c49, %c0_108] {strides = array<i32: 64, 1>} : memref<512x32xf32, #tpu.memory_space<vmem>>, vector<8x32xf32>
    %222 = arith.maximumf %220, %221 : vector<8x32xf32>
    %c50 = arith.constant 50 : index
    %c0_109 = arith.constant 0 : index
    %223 = tpu.strided_load %arg12[%c50, %c0_109] {strides = array<i32: 64, 1>} : memref<512x32xf32, #tpu.memory_space<vmem>>, vector<8x32xf32>
    %c51 = arith.constant 51 : index
    %c0_110 = arith.constant 0 : index
    %224 = tpu.strided_load %arg12[%c51, %c0_110] {strides = array<i32: 64, 1>} : memref<512x32xf32, #tpu.memory_space<vmem>>, vector<8x32xf32>
    %225 = arith.maximumf %223, %224 : vector<8x32xf32>
    %c52 = arith.constant 52 : index
    %c0_111 = arith.constant 0 : index
    %226 = tpu.strided_load %arg12[%c52, %c0_111] {strides = array<i32: 64, 1>} : memref<512x32xf32, #tpu.memory_space<vmem>>, vector<8x32xf32>
    %c53 = arith.constant 53 : index
    %c0_112 = arith.constant 0 : index
    %227 = tpu.strided_load %arg12[%c53, %c0_112] {strides = array<i32: 64, 1>} : memref<512x32xf32, #tpu.memory_space<vmem>>, vector<8x32xf32>
    %228 = arith.maximumf %226, %227 : vector<8x32xf32>
    %c54 = arith.constant 54 : index
    %c0_113 = arith.constant 0 : index
    %229 = tpu.strided_load %arg12[%c54, %c0_113] {strides = array<i32: 64, 1>} : memref<512x32xf32, #tpu.memory_space<vmem>>, vector<8x32xf32>
    %c55 = arith.constant 55 : index
    %c0_114 = arith.constant 0 : index
    %230 = tpu.strided_load %arg12[%c55, %c0_114] {strides = array<i32: 64, 1>} : memref<512x32xf32, #tpu.memory_space<vmem>>, vector<8x32xf32>
    %231 = arith.maximumf %229, %230 : vector<8x32xf32>
    %c56 = arith.constant 56 : index
    %c0_115 = arith.constant 0 : index
    %232 = tpu.strided_load %arg12[%c56, %c0_115] {strides = array<i32: 64, 1>} : memref<512x32xf32, #tpu.memory_space<vmem>>, vector<8x32xf32>
    %c57 = arith.constant 57 : index
    %c0_116 = arith.constant 0 : index
    %233 = tpu.strided_load %arg12[%c57, %c0_116] {strides = array<i32: 64, 1>} : memref<512x32xf32, #tpu.memory_space<vmem>>, vector<8x32xf32>
    %234 = arith.maximumf %232, %233 : vector<8x32xf32>
    %c58 = arith.constant 58 : index
    %c0_117 = arith.constant 0 : index
    %235 = tpu.strided_load %arg12[%c58, %c0_117] {strides = array<i32: 64, 1>} : memref<512x32xf32, #tpu.memory_space<vmem>>, vector<8x32xf32>
    %c59 = arith.constant 59 : index
    %c0_118 = arith.constant 0 : index
    %236 = tpu.strided_load %arg12[%c59, %c0_118] {strides = array<i32: 64, 1>} : memref<512x32xf32, #tpu.memory_space<vmem>>, vector<8x32xf32>
    %237 = arith.maximumf %235, %236 : vector<8x32xf32>
    %c60 = arith.constant 60 : index
    %c0_119 = arith.constant 0 : index
    %238 = tpu.strided_load %arg12[%c60, %c0_119] {strides = array<i32: 64, 1>} : memref<512x32xf32, #tpu.memory_space<vmem>>, vector<8x32xf32>
    %c61 = arith.constant 61 : index
    %c0_120 = arith.constant 0 : index
    %239 = tpu.strided_load %arg12[%c61, %c0_120] {strides = array<i32: 64, 1>} : memref<512x32xf32, #tpu.memory_space<vmem>>, vector<8x32xf32>
    %240 = arith.maximumf %238, %239 : vector<8x32xf32>
    %c62 = arith.constant 62 : index
    %c0_121 = arith.constant 0 : index
    %241 = tpu.strided_load %arg12[%c62, %c0_121] {strides = array<i32: 64, 1>} : memref<512x32xf32, #tpu.memory_space<vmem>>, vector<8x32xf32>
    %c63 = arith.constant 63 : index
    %c0_122 = arith.constant 0 : index
    %242 = tpu.strided_load %arg12[%c63, %c0_122] {strides = array<i32: 64, 1>} : memref<512x32xf32, #tpu.memory_space<vmem>>, vector<8x32xf32>
    %243 = arith.maximumf %241, %242 : vector<8x32xf32>
    %244 = tpu.concatenate %150, %153, %156, %159, %162, %165, %168, %171, %174, %177, %180, %183, %186, %189, %192, %195 in 1 : vector<8x32xf32>, vector<8x32xf32>, vector<8x32xf32>, vector<8x32xf32>, vector<8x32xf32>, vector<8x32xf32>, vector<8x32xf32>, vector<8x32xf32>, vector<8x32xf32>, vector<8x32xf32>, vector<8x32xf32>, vector<8x32xf32>, vector<8x32xf32>, vector<8x32xf32>, vector<8x32xf32>, vector<8x32xf32> -> vector<8x512xf32>
    %245 = tpu.concatenate %198, %201, %204, %207, %210, %213, %216, %219, %222, %225, %228, %231, %234, %237, %240, %243 in 1 : vector<8x32xf32>, vector<8x32xf32>, vector<8x32xf32>, vector<8x32xf32>, vector<8x32xf32>, vector<8x32xf32>, vector<8x32xf32>, vector<8x32xf32>, vector<8x32xf32>, vector<8x32xf32>, vector<8x32xf32>, vector<8x32xf32>, vector<8x32xf32>, vector<8x32xf32>, vector<8x32xf32>, vector<8x32xf32> -> vector<8x512xf32>
    %246 = tpu.concatenate %244, %245 in 1 : vector<8x512xf32>, vector<8x512xf32> -> vector<8x1024xf32>
    %c0_123 = arith.constant 0 : index
    %c0_124 = arith.constant 0 : index
    %247 = vector.load %arg6[%c0_123, %c0_124] : memref<1024x64xf32, #tpu.memory_space<vmem>>, vector<1024x64xf32>
    %cst_125 = arith.constant dense<0.000000e+00> : vector<8x64xf32>
    %248 = tpu.matmul %246, %247, %cst_125 {dimension_numbers = #tpu.dot_dimension_numbers<[1], [0], [0], [1], [0, 0, 1, 1], [], []>} : vector<8x1024xf32>, vector<1024x64xf32>, vector<8x64xf32> -> vector<8x64xf32>
    %c0_126 = arith.constant 0 : index
    %c0_127 = arith.constant 0 : index
    %249 = vector.load %arg7[%c0_126, %c0_127] : memref<1x64xf32, #tpu.memory_space<vmem>>, vector<1x64xf32>
    %250 = vector.broadcast %249 : vector<1x64xf32> to vector<8x64xf32>
    %251 = arith.addf %248, %250 : vector<8x64xf32>
    %cst_128 = arith.constant 0.000000e+00 : f32
    %252 = vector.broadcast %cst_128 : f32 to vector<8x64xf32>
    %253 = arith.maximumf %251, %252 : vector<8x64xf32>
    %c0_129 = arith.constant 0 : index
    %c0_130 = arith.constant 0 : index
    %254 = vector.load %arg8[%c0_129, %c0_130] : memref<64x1xf32, #tpu.memory_space<vmem>>, vector<64x1xf32>
    %cst_131 = arith.constant dense<0.000000e+00> : vector<8x1xf32>
    %255 = tpu.matmul %253, %254, %cst_131 {dimension_numbers = #tpu.dot_dimension_numbers<[1], [0], [0], [1], [0, 0, 1, 1], [], []>} : vector<8x64xf32>, vector<64x1xf32>, vector<8x1xf32> -> vector<8x1xf32>
    %c0_132 = arith.constant 0 : index
    %c0_133 = arith.constant 0 : index
    %256 = vector.load %arg9[%c0_132, %c0_133] : memref<1x1xf32, #tpu.memory_space<vmem>>, vector<1x1xf32>
    %257 = vector.broadcast %256 : vector<1x1xf32> to vector<8x1xf32>
    %258 = arith.addf %255, %257 : vector<8x1xf32>
    %cst_134 = arith.constant 5.000000e-01 : f32
    %259 = vector.broadcast %cst_134 : f32 to vector<8x1xf32>
    %260 = arith.mulf %259, %258 : vector<8x1xf32>
    %261 = math.tanh %260 : vector<8x1xf32>
    %cst_135 = arith.constant 1.000000e+00 : f32
    %262 = vector.broadcast %cst_135 : f32 to vector<8x1xf32>
    %263 = arith.addf %261, %262 : vector<8x1xf32>
    %cst_136 = arith.constant 5.000000e-01 : f32
    %264 = vector.broadcast %cst_136 : f32 to vector<8x1xf32>
    %265 = arith.mulf %264, %263 : vector<8x1xf32>
    %c0_137 = arith.constant 0 : index
    %c0_138 = arith.constant 0 : index
    %266 = vector.load %arg10[%c0_137, %c0_138] : memref<8x1xf32, #tpu.memory_space<vmem>>, vector<8x1xf32>
    tpu.vector_store %arg10[%c0_137, %c0_138], %265 {strides = array<i32>} : memref<8x1xf32, #tpu.memory_space<vmem>>, vector<8x1xf32>,
    return
  }
}

</mosaic_0001>

<llo_original>
// kernel: simple_1d_cnn_v2_forward.1
$region0: #{simple_1d_cnn_v2_forward.1}
  #allocation0 [shape = 'u32[]', space=smem, size = 0x4, offset = 0x4, fixed_abs, tag = 'smem constant byte address 0x4 - core index']
  #allocation1 [shape = 'u32[144,128]{1,0:T(1,128)}', space=vmem, size = 0x12000, scoped, tag = 'internal scratch']
  #allocation2 [shape = 'f32[1024,16]{1,0:T(8,128)}', space=vmem, size = 0x80000, scoped, tag = 'scratch operand']
  #allocation3 [shape = 'f32[512,32]{1,0:T(8,128)}', space=vmem, size = 0x40000, scoped, tag = 'scratch operand']
  #allocation4 [shape = 'f32[1,1]{1,0:T(1,128)S(1)}', space=vmem, size = 0x200, scoped, tag = 'scoped memory for simple_1d_cnn_v2_forward.1']
  %s0 = inlined_call_operand.vmem [shape: f32[8,128], index: 0, kind: input, shape index: {}]
  %s1 = inlined_call_operand.vmem [shape: f32[128,128], index: 1, kind: input, shape index: {}]
  %s2 = inlined_call_operand.vmem [shape: f32[3,16], index: 2, kind: input, shape index: {}]
  %s3 = inlined_call_operand.vmem [shape: f32[1,16], index: 3, kind: input, shape index: {}]
  %s4 = inlined_call_operand.vmem [shape: f32[48,32], index: 4, kind: input, shape index: {}]
  %s5 = inlined_call_operand.vmem [shape: f32[1,32], index: 5, kind: input, shape index: {}]
  %s6 = inlined_call_operand.vmem [shape: f32[1024,64], index: 6, kind: input, shape index: {}]
  %s7 = inlined_call_operand.vmem [shape: f32[1,64], index: 7, kind: input, shape index: {}]
  %s8 = inlined_call_operand.vmem [shape: f32[64,1], index: 8, kind: input, shape index: {}]
  %s9 = inlined_call_operand.<no memory space> [shape: f32[1,1], index: 9, kind: input, shape index: {}]
  %s10 = inlined_call_operand.vmem [shape: f32[8,1], index: 10, kind: output, shape index: {}]
  %s11 = sld [smem:[#allocation0]]
  $region50: #{simple_1d_cnn_v2_forward.1} parent=0
    _
  %s13 = ssub.s32 1, %s11
  %s14 = scalar_select 0, %s13, %s11
  %v15 = vstv %s9
  %16 = vst [vmem:[#allocation4] sm:$0x1] %v15
  // Predicated region
  $region2: #{simple_1d_cnn_v2_forward.1} parent=0 // pred_check
    _
  $region3: #{simple_1d_cnn_v2_forward.1} parent=0 // pred_check_branch
    %18 = sbr.rel (0) target = $region5
  $region4: #{simple_1d_cnn_v2_forward.1} parent=0 // pred_region
    _
  $region5: #{simple_1d_cnn_v2_forward.1} parent=0 // pred_fallthru
    _
  // Predicated region
  $region6: #{simple_1d_cnn_v2_forward.1} parent=0 // pred_check
    _
  $region7: #{simple_1d_cnn_v2_forward.1} parent=0 // pred_check_branch
    %20 = sbr.rel (0) target = $region9
  $region8: #{simple_1d_cnn_v2_forward.1} parent=0 // pred_region
    _
  $region9: #{simple_1d_cnn_v2_forward.1} parent=0 // pred_fallthru
    _
  // Predicated region
  $region10: #{simple_1d_cnn_v2_forward.1} parent=0 // pred_check
    _
  $region11: #{simple_1d_cnn_v2_forward.1} parent=0 // pred_check_branch
    %22 = sbr.rel (0) target = $region13
  $region12: #{simple_1d_cnn_v2_forward.1} parent=0 // pred_region
    _
  $region13: #{simple_1d_cnn_v2_forward.1} parent=0 // pred_fallthru
    _
  // Predicated region
  $region14: #{simple_1d_cnn_v2_forward.1} parent=0 // pred_check
    _
  $region15: #{simple_1d_cnn_v2_forward.1} parent=0 // pred_check_branch
    %24 = sbr.rel (0) target = $region17
  $region16: #{simple_1d_cnn_v2_forward.1} parent=0 // pred_region
    _
  $region17: #{simple_1d_cnn_v2_forward.1} parent=0 // pred_fallthru
    _
  // Predicated region
  $region18: #{simple_1d_cnn_v2_forward.1} parent=0 // pred_check
    _
  $region19: #{simple_1d_cnn_v2_forward.1} parent=0 // pred_check_branch
    %26 = sbr.rel (0) target = $region21
  $region20: #{simple_1d_cnn_v2_forward.1} parent=0 // pred_region
    _
  $region21: #{simple_1d_cnn_v2_forward.1} parent=0 // pred_fallthru
    _
  // Predicated region
  $region22: #{simple_1d_cnn_v2_forward.1} parent=0 // pred_check
    _
  $region23: #{simple_1d_cnn_v2_forward.1} parent=0 // pred_check_branch
    %28 = sbr.rel (0) target = $region25
  $region24: #{simple_1d_cnn_v2_forward.1} parent=0 // pred_region
    _
  $region25: #{simple_1d_cnn_v2_forward.1} parent=0 // pred_fallthru
    _
  // Predicated region
  $region26: #{simple_1d_cnn_v2_forward.1} parent=0 // pred_check
    _
  $region27: #{simple_1d_cnn_v2_forward.1} parent=0 // pred_check_branch
    %30 = sbr.rel (0) target = $region29
  $region28: #{simple_1d_cnn_v2_forward.1} parent=0 // pred_region
    _
  $region29: #{simple_1d_cnn_v2_forward.1} parent=0 // pred_fallthru
    _
  // Predicated region
  $region30: #{simple_1d_cnn_v2_forward.1} parent=0 // pred_check
    _
  $region31: #{simple_1d_cnn_v2_forward.1} parent=0 // pred_check_branch
    %32 = sbr.rel (0) target = $region33
  $region32: #{simple_1d_cnn_v2_forward.1} parent=0 // pred_region
    _
  $region33: #{simple_1d_cnn_v2_forward.1} parent=0 // pred_fallthru
    _
  // Predicated region
  $region34: #{simple_1d_cnn_v2_forward.1} parent=0 // pred_check
    _
  $region35: #{simple_1d_cnn_v2_forward.1} parent=0 // pred_check_branch
    %34 = sbr.rel (0) target = $region37
  $region36: #{simple_1d_cnn_v2_forward.1} parent=0 // pred_region
    _
  $region37: #{simple_1d_cnn_v2_forward.1} parent=0 // pred_fallthru
    _
  // Predicated region
  $region38: #{simple_1d_cnn_v2_forward.1} parent=0 // pred_check
    _
  $region39: #{simple_1d_cnn_v2_forward.1} parent=0 // pred_check_branch
    %36 = sbr.rel (0) target = $region41
  $region40: #{simple_1d_cnn_v2_forward.1} parent=0 // pred_region
    _
  $region41: #{simple_1d_cnn_v2_forward.1} parent=0 // pred_fallthru
    _
  %v37 = vld [vmem:[%s1] sm:$0xff]
  %v38 = vld [vmem:[%s1 + $0x8] sm:$0xff]
  %v39 = vld [vmem:[%s1 + $0x10] sm:$0xff]
  %v40 = vld [vmem:[%s1 + $0x18] sm:$0xff]
  %v41 = vld [vmem:[%s1 + $0x20] sm:$0xff]
  %v42 = vld [vmem:[%s1 + $0x28] sm:$0xff]
  %v43 = vld [vmem:[%s1 + $0x30] sm:$0xff]
  %v44 = vld [vmem:[%s1 + $0x38] sm:$0xff]
  %v45 = vld [vmem:[%s1 + $0x40] sm:$0xff]
  %v46 = vld [vmem:[%s1 + $0x48] sm:$0xff]
  %v47 = vld [vmem:[%s1 + $0x50] sm:$0xff]
  %v48 = vld [vmem:[%s1 + $0x58] sm:$0xff]
  %v49 = vld [vmem:[%s1 + $0x60] sm:$0xff]
  %v50 = vld [vmem:[%s1 + $0x68] sm:$0xff]
  %v51 = vld [vmem:[%s1 + $0x70] sm:$0xff]
  %v52 = vld [vmem:[%s1 + $0x78] sm:$0xff]
  %v53 = vld [vmem:[%s0] sm:$0xff]
  %54 = vmatprep.subr.mxu0 0.0
  %55 = vmatpush1.xpose.msra.mxu0 %v53
  %56 = vmatprep.subr.mxu0 0.0
  %57 = vmatpush1.xpose.msra.mxu0 0.0
  %58 = vmatprep.subr.mxu0 0.0
  %59 = vmatpush1.xpose.msra.mxu0 0.0
  %60 = vmatprep.subr.mxu0 0.0
  %61 = vmatpush1.xpose.msra.mxu0 0.0
  %62 = vmatprep.subr.mxu0 0.0
  %63 = vmatpush1.xpose.msra.mxu0 0.0
  %64 = vmatprep.subr.mxu0 0.0
  %65 = vmatpush1.xpose.msra.mxu0 0.0
  %66 = vmatprep.subr.mxu0 0.0
  %67 = vmatpush1.xpose.msra.mxu0 0.0
  %68 = vmatprep.subr.mxu0 0.0
  %69 = vmatpush1.xpose.msra.mxu0 0.0
  %70 = vmatprep.subr.mxu0 0.0
  %71 = vmatpush1.xpose.msra.mxu0 0.0
  %72 = vmatprep.subr.mxu0 0.0
  %73 = vmatpush1.xpose.msra.mxu0 0.0
  %74 = vmatprep.subr.mxu0 0.0
  %75 = vmatpush1.xpose.msra.mxu0 0.0
  %76 = vmatprep.subr.mxu0 0.0
  %77 = vmatpush1.xpose.msra.mxu0 0.0
  %78 = vmatprep.subr.mxu0 0.0
  %79 = vmatpush1.xpose.msra.mxu0 0.0
  %80 = vmatprep.subr.mxu0 0.0
  %81 = vmatpush1.xpose.msra.mxu0 0.0
  %82 = vmatprep.subr.mxu0 0.0
  %83 = vmatpush1.xpose.msra.mxu0 0.0
  %84 = vmatprep.subr.mxu0 0.0
  %85 = vmatpush1.xpose.msra.mxu0 0.0
  %86 = vmatprep.subr.mxu0 0.0
  %87 = vmatpush1.xpose.msra.mxu0 0.0
  %88 = vmatprep.subr.mxu0 0.0
  %89 = vmatpush1.xpose.msra.mxu0 0.0
  %90 = vmatprep.subr.mxu0 0.0
  %91 = vmatpush1.xpose.msra.mxu0 0.0
  %92 = vmatprep.subr.mxu0 0.0
  %93 = vmatpush1.xpose.msra.mxu0 0.0
  %94 = vmatprep.subr.mxu0 0.0
  %95 = vmatpush1.xpose.msra.mxu0 0.0
  %96 = vmatprep.subr.mxu0 0.0
  %97 = vmatpush1.xpose.msra.mxu0 0.0
  %98 = vmatprep.subr.mxu0 0.0
  %99 = vmatpush1.xpose.msra.mxu0 0.0
  %100 = vmatprep.subr.mxu0 0.0
  %101 = vmatpush1.xpose.msra.mxu0 0.0
  %102 = vmatprep.subr.mxu0 0.0
  %103 = vmatpush1.xpose.msra.mxu0 0.0
  %104 = vmatprep.subr.mxu0 0.0
  %105 = vmatpush1.xpose.msra.mxu0 0.0
  %106 = vmatprep.subr.mxu0 0.0
  %107 = vmatpush1.xpose.msra.mxu0 0.0
  %108 = vmatprep.subr.mxu0 0.0
  %109 = vmatpush1.xpose.msra.mxu0 0.0
  %110 = vmatprep.subr.mxu0 0.0
  %111 = vmatpush1.xpose.msra.mxu0 0.0
  %112 = vmatprep.subr.mxu0 0.0
  %113 = vmatpush1.xpose.msra.mxu0 0.0
  %114 = vmatprep.subr.mxu0 0.0
  %115 = vmatpush1.xpose.msra.mxu0 0.0
  %116 = vmatprep.subr.mxu0 0.0
  %117 = vmatpush1.xpose.msra.mxu0 0.0
  %118 = vmatprep.mubr.f32.mxu0 0.0
  %119 = vmatmul.mubr.f32.gmra.mrb[0].mxu0 %v37
  %v120 = vpop.f32.mrb[0].mxu0
  %v121 = vadd.f32 0.0, %v120
  %v122 = vpop.f32.mrb[0].mxu0
  %123 = vmatprep.mubr.f32.mxu0 0.0
  %124 = vmatmul.mubr.f32.gmra.mrb[0].mxu0 %v38
  %v125 = vpop.f32.mrb[0].mxu0
  %v126 = vadd.f32 0.0, %v125
  %v127 = vpop.f32.mrb[0].mxu0
  %128 = vmatprep.mubr.f32.mxu0 0.0
  %129 = vmatmul.mubr.f32.gmra.mrb[0].mxu0 %v39
  %v130 = vpop.f32.mrb[0].mxu0
  %v131 = vadd.f32 0.0, %v130
  %v132 = vpop.f32.mrb[0].mxu0
  %133 = vmatprep.mubr.f32.mxu0 0.0
  %134 = vmatmul.mubr.f32.gmra.mrb[0].mxu0 %v40
  %v135 = vpop.f32.mrb[0].mxu0
  %v136 = vadd.f32 0.0, %v135
  %v137 = vpop.f32.mrb[0].mxu0
  %138 = vmatprep.mubr.f32.mxu0 0.0
  %139 = vmatmul.mubr.f32.gmra.mrb[0].mxu0 %v41
  %v140 = vpop.f32.mrb[0].mxu0
  %v141 = vadd.f32 0.0, %v140
  %v142 = vpop.f32.mrb[0].mxu0
  %143 = vmatprep.mubr.f32.mxu0 0.0
  %144 = vmatmul.mubr.f32.gmra.mrb[0].mxu0 %v42
  %v145 = vpop.f32.mrb[0].mxu0
  %v146 = vadd.f32 0.0, %v145
  %v147 = vpop.f32.mrb[0].mxu0
  %148 = vmatprep.mubr.f32.mxu0 0.0
  %149 = vmatmul.mubr.f32.gmra.mrb[0].mxu0 %v43
  %v150 = vpop.f32.mrb[0].mxu0
  %v151 = vadd.f32 0.0, %v150
  %v152 = vpop.f32.mrb[0].mxu0
  %153 = vmatprep.mubr.f32.mxu0 0.0
  %154 = vmatmul.mubr.f32.gmra.mrb[0].mxu0 %v44
  %v155 = vpop.f32.mrb[0].mxu0
  %v156 = vadd.f32 0.0, %v155
  %v157 = vpop.f32.mrb[0].mxu0
  %158 = vmatprep.mubr.f32.mxu0 0.0
  %159 = vmatmul.mubr.f32.gmra.mrb[0].mxu0 %v45
  %v160 = vpop.f32.mrb[0].mxu0
  %v161 = vadd.f32 0.0, %v160
  %v162 = vpop.f32.mrb[0].mxu0
  %163 = vmatprep.mubr.f32.mxu0 0.0
  %164 = vmatmul.mubr.f32.gmra.mrb[0].mxu0 %v46
  %v165 = vpop.f32.mrb[0].mxu0
  %v166 = vadd.f32 0.0, %v165
  %v167 = vpop.f32.mrb[0].mxu0
  %168 = vmatprep.mubr.f32.mxu0 0.0
  %169 = vmatmul.mubr.f32.gmra.mrb[0].mxu0 %v47
  %v170 = vpop.f32.mrb[0].mxu0
  %v171 = vadd.f32 0.0, %v170
  %v172 = vpop.f32.mrb[0].mxu0
  %173 = vmatprep.mubr.f32.mxu0 0.0
  %174 = vmatmul.mubr.f32.gmra.mrb[0].mxu0 %v48
  %v175 = vpop.f32.mrb[0].mxu0
  %v176 = vadd.f32 0.0, %v175
  %v177 = vpop.f32.mrb[0].mxu0
  %178 = vmatprep.mubr.f32.mxu0 0.0
  %179 = vmatmul.mubr.f32.gmra.mrb[0].mxu0 %v49
  %v180 = vpop.f32.mrb[0].mxu0
  %v181 = vadd.f32 0.0, %v180
  %v182 = vpop.f32.mrb[0].mxu0
  %183 = vmatprep.mubr.f32.mxu0 0.0
  %184 = vmatmul.mubr.f32.gmra.mrb[0].mxu0 %v50
  %v185 = vpop.f32.mrb[0].mxu0
  %v186 = vadd.f32 0.0, %v185
  %v187 = vpop.f32.mrb[0].mxu0
  %188 = vmatprep.mubr.f32.mxu0 0.0
  %189 = vmatmul.mubr.f32.gmra.mrb[0].mxu0 %v51
  %v190 = vpop.f32.mrb[0].mxu0
  %v191 = vadd.f32 0.0, %v190
  %v192 = vpop.f32.mrb[0].mxu0
  %193 = vmatprep.mubr.f32.mxu0 0.0
  %194 = vmatmul.mubr.f32.gmra.mrb[0].mxu0 %v52
  %v195 = vpop.f32.mrb[0].mxu0
  %v196 = vadd.f32 0.0, %v195
  %v197 = vpop.f32.mrb[0].mxu0
  %198 = vdwg.mxu0
  %vm215 = vcmask 1040384
  %v216 = vrot.slane %v121, 7
  %v217 = vrot.slane %v126, 7
  %v218 = vsel %vm215, %v216, %v217
  %v219 = vrot.slane %v131, 7
  %v220 = vsel %vm215, %v217, %v219
  %v221 = vrot.slane %v136, 7
  %v222 = vsel %vm215, %v219, %v221
  %v223 = vrot.slane %v141, 7
  %v224 = vsel %vm215, %v221, %v223
  %v225 = vrot.slane %v146, 7
  %v226 = vsel %vm215, %v223, %v225
  %v227 = vrot.slane %v151, 7
  %v228 = vsel %vm215, %v225, %v227
  %v229 = vrot.slane %v156, 7
  %v230 = vsel %vm215, %v227, %v229
  %v231 = vrot.slane %v161, 7
  %v232 = vsel %vm215, %v229, %v231
  %v233 = vrot.slane %v166, 7
  %v234 = vsel %vm215, %v231, %v233
  %v235 = vrot.slane %v171, 7
  %v236 = vsel %vm215, %v233, %v235
  %v237 = vrot.slane %v176, 7
  %v238 = vsel %vm215, %v235, %v237
  %v239 = vrot.slane %v181, 7
  %v240 = vsel %vm215, %v237, %v239
  %v241 = vrot.slane %v186, 7
  %v242 = vsel %vm215, %v239, %v241
  %v243 = vrot.slane %v191, 7
  %v244 = vsel %vm215, %v241, %v243
  %v245 = vrot.slane %v196, 7
  %v246 = vsel %vm215, %v243, %v245
  %v263 = vsel %vm215, 0.0, %v216
  %vm264 = vcmask 1046528
  %v265 = vrot.slane %v121, 1
  %v266 = vrot.slane %v126, 1
  %v267 = vsel %vm264, %v265, %v266
  %v268 = vrot.slane %v131, 1
  %v269 = vsel %vm264, %v266, %v268
  %v270 = vrot.slane %v136, 1
  %v271 = vsel %vm264, %v268, %v270
  %v272 = vrot.slane %v141, 1
  %v273 = vsel %vm264, %v270, %v272
  %v274 = vrot.slane %v146, 1
  %v275 = vsel %vm264, %v272, %v274
  %v276 = vrot.slane %v151, 1
  %v277 = vsel %vm264, %v274, %v276
  %v278 = vrot.slane %v156, 1
  %v279 = vsel %vm264, %v276, %v278
  %v280 = vrot.slane %v161, 1
  %v281 = vsel %vm264, %v278, %v280
  %v282 = vrot.slane %v166, 1
  %v283 = vsel %vm264, %v280, %v282
  %v284 = vrot.slane %v171, 1
  %v285 = vsel %vm264, %v282, %v284
  %v286 = vrot.slane %v176, 1
  %v287 = vsel %vm264, %v284, %v286
  %v288 = vrot.slane %v181, 1
  %v289 = vsel %vm264, %v286, %v288
  %v290 = vrot.slane %v186, 1
  %v291 = vsel %vm264, %v288, %v290
  %v292 = vrot.slane %v191, 1
  %v293 = vsel %vm264, %v290, %v292
  %v294 = vrot.slane %v196, 1
  %v295 = vsel %vm264, %v292, %v294
  %v312 = vsel %vm264, %v294, 0.0
  %v313 = vld [vmem:[%s2] sm:$0x7]
  %v314 = vld [vmem:[%s3] sm:$0x1]
  %315 = vrot.lane.b32.xlu0 %v121, 1
  %v316 = vpop.permute.xlu0 %315
  %317 = vrot.lane.b32.xlu0 %v126, 1
  %v318 = vpop.permute.xlu0 %317
  %319 = vrot.lane.b32.xlu0 %v131, 1
  %v320 = vpop.permute.xlu0 %319
  %321 = vrot.lane.b32.xlu0 %v136, 1
  %v322 = vpop.permute.xlu0 %321
  %323 = vrot.lane.b32.xlu0 %v141, 1
  %v324 = vpop.permute.xlu0 %323
  %325 = vrot.lane.b32.xlu0 %v146, 1
  %v326 = vpop.permute.xlu0 %325
  %327 = vrot.lane.b32.xlu0 %v151, 1
  %v328 = vpop.permute.xlu0 %327
  %329 = vrot.lane.b32.xlu0 %v156, 1
  %v330 = vpop.permute.xlu0 %329
  %331 = vrot.lane.b32.xlu0 %v161, 1
  %v332 = vpop.permute.xlu0 %331
  %333 = vrot.lane.b32.xlu0 %v166, 1
  %v334 = vpop.permute.xlu0 %333
  %335 = vrot.lane.b32.xlu0 %v171, 1
  %v336 = vpop.permute.xlu0 %335
  %337 = vrot.lane.b32.xlu0 %v176, 1
  %v338 = vpop.permute.xlu0 %337
  %339 = vrot.lane.b32.xlu0 %v181, 1
  %v340 = vpop.permute.xlu0 %339
  %341 = vrot.lane.b32.xlu0 %v186, 1
  %v342 = vpop.permute.xlu0 %341
  %343 = vrot.lane.b32.xlu0 %v191, 1
  %v344 = vpop.permute.xlu0 %343
  %345 = vrot.lane.b32.xlu0 %v196, 1
  %v346 = vpop.permute.xlu0 %345
  %364 = vrot.lane.b32.xlu0 %v267, 2
  %v365 = vpop.permute.xlu0 %364
  %366 = vrot.lane.b32.xlu0 %v269, 2
  %v367 = vpop.permute.xlu0 %366
  %368 = vrot.lane.b32.xlu0 %v271, 2
  %v369 = vpop.permute.xlu0 %368
  %370 = vrot.lane.b32.xlu0 %v273, 2
  %v371 = vpop.permute.xlu0 %370
  %372 = vrot.lane.b32.xlu0 %v275, 2
  %v373 = vpop.permute.xlu0 %372
  %374 = vrot.lane.b32.xlu0 %v277, 2
  %v375 = vpop.permute.xlu0 %374
  %376 = vrot.lane.b32.xlu0 %v279, 2
  %v377 = vpop.permute.xlu0 %376
  %378 = vrot.lane.b32.xlu0 %v281, 2
  %v379 = vpop.permute.xlu0 %378
  %380 = vrot.lane.b32.xlu0 %v283, 2
  %v381 = vpop.permute.xlu0 %380
  %382 = vrot.lane.b32.xlu0 %v285, 2
  %v383 = vpop.permute.xlu0 %382
  %384 = vrot.lane.b32.xlu0 %v287, 2
  %v385 = vpop.permute.xlu0 %384
  %386 = vrot.lane.b32.xlu0 %v289, 2
  %v387 = vpop.permute.xlu0 %386
  %388 = vrot.lane.b32.xlu0 %v291, 2
  %v389 = vpop.permute.xlu0 %388
  %390 = vrot.lane.b32.xlu0 %v293, 2
  %v391 = vpop.permute.xlu0 %390
  %392 = vrot.lane.b32.xlu0 %v295, 2
  %v393 = vpop.permute.xlu0 %392
  %394 = vrot.lane.b32.xlu0 %v312, 2
  %v395 = vpop.permute.xlu0 %394
  %vm412 = vcmask 7168
  %v413 = vsel %vm412, %v263, %v316
  %v414 = vsel %vm412, %v218, %v318
  %v415 = vsel %vm412, %v220, %v320
  %v416 = vsel %vm412, %v222, %v322
  %v417 = vsel %vm412, %v224, %v324
  %v418 = vsel %vm412, %v226, %v326
  %v419 = vsel %vm412, %v228, %v328
  %v420 = vsel %vm412, %v230, %v330
  %v421 = vsel %vm412, %v232, %v332
  %v422 = vsel %vm412, %v234, %v334
  %v423 = vsel %vm412, %v236, %v336
  %v424 = vsel %vm412, %v238, %v338
  %v425 = vsel %vm412, %v240, %v340
  %v426 = vsel %vm412, %v242, %v342
  %v427 = vsel %vm412, %v244, %v344
  %v428 = vsel %vm412, %v246, %v346
  %vm429 = vcmask 15360
  %v430 = vsel %vm429, %v413, %v365
  %v431 = vsel %vm429, %v414, %v367
  %v432 = vsel %vm429, %v415, %v369
  %v433 = vsel %vm429, %v416, %v371
  %v434 = vsel %vm429, %v417, %v373
  %v435 = vsel %vm429, %v418, %v375
  %v436 = vsel %vm429, %v419, %v377
  %v437 = vsel %vm429, %v420, %v379
  %v438 = vsel %vm429, %v421, %v381
  %v439 = vsel %vm429, %v422, %v383
  %v440 = vsel %vm429, %v423, %v385
  %v441 = vsel %vm429, %v424, %v387
  %v442 = vsel %vm429, %v425, %v389
  %v443 = vsel %vm429, %v426, %v391
  %v444 = vsel %vm429, %v427, %v393
  %v445 = vsel %vm429, %v428, %v395
  %v447 = vlaneseq
  %v448 = vshrl.u32 %v447, 7
  %v449 = vsub.s32 0, %v448
  %v450 = vrot.slane %v314, %v449
  %vm452 = vcmask 23552
  %v454 = vsel %vm452, %v430, 0
  %v457 = vsel %vm452, %v431, 0
  %v460 = vsel %vm452, %v432, 0
  %v463 = vsel %vm452, %v433, 0
  %v466 = vsel %vm452, %v434, 0
  %v469 = vsel %vm452, %v435, 0
  %v472 = vsel %vm452, %v436, 0
  %v475 = vsel %vm452, %v437, 0
  %v478 = vsel %vm452, %v438, 0
  %v481 = vsel %vm452, %v439, 0
  %v484 = vsel %vm452, %v440, 0
  %v487 = vsel %vm452, %v441, 0
  %v490 = vsel %vm452, %v442, 0
  %v493 = vsel %vm452, %v443, 0
  %v496 = vsel %vm452, %v444, 0
  %v499 = vsel %vm452, %v445, 0
  %vm501 = vcmask 1042432
  %v503 = vsel %vm501, %v313, 0
  %505 = vmatprep.subr.mxu0 0.0
  %506 = vmatpush1.msra.mxu0 %v503
  %507 = vmatprep.subr.mxu0 0.0
  %508 = vmatpush1.msra.mxu0 0.0
  %509 = vmatprep.subr.mxu0 0.0
  %510 = vmatpush1.msra.mxu0 0.0
  %511 = vmatprep.subr.mxu0 0.0
  %512 = vmatpush1.msra.mxu0 0.0
  %513 = vmatprep.subr.mxu0 0.0
  %514 = vmatpush1.msra.mxu0 0.0
  %515 = vmatprep.subr.mxu0 0.0
  %516 = vmatpush1.msra.mxu0 0.0
  %517 = vmatprep.subr.mxu0 0.0
  %518 = vmatpush1.msra.mxu0 0.0
  %519 = vmatprep.subr.mxu0 0.0
  %520 = vmatpush1.msra.mxu0 0.0
  %521 = vmatprep.subr.mxu0 0.0
  %522 = vmatpush1.msra.mxu0 0.0
  %523 = vmatprep.subr.mxu0 0.0
  %524 = vmatpush1.msra.mxu0 0.0
  %525 = vmatprep.subr.mxu0 0.0
  %526 = vmatpush1.msra.mxu0 0.0
  %527 = vmatprep.subr.mxu0 0.0
  %528 = vmatpush1.msra.mxu0 0.0
  %529 = vmatprep.subr.mxu0 0.0
  %530 = vmatpush1.msra.mxu0 0.0
  %531 = vmatprep.subr.mxu0 0.0
  %532 = vmatpush1.msra.mxu0 0.0
  %533 = vmatprep.subr.mxu0 0.0
  %534 = vmatpush1.msra.mxu0 0.0
  %535 = vmatprep.subr.mxu0 0.0
  %536 = vmatpush1.msra.mxu0 0.0
  %537 = vmatprep.subr.mxu0 0.0
  %538 = vmatpush1.msra.mxu0 0.0
  %539 = vmatprep.subr.mxu0 0.0
  %540 = vmatpush1.msra.mxu0 0.0
  %541 = vmatprep.subr.mxu0 0.0
  %542 = vmatpush1.msra.mxu0 0.0
  %543 = vmatprep.subr.mxu0 0.0
  %544 = vmatpush1.msra.mxu0 0.0
  %545 = vmatprep.subr.mxu0 0.0
  %546 = vmatpush1.msra.mxu0 0.0
  %547 = vmatprep.subr.mxu0 0.0
  %548 = vmatpush1.msra.mxu0 0.0
  %549 = vmatprep.subr.mxu0 0.0
  %550 = vmatpush1.msra.mxu0 0.0
  %551 = vmatprep.subr.mxu0 0.0
  %552 = vmatpush1.msra.mxu0 0.0
  %553 = vmatprep.subr.mxu0 0.0
  %554 = vmatpush1.msra.mxu0 0.0
  %555 = vmatprep.subr.mxu0 0.0
  %556 = vmatpush1.msra.mxu0 0.0
  %557 = vmatprep.subr.mxu0 0.0
  %558 = vmatpush1.msra.mxu0 0.0
  %559 = vmatprep.subr.mxu0 0.0
  %560 = vmatpush1.msra.mxu0 0.0
  %561 = vmatprep.subr.mxu0 0.0
  %562 = vmatpush1.msra.mxu0 0.0
  %563 = vmatprep.subr.mxu0 0.0
  %564 = vmatpush1.msra.mxu0 0.0
  %565 = vmatprep.subr.mxu0 0.0
  %566 = vmatpush1.msra.mxu0 0.0
  %567 = vmatprep.subr.mxu0 0.0
  %568 = vmatpush1.msra.mxu0 0.0
  %569 = vmatprep.mubr.f32.mxu0 0.0
  %570 = vmatmul.mubr.f32.gmra.mrb[0].mxu0 %v454
  %v571 = vpop.f32.mrb[0].mxu0
  %v572 = vadd.f32 %v450, %v571
  %v573 = vpop.f32.mrb[0].mxu0
  %574 = vmatprep.mubr.f32.mxu0 0.0
  %575 = vmatmul.mubr.f32.gmra.mrb[0].mxu0 %v457
  %v576 = vpop.f32.mrb[0].mxu0
  %v577 = vadd.f32 %v450, %v576
  %v578 = vpop.f32.mrb[0].mxu0
  %579 = vmatprep.mubr.f32.mxu0 0.0
  %580 = vmatmul.mubr.f32.gmra.mrb[0].mxu0 %v460
  %v581 = vpop.f32.mrb[0].mxu0
  %v582 = vadd.f32 %v450, %v581
  %v583 = vpop.f32.mrb[0].mxu0
  %584 = vmatprep.mubr.f32.mxu0 0.0
  %585 = vmatmul.mubr.f32.gmra.mrb[0].mxu0 %v463
  %v586 = vpop.f32.mrb[0].mxu0
  %v587 = vadd.f32 %v450, %v586
  %v588 = vpop.f32.mrb[0].mxu0
  %589 = vmatprep.mubr.f32.mxu0 0.0
  %590 = vmatmul.mubr.f32.gmra.mrb[0].mxu0 %v466
  %v591 = vpop.f32.mrb[0].mxu0
  %v592 = vadd.f32 %v450, %v591
  %v593 = vpop.f32.mrb[0].mxu0
  %594 = vmatprep.mubr.f32.mxu0 0.0
  %595 = vmatmul.mubr.f32.gmra.mrb[0].mxu0 %v469
  %v596 = vpop.f32.mrb[0].mxu0
  %v597 = vadd.f32 %v450, %v596
  %v598 = vpop.f32.mrb[0].mxu0
  %599 = vmatprep.mubr.f32.mxu0 0.0
  %600 = vmatmul.mubr.f32.gmra.mrb[0].mxu0 %v472
  %v601 = vpop.f32.mrb[0].mxu0
  %v602 = vadd.f32 %v450, %v601
  %v603 = vpop.f32.mrb[0].mxu0
  %604 = vmatprep.mubr.f32.mxu0 0.0
  %605 = vmatmul.mubr.f32.gmra.mrb[0].mxu0 %v475
  %v606 = vpop.f32.mrb[0].mxu0
  %v607 = vadd.f32 %v450, %v606
  %v608 = vpop.f32.mrb[0].mxu0
  %609 = vmatprep.mubr.f32.mxu0 0.0
  %610 = vmatmul.mubr.f32.gmra.mrb[0].mxu0 %v478
  %v611 = vpop.f32.mrb[0].mxu0
  %v612 = vadd.f32 %v450, %v611
  %v613 = vpop.f32.mrb[0].mxu0
  %614 = vmatprep.mubr.f32.mxu0 0.0
  %615 = vmatmul.mubr.f32.gmra.mrb[0].mxu0 %v481
  %v616 = vpop.f32.mrb[0].mxu0
  %v617 = vadd.f32 %v450, %v616
  %v618 = vpop.f32.mrb[0].mxu0
  %619 = vmatprep.mubr.f32.mxu0 0.0
  %620 = vmatmul.mubr.f32.gmra.mrb[0].mxu0 %v484
  %v621 = vpop.f32.mrb[0].mxu0
  %v622 = vadd.f32 %v450, %v621
  %v623 = vpop.f32.mrb[0].mxu0
  %624 = vmatprep.mubr.f32.mxu0 0.0
  %625 = vmatmul.mubr.f32.gmra.mrb[0].mxu0 %v487
  %v626 = vpop.f32.mrb[0].mxu0
  %v627 = vadd.f32 %v450, %v626
  %v628 = vpop.f32.mrb[0].mxu0
  %629 = vmatprep.mubr.f32.mxu0 0.0
  %630 = vmatmul.mubr.f32.gmra.mrb[0].mxu0 %v490
  %v631 = vpop.f32.mrb[0].mxu0
  %v632 = vadd.f32 %v450, %v631
  %v633 = vpop.f32.mrb[0].mxu0
  %634 = vmatprep.mubr.f32.mxu0 0.0
  %635 = vmatmul.mubr.f32.gmra.mrb[0].mxu0 %v493
  %v636 = vpop.f32.mrb[0].mxu0
  %v637 = vadd.f32 %v450, %v636
  %v638 = vpop.f32.mrb[0].mxu0
  %639 = vmatprep.mubr.f32.mxu0 0.0
  %640 = vmatmul.mubr.f32.gmra.mrb[0].mxu0 %v496
  %v641 = vpop.f32.mrb[0].mxu0
  %v642 = vadd.f32 %v450, %v641
  %v643 = vpop.f32.mrb[0].mxu0
  %644 = vmatprep.mubr.f32.mxu0 0.0
  %645 = vmatmul.mubr.f32.gmra.mrb[0].mxu0 %v499
  %v646 = vpop.f32.mrb[0].mxu0
  %v647 = vadd.f32 %v450, %v646
  %v648 = vpop.f32.mrb[0].mxu0
  %649 = vdwg.mxu0
  %v650 = vmax.f32 %v572, 0.0
  %v651 = vmax.f32 %v577, 0.0
  %v652 = vmax.f32 %v582, 0.0
  %v653 = vmax.f32 %v587, 0.0
  %v654 = vmax.f32 %v592, 0.0
  %v655 = vmax.f32 %v597, 0.0
  %v656 = vmax.f32 %v602, 0.0
  %v657 = vmax.f32 %v607, 0.0
  %v658 = vmax.f32 %v612, 0.0
  %v659 = vmax.f32 %v617, 0.0
  %v660 = vmax.f32 %v622, 0.0
  %v661 = vmax.f32 %v627, 0.0
  %v662 = vmax.f32 %v632, 0.0
  %v663 = vmax.f32 %v637, 0.0
  %v664 = vmax.f32 %v642, 0.0
  %v665 = vmax.f32 %v647, 0.0
  %vm666 = vcmask 130048
  %667 = vst.msk [vmem:[#allocation2] sm:$0xff] %vm666, %v650
  %668 = vst.msk [vmem:[#allocation2 + $0x8] sm:$0xff] %vm666, %v651
  %669 = vst.msk [vmem:[#allocation2 + $0x10] sm:$0xff] %vm666, %v652
  %670 = vst.msk [vmem:[#allocation2 + $0x18] sm:$0xff] %vm666, %v653
  %671 = vst.msk [vmem:[#allocation2 + $0x20] sm:$0xff] %vm666, %v654
  %672 = vst.msk [vmem:[#allocation2 + $0x28] sm:$0xff] %vm666, %v655
  %673 = vst.msk [vmem:[#allocation2 + $0x30] sm:$0xff] %vm666, %v656
  %674 = vst.msk [vmem:[#allocation2 + $0x38] sm:$0xff] %vm666, %v657
  %675 = vst.msk [vmem:[#allocation2 + $0x40] sm:$0xff] %vm666, %v658
  %676 = vst.msk [vmem:[#allocation2 + $0x48] sm:$0xff] %vm666, %v659
  %677 = vst.msk [vmem:[#allocation2 + $0x50] sm:$0xff] %vm666, %v660
  %678 = vst.msk [vmem:[#allocation2 + $0x58] sm:$0xff] %vm666, %v661
  %679 = vst.msk [vmem:[#allocation2 + $0x60] sm:$0xff] %vm666, %v662
  %680 = vst.msk [vmem:[#allocation2 + $0x68] sm:$0xff] %vm666, %v663
  %681 = vst.msk [vmem:[#allocation2 + $0x70] sm:$0xff] %vm666, %v664
  %682 = vst.msk [vmem:[#allocation2 + $0x78] sm:$0xff] %vm666, %v665
  %684 = vrot.lane.b32.xlu0 %v263, 127
  %v685 = vpop.permute.xlu0 %684
  %686 = vrot.lane.b32.xlu0 %v218, 127
  %v687 = vpop.permute.xlu0 %686
  %688 = vrot.lane.b32.xlu0 %v220, 127
  %v689 = vpop.permute.xlu0 %688
  %690 = vrot.lane.b32.xlu0 %v222, 127
  %v691 = vpop.permute.xlu0 %690
  %692 = vrot.lane.b32.xlu0 %v224, 127
  %v693 = vpop.permute.xlu0 %692
  %694 = vrot.lane.b32.xlu0 %v226, 127
  %v695 = vpop.permute.xlu0 %694
  %696 = vrot.lane.b32.xlu0 %v228, 127
  %v697 = vpop.permute.xlu0 %696
  %698 = vrot.lane.b32.xlu0 %v230, 127
  %v699 = vpop.permute.xlu0 %698
  %700 = vrot.lane.b32.xlu0 %v232, 127
  %v701 = vpop.permute.xlu0 %700
  %702 = vrot.lane.b32.xlu0 %v234, 127
  %v703 = vpop.permute.xlu0 %702
  %704 = vrot.lane.b32.xlu0 %v236, 127
  %v705 = vpop.permute.xlu0 %704
  %706 = vrot.lane.b32.xlu0 %v238, 127
  %v707 = vpop.permute.xlu0 %706
  %708 = vrot.lane.b32.xlu0 %v240, 127
  %v709 = vpop.permute.xlu0 %708
  %710 = vrot.lane.b32.xlu0 %v242, 127
  %v711 = vpop.permute.xlu0 %710
  %712 = vrot.lane.b32.xlu0 %v244, 127
  %v713 = vpop.permute.xlu0 %712
  %714 = vrot.lane.b32.xlu0 %v246, 127
  %v715 = vpop.permute.xlu0 %714
  %732 = vrot.lane.b32.xlu0 %v267, 1
  %v733 = vpop.permute.xlu0 %732
  %734 = vrot.lane.b32.xlu0 %v269, 1
  %v735 = vpop.permute.xlu0 %734
  %736 = vrot.lane.b32.xlu0 %v271, 1
  %v737 = vpop.permute.xlu0 %736
  %738 = vrot.lane.b32.xlu0 %v273, 1
  %v739 = vpop.permute.xlu0 %738
  %740 = vrot.lane.b32.xlu0 %v275, 1
  %v741 = vpop.permute.xlu0 %740
  %742 = vrot.lane.b32.xlu0 %v277, 1
  %v743 = vpop.permute.xlu0 %742
  %744 = vrot.lane.b32.xlu0 %v279, 1
  %v745 = vpop.permute.xlu0 %744
  %746 = vrot.lane.b32.xlu0 %v281, 1
  %v747 = vpop.permute.xlu0 %746
  %748 = vrot.lane.b32.xlu0 %v283, 1
  %v749 = vpop.permute.xlu0 %748
  %750 = vrot.lane.b32.xlu0 %v285, 1
  %v751 = vpop.permute.xlu0 %750
  %752 = vrot.lane.b32.xlu0 %v287, 1
  %v753 = vpop.permute.xlu0 %752
  %754 = vrot.lane.b32.xlu0 %v289, 1
  %v755 = vpop.permute.xlu0 %754
  %756 = vrot.lane.b32.xlu0 %v291, 1
  %v757 = vpop.permute.xlu0 %756
  %758 = vrot.lane.b32.xlu0 %v293, 1
  %v759 = vpop.permute.xlu0 %758
  %760 = vrot.lane.b32.xlu0 %v295, 1
  %v761 = vpop.permute.xlu0 %760
  %762 = vrot.lane.b32.xlu0 %v312, 1
  %v763 = vpop.permute.xlu0 %762
  %v780 = vsel %vm412, %v685, %v121
  %v781 = vsel %vm412, %v687, %v126
  %v782 = vsel %vm412, %v689, %v131
  %v783 = vsel %vm412, %v691, %v136
  %v784 = vsel %vm412, %v693, %v141
  %v785 = vsel %vm412, %v695, %v146
  %v786 = vsel %vm412, %v697, %v151
  %v787 = vsel %vm412, %v699, %v156
  %v788 = vsel %vm412, %v701, %v161
  %v789 = vsel %vm412, %v703, %v166
  %v790 = vsel %vm412, %v705, %v171
  %v791 = vsel %vm412, %v707, %v176
  %v792 = vsel %vm412, %v709, %v181
  %v793 = vsel %vm412, %v711, %v186
  %v794 = vsel %vm412, %v713, %v191
  %v795 = vsel %vm412, %v715, %v196
  %v796 = vsel %vm429, %v780, %v733
  %v797 = vsel %vm429, %v781, %v735
  %v798 = vsel %vm429, %v782, %v737
  %v799 = vsel %vm429, %v783, %v739
  %v800 = vsel %vm429, %v784, %v741
  %v801 = vsel %vm429, %v785, %v743
  %v802 = vsel %vm429, %v786, %v745
  %v803 = vsel %vm429, %v787, %v747
  %v804 = vsel %vm429, %v788, %v749
  %v805 = vsel %vm429, %v789, %v751
  %v806 = vsel %vm429, %v790, %v753
  %v807 = vsel %vm429, %v791, %v755
  %v808 = vsel %vm429, %v792, %v757
  %v809 = vsel %vm429, %v793, %v759
  %v810 = vsel %vm429, %v794, %v761
  %v811 = vsel %vm429, %v795, %v763
  %v813 = vsel %vm452, %v796, 0
  %v816 = vsel %vm452, %v797, 0
  %v819 = vsel %vm452, %v798, 0
  %v822 = vsel %vm452, %v799, 0
  %v825 = vsel %vm452, %v800, 0
  %v828 = vsel %vm452, %v801, 0
  %v831 = vsel %vm452, %v802, 0
  %v834 = vsel %vm452, %v803, 0
  %v837 = vsel %vm452, %v804, 0
  %v840 = vsel %vm452, %v805, 0
  %v843 = vsel %vm452, %v806, 0
  %v846 = vsel %vm452, %v807, 0
  %v849 = vsel %vm452, %v808, 0
  %v852 = vsel %vm452, %v809, 0
  %v855 = vsel %vm452, %v810, 0
  %v858 = vsel %vm452, %v811, 0
  %860 = vmatprep.subr.mxu0 0.0
  %861 = vmatpush1.msra.mxu0 %v503
  %862 = vmatprep.subr.mxu0 0.0
  %863 = vmatpush1.msra.mxu0 0.0
  %864 = vmatprep.subr.mxu0 0.0
  %865 = vmatpush1.msra.mxu0 0.0
  %866 = vmatprep.subr.mxu0 0.0
  %867 = vmatpush1.msra.mxu0 0.0
  %868 = vmatprep.subr.mxu0 0.0
  %869 = vmatpush1.msra.mxu0 0.0
  %870 = vmatprep.subr.mxu0 0.0
  %871 = vmatpush1.msra.mxu0 0.0
  %872 = vmatprep.subr.mxu0 0.0
  %873 = vmatpush1.msra.mxu0 0.0
  %874 = vmatprep.subr.mxu0 0.0
  %875 = vmatpush1.msra.mxu0 0.0
  %876 = vmatprep.subr.mxu0 0.0
  %877 = vmatpush1.msra.mxu0 0.0
  %878 = vmatprep.subr.mxu0 0.0
  %879 = vmatpush1.msra.mxu0 0.0
  %880 = vmatprep.subr.mxu0 0.0
  %881 = vmatpush1.msra.mxu0 0.0
  %882 = vmatprep.subr.mxu0 0.0
  %883 = vmatpush1.msra.mxu0 0.0
  %884 = vmatprep.subr.mxu0 0.0
  %885 = vmatpush1.msra.mxu0 0.0
  %886 = vmatprep.subr.mxu0 0.0
  %887 = vmatpush1.msra.mxu0 0.0
  %888 = vmatprep.subr.mxu0 0.0
  %889 = vmatpush1.msra.mxu0 0.0
  %890 = vmatprep.subr.mxu0 0.0
  %891 = vmatpush1.msra.mxu0 0.0
  %892 = vmatprep.subr.mxu0 0.0
  %893 = vmatpush1.msra.mxu0 0.0
  %894 = vmatprep.subr.mxu0 0.0
  %895 = vmatpush1.msra.mxu0 0.0
  %896 = vmatprep.subr.mxu0 0.0
  %897 = vmatpush1.msra.mxu0 0.0
  %898 = vmatprep.subr.mxu0 0.0
  %899 = vmatpush1.msra.mxu0 0.0
  %900 = vmatprep.subr.mxu0 0.0
  %901 = vmatpush1.msra.mxu0 0.0
  %902 = vmatprep.subr.mxu0 0.0
  %903 = vmatpush1.msra.mxu0 0.0
  %904 = vmatprep.subr.mxu0 0.0
  %905 = vmatpush1.msra.mxu0 0.0
  %906 = vmatprep.subr.mxu0 0.0
  %907 = vmatpush1.msra.mxu0 0.0
  %908 = vmatprep.subr.mxu0 0.0
  %909 = vmatpush1.msra.mxu0 0.0
  %910 = vmatprep.subr.mxu0 0.0
  %911 = vmatpush1.msra.mxu0 0.0
  %912 = vmatprep.subr.mxu0 0.0
  %913 = vmatpush1.msra.mxu0 0.0
  %914 = vmatprep.subr.mxu0 0.0
  %915 = vmatpush1.msra.mxu0 0.0
  %916 = vmatprep.subr.mxu0 0.0
  %917 = vmatpush1.msra.mxu0 0.0
  %918 = vmatprep.subr.mxu0 0.0
  %919 = vmatpush1.msra.mxu0 0.0
  %920 = vmatprep.subr.mxu0 0.0
  %921 = vmatpush1.msra.mxu0 0.0
  %922 = vmatprep.subr.mxu0 0.0
  %923 = vmatpush1.msra.mxu0 0.0
  %924 = vmatprep.mubr.f32.mxu0 0.0
  %925 = vmatmul.mubr.f32.gmra.mrb[0].mxu0 %v813
  %v926 = vpop.f32.mrb[0].mxu0
  %v927 = vadd.f32 %v450, %v926
  %v928 = vpop.f32.mrb[0].mxu0
  %929 = vmatprep.mubr.f32.mxu0 0.0
  %930 = vmatmul.mubr.f32.gmra.mrb[0].mxu0 %v816
  %v931 = vpop.f32.mrb[0].mxu0
  %v932 = vadd.f32 %v450, %v931
  %v933 = vpop.f32.mrb[0].mxu0
  %934 = vmatprep.mubr.f32.mxu0 0.0
  %935 = vmatmul.mubr.f32.gmra.mrb[0].mxu0 %v819
  %v936 = vpop.f32.mrb[0].mxu0
  %v937 = vadd.f32 %v450, %v936
  %v938 = vpop.f32.mrb[0].mxu0
  %939 = vmatprep.mubr.f32.mxu0 0.0
  %940 = vmatmul.mubr.f32.gmra.mrb[0].mxu0 %v822
  %v941 = vpop.f32.mrb[0].mxu0
  %v942 = vadd.f32 %v450, %v941
  %v943 = vpop.f32.mrb[0].mxu0
  %944 = vmatprep.mubr.f32.mxu0 0.0
  %945 = vmatmul.mubr.f32.gmra.mrb[0].mxu0 %v825
  %v946 = vpop.f32.mrb[0].mxu0
  %v947 = vadd.f32 %v450, %v946
  %v948 = vpop.f32.mrb[0].mxu0
  %949 = vmatprep.mubr.f32.mxu0 0.0
  %950 = vmatmul.mubr.f32.gmra.mrb[0].mxu0 %v828
  %v951 = vpop.f32.mrb[0].mxu0
  %v952 = vadd.f32 %v450, %v951
  %v953 = vpop.f32.mrb[0].mxu0
  %954 = vmatprep.mubr.f32.mxu0 0.0
  %955 = vmatmul.mubr.f32.gmra.mrb[0].mxu0 %v831
  %v956 = vpop.f32.mrb[0].mxu0
  %v957 = vadd.f32 %v450, %v956
  %v958 = vpop.f32.mrb[0].mxu0
  %959 = vmatprep.mubr.f32.mxu0 0.0
  %960 = vmatmul.mubr.f32.gmra.mrb[0].mxu0 %v834
  %v961 = vpop.f32.mrb[0].mxu0
  %v962 = vadd.f32 %v450, %v961
  %v963 = vpop.f32.mrb[0].mxu0
  %964 = vmatprep.mubr.f32.mxu0 0.0
  %965 = vmatmul.mubr.f32.gmra.mrb[0].mxu0 %v837
  %v966 = vpop.f32.mrb[0].mxu0
  %v967 = vadd.f32 %v450, %v966
  %v968 = vpop.f32.mrb[0].mxu0
  %969 = vmatprep.mubr.f32.mxu0 0.0
  %970 = vmatmul.mubr.f32.gmra.mrb[0].mxu0 %v840
  %v971 = vpop.f32.mrb[0].mxu0
  %v972 = vadd.f32 %v450, %v971
  %v973 = vpop.f32.mrb[0].mxu0
  %974 = vmatprep.mubr.f32.mxu0 0.0
  %975 = vmatmul.mubr.f32.gmra.mrb[0].mxu0 %v843
  %v976 = vpop.f32.mrb[0].mxu0
  %v977 = vadd.f32 %v450, %v976
  %v978 = vpop.f32.mrb[0].mxu0
  %979 = vmatprep.mubr.f32.mxu0 0.0
  %980 = vmatmul.mubr.f32.gmra.mrb[0].mxu0 %v846
  %v981 = vpop.f32.mrb[0].mxu0
  %v982 = vadd.f32 %v450, %v981
  %v983 = vpop.f32.mrb[0].mxu0
  %984 = vmatprep.mubr.f32.mxu0 0.0
  %985 = vmatmul.mubr.f32.gmra.mrb[0].mxu0 %v849
  %v986 = vpop.f32.mrb[0].mxu0
  %v987 = vadd.f32 %v450, %v986
  %v988 = vpop.f32.mrb[0].mxu0
  %989 = vmatprep.mubr.f32.mxu0 0.0
  %990 = vmatmul.mubr.f32.gmra.mrb[0].mxu0 %v852
  %v991 = vpop.f32.mrb[0].mxu0
  %v992 = vadd.f32 %v450, %v991
  %v993 = vpop.f32.mrb[0].mxu0
  %994 = vmatprep.mubr.f32.mxu0 0.0
  %995 = vmatmul.mubr.f32.gmra.mrb[0].mxu0 %v855
  %v996 = vpop.f32.mrb[0].mxu0
  %v997 = vadd.f32 %v450, %v996
  %v998 = vpop.f32.mrb[0].mxu0
  %999 = vmatprep.mubr.f32.mxu0 0.0
  %1000 = vmatmul.mubr.f32.gmra.mrb[0].mxu0 %v858
  %v1001 = vpop.f32.mrb[0].mxu0
  %v1002 = vadd.f32 %v450, %v1001
  %v1003 = vpop.f32.mrb[0].mxu0
  %1004 = vdwg.mxu0
  %v1005 = vmax.f32 %v927, 0.0
  %v1006 = vmax.f32 %v932, 0.0
  %v1007 = vmax.f32 %v937, 0.0
  %v1008 = vmax.f32 %v942, 0.0
  %v1009 = vmax.f32 %v947, 0.0
  %v1010 = vmax.f32 %v952, 0.0
  %v1011 = vmax.f32 %v957, 0.0
  %v1012 = vmax.f32 %v962, 0.0
  %v1013 = vmax.f32 %v967, 0.0
  %v1014 = vmax.f32 %v972, 0.0
  %v1015 = vmax.f32 %v977, 0.0
  %v1016 = vmax.f32 %v982, 0.0
  %v1017 = vmax.f32 %v987, 0.0
  %v1018 = vmax.f32 %v992, 0.0
  %v1019 = vmax.f32 %v997, 0.0
  %v1020 = vmax.f32 %v1002, 0.0
  %1021 = vst.msk [vmem:[#allocation2 + $0x80] sm:$0xff] %vm666, %v1005
  %1022 = vst.msk [vmem:[#allocation2 + $0x88] sm:$0xff] %vm666, %v1006
  %1023 = vst.msk [vmem:[#allocation2 + $0x90] sm:$0xff] %vm666, %v1007
  %1024 = vst.msk [vmem:[#allocation2 + $0x98] sm:$0xff] %vm666, %v1008
  %1025 = vst.msk [vmem:[#allocation2 + $0xa0] sm:$0xff] %vm666, %v1009
  %1026 = vst.msk [vmem:[#allocation2 + $0xa8] sm:$0xff] %vm666, %v1010
  %1027 = vst.msk [vmem:[#allocation2 + $0xb0] sm:$0xff] %vm666, %v1011
  %1028 = vst.msk [vmem:[#allocation2 + $0xb8] sm:$0xff] %vm666, %v1012
  %1029 = vst.msk [vmem:[#allocation2 + $0xc0] sm:$0xff] %vm666, %v1013
  %1030 = vst.msk [vmem:[#allocation2 + $0xc8] sm:$0xff] %vm666, %v1014
  %1031 = vst.msk [vmem:[#allocation2 + $0xd0] sm:$0xff] %vm666, %v1015
  %1032 = vst.msk [vmem:[#allocation2 + $0xd8] sm:$0xff] %vm666, %v1016
  %1033 = vst.msk [vmem:[#allocation2 + $0xe0] sm:$0xff] %vm666, %v1017
  %1034 = vst.msk [vmem:[#allocation2 + $0xe8] sm:$0xff] %vm666, %v1018
  %1035 = vst.msk [vmem:[#allocation2 + $0xf0] sm:$0xff] %vm666, %v1019
  %1036 = vst.msk [vmem:[#allocation2 + $0xf8] sm:$0xff] %vm666, %v1020
  %1037 = vrot.lane.b32.xlu0 %v263, 126
  %v1038 = vpop.permute.xlu0 %1037
  %1039 = vrot.lane.b32.xlu0 %v218, 126
  %v1040 = vpop.permute.xlu0 %1039
  %1041 = vrot.lane.b32.xlu0 %v220, 126
  %v1042 = vpop.permute.xlu0 %1041
  %1043 = vrot.lane.b32.xlu0 %v222, 126
  %v1044 = vpop.permute.xlu0 %1043
  %1045 = vrot.lane.b32.xlu0 %v224, 126
  %v1046 = vpop.permute.xlu0 %1045
  %1047 = vrot.lane.b32.xlu0 %v226, 126
  %v1048 = vpop.permute.xlu0 %1047
  %1049 = vrot.lane.b32.xlu0 %v228, 126
  %v1050 = vpop.permute.xlu0 %1049
  %1051 = vrot.lane.b32.xlu0 %v230, 126
  %v1052 = vpop.permute.xlu0 %1051
  %1053 = vrot.lane.b32.xlu0 %v232, 126
  %v1054 = vpop.permute.xlu0 %1053
  %1055 = vrot.lane.b32.xlu0 %v234, 126
  %v1056 = vpop.permute.xlu0 %1055
  %1057 = vrot.lane.b32.xlu0 %v236, 126
  %v1058 = vpop.permute.xlu0 %1057
  %1059 = vrot.lane.b32.xlu0 %v238, 126
  %v1060 = vpop.permute.xlu0 %1059
  %1061 = vrot.lane.b32.xlu0 %v240, 126
  %v1062 = vpop.permute.xlu0 %1061
  %1063 = vrot.lane.b32.xlu0 %v242, 126
  %v1064 = vpop.permute.xlu0 %1063
  %1065 = vrot.lane.b32.xlu0 %v244, 126
  %v1066 = vpop.permute.xlu0 %1065
  %1067 = vrot.lane.b32.xlu0 %v246, 126
  %v1068 = vpop.permute.xlu0 %1067
  %1085 = vrot.lane.b32.xlu0 %v121, 127
  %v1086 = vpop.permute.xlu0 %1085
  %1087 = vrot.lane.b32.xlu0 %v126, 127
  %v1088 = vpop.permute.xlu0 %1087
  %1089 = vrot.lane.b32.xlu0 %v131, 127
  %v1090 = vpop.permute.xlu0 %1089
  %1091 = vrot.lane.b32.xlu0 %v136, 127
  %v1092 = vpop.permute.xlu0 %1091
  %1093 = vrot.lane.b32.xlu0 %v141, 127
  %v1094 = vpop.permute.xlu0 %1093
  %1095 = vrot.lane.b32.xlu0 %v146, 127
  %v1096 = vpop.permute.xlu0 %1095
  %1097 = vrot.lane.b32.xlu0 %v151, 127
  %v1098 = vpop.permute.xlu0 %1097
  %1099 = vrot.lane.b32.xlu0 %v156, 127
  %v1100 = vpop.permute.xlu0 %1099
  %1101 = vrot.lane.b32.xlu0 %v161, 127
  %v1102 = vpop.permute.xlu0 %1101
  %1103 = vrot.lane.b32.xlu0 %v166, 127
  %v1104 = vpop.permute.xlu0 %1103
  %1105 = vrot.lane.b32.xlu0 %v171, 127
  %v1106 = vpop.permute.xlu0 %1105
  %1107 = vrot.lane.b32.xlu0 %v176, 127
  %v1108 = vpop.permute.xlu0 %1107
  %1109 = vrot.lane.b32.xlu0 %v181, 127
  %v1110 = vpop.permute.xlu0 %1109
  %1111 = vrot.lane.b32.xlu0 %v186, 127
  %v1112 = vpop.permute.xlu0 %1111
  %1113 = vrot.lane.b32.xlu0 %v191, 127
  %v1114 = vpop.permute.xlu0 %1113
  %1115 = vrot.lane.b32.xlu0 %v196, 127
  %v1116 = vpop.permute.xlu0 %1115
  %v1133 = vsel %vm412, %v1038, %v1086
  %v1134 = vsel %vm412, %v1040, %v1088
  %v1135 = vsel %vm412, %v1042, %v1090
  %v1136 = vsel %vm412, %v1044, %v1092
  %v1137 = vsel %vm412, %v1046, %v1094
  %v1138 = vsel %vm412, %v1048, %v1096
  %v1139 = vsel %vm412, %v1050, %v1098
  %v1140 = vsel %vm412, %v1052, %v1100
  %v1141 = vsel %vm412, %v1054, %v1102
  %v1142 = vsel %vm412, %v1056, %v1104
  %v1143 = vsel %vm412, %v1058, %v1106
  %v1144 = vsel %vm412, %v1060, %v1108
  %v1145 = vsel %vm412, %v1062, %v1110
  %v1146 = vsel %vm412, %v1064, %v1112
  %v1147 = vsel %vm412, %v1066, %v1114
  %v1148 = vsel %vm412, %v1068, %v1116
  %v1149 = vsel %vm429, %v1133, %v267
  %v1150 = vsel %vm429, %v1134, %v269
  %v1151 = vsel %vm429, %v1135, %v271
  %v1152 = vsel %vm429, %v1136, %v273
  %v1153 = vsel %vm429, %v1137, %v275
  %v1154 = vsel %vm429, %v1138, %v277
  %v1155 = vsel %vm429, %v1139, %v279
  %v1156 = vsel %vm429, %v1140, %v281
  %v1157 = vsel %vm429, %v1141, %v283
  %v1158 = vsel %vm429, %v1142, %v285
  %v1159 = vsel %vm429, %v1143, %v287
  %v1160 = vsel %vm429, %v1144, %v289
  %v1161 = vsel %vm429, %v1145, %v291
  %v1162 = vsel %vm429, %v1146, %v293
  %v1163 = vsel %vm429, %v1147, %v295
  %v1164 = vsel %vm429, %v1148, %v312
  %v1166 = vsel %vm452, %v1149, 0
  %v1169 = vsel %vm452, %v1150, 0
  %v1172 = vsel %vm452, %v1151, 0
  %v1175 = vsel %vm452, %v1152, 0
  %v1178 = vsel %vm452, %v1153, 0
  %v1181 = vsel %vm452, %v1154, 0
  %v1184 = vsel %vm452, %v1155, 0
  %v1187 = vsel %vm452, %v1156, 0
  %v1190 = vsel %vm452, %v1157, 0
  %v1193 = vsel %vm452, %v1158, 0
  %v1196 = vsel %vm452, %v1159, 0
  %v1199 = vsel %vm452, %v1160, 0
  %v1202 = vsel %vm452, %v1161, 0
  %v1205 = vsel %vm452, %v1162, 0
  %v1208 = vsel %vm452, %v1163, 0
  %v1211 = vsel %vm452, %v1164, 0
  %1213 = vmatprep.subr.mxu0 0.0
  %1214 = vmatpush1.msra.mxu0 %v503
  %1215 = vmatprep.subr.mxu0 0.0
  %1216 = vmatpush1.msra.mxu0 0.0
  %1217 = vmatprep.subr.mxu0 0.0
  %1218 = vmatpush1.msra.mxu0 0.0
  %1219 = vmatprep.subr.mxu0 0.0
  %1220 = vmatpush1.msra.mxu0 0.0
  %1221 = vmatprep.subr.mxu0 0.0
  %1222 = vmatpush1.msra.mxu0 0.0
  %1223 = vmatprep.subr.mxu0 0.0
  %1224 = vmatpush1.msra.mxu0 0.0
  %1225 = vmatprep.subr.mxu0 0.0
  %1226 = vmatpush1.msra.mxu0 0.0
  %1227 = vmatprep.subr.mxu0 0.0
  %1228 = vmatpush1.msra.mxu0 0.0
  %1229 = vmatprep.subr.mxu0 0.0
  %1230 = vmatpush1.msra.mxu0 0.0
  %1231 = vmatprep.subr.mxu0 0.0
  %1232 = vmatpush1.msra.mxu0 0.0
  %1233 = vmatprep.subr.mxu0 0.0
  %1234 = vmatpush1.msra.mxu0 0.0
  %1235 = vmatprep.subr.mxu0 0.0
  %1236 = vmatpush1.msra.mxu0 0.0
  %1237 = vmatprep.subr.mxu0 0.0
  %1238 = vmatpush1.msra.mxu0 0.0
  %1239 = vmatprep.subr.mxu0 0.0
  %1240 = vmatpush1.msra.mxu0 0.0
  %1241 = vmatprep.subr.mxu0 0.0
  %1242 = vmatpush1.msra.mxu0 0.0
  %1243 = vmatprep.subr.mxu0 0.0
  %1244 = vmatpush1.msra.mxu0 0.0
  %1245 = vmatprep.subr.mxu0 0.0
  %1246 = vmatpush1.msra.mxu0 0.0
  %1247 = vmatprep.subr.mxu0 0.0
  %1248 = vmatpush1.msra.mxu0 0.0
  %1249 = vmatprep.subr.mxu0 0.0
  %1250 = vmatpush1.msra.mxu0 0.0
  %1251 = vmatprep.subr.mxu0 0.0
  %1252 = vmatpush1.msra.mxu0 0.0
  %1253 = vmatprep.subr.mxu0 0.0
  %1254 = vmatpush1.msra.mxu0 0.0
  %1255 = vmatprep.subr.mxu0 0.0
  %1256 = vmatpush1.msra.mxu0 0.0
  %1257 = vmatprep.subr.mxu0 0.0
  %1258 = vmatpush1.msra.mxu0 0.0
  %1259 = vmatprep.subr.mxu0 0.0
  %1260 = vmatpush1.msra.mxu0 0.0
  %1261 = vmatprep.subr.mxu0 0.0
  %1262 = vmatpush1.msra.mxu0 0.0
  %1263 = vmatprep.subr.mxu0 0.0
  %1264 = vmatpush1.msra.mxu0 0.0
  %1265 = vmatprep.subr.mxu0 0.0
  %1266 = vmatpush1.msra.mxu0 0.0
  %1267 = vmatprep.subr.mxu0 0.0
  %1268 = vmatpush1.msra.mxu0 0.0
  %1269 = vmatprep.subr.mxu0 0.0
  %1270 = vmatpush1.msra.mxu0 0.0
  %1271 = vmatprep.subr.mxu0 0.0
  %1272 = vmatpush1.msra.mxu0 0.0
  %1273 = vmatprep.subr.mxu0 0.0
  %1274 = vmatpush1.msra.mxu0 0.0
  %1275 = vmatprep.subr.mxu0 0.0
  %1276 = vmatpush1.msra.mxu0 0.0
  %1277 = vmatprep.mubr.f32.mxu0 0.0
  %1278 = vmatmul.mubr.f32.gmra.mrb[0].mxu0 %v1166
  %v1279 = vpop.f32.mrb[0].mxu0
  %v1280 = vadd.f32 %v450, %v1279
  %v1281 = vpop.f32.mrb[0].mxu0
  %1282 = vmatprep.mubr.f32.mxu0 0.0
  %1283 = vmatmul.mubr.f32.gmra.mrb[0].mxu0 %v1169
  %v1284 = vpop.f32.mrb[0].mxu0
  %v1285 = vadd.f32 %v450, %v1284
  %v1286 = vpop.f32.mrb[0].mxu0
  %1287 = vmatprep.mubr.f32.mxu0 0.0
  %1288 = vmatmul.mubr.f32.gmra.mrb[0].mxu0 %v1172
  %v1289 = vpop.f32.mrb[0].mxu0
  %v1290 = vadd.f32 %v450, %v1289
  %v1291 = vpop.f32.mrb[0].mxu0
  %1292 = vmatprep.mubr.f32.mxu0 0.0
  %1293 = vmatmul.mubr.f32.gmra.mrb[0].mxu0 %v1175
  %v1294 = vpop.f32.mrb[0].mxu0
  %v1295 = vadd.f32 %v450, %v1294
  %v1296 = vpop.f32.mrb[0].mxu0
  %1297 = vmatprep.mubr.f32.mxu0 0.0
  %1298 = vmatmul.mubr.f32.gmra.mrb[0].mxu0 %v1178
  %v1299 = vpop.f32.mrb[0].mxu0
  %v1300 = vadd.f32 %v450, %v1299
  %v1301 = vpop.f32.mrb[0].mxu0
  %1302 = vmatprep.mubr.f32.mxu0 0.0
  %1303 = vmatmul.mubr.f32.gmra.mrb[0].mxu0 %v1181
  %v1304 = vpop.f32.mrb[0].mxu0
  %v1305 = vadd.f32 %v450, %v1304
  %v1306 = vpop.f32.mrb[0].mxu0
  %1307 = vmatprep.mubr.f32.mxu0 0.0
  %1308 = vmatmul.mubr.f32.gmra.mrb[0].mxu0 %v1184
  %v1309 = vpop.f32.mrb[0].mxu0
  %v1310 = vadd.f32 %v450, %v1309
  %v1311 = vpop.f32.mrb[0].mxu0
  %1312 = vmatprep.mubr.f32.mxu0 0.0
  %1313 = vmatmul.mubr.f32.gmra.mrb[0].mxu0 %v1187
  %v1314 = vpop.f32.mrb[0].mxu0
  %v1315 = vadd.f32 %v450, %v1314
  %v1316 = vpop.f32.mrb[0].mxu0
  %1317 = vmatprep.mubr.f32.mxu0 0.0
  %1318 = vmatmul.mubr.f32.gmra.mrb[0].mxu0 %v1190
  %v1319 = vpop.f32.mrb[0].mxu0
  %v1320 = vadd.f32 %v450, %v1319
  %v1321 = vpop.f32.mrb[0].mxu0
  %1322 = vmatprep.mubr.f32.mxu0 0.0
  %1323 = vmatmul.mubr.f32.gmra.mrb[0].mxu0 %v1193
  %v1324 = vpop.f32.mrb[0].mxu0
  %v1325 = vadd.f32 %v450, %v1324
  %v1326 = vpop.f32.mrb[0].mxu0
  %1327 = vmatprep.mubr.f32.mxu0 0.0
  %1328 = vmatmul.mubr.f32.gmra.mrb[0].mxu0 %v1196
  %v1329 = vpop.f32.mrb[0].mxu0
  %v1330 = vadd.f32 %v450, %v1329
  %v1331 = vpop.f32.mrb[0].mxu0
  %1332 = vmatprep.mubr.f32.mxu0 0.0
  %1333 = vmatmul.mubr.f32.gmra.mrb[0].mxu0 %v1199
  %v1334 = vpop.f32.mrb[0].mxu0
  %v1335 = vadd.f32 %v450, %v1334
  %v1336 = vpop.f32.mrb[0].mxu0
  %1337 = vmatprep.mubr.f32.mxu0 0.0
  %1338 = vmatmul.mubr.f32.gmra.mrb[0].mxu0 %v1202
  %v1339 = vpop.f32.mrb[0].mxu0
  %v1340 = vadd.f32 %v450, %v1339
  %v1341 = vpop.f32.mrb[0].mxu0
  %1342 = vmatprep.mubr.f32.mxu0 0.0
  %1343 = vmatmul.mubr.f32.gmra.mrb[0].mxu0 %v1205
  %v1344 = vpop.f32.mrb[0].mxu0
  %v1345 = vadd.f32 %v450, %v1344
  %v1346 = vpop.f32.mrb[0].mxu0
  %1347 = vmatprep.mubr.f32.mxu0 0.0
  %1348 = vmatmul.mubr.f32.gmra.mrb[0].mxu0 %v1208
  %v1349 = vpop.f32.mrb[0].mxu0
  %v1350 = vadd.f32 %v450, %v1349
  %v1351 = vpop.f32.mrb[0].mxu0
  %1352 = vmatprep.mubr.f32.mxu0 0.0
  %1353 = vmatmul.mubr.f32.gmra.mrb[0].mxu0 %v1211
  %v1354 = vpop.f32.mrb[0].mxu0
  %v1355 = vadd.f32 %v450, %v1354
  %v1356 = vpop.f32.mrb[0].mxu0
  %1357 = vdwg.mxu0
  %v1358 = vmax.f32 %v1280, 0.0
  %v1359 = vmax.f32 %v1285, 0.0
  %v1360 = vmax.f32 %v1290, 0.0
  %v1361 = vmax.f32 %v1295, 0.0
  %v1362 = vmax.f32 %v1300, 0.0
  %v1363 = vmax.f32 %v1305, 0.0
  %v1364 = vmax.f32 %v1310, 0.0
  %v1365 = vmax.f32 %v1315, 0.0
  %v1366 = vmax.f32 %v1320, 0.0
  %v1367 = vmax.f32 %v1325, 0.0
  %v1368 = vmax.f32 %v1330, 0.0
  %v1369 = vmax.f32 %v1335, 0.0
  %v1370 = vmax.f32 %v1340, 0.0
  %v1371 = vmax.f32 %v1345, 0.0
  %v1372 = vmax.f32 %v1350, 0.0
  %v1373 = vmax.f32 %v1355, 0.0
  %1374 = vst.msk [vmem:[#allocation2 + $0x100] sm:$0xff] %vm666, %v1358
  %1375 = vst.msk [vmem:[#allocation2 + $0x108] sm:$0xff] %vm666, %v1359
  %1376 = vst.msk [vmem:[#allocation2 + $0x110] sm:$0xff] %vm666, %v1360
  %1377 = vst.msk [vmem:[#allocation2 + $0x118] sm:$0xff] %vm666, %v1361
  %1378 = vst.msk [vmem:[#allocation2 + $0x120] sm:$0xff] %vm666, %v1362
  %1379 = vst.msk [vmem:[#allocation2 + $0x128] sm:$0xff] %vm666, %v1363
  %1380 = vst.msk [vmem:[#allocation2 + $0x130] sm:$0xff] %vm666, %v1364
  %1381 = vst.msk [vmem:[#allocation2 + $0x138] sm:$0xff] %vm666, %v1365
  %1382 = vst.msk [vmem:[#allocation2 + $0x140] sm:$0xff] %vm666, %v1366
  %1383 = vst.msk [vmem:[#allocation2 + $0x148] sm:$0xff] %vm666, %v1367
  %1384 = vst.msk [vmem:[#allocation2 + $0x150] sm:$0xff] %vm666, %v1368
  %1385 = vst.msk [vmem:[#allocation2 + $0x158] sm:$0xff] %vm666, %v1369
  %1386 = vst.msk [vmem:[#allocation2 + $0x160] sm:$0xff] %vm666, %v1370
  %1387 = vst.msk [vmem:[#allocation2 + $0x168] sm:$0xff] %vm666, %v1371
  %1388 = vst.msk [vmem:[#allocation2 + $0x170] sm:$0xff] %vm666, %v1372
  %1389 = vst.msk [vmem:[#allocation2 + $0x178] sm:$0xff] %vm666, %v1373
  %1390 = vrot.lane.b32.xlu0 %v263, 125
  %v1391 = vpop.permute.xlu0 %1390
  %1392 = vrot.lane.b32.xlu0 %v218, 125
  %v1393 = vpop.permute.xlu0 %1392
  %1394 = vrot.lane.b32.xlu0 %v220, 125
  %v1395 = vpop.permute.xlu0 %1394
  %1396 = vrot.lane.b32.xlu0 %v222, 125
  %v1397 = vpop.permute.xlu0 %1396
  %1398 = vrot.lane.b32.xlu0 %v224, 125
  %v1399 = vpop.permute.xlu0 %1398
  %1400 = vrot.lane.b32.xlu0 %v226, 125
  %v1401 = vpop.permute.xlu0 %1400
  %1402 = vrot.lane.b32.xlu0 %v228, 125
  %v1403 = vpop.permute.xlu0 %1402
  %1404 = vrot.lane.b32.xlu0 %v230, 125
  %v1405 = vpop.permute.xlu0 %1404
  %1406 = vrot.lane.b32.xlu0 %v232, 125
  %v1407 = vpop.permute.xlu0 %1406
  %1408 = vrot.lane.b32.xlu0 %v234, 125
  %v1409 = vpop.permute.xlu0 %1408
  %1410 = vrot.lane.b32.xlu0 %v236, 125
  %v1411 = vpop.permute.xlu0 %1410
  %1412 = vrot.lane.b32.xlu0 %v238, 125
  %v1413 = vpop.permute.xlu0 %1412
  %1414 = vrot.lane.b32.xlu0 %v240, 125
  %v1415 = vpop.permute.xlu0 %1414
  %1416 = vrot.lane.b32.xlu0 %v242, 125
  %v1417 = vpop.permute.xlu0 %1416
  %1418 = vrot.lane.b32.xlu0 %v244, 125
  %v1419 = vpop.permute.xlu0 %1418
  %1420 = vrot.lane.b32.xlu0 %v246, 125
  %v1421 = vpop.permute.xlu0 %1420
  %1438 = vrot.lane.b32.xlu0 %v121, 126
  %v1439 = vpop.permute.xlu0 %1438
  %1440 = vrot.lane.b32.xlu0 %v126, 126
  %v1441 = vpop.permute.xlu0 %1440
  %1442 = vrot.lane.b32.xlu0 %v131, 126
  %v1443 = vpop.permute.xlu0 %1442
  %1444 = vrot.lane.b32.xlu0 %v136, 126
  %v1445 = vpop.permute.xlu0 %1444
  %1446 = vrot.lane.b32.xlu0 %v141, 126
  %v1447 = vpop.permute.xlu0 %1446
  %1448 = vrot.lane.b32.xlu0 %v146, 126
  %v1449 = vpop.permute.xlu0 %1448
  %1450 = vrot.lane.b32.xlu0 %v151, 126
  %v1451 = vpop.permute.xlu0 %1450
  %1452 = vrot.lane.b32.xlu0 %v156, 126
  %v1453 = vpop.permute.xlu0 %1452
  %1454 = vrot.lane.b32.xlu0 %v161, 126
  %v1455 = vpop.permute.xlu0 %1454
  %1456 = vrot.lane.b32.xlu0 %v166, 126
  %v1457 = vpop.permute.xlu0 %1456
  %1458 = vrot.lane.b32.xlu0 %v171, 126
  %v1459 = vpop.permute.xlu0 %1458
  %1460 = vrot.lane.b32.xlu0 %v176, 126
  %v1461 = vpop.permute.xlu0 %1460
  %1462 = vrot.lane.b32.xlu0 %v181, 126
  %v1463 = vpop.permute.xlu0 %1462
  %1464 = vrot.lane.b32.xlu0 %v186, 126
  %v1465 = vpop.permute.xlu0 %1464
  %1466 = vrot.lane.b32.xlu0 %v191, 126
  %v1467 = vpop.permute.xlu0 %1466
  %1468 = vrot.lane.b32.xlu0 %v196, 126
  %v1469 = vpop.permute.xlu0 %1468
  %1486 = vrot.lane.b32.xlu0 %v267, 127
  %v1487 = vpop.permute.xlu0 %1486
  %1488 = vrot.lane.b32.xlu0 %v269, 127
  %v1489 = vpop.permute.xlu0 %1488
  %1490 = vrot.lane.b32.xlu0 %v271, 127
  %v1491 = vpop.permute.xlu0 %1490
  %1492 = vrot.lane.b32.xlu0 %v273, 127
  %v1493 = vpop.permute.xlu0 %1492
  %1494 = vrot.lane.b32.xlu0 %v275, 127
  %v1495 = vpop.permute.xlu0 %1494
  %1496 = vrot.lane.b32.xlu0 %v277, 127
  %v1497 = vpop.permute.xlu0 %1496
  %1498 = vrot.lane.b32.xlu0 %v279, 127
  %v1499 = vpop.permute.xlu0 %1498
  %1500 = vrot.lane.b32.xlu0 %v281, 127
  %v1501 = vpop.permute.xlu0 %1500
  %1502 = vrot.lane.b32.xlu0 %v283, 127
  %v1503 = vpop.permute.xlu0 %1502
  %1504 = vrot.lane.b32.xlu0 %v285, 127
  %v1505 = vpop.permute.xlu0 %1504
  %1506 = vrot.lane.b32.xlu0 %v287, 127
  %v1507 = vpop.permute.xlu0 %1506
  %1508 = vrot.lane.b32.xlu0 %v289, 127
  %v1509 = vpop.permute.xlu0 %1508
  %1510 = vrot.lane.b32.xlu0 %v291, 127
  %v1511 = vpop.permute.xlu0 %1510
  %1512 = vrot.lane.b32.xlu0 %v293, 127
  %v1513 = vpop.permute.xlu0 %1512
  %1514 = vrot.lane.b32.xlu0 %v295, 127
  %v1515 = vpop.permute.xlu0 %1514
  %1516 = vrot.lane.b32.xlu0 %v312, 127
  %v1517 = vpop.permute.xlu0 %1516
  %v1534 = vsel %vm412, %v1391, %v1439
  %v1535 = vsel %vm412, %v1393, %v1441
  %v1536 = vsel %vm412, %v1395, %v1443
  %v1537 = vsel %vm412, %v1397, %v1445
  %v1538 = vsel %vm412, %v1399, %v1447
  %v1539 = vsel %vm412, %v1401, %v1449
  %v1540 = vsel %vm412, %v1403, %v1451
  %v1541 = vsel %vm412, %v1405, %v1453
  %v1542 = vsel %vm412, %v1407, %v1455
  %v1543 = vsel %vm412, %v1409, %v1457
  %v1544 = vsel %vm412, %v1411, %v1459
  %v1545 = vsel %vm412, %v1413, %v1461
  %v1546 = vsel %vm412, %v1415, %v1463
  %v1547 = vsel %vm412, %v1417, %v1465
  %v1548 = vsel %vm412, %v1419, %v1467
  %v1549 = vsel %vm412, %v1421, %v1469
  %v1550 = vsel %vm429, %v1534, %v1487
  %v1551 = vsel %vm429, %v1535, %v1489
  %v1552 = vsel %vm429, %v1536, %v1491
  %v1553 = vsel %vm429, %v1537, %v1493
  %v1554 = vsel %vm429, %v1538, %v1495
  %v1555 = vsel %vm429, %v1539, %v1497
  %v1556 = vsel %vm429, %v1540, %v1499
  %v1557 = vsel %vm429, %v1541, %v1501
  %v1558 = vsel %vm429, %v1542, %v1503
  %v1559 = vsel %vm429, %v1543, %v1505
  %v1560 = vsel %vm429, %v1544, %v1507
  %v1561 = vsel %vm429, %v1545, %v1509
  %v1562 = vsel %vm429, %v1546, %v1511
  %v1563 = vsel %vm429, %v1547, %v1513
  %v1564 = vsel %vm429, %v1548, %v1515
  %v1565 = vsel %vm429, %v1549, %v1517
  %v1567 = vsel %vm452, %v1550, 0
  %v1570 = vsel %vm452, %v1551, 0
  %v1573 = vsel %vm452, %v1552, 0
  %v1576 = vsel %vm452, %v1553, 0
  %v1579 = vsel %vm452, %v1554, 0
  %v1582 = vsel %vm452, %v1555, 0
  %v1585 = vsel %vm452, %v1556, 0
  %v1588 = vsel %vm452, %v1557, 0
  %v1591 = vsel %vm452, %v1558, 0
  %v1594 = vsel %vm452, %v1559, 0
  %v1597 = vsel %vm452, %v1560, 0
  %v1600 = vsel %vm452, %v1561, 0
  %v1603 = vsel %vm452, %v1562, 0
  %v1606 = vsel %vm452, %v1563, 0
  %v1609 = vsel %vm452, %v1564, 0
  %v1612 = vsel %vm452, %v1565, 0
  %1614 = vmatprep.subr.mxu0 0.0
  %1615 = vmatpush1.msra.mxu0 %v503
  %1616 = vmatprep.subr.mxu0 0.0
  %1617 = vmatpush1.msra.mxu0 0.0
  %1618 = vmatprep.subr.mxu0 0.0
  %1619 = vmatpush1.msra.mxu0 0.0
  %1620 = vmatprep.subr.mxu0 0.0
  %1621 = vmatpush1.msra.mxu0 0.0
  %1622 = vmatprep.subr.mxu0 0.0
  %1623 = vmatpush1.msra.mxu0 0.0
  %1624 = vmatprep.subr.mxu0 0.0
  %1625 = vmatpush1.msra.mxu0 0.0
  %1626 = vmatprep.subr.mxu0 0.0
  %1627 = vmatpush1.msra.mxu0 0.0
  %1628 = vmatprep.subr.mxu0 0.0
  %1629 = vmatpush1.msra.mxu0 0.0
  %1630 = vmatprep.subr.mxu0 0.0
  %1631 = vmatpush1.msra.mxu0 0.0
  %1632 = vmatprep.subr.mxu0 0.0
  %1633 = vmatpush1.msra.mxu0 0.0
  %1634 = vmatprep.subr.mxu0 0.0
  %1635 = vmatpush1.msra.mxu0 0.0
  %1636 = vmatprep.subr.mxu0 0.0
  %1637 = vmatpush1.msra.mxu0 0.0
  %1638 = vmatprep.subr.mxu0 0.0
  %1639 = vmatpush1.msra.mxu0 0.0
  %1640 = vmatprep.subr.mxu0 0.0
  %1641 = vmatpush1.msra.mxu0 0.0
  %1642 = vmatprep.subr.mxu0 0.0
  %1643 = vmatpush1.msra.mxu0 0.0
  %1644 = vmatprep.subr.mxu0 0.0
  %1645 = vmatpush1.msra.mxu0 0.0
  %1646 = vmatprep.subr.mxu0 0.0
  %1647 = vmatpush1.msra.mxu0 0.0
  %1648 = vmatprep.subr.mxu0 0.0
  %1649 = vmatpush1.msra.mxu0 0.0
  %1650 = vmatprep.subr.mxu0 0.0
  %1651 = vmatpush1.msra.mxu0 0.0
  %1652 = vmatprep.subr.mxu0 0.0
  %1653 = vmatpush1.msra.mxu0 0.0
  %1654 = vmatprep.subr.mxu0 0.0
  %1655 = vmatpush1.msra.mxu0 0.0
  %1656 = vmatprep.subr.mxu0 0.0
  %1657 = vmatpush1.msra.mxu0 0.0
  %1658 = vmatprep.subr.mxu0 0.0
  %1659 = vmatpush1.msra.mxu0 0.0
  %1660 = vmatprep.subr.mxu0 0.0
  %1661 = vmatpush1.msra.mxu0 0.0
  %1662 = vmatprep.subr.mxu0 0.0
  %1663 = vmatpush1.msra.mxu0 0.0
  %1664 = vmatprep.subr.mxu0 0.0
  %1665 = vmatpush1.msra.mxu0 0.0
  %1666 = vmatprep.subr.mxu0 0.0
  %1667 = vmatpush1.msra.mxu0 0.0
  %1668 = vmatprep.subr.mxu0 0.0
  %1669 = vmatpush1.msra.mxu0 0.0
  %1670 = vmatprep.subr.mxu0 0.0
  %1671 = vmatpush1.msra.mxu0 0.0
  %1672 = vmatprep.subr.mxu0 0.0
  %1673 = vmatpush1.msra.mxu0 0.0
  %1674 = vmatprep.subr.mxu0 0.0
  %1675 = vmatpush1.msra.mxu0 0.0
  %1676 = vmatprep.subr.mxu0 0.0
  %1677 = vmatpush1.msra.mxu0 0.0
  %1678 = vmatprep.mubr.f32.mxu0 0.0
  %1679 = vmatmul.mubr.f32.gmra.mrb[0].mxu0 %v1567
  %v1680 = vpop.f32.mrb[0].mxu0
  %v1681 = vadd.f32 %v450, %v1680
  %v1682 = vpop.f32.mrb[0].mxu0
  %1683 = vmatprep.mubr.f32.mxu0 0.0
  %1684 = vmatmul.mubr.f32.gmra.mrb[0].mxu0 %v1570
  %v1685 = vpop.f32.mrb[0].mxu0
  %v1686 = vadd.f32 %v450, %v1685
  %v1687 = vpop.f32.mrb[0].mxu0
  %1688 = vmatprep.mubr.f32.mxu0 0.0
  %1689 = vmatmul.mubr.f32.gmra.mrb[0].mxu0 %v1573
  %v1690 = vpop.f32.mrb[0].mxu0
  %v1691 = vadd.f32 %v450, %v1690
  %v1692 = vpop.f32.mrb[0].mxu0
  %1693 = vmatprep.mubr.f32.mxu0 0.0
  %1694 = vmatmul.mubr.f32.gmra.mrb[0].mxu0 %v1576
  %v1695 = vpop.f32.mrb[0].mxu0
  %v1696 = vadd.f32 %v450, %v1695
  %v1697 = vpop.f32.mrb[0].mxu0
  %1698 = vmatprep.mubr.f32.mxu0 0.0
  %1699 = vmatmul.mubr.f32.gmra.mrb[0].mxu0 %v1579
  %v1700 = vpop.f32.mrb[0].mxu0
  %v1701 = vadd.f32 %v450, %v1700
  %v1702 = vpop.f32.mrb[0].mxu0
  %1703 = vmatprep.mubr.f32.mxu0 0.0
  %1704 = vmatmul.mubr.f32.gmra.mrb[0].mxu0 %v1582
  %v1705 = vpop.f32.mrb[0].mxu0
  %v1706 = vadd.f32 %v450, %v1705
  %v1707 = vpop.f32.mrb[0].mxu0
  %1708 = vmatprep.mubr.f32.mxu0 0.0
  %1709 = vmatmul.mubr.f32.gmra.mrb[0].mxu0 %v1585
  %v1710 = vpop.f32.mrb[0].mxu0
  %v1711 = vadd.f32 %v450, %v1710
  %v1712 = vpop.f32.mrb[0].mxu0
  %1713 = vmatprep.mubr.f32.mxu0 0.0
  %1714 = vmatmul.mubr.f32.gmra.mrb[0].mxu0 %v1588
  %v1715 = vpop.f32.mrb[0].mxu0
  %v1716 = vadd.f32 %v450, %v1715
  %v1717 = vpop.f32.mrb[0].mxu0
  %1718 = vmatprep.mubr.f32.mxu0 0.0
  %1719 = vmatmul.mubr.f32.gmra.mrb[0].mxu0 %v1591
  %v1720 = vpop.f32.mrb[0].mxu0
  %v1721 = vadd.f32 %v450, %v1720
  %v1722 = vpop.f32.mrb[0].mxu0
  %1723 = vmatprep.mubr.f32.mxu0 0.0
  %1724 = vmatmul.mubr.f32.gmra.mrb[0].mxu0 %v1594
  %v1725 = vpop.f32.mrb[0].mxu0
  %v1726 = vadd.f32 %v450, %v1725
  %v1727 = vpop.f32.mrb[0].mxu0
  %1728 = vmatprep.mubr.f32.mxu0 0.0
  %1729 = vmatmul.mubr.f32.gmra.mrb[0].mxu0 %v1597
  %v1730 = vpop.f32.mrb[0].mxu0
  %v1731 = vadd.f32 %v450, %v1730
  %v1732 = vpop.f32.mrb[0].mxu0
  %1733 = vmatprep.mubr.f32.mxu0 0.0
  %1734 = vmatmul.mubr.f32.gmra.mrb[0].mxu0 %v1600
  %v1735 = vpop.f32.mrb[0].mxu0
  %v1736 = vadd.f32 %v450, %v1735
  %v1737 = vpop.f32.mrb[0].mxu0
  %1738 = vmatprep.mubr.f32.mxu0 0.0
  %1739 = vmatmul.mubr.f32.gmra.mrb[0].mxu0 %v1603
  %v1740 = vpop.f32.mrb[0].mxu0
  %v1741 = vadd.f32 %v450, %v1740
  %v1742 = vpop.f32.mrb[0].mxu0
  %1743 = vmatprep.mubr.f32.mxu0 0.0
  %1744 = vmatmul.mubr.f32.gmra.mrb[0].mxu0 %v1606
  %v1745 = vpop.f32.mrb[0].mxu0
  %v1746 = vadd.f32 %v450, %v1745
  %v1747 = vpop.f32.mrb[0].mxu0
  %1748 = vmatprep.mubr.f32.mxu0 0.0
  %1749 = vmatmul.mubr.f32.gmra.mrb[0].mxu0 %v1609
  %v1750 = vpop.f32.mrb[0].mxu0
  %v1751 = vadd.f32 %v450, %v1750
  %v1752 = vpop.f32.mrb[0].mxu0
  %1753 = vmatprep.mubr.f32.mxu0 0.0
  %1754 = vmatmul.mubr.f32.gmra.mrb[0].mxu0 %v1612
  %v1755 = vpop.f32.mrb[0].mxu0
  %v1756 = vadd.f32 %v450, %v1755
  %v1757 = vpop.f32.mrb[0].mxu0
  %1758 = vdwg.mxu0
  %v1759 = vmax.f32 %v1681, 0.0
  %v1760 = vmax.f32 %v1686, 0.0
  %v1761 = vmax.f32 %v1691, 0.0
  %v1762 = vmax.f32 %v1696, 0.0
  %v1763 = vmax.f32 %v1701, 0.0
  %v1764 = vmax.f32 %v1706, 0.0
  %v1765 = vmax.f32 %v1711, 0.0
  %v1766 = vmax.f32 %v1716, 0.0
  %v1767 = vmax.f32 %v1721, 0.0
  %v1768 = vmax.f32 %v1726, 0.0
  %v1769 = vmax.f32 %v1731, 0.0
  %v1770 = vmax.f32 %v1736, 0.0
  %v1771 = vmax.f32 %v1741, 0.0
  %v1772 = vmax.f32 %v1746, 0.0
  %v1773 = vmax.f32 %v1751, 0.0
  %v1774 = vmax.f32 %v1756, 0.0
  %1775 = vst.msk [vmem:[#allocation2 + $0x180] sm:$0xff] %vm666, %v1759
  %1776 = vst.msk [vmem:[#allocation2 + $0x188] sm:$0xff] %vm666, %v1760
  %1777 = vst.msk [vmem:[#allocation2 + $0x190] sm:$0xff] %vm666, %v1761
  %1778 = vst.msk [vmem:[#allocation2 + $0x198] sm:$0xff] %vm666, %v1762
  %1779 = vst.msk [vmem:[#allocation2 + $0x1a0] sm:$0xff] %vm666, %v1763
  %1780 = vst.msk [vmem:[#allocation2 + $0x1a8] sm:$0xff] %vm666, %v1764
  %1781 = vst.msk [vmem:[#allocation2 + $0x1b0] sm:$0xff] %vm666, %v1765
  %1782 = vst.msk [vmem:[#allocation2 + $0x1b8] sm:$0xff] %vm666, %v1766
  %1783 = vst.msk [vmem:[#allocation2 + $0x1c0] sm:$0xff] %vm666, %v1767
  %1784 = vst.msk [vmem:[#allocation2 + $0x1c8] sm:$0xff] %vm666, %v1768
  %1785 = vst.msk [vmem:[#allocation2 + $0x1d0] sm:$0xff] %vm666, %v1769
  %1786 = vst.msk [vmem:[#allocation2 + $0x1d8] sm:$0xff] %vm666, %v1770
  %1787 = vst.msk [vmem:[#allocation2 + $0x1e0] sm:$0xff] %vm666, %v1771
  %1788 = vst.msk [vmem:[#allocation2 + $0x1e8] sm:$0xff] %vm666, %v1772
  %1789 = vst.msk [vmem:[#allocation2 + $0x1f0] sm:$0xff] %vm666, %v1773
  %1790 = vst.msk [vmem:[#allocation2 + $0x1f8] sm:$0xff] %vm666, %v1774
  %1791 = vrot.lane.b32.xlu0 %v263, 124
  %v1792 = vpop.permute.xlu0 %1791
  %1793 = vrot.lane.b32.xlu0 %v218, 124
  %v1794 = vpop.permute.xlu0 %1793
  %1795 = vrot.lane.b32.xlu0 %v220, 124
  %v1796 = vpop.permute.xlu0 %1795
  %1797 = vrot.lane.b32.xlu0 %v222, 124
  %v1798 = vpop.permute.xlu0 %1797
  %1799 = vrot.lane.b32.xlu0 %v224, 124
  %v1800 = vpop.permute.xlu0 %1799
  %1801 = vrot.lane.b32.xlu0 %v226, 124
  %v1802 = vpop.permute.xlu0 %1801
  %1803 = vrot.lane.b32.xlu0 %v228, 124
  %v1804 = vpop.permute.xlu0 %1803
  %1805 = vrot.lane.b32.xlu0 %v230, 124
  %v1806 = vpop.permute.xlu0 %1805
  %1807 = vrot.lane.b32.xlu0 %v232, 124
  %v1808 = vpop.permute.xlu0 %1807
  %1809 = vrot.lane.b32.xlu0 %v234, 124
  %v1810 = vpop.permute.xlu0 %1809
  %1811 = vrot.lane.b32.xlu0 %v236, 124
  %v1812 = vpop.permute.xlu0 %1811
  %1813 = vrot.lane.b32.xlu0 %v238, 124
  %v1814 = vpop.permute.xlu0 %1813
  %1815 = vrot.lane.b32.xlu0 %v240, 124
  %v1816 = vpop.permute.xlu0 %1815
  %1817 = vrot.lane.b32.xlu0 %v242, 124
  %v1818 = vpop.permute.xlu0 %1817
  %1819 = vrot.lane.b32.xlu0 %v244, 124
  %v1820 = vpop.permute.xlu0 %1819
  %1821 = vrot.lane.b32.xlu0 %v246, 124
  %v1822 = vpop.permute.xlu0 %1821
  %1839 = vrot.lane.b32.xlu0 %v121, 125
  %v1840 = vpop.permute.xlu0 %1839
  %1841 = vrot.lane.b32.xlu0 %v126, 125
  %v1842 = vpop.permute.xlu0 %1841
  %1843 = vrot.lane.b32.xlu0 %v131, 125
  %v1844 = vpop.permute.xlu0 %1843
  %1845 = vrot.lane.b32.xlu0 %v136, 125
  %v1846 = vpop.permute.xlu0 %1845
  %1847 = vrot.lane.b32.xlu0 %v141, 125
  %v1848 = vpop.permute.xlu0 %1847
  %1849 = vrot.lane.b32.xlu0 %v146, 125
  %v1850 = vpop.permute.xlu0 %1849
  %1851 = vrot.lane.b32.xlu0 %v151, 125
  %v1852 = vpop.permute.xlu0 %1851
  %1853 = vrot.lane.b32.xlu0 %v156, 125
  %v1854 = vpop.permute.xlu0 %1853
  %1855 = vrot.lane.b32.xlu0 %v161, 125
  %v1856 = vpop.permute.xlu0 %1855
  %1857 = vrot.lane.b32.xlu0 %v166, 125
  %v1858 = vpop.permute.xlu0 %1857
  %1859 = vrot.lane.b32.xlu0 %v171, 125
  %v1860 = vpop.permute.xlu0 %1859
  %1861 = vrot.lane.b32.xlu0 %v176, 125
  %v1862 = vpop.permute.xlu0 %1861
  %1863 = vrot.lane.b32.xlu0 %v181, 125
  %v1864 = vpop.permute.xlu0 %1863
  %1865 = vrot.lane.b32.xlu0 %v186, 125
  %v1866 = vpop.permute.xlu0 %1865
  %1867 = vrot.lane.b32.xlu0 %v191, 125
  %v1868 = vpop.permute.xlu0 %1867
  %1869 = vrot.lane.b32.xlu0 %v196, 125
  %v1870 = vpop.permute.xlu0 %1869
  %1887 = vrot.lane.b32.xlu0 %v267, 126
  %v1888 = vpop.permute.xlu0 %1887
  %1889 = vrot.lane.b32.xlu0 %v269, 126
  %v1890 = vpop.permute.xlu0 %1889
  %1891 = vrot.lane.b32.xlu0 %v271, 126
  %v1892 = vpop.permute.xlu0 %1891
  %1893 = vrot.lane.b32.xlu0 %v273, 126
  %v1894 = vpop.permute.xlu0 %1893
  %1895 = vrot.lane.b32.xlu0 %v275, 126
  %v1896 = vpop.permute.xlu0 %1895
  %1897 = vrot.lane.b32.xlu0 %v277, 126
  %v1898 = vpop.permute.xlu0 %1897
  %1899 = vrot.lane.b32.xlu0 %v279, 126
  %v1900 = vpop.permute.xlu0 %1899
  %1901 = vrot.lane.b32.xlu0 %v281, 126
  %v1902 = vpop.permute.xlu0 %1901
  %1903 = vrot.lane.b32.xlu0 %v283, 126
  %v1904 = vpop.permute.xlu0 %1903
  %1905 = vrot.lane.b32.xlu0 %v285, 126
  %v1906 = vpop.permute.xlu0 %1905
  %1907 = vrot.lane.b32.xlu0 %v287, 126
  %v1908 = vpop.permute.xlu0 %1907
  %1909 = vrot.lane.b32.xlu0 %v289, 126
  %v1910 = vpop.permute.xlu0 %1909
  %1911 = vrot.lane.b32.xlu0 %v291, 126
  %v1912 = vpop.permute.xlu0 %1911
  %1913 = vrot.lane.b32.xlu0 %v293, 126
  %v1914 = vpop.permute.xlu0 %1913
  %1915 = vrot.lane.b32.xlu0 %v295, 126
  %v1916 = vpop.permute.xlu0 %1915
  %1917 = vrot.lane.b32.xlu0 %v312, 126
  %v1918 = vpop.permute.xlu0 %1917
  %v1935 = vsel %vm412, %v1792, %v1840
  %v1936 = vsel %vm412, %v1794, %v1842
  %v1937 = vsel %vm412, %v1796, %v1844
  %v1938 = vsel %vm412, %v1798, %v1846
  %v1939 = vsel %vm412, %v1800, %v1848
  %v1940 = vsel %vm412, %v1802, %v1850
  %v1941 = vsel %vm412, %v1804, %v1852
  %v1942 = vsel %vm412, %v1806, %v1854
  %v1943 = vsel %vm412, %v1808, %v1856
  %v1944 = vsel %vm412, %v1810, %v1858
  %v1945 = vsel %vm412, %v1812, %v1860
  %v1946 = vsel %vm412, %v1814, %v1862
  %v1947 = vsel %vm412, %v1816, %v1864
  %v1948 = vsel %vm412, %v1818, %v1866
  %v1949 = vsel %vm412, %v1820, %v1868
  %v1950 = vsel %vm412, %v1822, %v1870
  %v1951 = vsel %vm429, %v1935, %v1888
  %v1952 = vsel %vm429, %v1936, %v1890
  %v1953 = vsel %vm429, %v1937, %v1892
  %v1954 = vsel %vm429, %v1938, %v1894
  %v1955 = vsel %vm429, %v1939, %v1896
  %v1956 = vsel %vm429, %v1940, %v1898
  %v1957 = vsel %vm429, %v1941, %v1900
  %v1958 = vsel %vm429, %v1942, %v1902
  %v1959 = vsel %vm429, %v1943, %v1904
  %v1960 = vsel %vm429, %v1944, %v1906
  %v1961 = vsel %vm429, %v1945, %v1908
  %v1962 = vsel %vm429, %v1946, %v1910
  %v1963 = vsel %vm429, %v1947, %v1912
  %v1964 = vsel %vm429, %v1948, %v1914
  %v1965 = vsel %vm429, %v1949, %v1916
  %v1966 = vsel %vm429, %v1950, %v1918
  %v1968 = vsel %vm452, %v1951, 0
  %v1971 = vsel %vm452, %v1952, 0
  %v1974 = vsel %vm452, %v1953, 0
  %v1977 = vsel %vm452, %v1954, 0
  %v1980 = vsel %vm452, %v1955, 0
  %v1983 = vsel %vm452, %v1956, 0
  %v1986 = vsel %vm452, %v1957, 0
  %v1989 = vsel %vm452, %v1958, 0
  %v1992 = vsel %vm452, %v1959, 0
  %v1995 = vsel %vm452, %v1960, 0
  %v1998 = vsel %vm452, %v1961, 0
  %v2001 = vsel %vm452, %v1962, 0
  %v2004 = vsel %vm452, %v1963, 0
  %v2007 = vsel %vm452, %v1964, 0
  %v2010 = vsel %vm452, %v1965, 0
  %v2013 = vsel %vm452, %v1966, 0
  %2015 = vmatprep.subr.mxu0 0.0
  %2016 = vmatpush1.msra.mxu0 %v503
  %2017 = vmatprep.subr.mxu0 0.0
  %2018 = vmatpush1.msra.mxu0 0.0
  %2019 = vmatprep.subr.mxu0 0.0
  %2020 = vmatpush1.msra.mxu0 0.0
  %2021 = vmatprep.subr.mxu0 0.0
  %2022 = vmatpush1.msra.mxu0 0.0
  %2023 = vmatprep.subr.mxu0 0.0
  %2024 = vmatpush1.msra.mxu0 0.0
  %2025 = vmatprep.subr.mxu0 0.0
  %2026 = vmatpush1.msra.mxu0 0.0
  %2027 = vmatprep.subr.mxu0 0.0
  %2028 = vmatpush1.msra.mxu0 0.0
  %2029 = vmatprep.subr.mxu0 0.0
  %2030 = vmatpush1.msra.mxu0 0.0
  %2031 = vmatprep.subr.mxu0 0.0
  %2032 = vmatpush1.msra.mxu0 0.0
  %2033 = vmatprep.subr.mxu0 0.0
  %2034 = vmatpush1.msra.mxu0 0.0
  %2035 = vmatprep.subr.mxu0 0.0
  %2036 = vmatpush1.msra.mxu0 0.0
  %2037 = vmatprep.subr.mxu0 0.0
  %2038 = vmatpush1.msra.mxu0 0.0
  %2039 = vmatprep.subr.mxu0 0.0
  %2040 = vmatpush1.msra.mxu0 0.0
  %2041 = vmatprep.subr.mxu0 0.0
  %2042 = vmatpush1.msra.mxu0 0.0
  %2043 = vmatprep.subr.mxu0 0.0
  %2044 = vmatpush1.msra.mxu0 0.0
  %2045 = vmatprep.subr.mxu0 0.0
  %2046 = vmatpush1.msra.mxu0 0.0
  %2047 = vmatprep.subr.mxu0 0.0
  %2048 = vmatpush1.msra.mxu0 0.0
  %2049 = vmatprep.subr.mxu0 0.0
  %2050 = vmatpush1.msra.mxu0 0.0
  %2051 = vmatprep.subr.mxu0 0.0
  %2052 = vmatpush1.msra.mxu0 0.0
  %2053 = vmatprep.subr.mxu0 0.0
  %2054 = vmatpush1.msra.mxu0 0.0
  %2055 = vmatprep.subr.mxu0 0.0
  %2056 = vmatpush1.msra.mxu0 0.0
  %2057 = vmatprep.subr.mxu0 0.0
  %2058 = vmatpush1.msra.mxu0 0.0
  %2059 = vmatprep.subr.mxu0 0.0
  %2060 = vmatpush1.msra.mxu0 0.0
  %2061 = vmatprep.subr.mxu0 0.0
  %2062 = vmatpush1.msra.mxu0 0.0
  %2063 = vmatprep.subr.mxu0 0.0
  %2064 = vmatpush1.msra.mxu0 0.0
  %2065 = vmatprep.subr.mxu0 0.0
  %2066 = vmatpush1.msra.mxu0 0.0
  %2067 = vmatprep.subr.mxu0 0.0
  %2068 = vmatpush1.msra.mxu0 0.0
  %2069 = vmatprep.subr.mxu0 0.0
  %2070 = vmatpush1.msra.mxu0 0.0
  %2071 = vmatprep.subr.mxu0 0.0
  %2072 = vmatpush1.msra.mxu0 0.0
  %2073 = vmatprep.subr.mxu0 0.0
  %2074 = vmatpush1.msra.mxu0 0.0
  %2075 = vmatprep.subr.mxu0 0.0
  %2076 = vmatpush1.msra.mxu0 0.0
  %2077 = vmatprep.subr.mxu0 0.0
  %2078 = vmatpush1.msra.mxu0 0.0
  %2079 = vmatprep.mubr.f32.mxu0 0.0
  %2080 = vmatmul.mubr.f32.gmra.mrb[0].mxu0 %v1968
  %v2081 = vpop.f32.mrb[0].mxu0
  %v2082 = vadd.f32 %v450, %v2081
  %v2083 = vpop.f32.mrb[0].mxu0
  %2084 = vmatprep.mubr.f32.mxu0 0.0
  %2085 = vmatmul.mubr.f32.gmra.mrb[0].mxu0 %v1971
  %v2086 = vpop.f32.mrb[0].mxu0
  %v2087 = vadd.f32 %v450, %v2086
  %v2088 = vpop.f32.mrb[0].mxu0
  %2089 = vmatprep.mubr.f32.mxu0 0.0
  %2090 = vmatmul.mubr.f32.gmra.mrb[0].mxu0 %v1974
  %v2091 = vpop.f32.mrb[0].mxu0
  %v2092 = vadd.f32 %v450, %v2091
  %v2093 = vpop.f32.mrb[0].mxu0
  %2094 = vmatprep.mubr.f32.mxu0 0.0
  %2095 = vmatmul.mubr.f32.gmra.mrb[0].mxu0 %v1977
  %v2096 = vpop.f32.mrb[0].mxu0
  %v2097 = vadd.f32 %v450, %v2096
  %v2098 = vpop.f32.mrb[0].mxu0
  %2099 = vmatprep.mubr.f32.mxu0 0.0
  %2100 = vmatmul.mubr.f32.gmra.mrb[0].mxu0 %v1980
  %v2101 = vpop.f32.mrb[0].mxu0
  %v2102 = vadd.f32 %v450, %v2101
  %v2103 = vpop.f32.mrb[0].mxu0
  %2104 = vmatprep.mubr.f32.mxu0 0.0
  %2105 = vmatmul.mubr.f32.gmra.mrb[0].mxu0 %v1983
  %v2106 = vpop.f32.mrb[0].mxu0
  %v2107 = vadd.f32 %v450, %v2106
  %v2108 = vpop.f32.mrb[0].mxu0
  %2109 = vmatprep.mubr.f32.mxu0 0.0
  %2110 = vmatmul.mubr.f32.gmra.mrb[0].mxu0 %v1986
  %v2111 = vpop.f32.mrb[0].mxu0
  %v2112 = vadd.f32 %v450, %v2111
  %v2113 = vpop.f32.mrb[0].mxu0
  %2114 = vmatprep.mubr.f32.mxu0 0.0
  %2115 = vmatmul.mubr.f32.gmra.mrb[0].mxu0 %v1989
  %v2116 = vpop.f32.mrb[0].mxu0
  %v2117 = vadd.f32 %v450, %v2116
  %v2118 = vpop.f32.mrb[0].mxu0
  %2119 = vmatprep.mubr.f32.mxu0 0.0
  %2120 = vmatmul.mubr.f32.gmra.mrb[0].mxu0 %v1992
  %v2121 = vpop.f32.mrb[0].mxu0
  %v2122 = vadd.f32 %v450, %v2121
  %v2123 = vpop.f32.mrb[0].mxu0
  %2124 = vmatprep.mubr.f32.mxu0 0.0
  %2125 = vmatmul.mubr.f32.gmra.mrb[0].mxu0 %v1995
  %v2126 = vpop.f32.mrb[0].mxu0
  %v2127 = vadd.f32 %v450, %v2126
  %v2128 = vpop.f32.mrb[0].mxu0
  %2129 = vmatprep.mubr.f32.mxu0 0.0
  %2130 = vmatmul.mubr.f32.gmra.mrb[0].mxu0 %v1998
  %v2131 = vpop.f32.mrb[0].mxu0
  %v2132 = vadd.f32 %v450, %v2131
  %v2133 = vpop.f32.mrb[0].mxu0
  %2134 = vmatprep.mubr.f32.mxu0 0.0
  %2135 = vmatmul.mubr.f32.gmra.mrb[0].mxu0 %v2001
  %v2136 = vpop.f32.mrb[0].mxu0
  %v2137 = vadd.f32 %v450, %v2136
  %v2138 = vpop.f32.mrb[0].mxu0
  %2139 = vmatprep.mubr.f32.mxu0 0.0
  %2140 = vmatmul.mubr.f32.gmra.mrb[0].mxu0 %v2004
  %v2141 = vpop.f32.mrb[0].mxu0
  %v2142 = vadd.f32 %v450, %v2141
  %v2143 = vpop.f32.mrb[0].mxu0
  %2144 = vmatprep.mubr.f32.mxu0 0.0
  %2145 = vmatmul.mubr.f32.gmra.mrb[0].mxu0 %v2007
  %v2146 = vpop.f32.mrb[0].mxu0
  %v2147 = vadd.f32 %v450, %v2146
  %v2148 = vpop.f32.mrb[0].mxu0
  %2149 = vmatprep.mubr.f32.mxu0 0.0
  %2150 = vmatmul.mubr.f32.gmra.mrb[0].mxu0 %v2010
  %v2151 = vpop.f32.mrb[0].mxu0
  %v2152 = vadd.f32 %v450, %v2151
  %v2153 = vpop.f32.mrb[0].mxu0
  %2154 = vmatprep.mubr.f32.mxu0 0.0
  %2155 = vmatmul.mubr.f32.gmra.mrb[0].mxu0 %v2013
  %v2156 = vpop.f32.mrb[0].mxu0
  %v2157 = vadd.f32 %v450, %v2156
  %v2158 = vpop.f32.mrb[0].mxu0
  %2159 = vdwg.mxu0
  %v2160 = vmax.f32 %v2082, 0.0
  %v2161 = vmax.f32 %v2087, 0.0
  %v2162 = vmax.f32 %v2092, 0.0
  %v2163 = vmax.f32 %v2097, 0.0
  %v2164 = vmax.f32 %v2102, 0.0
  %v2165 = vmax.f32 %v2107, 0.0
  %v2166 = vmax.f32 %v2112, 0.0
  %v2167 = vmax.f32 %v2117, 0.0
  %v2168 = vmax.f32 %v2122, 0.0
  %v2169 = vmax.f32 %v2127, 0.0
  %v2170 = vmax.f32 %v2132, 0.0
  %v2171 = vmax.f32 %v2137, 0.0
  %v2172 = vmax.f32 %v2142, 0.0
  %v2173 = vmax.f32 %v2147, 0.0
  %v2174 = vmax.f32 %v2152, 0.0
  %v2175 = vmax.f32 %v2157, 0.0
  %2176 = vst.msk [vmem:[#allocation2 + $0x200] sm:$0xff] %vm666, %v2160
  %2177 = vst.msk [vmem:[#allocation2 + $0x208] sm:$0xff] %vm666, %v2161
  %2178 = vst.msk [vmem:[#allocation2 + $0x210] sm:$0xff] %vm666, %v2162
  %2179 = vst.msk [vmem:[#allocation2 + $0x218] sm:$0xff] %vm666, %v2163
  %2180 = vst.msk [vmem:[#allocation2 + $0x220] sm:$0xff] %vm666, %v2164
  %2181 = vst.msk [vmem:[#allocation2 + $0x228] sm:$0xff] %vm666, %v2165
  %2182 = vst.msk [vmem:[#allocation2 + $0x230] sm:$0xff] %vm666, %v2166
  %2183 = vst.msk [vmem:[#allocation2 + $0x238] sm:$0xff] %vm666, %v2167
  %2184 = vst.msk [vmem:[#allocation2 + $0x240] sm:$0xff] %vm666, %v2168
  %2185 = vst.msk [vmem:[#allocation2 + $0x248] sm:$0xff] %vm666, %v2169
  %2186 = vst.msk [vmem:[#allocation2 + $0x250] sm:$0xff] %vm666, %v2170
  %2187 = vst.msk [vmem:[#allocation2 + $0x258] sm:$0xff] %vm666, %v2171
  %2188 = vst.msk [vmem:[#allocation2 + $0x260] sm:$0xff] %vm666, %v2172
  %2189 = vst.msk [vmem:[#allocation2 + $0x268] sm:$0xff] %vm666, %v2173
  %2190 = vst.msk [vmem:[#allocation2 + $0x270] sm:$0xff] %vm666, %v2174
  %2191 = vst.msk [vmem:[#allocation2 + $0x278] sm:$0xff] %vm666, %v2175
  %2192 = vrot.lane.b32.xlu0 %v263, 123
  %v2193 = vpop.permute.xlu0 %2192
  %2194 = vrot.lane.b32.xlu0 %v218, 123
  %v2195 = vpop.permute.xlu0 %2194
  %2196 = vrot.lane.b32.xlu0 %v220, 123
  %v2197 = vpop.permute.xlu0 %2196
  %2198 = vrot.lane.b32.xlu0 %v222, 123
  %v2199 = vpop.permute.xlu0 %2198
  %2200 = vrot.lane.b32.xlu0 %v224, 123
  %v2201 = vpop.permute.xlu0 %2200
  %2202 = vrot.lane.b32.xlu0 %v226, 123
  %v2203 = vpop.permute.xlu0 %2202
  %2204 = vrot.lane.b32.xlu0 %v228, 123
  %v2205 = vpop.permute.xlu0 %2204
  %2206 = vrot.lane.b32.xlu0 %v230, 123
  %v2207 = vpop.permute.xlu0 %2206
  %2208 = vrot.lane.b32.xlu0 %v232, 123
  %v2209 = vpop.permute.xlu0 %2208
  %2210 = vrot.lane.b32.xlu0 %v234, 123
  %v2211 = vpop.permute.xlu0 %2210
  %2212 = vrot.lane.b32.xlu0 %v236, 123
  %v2213 = vpop.permute.xlu0 %2212
  %2214 = vrot.lane.b32.xlu0 %v238, 123
  %v2215 = vpop.permute.xlu0 %2214
  %2216 = vrot.lane.b32.xlu0 %v240, 123
  %v2217 = vpop.permute.xlu0 %2216
  %2218 = vrot.lane.b32.xlu0 %v242, 123
  %v2219 = vpop.permute.xlu0 %2218
  %2220 = vrot.lane.b32.xlu0 %v244, 123
  %v2221 = vpop.permute.xlu0 %2220
  %2222 = vrot.lane.b32.xlu0 %v246, 123
  %v2223 = vpop.permute.xlu0 %2222
  %2240 = vrot.lane.b32.xlu0 %v121, 124
  %v2241 = vpop.permute.xlu0 %2240
  %2242 = vrot.lane.b32.xlu0 %v126, 124
  %v2243 = vpop.permute.xlu0 %2242
  %2244 = vrot.lane.b32.xlu0 %v131, 124
  %v2245 = vpop.permute.xlu0 %2244
  %2246 = vrot.lane.b32.xlu0 %v136, 124
  %v2247 = vpop.permute.xlu0 %2246
  %2248 = vrot.lane.b32.xlu0 %v141, 124
  %v2249 = vpop.permute.xlu0 %2248
  %2250 = vrot.lane.b32.xlu0 %v146, 124
  %v2251 = vpop.permute.xlu0 %2250
  %2252 = vrot.lane.b32.xlu0 %v151, 124
  %v2253 = vpop.permute.xlu0 %2252
  %2254 = vrot.lane.b32.xlu0 %v156, 124
  %v2255 = vpop.permute.xlu0 %2254
  %2256 = vrot.lane.b32.xlu0 %v161, 124
  %v2257 = vpop.permute.xlu0 %2256
  %2258 = vrot.lane.b32.xlu0 %v166, 124
  %v2259 = vpop.permute.xlu0 %2258
  %2260 = vrot.lane.b32.xlu0 %v171, 124
  %v2261 = vpop.permute.xlu0 %2260
  %2262 = vrot.lane.b32.xlu0 %v176, 124
  %v2263 = vpop.permute.xlu0 %2262
  %2264 = vrot.lane.b32.xlu0 %v181, 124
  %v2265 = vpop.permute.xlu0 %2264
  %2266 = vrot.lane.b32.xlu0 %v186, 124
  %v2267 = vpop.permute.xlu0 %2266
  %2268 = vrot.lane.b32.xlu0 %v191, 124
  %v2269 = vpop.permute.xlu0 %2268
  %2270 = vrot.lane.b32.xlu0 %v196, 124
  %v2271 = vpop.permute.xlu0 %2270
  %2288 = vrot.lane.b32.xlu0 %v267, 125
  %v2289 = vpop.permute.xlu0 %2288
  %2290 = vrot.lane.b32.xlu0 %v269, 125
  %v2291 = vpop.permute.xlu0 %2290
  %2292 = vrot.lane.b32.xlu0 %v271, 125
  %v2293 = vpop.permute.xlu0 %2292
  %2294 = vrot.lane.b32.xlu0 %v273, 125
  %v2295 = vpop.permute.xlu0 %2294
  %2296 = vrot.lane.b32.xlu0 %v275, 125
  %v2297 = vpop.permute.xlu0 %2296
  %2298 = vrot.lane.b32.xlu0 %v277, 125
  %v2299 = vpop.permute.xlu0 %2298
  %2300 = vrot.lane.b32.xlu0 %v279, 125
  %v2301 = vpop.permute.xlu0 %2300
  %2302 = vrot.lane.b32.xlu0 %v281, 125
  %v2303 = vpop.permute.xlu0 %2302
  %2304 = vrot.lane.b32.xlu0 %v283, 125
  %v2305 = vpop.permute.xlu0 %2304
  %2306 = vrot.lane.b32.xlu0 %v285, 125
  %v2307 = vpop.permute.xlu0 %2306
  %2308 = vrot.lane.b32.xlu0 %v287, 125
  %v2309 = vpop.permute.xlu0 %2308
  %2310 = vrot.lane.b32.xlu0 %v289, 125
  %v2311 = vpop.permute.xlu0 %2310
  %2312 = vrot.lane.b32.xlu0 %v291, 125
  %v2313 = vpop.permute.xlu0 %2312
  %2314 = vrot.lane.b32.xlu0 %v293, 125
  %v2315 = vpop.permute.xlu0 %2314
  %2316 = vrot.lane.b32.xlu0 %v295, 125
  %v2317 = vpop.permute.xlu0 %2316
  %2318 = vrot.lane.b32.xlu0 %v312, 125
  %v2319 = vpop.permute.xlu0 %2318
  %v2336 = vsel %vm412, %v2193, %v2241
  %v2337 = vsel %vm412, %v2195, %v2243
  %v2338 = vsel %vm412, %v2197, %v2245
  %v2339 = vsel %vm412, %v2199, %v2247
  %v2340 = vsel %vm412, %v2201, %v2249
  %v2341 = vsel %vm412, %v2203, %v2251
  %v2342 = vsel %vm412, %v2205, %v2253
  %v2343 = vsel %vm412, %v2207, %v2255
  %v2344 = vsel %vm412, %v2209, %v2257
  %v2345 = vsel %vm412, %v2211, %v2259
  %v2346 = vsel %vm412, %v2213, %v2261
  %v2347 = vsel %vm412, %v2215, %v2263
  %v2348 = vsel %vm412, %v2217, %v2265
  %v2349 = vsel %vm412, %v2219, %v2267
  %v2350 = vsel %vm412, %v2221, %v2269
  %v2351 = vsel %vm412, %v2223, %v2271
  %v2352 = vsel %vm429, %v2336, %v2289
  %v2353 = vsel %vm429, %v2337, %v2291
  %v2354 = vsel %vm429, %v2338, %v2293
  %v2355 = vsel %vm429, %v2339, %v2295
  %v2356 = vsel %vm429, %v2340, %v2297
  %v2357 = vsel %vm429, %v2341, %v2299
  %v2358 = vsel %vm429, %v2342, %v2301
  %v2359 = vsel %vm429, %v2343, %v2303
  %v2360 = vsel %vm429, %v2344, %v2305
  %v2361 = vsel %vm429, %v2345, %v2307
  %v2362 = vsel %vm429, %v2346, %v2309
  %v2363 = vsel %vm429, %v2347, %v2311
  %v2364 = vsel %vm429, %v2348, %v2313
  %v2365 = vsel %vm429, %v2349, %v2315
  %v2366 = vsel %vm429, %v2350, %v2317
  %v2367 = vsel %vm429, %v2351, %v2319
  %v2369 = vsel %vm452, %v2352, 0
  %v2372 = vsel %vm452, %v2353, 0
  %v2375 = vsel %vm452, %v2354, 0
  %v2378 = vsel %vm452, %v2355, 0
  %v2381 = vsel %vm452, %v2356, 0
  %v2384 = vsel %vm452, %v2357, 0
  %v2387 = vsel %vm452, %v2358, 0
  %v2390 = vsel %vm452, %v2359, 0
  %v2393 = vsel %vm452, %v2360, 0
  %v2396 = vsel %vm452, %v2361, 0
  %v2399 = vsel %vm452, %v2362, 0
  %v2402 = vsel %vm452, %v2363, 0
  %v2405 = vsel %vm452, %v2364, 0
  %v2408 = vsel %vm452, %v2365, 0
  %v2411 = vsel %vm452, %v2366, 0
  %v2414 = vsel %vm452, %v2367, 0
  %2416 = vmatprep.subr.mxu0 0.0
  %2417 = vmatpush1.msra.mxu0 %v503
  %2418 = vmatprep.subr.mxu0 0.0
  %2419 = vmatpush1.msra.mxu0 0.0
  %2420 = vmatprep.subr.mxu0 0.0
  %2421 = vmatpush1.msra.mxu0 0.0
  %2422 = vmatprep.subr.mxu0 0.0
  %2423 = vmatpush1.msra.mxu0 0.0
  %2424 = vmatprep.subr.mxu0 0.0
  %2425 = vmatpush1.msra.mxu0 0.0
  %2426 = vmatprep.subr.mxu0 0.0
  %2427 = vmatpush1.msra.mxu0 0.0
  %2428 = vmatprep.subr.mxu0 0.0
  %2429 = vmatpush1.msra.mxu0 0.0
  %2430 = vmatprep.subr.mxu0 0.0
  %2431 = vmatpush1.msra.mxu0 0.0
  %2432 = vmatprep.subr.mxu0 0.0
  %2433 = vmatpush1.msra.mxu0 0.0
  %2434 = vmatprep.subr.mxu0 0.0
  %2435 = vmatpush1.msra.mxu0 0.0
  %2436 = vmatprep.subr.mxu0 0.0
  %2437 = vmatpush1.msra.mxu0 0.0
  %2438 = vmatprep.subr.mxu0 0.0
  %2439 = vmatpush1.msra.mxu0 0.0
  %2440 = vmatprep.subr.mxu0 0.0
  %2441 = vmatpush1.msra.mxu0 0.0
  %2442 = vmatprep.subr.mxu0 0.0
  %2443 = vmatpush1.msra.mxu0 0.0
  %2444 = vmatprep.subr.mxu0 0.0
  %2445 = vmatpush1.msra.mxu0 0.0
  %2446 = vmatprep.subr.mxu0 0.0
  %2447 = vmatpush1.msra.mxu0 0.0
  %2448 = vmatprep.subr.mxu0 0.0
  %2449 = vmatpush1.msra.mxu0 0.0
  %2450 = vmatprep.subr.mxu0 0.0
  %2451 = vmatpush1.msra.mxu0 0.0
  %2452 = vmatprep.subr.mxu0 0.0
  %2453 = vmatpush1.msra.mxu0 0.0
  %2454 = vmatprep.subr.mxu0 0.0
  %2455 = vmatpush1.msra.mxu0 0.0
  %2456 = vmatprep.subr.mxu0 0.0
  %2457 = vmatpush1.msra.mxu0 0.0
  %2458 = vmatprep.subr.mxu0 0.0
  %2459 = vmatpush1.msra.mxu0 0.0
  %2460 = vmatprep.subr.mxu0 0.0
  %2461 = vmatpush1.msra.mxu0 0.0
  %2462 = vmatprep.subr.mxu0 0.0
  %2463 = vmatpush1.msra.mxu0 0.0
  %2464 = vmatprep.subr.mxu0 0.0
  %2465 = vmatpush1.msra.mxu0 0.0
  %2466 = vmatprep.subr.mxu0 0.0
  %2467 = vmatpush1.msra.mxu0 0.0
  %2468 = vmatprep.subr.mxu0 0.0
  %2469 = vmatpush1.msra.mxu0 0.0
  %2470 = vmatprep.subr.mxu0 0.0
  %2471 = vmatpush1.msra.mxu0 0.0
  %2472 = vmatprep.subr.mxu0 0.0
  %2473 = vmatpush1.msra.mxu0 0.0
  %2474 = vmatprep.subr.mxu0 0.0
  %2475 = vmatpush1.msra.mxu0 0.0
  %2476 = vmatprep.subr.mxu0 0.0
  %2477 = vmatpush1.msra.mxu0 0.0
  %2478 = vmatprep.subr.mxu0 0.0
  %2479 = vmatpush1.msra.mxu0 0.0
  %2480 = vmatprep.mubr.f32.mxu0 0.0
  %2481 = vmatmul.mubr.f32.gmra.mrb[0].mxu0 %v2369
  %v2482 = vpop.f32.mrb[0].mxu0
  %v2483 = vadd.f32 %v450, %v2482
  %v2484 = vpop.f32.mrb[0].mxu0
  %2485 = vmatprep.mubr.f32.mxu0 0.0
  %2486 = vmatmul.mubr.f32.gmra.mrb[0].mxu0 %v2372
  %v2487 = vpop.f32.mrb[0].mxu0
  %v2488 = vadd.f32 %v450, %v2487
  %v2489 = vpop.f32.mrb[0].mxu0
  %2490 = vmatprep.mubr.f32.mxu0 0.0
  %2491 = vmatmul.mubr.f32.gmra.mrb[0].mxu0 %v2375
  %v2492 = vpop.f32.mrb[0].mxu0
  %v2493 = vadd.f32 %v450, %v2492
  %v2494 = vpop.f32.mrb[0].mxu0
  %2495 = vmatprep.mubr.f32.mxu0 0.0
  %2496 = vmatmul.mubr.f32.gmra.mrb[0].mxu0 %v2378
  %v2497 = vpop.f32.mrb[0].mxu0
  %v2498 = vadd.f32 %v450, %v2497
  %v2499 = vpop.f32.mrb[0].mxu0
  %2500 = vmatprep.mubr.f32.mxu0 0.0
  %2501 = vmatmul.mubr.f32.gmra.mrb[0].mxu0 %v2381
  %v2502 = vpop.f32.mrb[0].mxu0
  %v2503 = vadd.f32 %v450, %v2502
  %v2504 = vpop.f32.mrb[0].mxu0
  %2505 = vmatprep.mubr.f32.mxu0 0.0
  %2506 = vmatmul.mubr.f32.gmra.mrb[0].mxu0 %v2384
  %v2507 = vpop.f32.mrb[0].mxu0
  %v2508 = vadd.f32 %v450, %v2507
  %v2509 = vpop.f32.mrb[0].mxu0
  %2510 = vmatprep.mubr.f32.mxu0 0.0
  %2511 = vmatmul.mubr.f32.gmra.mrb[0].mxu0 %v2387
  %v2512 = vpop.f32.mrb[0].mxu0
  %v2513 = vadd.f32 %v450, %v2512
  %v2514 = vpop.f32.mrb[0].mxu0
  %2515 = vmatprep.mubr.f32.mxu0 0.0
  %2516 = vmatmul.mubr.f32.gmra.mrb[0].mxu0 %v2390
  %v2517 = vpop.f32.mrb[0].mxu0
  %v2518 = vadd.f32 %v450, %v2517
  %v2519 = vpop.f32.mrb[0].mxu0
  %2520 = vmatprep.mubr.f32.mxu0 0.0
  %2521 = vmatmul.mubr.f32.gmra.mrb[0].mxu0 %v2393
  %v2522 = vpop.f32.mrb[0].mxu0
  %v2523 = vadd.f32 %v450, %v2522
  %v2524 = vpop.f32.mrb[0].mxu0
  %2525 = vmatprep.mubr.f32.mxu0 0.0
  %2526 = vmatmul.mubr.f32.gmra.mrb[0].mxu0 %v2396
  %v2527 = vpop.f32.mrb[0].mxu0
  %v2528 = vadd.f32 %v450, %v2527
  %v2529 = vpop.f32.mrb[0].mxu0
  %2530 = vmatprep.mubr.f32.mxu0 0.0
  %2531 = vmatmul.mubr.f32.gmra.mrb[0].mxu0 %v2399
  %v2532 = vpop.f32.mrb[0].mxu0
  %v2533 = vadd.f32 %v450, %v2532
  %v2534 = vpop.f32.mrb[0].mxu0
  %2535 = vmatprep.mubr.f32.mxu0 0.0
  %2536 = vmatmul.mubr.f32.gmra.mrb[0].mxu0 %v2402
  %v2537 = vpop.f32.mrb[0].mxu0
  %v2538 = vadd.f32 %v450, %v2537
  %v2539 = vpop.f32.mrb[0].mxu0
  %2540 = vmatprep.mubr.f32.mxu0 0.0
  %2541 = vmatmul.mubr.f32.gmra.mrb[0].mxu0 %v2405
  %v2542 = vpop.f32.mrb[0].mxu0
  %v2543 = vadd.f32 %v450, %v2542
  %v2544 = vpop.f32.mrb[0].mxu0
  %2545 = vmatprep.mubr.f32.mxu0 0.0
  %2546 = vmatmul.mubr.f32.gmra.mrb[0].mxu0 %v2408
  %v2547 = vpop.f32.mrb[0].mxu0
  %v2548 = vadd.f32 %v450, %v2547
  %v2549 = vpop.f32.mrb[0].mxu0
  %2550 = vmatprep.mubr.f32.mxu0 0.0
  %2551 = vmatmul.mubr.f32.gmra.mrb[0].mxu0 %v2411
  %v2552 = vpop.f32.mrb[0].mxu0
  %v2553 = vadd.f32 %v450, %v2552
  %v2554 = vpop.f32.mrb[0].mxu0
  %2555 = vmatprep.mubr.f32.mxu0 0.0
  %2556 = vmatmul.mubr.f32.gmra.mrb[0].mxu0 %v2414
  %v2557 = vpop.f32.mrb[0].mxu0
  %v2558 = vadd.f32 %v450, %v2557
  %v2559 = vpop.f32.mrb[0].mxu0
  %2560 = vdwg.mxu0
  %v2561 = vmax.f32 %v2483, 0.0
  %v2562 = vmax.f32 %v2488, 0.0
  %v2563 = vmax.f32 %v2493, 0.0
  %v2564 = vmax.f32 %v2498, 0.0
  %v2565 = vmax.f32 %v2503, 0.0
  %v2566 = vmax.f32 %v2508, 0.0
  %v2567 = vmax.f32 %v2513, 0.0
  %v2568 = vmax.f32 %v2518, 0.0
  %v2569 = vmax.f32 %v2523, 0.0
  %v2570 = vmax.f32 %v2528, 0.0
  %v2571 = vmax.f32 %v2533, 0.0
  %v2572 = vmax.f32 %v2538, 0.0
  %v2573 = vmax.f32 %v2543, 0.0
  %v2574 = vmax.f32 %v2548, 0.0
  %v2575 = vmax.f32 %v2553, 0.0
  %v2576 = vmax.f32 %v2558, 0.0
  %2577 = vst.msk [vmem:[#allocation2 + $0x280] sm:$0xff] %vm666, %v2561
  %2578 = vst.msk [vmem:[#allocation2 + $0x288] sm:$0xff] %vm666, %v2562
  %2579 = vst.msk [vmem:[#allocation2 + $0x290] sm:$0xff] %vm666, %v2563
  %2580 = vst.msk [vmem:[#allocation2 + $0x298] sm:$0xff] %vm666, %v2564
  %2581 = vst.msk [vmem:[#allocation2 + $0x2a0] sm:$0xff] %vm666, %v2565
  %2582 = vst.msk [vmem:[#allocation2 + $0x2a8] sm:$0xff] %vm666, %v2566
  %2583 = vst.msk [vmem:[#allocation2 + $0x2b0] sm:$0xff] %vm666, %v2567
  %2584 = vst.msk [vmem:[#allocation2 + $0x2b8] sm:$0xff] %vm666, %v2568
  %2585 = vst.msk [vmem:[#allocation2 + $0x2c0] sm:$0xff] %vm666, %v2569
  %2586 = vst.msk [vmem:[#allocation2 + $0x2c8] sm:$0xff] %vm666, %v2570
  %2587 = vst.msk [vmem:[#allocation2 + $0x2d0] sm:$0xff] %vm666, %v2571
  %2588 = vst.msk [vmem:[#allocation2 + $0x2d8] sm:$0xff] %vm666, %v2572
  %2589 = vst.msk [vmem:[#allocation2 + $0x2e0] sm:$0xff] %vm666, %v2573
  %2590 = vst.msk [vmem:[#allocation2 + $0x2e8] sm:$0xff] %vm666, %v2574
  %2591 = vst.msk [vmem:[#allocation2 + $0x2f0] sm:$0xff] %vm666, %v2575
  %2592 = vst.msk [vmem:[#allocation2 + $0x2f8] sm:$0xff] %vm666, %v2576
  %2593 = vrot.lane.b32.xlu0 %v263, 122
  %v2594 = vpop.permute.xlu0 %2593
  %2595 = vrot.lane.b32.xlu0 %v218, 122
  %v2596 = vpop.permute.xlu0 %2595
  %2597 = vrot.lane.b32.xlu0 %v220, 122
  %v2598 = vpop.permute.xlu0 %2597
  %2599 = vrot.lane.b32.xlu0 %v222, 122
  %v2600 = vpop.permute.xlu0 %2599
  %2601 = vrot.lane.b32.xlu0 %v224, 122
  %v2602 = vpop.permute.xlu0 %2601
  %2603 = vrot.lane.b32.xlu0 %v226, 122
  %v2604 = vpop.permute.xlu0 %2603
  %2605 = vrot.lane.b32.xlu0 %v228, 122
  %v2606 = vpop.permute.xlu0 %2605
  %2607 = vrot.lane.b32.xlu0 %v230, 122
  %v2608 = vpop.permute.xlu0 %2607
  %2609 = vrot.lane.b32.xlu0 %v232, 122
  %v2610 = vpop.permute.xlu0 %2609
  %2611 = vrot.lane.b32.xlu0 %v234, 122
  %v2612 = vpop.permute.xlu0 %2611
  %2613 = vrot.lane.b32.xlu0 %v236, 122
  %v2614 = vpop.permute.xlu0 %2613
  %2615 = vrot.lane.b32.xlu0 %v238, 122
  %v2616 = vpop.permute.xlu0 %2615
  %2617 = vrot.lane.b32.xlu0 %v240, 122
  %v2618 = vpop.permute.xlu0 %2617
  %2619 = vrot.lane.b32.xlu0 %v242, 122
  %v2620 = vpop.permute.xlu0 %2619
  %2621 = vrot.lane.b32.xlu0 %v244, 122
  %v2622 = vpop.permute.xlu0 %2621
  %2623 = vrot.lane.b32.xlu0 %v246, 122
  %v2624 = vpop.permute.xlu0 %2623
  %2641 = vrot.lane.b32.xlu0 %v121, 123
  %v2642 = vpop.permute.xlu0 %2641
  %2643 = vrot.lane.b32.xlu0 %v126, 123
  %v2644 = vpop.permute.xlu0 %2643
  %2645 = vrot.lane.b32.xlu0 %v131, 123
  %v2646 = vpop.permute.xlu0 %2645
  %2647 = vrot.lane.b32.xlu0 %v136, 123
  %v2648 = vpop.permute.xlu0 %2647
  %2649 = vrot.lane.b32.xlu0 %v141, 123
  %v2650 = vpop.permute.xlu0 %2649
  %2651 = vrot.lane.b32.xlu0 %v146, 123
  %v2652 = vpop.permute.xlu0 %2651
  %2653 = vrot.lane.b32.xlu0 %v151, 123
  %v2654 = vpop.permute.xlu0 %2653
  %2655 = vrot.lane.b32.xlu0 %v156, 123
  %v2656 = vpop.permute.xlu0 %2655
  %2657 = vrot.lane.b32.xlu0 %v161, 123
  %v2658 = vpop.permute.xlu0 %2657
  %2659 = vrot.lane.b32.xlu0 %v166, 123
  %v2660 = vpop.permute.xlu0 %2659
  %2661 = vrot.lane.b32.xlu0 %v171, 123
  %v2662 = vpop.permute.xlu0 %2661
  %2663 = vrot.lane.b32.xlu0 %v176, 123
  %v2664 = vpop.permute.xlu0 %2663
  %2665 = vrot.lane.b32.xlu0 %v181, 123
  %v2666 = vpop.permute.xlu0 %2665
  %2667 = vrot.lane.b32.xlu0 %v186, 123
  %v2668 = vpop.permute.xlu0 %2667
  %2669 = vrot.lane.b32.xlu0 %v191, 123
  %v2670 = vpop.permute.xlu0 %2669
  %2671 = vrot.lane.b32.xlu0 %v196, 123
  %v2672 = vpop.permute.xlu0 %2671
  %2689 = vrot.lane.b32.xlu0 %v267, 124
  %v2690 = vpop.permute.xlu0 %2689
  %2691 = vrot.lane.b32.xlu0 %v269, 124
  %v2692 = vpop.permute.xlu0 %2691
  %2693 = vrot.lane.b32.xlu0 %v271, 124
  %v2694 = vpop.permute.xlu0 %2693
  %2695 = vrot.lane.b32.xlu0 %v273, 124
  %v2696 = vpop.permute.xlu0 %2695
  %2697 = vrot.lane.b32.xlu0 %v275, 124
  %v2698 = vpop.permute.xlu0 %2697
  %2699 = vrot.lane.b32.xlu0 %v277, 124
  %v2700 = vpop.permute.xlu0 %2699
  %2701 = vrot.lane.b32.xlu0 %v279, 124
  %v2702 = vpop.permute.xlu0 %2701
  %2703 = vrot.lane.b32.xlu0 %v281, 124
  %v2704 = vpop.permute.xlu0 %2703
  %2705 = vrot.lane.b32.xlu0 %v283, 124
  %v2706 = vpop.permute.xlu0 %2705
  %2707 = vrot.lane.b32.xlu0 %v285, 124
  %v2708 = vpop.permute.xlu0 %2707
  %2709 = vrot.lane.b32.xlu0 %v287, 124
  %v2710 = vpop.permute.xlu0 %2709
  %2711 = vrot.lane.b32.xlu0 %v289, 124
  %v2712 = vpop.permute.xlu0 %2711
  %2713 = vrot.lane.b32.xlu0 %v291, 124
  %v2714 = vpop.permute.xlu0 %2713
  %2715 = vrot.lane.b32.xlu0 %v293, 124
  %v2716 = vpop.permute.xlu0 %2715
  %2717 = vrot.lane.b32.xlu0 %v295, 124
  %v2718 = vpop.permute.xlu0 %2717
  %2719 = vrot.lane.b32.xlu0 %v312, 124
  %v2720 = vpop.permute.xlu0 %2719
  %v2737 = vsel %vm412, %v2594, %v2642
  %v2738 = vsel %vm412, %v2596, %v2644
  %v2739 = vsel %vm412, %v2598, %v2646
  %v2740 = vsel %vm412, %v2600, %v2648
  %v2741 = vsel %vm412, %v2602, %v2650
  %v2742 = vsel %vm412, %v2604, %v2652
  %v2743 = vsel %vm412, %v2606, %v2654
  %v2744 = vsel %vm412, %v2608, %v2656
  %v2745 = vsel %vm412, %v2610, %v2658
  %v2746 = vsel %vm412, %v2612, %v2660
  %v2747 = vsel %vm412, %v2614, %v2662
  %v2748 = vsel %vm412, %v2616, %v2664
  %v2749 = vsel %vm412, %v2618, %v2666
  %v2750 = vsel %vm412, %v2620, %v2668
  %v2751 = vsel %vm412, %v2622, %v2670
  %v2752 = vsel %vm412, %v2624, %v2672
  %v2753 = vsel %vm429, %v2737, %v2690
  %v2754 = vsel %vm429, %v2738, %v2692
  %v2755 = vsel %vm429, %v2739, %v2694
  %v2756 = vsel %vm429, %v2740, %v2696
  %v2757 = vsel %vm429, %v2741, %v2698
  %v2758 = vsel %vm429, %v2742, %v2700
  %v2759 = vsel %vm429, %v2743, %v2702
  %v2760 = vsel %vm429, %v2744, %v2704
  %v2761 = vsel %vm429, %v2745, %v2706
  %v2762 = vsel %vm429, %v2746, %v2708
  %v2763 = vsel %vm429, %v2747, %v2710
  %v2764 = vsel %vm429, %v2748, %v2712
  %v2765 = vsel %vm429, %v2749, %v2714
  %v2766 = vsel %vm429, %v2750, %v2716
  %v2767 = vsel %vm429, %v2751, %v2718
  %v2768 = vsel %vm429, %v2752, %v2720
  %v2770 = vsel %vm452, %v2753, 0
  %v2773 = vsel %vm452, %v2754, 0
  %v2776 = vsel %vm452, %v2755, 0
  %v2779 = vsel %vm452, %v2756, 0
  %v2782 = vsel %vm452, %v2757, 0
  %v2785 = vsel %vm452, %v2758, 0
  %v2788 = vsel %vm452, %v2759, 0
  %v2791 = vsel %vm452, %v2760, 0
  %v2794 = vsel %vm452, %v2761, 0
  %v2797 = vsel %vm452, %v2762, 0
  %v2800 = vsel %vm452, %v2763, 0
  %v2803 = vsel %vm452, %v2764, 0
  %v2806 = vsel %vm452, %v2765, 0
  %v2809 = vsel %vm452, %v2766, 0
  %v2812 = vsel %vm452, %v2767, 0
  %v2815 = vsel %vm452, %v2768, 0
  %2817 = vmatprep.subr.mxu0 0.0
  %2818 = vmatpush1.msra.mxu0 %v503
  %2819 = vmatprep.subr.mxu0 0.0
  %2820 = vmatpush1.msra.mxu0 0.0
  %2821 = vmatprep.subr.mxu0 0.0
  %2822 = vmatpush1.msra.mxu0 0.0
  %2823 = vmatprep.subr.mxu0 0.0
  %2824 = vmatpush1.msra.mxu0 0.0
  %2825 = vmatprep.subr.mxu0 0.0
  %2826 = vmatpush1.msra.mxu0 0.0
  %2827 = vmatprep.subr.mxu0 0.0
  %2828 = vmatpush1.msra.mxu0 0.0
  %2829 = vmatprep.subr.mxu0 0.0
  %2830 = vmatpush1.msra.mxu0 0.0
  %2831 = vmatprep.subr.mxu0 0.0
  %2832 = vmatpush1.msra.mxu0 0.0
  %2833 = vmatprep.subr.mxu0 0.0
  %2834 = vmatpush1.msra.mxu0 0.0
  %2835 = vmatprep.subr.mxu0 0.0
  %2836 = vmatpush1.msra.mxu0 0.0
  %2837 = vmatprep.subr.mxu0 0.0
  %2838 = vmatpush1.msra.mxu0 0.0
  %2839 = vmatprep.subr.mxu0 0.0
  %2840 = vmatpush1.msra.mxu0 0.0
  %2841 = vmatprep.subr.mxu0 0.0
  %2842 = vmatpush1.msra.mxu0 0.0
  %2843 = vmatprep.subr.mxu0 0.0
  %2844 = vmatpush1.msra.mxu0 0.0
  %2845 = vmatprep.subr.mxu0 0.0
  %2846 = vmatpush1.msra.mxu0 0.0
  %2847 = vmatprep.subr.mxu0 0.0
  %2848 = vmatpush1.msra.mxu0 0.0
  %2849 = vmatprep.subr.mxu0 0.0
  %2850 = vmatpush1.msra.mxu0 0.0
  %2851 = vmatprep.subr.mxu0 0.0
  %2852 = vmatpush1.msra.mxu0 0.0
  %2853 = vmatprep.subr.mxu0 0.0
  %2854 = vmatpush1.msra.mxu0 0.0
  %2855 = vmatprep.subr.mxu0 0.0
  %2856 = vmatpush1.msra.mxu0 0.0
  %2857 = vmatprep.subr.mxu0 0.0
  %2858 = vmatpush1.msra.mxu0 0.0
  %2859 = vmatprep.subr.mxu0 0.0
  %2860 = vmatpush1.msra.mxu0 0.0
  %2861 = vmatprep.subr.mxu0 0.0
  %2862 = vmatpush1.msra.mxu0 0.0
  %2863 = vmatprep.subr.mxu0 0.0
  %2864 = vmatpush1.msra.mxu0 0.0
  %2865 = vmatprep.subr.mxu0 0.0
  %2866 = vmatpush1.msra.mxu0 0.0
  %2867 = vmatprep.subr.mxu0 0.0
  %2868 = vmatpush1.msra.mxu0 0.0
  %2869 = vmatprep.subr.mxu0 0.0
  %2870 = vmatpush1.msra.mxu0 0.0
  %2871 = vmatprep.subr.mxu0 0.0
  %2872 = vmatpush1.msra.mxu0 0.0
  %2873 = vmatprep.subr.mxu0 0.0
  %2874 = vmatpush1.msra.mxu0 0.0
  %2875 = vmatprep.subr.mxu0 0.0
  %2876 = vmatpush1.msra.mxu0 0.0
  %2877 = vmatprep.subr.mxu0 0.0
  %2878 = vmatpush1.msra.mxu0 0.0
  %2879 = vmatprep.subr.mxu0 0.0
  %2880 = vmatpush1.msra.mxu0 0.0
  %2881 = vmatprep.mubr.f32.mxu0 0.0
  %2882 = vmatmul.mubr.f32.gmra.mrb[0].mxu0 %v2770
  %v2883 = vpop.f32.mrb[0].mxu0
  %v2884 = vadd.f32 %v450, %v2883
  %v2885 = vpop.f32.mrb[0].mxu0
  %2886 = vmatprep.mubr.f32.mxu0 0.0
  %2887 = vmatmul.mubr.f32.gmra.mrb[0].mxu0 %v2773
  %v2888 = vpop.f32.mrb[0].mxu0
  %v2889 = vadd.f32 %v450, %v2888
  %v2890 = vpop.f32.mrb[0].mxu0
  %2891 = vmatprep.mubr.f32.mxu0 0.0
  %2892 = vmatmul.mubr.f32.gmra.mrb[0].mxu0 %v2776
  %v2893 = vpop.f32.mrb[0].mxu0
  %v2894 = vadd.f32 %v450, %v2893
  %v2895 = vpop.f32.mrb[0].mxu0
  %2896 = vmatprep.mubr.f32.mxu0 0.0
  %2897 = vmatmul.mubr.f32.gmra.mrb[0].mxu0 %v2779
  %v2898 = vpop.f32.mrb[0].mxu0
  %v2899 = vadd.f32 %v450, %v2898
  %v2900 = vpop.f32.mrb[0].mxu0
  %2901 = vmatprep.mubr.f32.mxu0 0.0
  %2902 = vmatmul.mubr.f32.gmra.mrb[0].mxu0 %v2782
  %v2903 = vpop.f32.mrb[0].mxu0
  %v2904 = vadd.f32 %v450, %v2903
  %v2905 = vpop.f32.mrb[0].mxu0
  %2906 = vmatprep.mubr.f32.mxu0 0.0
  %2907 = vmatmul.mubr.f32.gmra.mrb[0].mxu0 %v2785
  %v2908 = vpop.f32.mrb[0].mxu0
  %v2909 = vadd.f32 %v450, %v2908
  %v2910 = vpop.f32.mrb[0].mxu0
  %2911 = vmatprep.mubr.f32.mxu0 0.0
  %2912 = vmatmul.mubr.f32.gmra.mrb[0].mxu0 %v2788
  %v2913 = vpop.f32.mrb[0].mxu0
  %v2914 = vadd.f32 %v450, %v2913
  %v2915 = vpop.f32.mrb[0].mxu0
  %2916 = vmatprep.mubr.f32.mxu0 0.0
  %2917 = vmatmul.mubr.f32.gmra.mrb[0].mxu0 %v2791
  %v2918 = vpop.f32.mrb[0].mxu0
  %v2919 = vadd.f32 %v450, %v2918
  %v2920 = vpop.f32.mrb[0].mxu0
  %2921 = vmatprep.mubr.f32.mxu0 0.0
  %2922 = vmatmul.mubr.f32.gmra.mrb[0].mxu0 %v2794
  %v2923 = vpop.f32.mrb[0].mxu0
  %v2924 = vadd.f32 %v450, %v2923
  %v2925 = vpop.f32.mrb[0].mxu0
  %2926 = vmatprep.mubr.f32.mxu0 0.0
  %2927 = vmatmul.mubr.f32.gmra.mrb[0].mxu0 %v2797
  %v2928 = vpop.f32.mrb[0].mxu0
  %v2929 = vadd.f32 %v450, %v2928
  %v2930 = vpop.f32.mrb[0].mxu0
  %2931 = vmatprep.mubr.f32.mxu0 0.0
  %2932 = vmatmul.mubr.f32.gmra.mrb[0].mxu0 %v2800
  %v2933 = vpop.f32.mrb[0].mxu0
  %v2934 = vadd.f32 %v450, %v2933
  %v2935 = vpop.f32.mrb[0].mxu0
  %2936 = vmatprep.mubr.f32.mxu0 0.0
  %2937 = vmatmul.mubr.f32.gmra.mrb[0].mxu0 %v2803
  %v2938 = vpop.f32.mrb[0].mxu0
  %v2939 = vadd.f32 %v450, %v2938
  %v2940 = vpop.f32.mrb[0].mxu0
  %2941 = vmatprep.mubr.f32.mxu0 0.0
  %2942 = vmatmul.mubr.f32.gmra.mrb[0].mxu0 %v2806
  %v2943 = vpop.f32.mrb[0].mxu0
  %v2944 = vadd.f32 %v450, %v2943
  %v2945 = vpop.f32.mrb[0].mxu0
  %2946 = vmatprep.mubr.f32.mxu0 0.0
  %2947 = vmatmul.mubr.f32.gmra.mrb[0].mxu0 %v2809
  %v2948 = vpop.f32.mrb[0].mxu0
  %v2949 = vadd.f32 %v450, %v2948
  %v2950 = vpop.f32.mrb[0].mxu0
  %2951 = vmatprep.mubr.f32.mxu0 0.0
  %2952 = vmatmul.mubr.f32.gmra.mrb[0].mxu0 %v2812
  %v2953 = vpop.f32.mrb[0].mxu0
  %v2954 = vadd.f32 %v450, %v2953
  %v2955 = vpop.f32.mrb[0].mxu0
  %2956 = vmatprep.mubr.f32.mxu0 0.0
  %2957 = vmatmul.mubr.f32.gmra.mrb[0].mxu0 %v2815
  %v2958 = vpop.f32.mrb[0].mxu0
  %v2959 = vadd.f32 %v450, %v2958
  %v2960 = vpop.f32.mrb[0].mxu0
  %2961 = vdwg.mxu0
  %v2962 = vmax.f32 %v2884, 0.0
  %v2963 = vmax.f32 %v2889, 0.0
  %v2964 = vmax.f32 %v2894, 0.0
  %v2965 = vmax.f32 %v2899, 0.0
  %v2966 = vmax.f32 %v2904, 0.0
  %v2967 = vmax.f32 %v2909, 0.0
  %v2968 = vmax.f32 %v2914, 0.0
  %v2969 = vmax.f32 %v2919, 0.0
  %v2970 = vmax.f32 %v2924, 0.0
  %v2971 = vmax.f32 %v2929, 0.0
  %v2972 = vmax.f32 %v2934, 0.0
  %v2973 = vmax.f32 %v2939, 0.0
  %v2974 = vmax.f32 %v2944, 0.0
  %v2975 = vmax.f32 %v2949, 0.0
  %v2976 = vmax.f32 %v2954, 0.0
  %v2977 = vmax.f32 %v2959, 0.0
  %2978 = vst.msk [vmem:[#allocation2 + $0x300] sm:$0xff] %vm666, %v2962
  %2979 = vst.msk [vmem:[#allocation2 + $0x308] sm:$0xff] %vm666, %v2963
  %2980 = vst.msk [vmem:[#allocation2 + $0x310] sm:$0xff] %vm666, %v2964
  %2981 = vst.msk [vmem:[#allocation2 + $0x318] sm:$0xff] %vm666, %v2965
  %2982 = vst.msk [vmem:[#allocation2 + $0x320] sm:$0xff] %vm666, %v2966
  %2983 = vst.msk [vmem:[#allocation2 + $0x328] sm:$0xff] %vm666, %v2967
  %2984 = vst.msk [vmem:[#allocation2 + $0x330] sm:$0xff] %vm666, %v2968
  %2985 = vst.msk [vmem:[#allocation2 + $0x338] sm:$0xff] %vm666, %v2969
  %2986 = vst.msk [vmem:[#allocation2 + $0x340] sm:$0xff] %vm666, %v2970
  %2987 = vst.msk [vmem:[#allocation2 + $0x348] sm:$0xff] %vm666, %v2971
  %2988 = vst.msk [vmem:[#allocation2 + $0x350] sm:$0xff] %vm666, %v2972
  %2989 = vst.msk [vmem:[#allocation2 + $0x358] sm:$0xff] %vm666, %v2973
  %2990 = vst.msk [vmem:[#allocation2 + $0x360] sm:$0xff] %vm666, %v2974
  %2991 = vst.msk [vmem:[#allocation2 + $0x368] sm:$0xff] %vm666, %v2975
  %2992 = vst.msk [vmem:[#allocation2 + $0x370] sm:$0xff] %vm666, %v2976
  %2993 = vst.msk [vmem:[#allocation2 + $0x378] sm:$0xff] %vm666, %v2977
  %2994 = vrot.lane.b32.xlu0 %v263, 121
  %v2995 = vpop.permute.xlu0 %2994
  %2996 = vrot.lane.b32.xlu0 %v218, 121
  %v2997 = vpop.permute.xlu0 %2996
  %2998 = vrot.lane.b32.xlu0 %v220, 121
  %v2999 = vpop.permute.xlu0 %2998
  %3000 = vrot.lane.b32.xlu0 %v222, 121
  %v3001 = vpop.permute.xlu0 %3000
  %3002 = vrot.lane.b32.xlu0 %v224, 121
  %v3003 = vpop.permute.xlu0 %3002
  %3004 = vrot.lane.b32.xlu0 %v226, 121
  %v3005 = vpop.permute.xlu0 %3004
  %3006 = vrot.lane.b32.xlu0 %v228, 121
  %v3007 = vpop.permute.xlu0 %3006
  %3008 = vrot.lane.b32.xlu0 %v230, 121
  %v3009 = vpop.permute.xlu0 %3008
  %3010 = vrot.lane.b32.xlu0 %v232, 121
  %v3011 = vpop.permute.xlu0 %3010
  %3012 = vrot.lane.b32.xlu0 %v234, 121
  %v3013 = vpop.permute.xlu0 %3012
  %3014 = vrot.lane.b32.xlu0 %v236, 121
  %v3015 = vpop.permute.xlu0 %3014
  %3016 = vrot.lane.b32.xlu0 %v238, 121
  %v3017 = vpop.permute.xlu0 %3016
  %3018 = vrot.lane.b32.xlu0 %v240, 121
  %v3019 = vpop.permute.xlu0 %3018
  %3020 = vrot.lane.b32.xlu0 %v242, 121
  %v3021 = vpop.permute.xlu0 %3020
  %3022 = vrot.lane.b32.xlu0 %v244, 121
  %v3023 = vpop.permute.xlu0 %3022
  %3024 = vrot.lane.b32.xlu0 %v246, 121
  %v3025 = vpop.permute.xlu0 %3024
  %3042 = vrot.lane.b32.xlu0 %v121, 122
  %v3043 = vpop.permute.xlu0 %3042
  %3044 = vrot.lane.b32.xlu0 %v126, 122
  %v3045 = vpop.permute.xlu0 %3044
  %3046 = vrot.lane.b32.xlu0 %v131, 122
  %v3047 = vpop.permute.xlu0 %3046
  %3048 = vrot.lane.b32.xlu0 %v136, 122
  %v3049 = vpop.permute.xlu0 %3048
  %3050 = vrot.lane.b32.xlu0 %v141, 122
  %v3051 = vpop.permute.xlu0 %3050
  %3052 = vrot.lane.b32.xlu0 %v146, 122
  %v3053 = vpop.permute.xlu0 %3052
  %3054 = vrot.lane.b32.xlu0 %v151, 122
  %v3055 = vpop.permute.xlu0 %3054
  %3056 = vrot.lane.b32.xlu0 %v156, 122
  %v3057 = vpop.permute.xlu0 %3056
  %3058 = vrot.lane.b32.xlu0 %v161, 122
  %v3059 = vpop.permute.xlu0 %3058
  %3060 = vrot.lane.b32.xlu0 %v166, 122
  %v3061 = vpop.permute.xlu0 %3060
  %3062 = vrot.lane.b32.xlu0 %v171, 122
  %v3063 = vpop.permute.xlu0 %3062
  %3064 = vrot.lane.b32.xlu0 %v176, 122
  %v3065 = vpop.permute.xlu0 %3064
  %3066 = vrot.lane.b32.xlu0 %v181, 122
  %v3067 = vpop.permute.xlu0 %3066
  %3068 = vrot.lane.b32.xlu0 %v186, 122
  %v3069 = vpop.permute.xlu0 %3068
  %3070 = vrot.lane.b32.xlu0 %v191, 122
  %v3071 = vpop.permute.xlu0 %3070
  %3072 = vrot.lane.b32.xlu0 %v196, 122
  %v3073 = vpop.permute.xlu0 %3072
  %3090 = vrot.lane.b32.xlu0 %v267, 123
  %v3091 = vpop.permute.xlu0 %3090
  %3092 = vrot.lane.b32.xlu0 %v269, 123
  %v3093 = vpop.permute.xlu0 %3092
  %3094 = vrot.lane.b32.xlu0 %v271, 123
  %v3095 = vpop.permute.xlu0 %3094
  %3096 = vrot.lane.b32.xlu0 %v273, 123
  %v3097 = vpop.permute.xlu0 %3096
  %3098 = vrot.lane.b32.xlu0 %v275, 123
  %v3099 = vpop.permute.xlu0 %3098
  %3100 = vrot.lane.b32.xlu0 %v277, 123
  %v3101 = vpop.permute.xlu0 %3100
  %3102 = vrot.lane.b32.xlu0 %v279, 123
  %v3103 = vpop.permute.xlu0 %3102
  %3104 = vrot.lane.b32.xlu0 %v281, 123
  %v3105 = vpop.permute.xlu0 %3104
  %3106 = vrot.lane.b32.xlu0 %v283, 123
  %v3107 = vpop.permute.xlu0 %3106
  %3108 = vrot.lane.b32.xlu0 %v285, 123
  %v3109 = vpop.permute.xlu0 %3108
  %3110 = vrot.lane.b32.xlu0 %v287, 123
  %v3111 = vpop.permute.xlu0 %3110
  %3112 = vrot.lane.b32.xlu0 %v289, 123
  %v3113 = vpop.permute.xlu0 %3112
  %3114 = vrot.lane.b32.xlu0 %v291, 123
  %v3115 = vpop.permute.xlu0 %3114
  %3116 = vrot.lane.b32.xlu0 %v293, 123
  %v3117 = vpop.permute.xlu0 %3116
  %3118 = vrot.lane.b32.xlu0 %v295, 123
  %v3119 = vpop.permute.xlu0 %3118
  %3120 = vrot.lane.b32.xlu0 %v312, 123
  %v3121 = vpop.permute.xlu0 %3120
  %v3138 = vsel %vm412, %v2995, %v3043
  %v3139 = vsel %vm412, %v2997, %v3045
  %v3140 = vsel %vm412, %v2999, %v3047
  %v3141 = vsel %vm412, %v3001, %v3049
  %v3142 = vsel %vm412, %v3003, %v3051
  %v3143 = vsel %vm412, %v3005, %v3053
  %v3144 = vsel %vm412, %v3007, %v3055
  %v3145 = vsel %vm412, %v3009, %v3057
  %v3146 = vsel %vm412, %v3011, %v3059
  %v3147 = vsel %vm412, %v3013, %v3061
  %v3148 = vsel %vm412, %v3015, %v3063
  %v3149 = vsel %vm412, %v3017, %v3065
  %v3150 = vsel %vm412, %v3019, %v3067
  %v3151 = vsel %vm412, %v3021, %v3069
  %v3152 = vsel %vm412, %v3023, %v3071
  %v3153 = vsel %vm412, %v3025, %v3073
  %v3154 = vsel %vm429, %v3138, %v3091
  %v3155 = vsel %vm429, %v3139, %v3093
  %v3156 = vsel %vm429, %v3140, %v3095
  %v3157 = vsel %vm429, %v3141, %v3097
  %v3158 = vsel %vm429, %v3142, %v3099
  %v3159 = vsel %vm429, %v3143, %v3101
  %v3160 = vsel %vm429, %v3144, %v3103
  %v3161 = vsel %vm429, %v3145, %v3105
  %v3162 = vsel %vm429, %v3146, %v3107
  %v3163 = vsel %vm429, %v3147, %v3109
  %v3164 = vsel %vm429, %v3148, %v3111
  %v3165 = vsel %vm429, %v3149, %v3113
  %v3166 = vsel %vm429, %v3150, %v3115
  %v3167 = vsel %vm429, %v3151, %v3117
  %v3168 = vsel %vm429, %v3152, %v3119
  %v3169 = vsel %vm429, %v3153, %v3121
  %v3171 = vsel %vm452, %v3154, 0
  %v3174 = vsel %vm452, %v3155, 0
  %v3177 = vsel %vm452, %v3156, 0
  %v3180 = vsel %vm452, %v3157, 0
  %v3183 = vsel %vm452, %v3158, 0
  %v3186 = vsel %vm452, %v3159, 0
  %v3189 = vsel %vm452, %v3160, 0
  %v3192 = vsel %vm452, %v3161, 0
  %v3195 = vsel %vm452, %v3162, 0
  %v3198 = vsel %vm452, %v3163, 0
  %v3201 = vsel %vm452, %v3164, 0
  %v3204 = vsel %vm452, %v3165, 0
  %v3207 = vsel %vm452, %v3166, 0
  %v3210 = vsel %vm452, %v3167, 0
  %v3213 = vsel %vm452, %v3168, 0
  %v3216 = vsel %vm452, %v3169, 0
  %3218 = vmatprep.subr.mxu0 0.0
  %3219 = vmatpush1.msra.mxu0 %v503
  %3220 = vmatprep.subr.mxu0 0.0
  %3221 = vmatpush1.msra.mxu0 0.0
  %3222 = vmatprep.subr.mxu0 0.0
  %3223 = vmatpush1.msra.mxu0 0.0
  %3224 = vmatprep.subr.mxu0 0.0
  %3225 = vmatpush1.msra.mxu0 0.0
  %3226 = vmatprep.subr.mxu0 0.0
  %3227 = vmatpush1.msra.mxu0 0.0
  %3228 = vmatprep.subr.mxu0 0.0
  %3229 = vmatpush1.msra.mxu0 0.0
  %3230 = vmatprep.subr.mxu0 0.0
  %3231 = vmatpush1.msra.mxu0 0.0
  %3232 = vmatprep.subr.mxu0 0.0
  %3233 = vmatpush1.msra.mxu0 0.0
  %3234 = vmatprep.subr.mxu0 0.0
  %3235 = vmatpush1.msra.mxu0 0.0
  %3236 = vmatprep.subr.mxu0 0.0
  %3237 = vmatpush1.msra.mxu0 0.0
  %3238 = vmatprep.subr.mxu0 0.0
  %3239 = vmatpush1.msra.mxu0 0.0
  %3240 = vmatprep.subr.mxu0 0.0
  %3241 = vmatpush1.msra.mxu0 0.0
  %3242 = vmatprep.subr.mxu0 0.0
  %3243 = vmatpush1.msra.mxu0 0.0
  %3244 = vmatprep.subr.mxu0 0.0
  %3245 = vmatpush1.msra.mxu0 0.0
  %3246 = vmatprep.subr.mxu0 0.0
  %3247 = vmatpush1.msra.mxu0 0.0
  %3248 = vmatprep.subr.mxu0 0.0
  %3249 = vmatpush1.msra.mxu0 0.0
  %3250 = vmatprep.subr.mxu0 0.0
  %3251 = vmatpush1.msra.mxu0 0.0
  %3252 = vmatprep.subr.mxu0 0.0
  %3253 = vmatpush1.msra.mxu0 0.0
  %3254 = vmatprep.subr.mxu0 0.0
  %3255 = vmatpush1.msra.mxu0 0.0
  %3256 = vmatprep.subr.mxu0 0.0
  %3257 = vmatpush1.msra.mxu0 0.0
  %3258 = vmatprep.subr.mxu0 0.0
  %3259 = vmatpush1.msra.mxu0 0.0
  %3260 = vmatprep.subr.mxu0 0.0
  %3261 = vmatpush1.msra.mxu0 0.0
  %3262 = vmatprep.subr.mxu0 0.0
  %3263 = vmatpush1.msra.mxu0 0.0
  %3264 = vmatprep.subr.mxu0 0.0
  %3265 = vmatpush1.msra.mxu0 0.0
  %3266 = vmatprep.subr.mxu0 0.0
  %3267 = vmatpush1.msra.mxu0 0.0
  %3268 = vmatprep.subr.mxu0 0.0
  %3269 = vmatpush1.msra.mxu0 0.0
  %3270 = vmatprep.subr.mxu0 0.0
  %3271 = vmatpush1.msra.mxu0 0.0
  %3272 = vmatprep.subr.mxu0 0.0
  %3273 = vmatpush1.msra.mxu0 0.0
  %3274 = vmatprep.subr.mxu0 0.0
  %3275 = vmatpush1.msra.mxu0 0.0
  %3276 = vmatprep.subr.mxu0 0.0
  %3277 = vmatpush1.msra.mxu0 0.0
  %3278 = vmatprep.subr.mxu0 0.0
  %3279 = vmatpush1.msra.mxu0 0.0
  %3280 = vmatprep.subr.mxu0 0.0
  %3281 = vmatpush1.msra.mxu0 0.0
  %3282 = vmatprep.mubr.f32.mxu0 0.0
  %3283 = vmatmul.mubr.f32.gmra.mrb[0].mxu0 %v3171
  %v3284 = vpop.f32.mrb[0].mxu0
  %v3285 = vadd.f32 %v450, %v3284
  %v3286 = vpop.f32.mrb[0].mxu0
  %3287 = vmatprep.mubr.f32.mxu0 0.0
  %3288 = vmatmul.mubr.f32.gmra.mrb[0].mxu0 %v3174
  %v3289 = vpop.f32.mrb[0].mxu0
  %v3290 = vadd.f32 %v450, %v3289
  %v3291 = vpop.f32.mrb[0].mxu0
  %3292 = vmatprep.mubr.f32.mxu0 0.0
  %3293 = vmatmul.mubr.f32.gmra.mrb[0].mxu0 %v3177
  %v3294 = vpop.f32.mrb[0].mxu0
  %v3295 = vadd.f32 %v450, %v3294
  %v3296 = vpop.f32.mrb[0].mxu0
  %3297 = vmatprep.mubr.f32.mxu0 0.0
  %3298 = vmatmul.mubr.f32.gmra.mrb[0].mxu0 %v3180
  %v3299 = vpop.f32.mrb[0].mxu0
  %v3300 = vadd.f32 %v450, %v3299
  %v3301 = vpop.f32.mrb[0].mxu0
  %3302 = vmatprep.mubr.f32.mxu0 0.0
  %3303 = vmatmul.mubr.f32.gmra.mrb[0].mxu0 %v3183
  %v3304 = vpop.f32.mrb[0].mxu0
  %v3305 = vadd.f32 %v450, %v3304
  %v3306 = vpop.f32.mrb[0].mxu0
  %3307 = vmatprep.mubr.f32.mxu0 0.0
  %3308 = vmatmul.mubr.f32.gmra.mrb[0].mxu0 %v3186
  %v3309 = vpop.f32.mrb[0].mxu0
  %v3310 = vadd.f32 %v450, %v3309
  %v3311 = vpop.f32.mrb[0].mxu0
  %3312 = vmatprep.mubr.f32.mxu0 0.0
  %3313 = vmatmul.mubr.f32.gmra.mrb[0].mxu0 %v3189
  %v3314 = vpop.f32.mrb[0].mxu0
  %v3315 = vadd.f32 %v450, %v3314
  %v3316 = vpop.f32.mrb[0].mxu0
  %3317 = vmatprep.mubr.f32.mxu0 0.0
  %3318 = vmatmul.mubr.f32.gmra.mrb[0].mxu0 %v3192
  %v3319 = vpop.f32.mrb[0].mxu0
  %v3320 = vadd.f32 %v450, %v3319
  %v3321 = vpop.f32.mrb[0].mxu0
  %3322 = vmatprep.mubr.f32.mxu0 0.0
  %3323 = vmatmul.mubr.f32.gmra.mrb[0].mxu0 %v3195
  %v3324 = vpop.f32.mrb[0].mxu0
  %v3325 = vadd.f32 %v450, %v3324
  %v3326 = vpop.f32.mrb[0].mxu0
  %3327 = vmatprep.mubr.f32.mxu0 0.0
  %3328 = vmatmul.mubr.f32.gmra.mrb[0].mxu0 %v3198
  %v3329 = vpop.f32.mrb[0].mxu0
  %v3330 = vadd.f32 %v450, %v3329
  %v3331 = vpop.f32.mrb[0].mxu0
  %3332 = vmatprep.mubr.f32.mxu0 0.0
  %3333 = vmatmul.mubr.f32.gmra.mrb[0].mxu0 %v3201
  %v3334 = vpop.f32.mrb[0].mxu0
  %v3335 = vadd.f32 %v450, %v3334
  %v3336 = vpop.f32.mrb[0].mxu0
  %3337 = vmatprep.mubr.f32.mxu0 0.0
  %3338 = vmatmul.mubr.f32.gmra.mrb[0].mxu0 %v3204
  %v3339 = vpop.f32.mrb[0].mxu0
  %v3340 = vadd.f32 %v450, %v3339
  %v3341 = vpop.f32.mrb[0].mxu0
  %3342 = vmatprep.mubr.f32.mxu0 0.0
  %3343 = vmatmul.mubr.f32.gmra.mrb[0].mxu0 %v3207
  %v3344 = vpop.f32.mrb[0].mxu0
  %v3345 = vadd.f32 %v450, %v3344
  %v3346 = vpop.f32.mrb[0].mxu0
  %3347 = vmatprep.mubr.f32.mxu0 0.0
  %3348 = vmatmul.mubr.f32.gmra.mrb[0].mxu0 %v3210
  %v3349 = vpop.f32.mrb[0].mxu0
  %v3350 = vadd.f32 %v450, %v3349
  %v3351 = vpop.f32.mrb[0].mxu0
  %3352 = vmatprep.mubr.f32.mxu0 0.0
  %3353 = vmatmul.mubr.f32.gmra.mrb[0].mxu0 %v3213
  %v3354 = vpop.f32.mrb[0].mxu0
  %v3355 = vadd.f32 %v450, %v3354
  %v3356 = vpop.f32.mrb[0].mxu0
  %3357 = vmatprep.mubr.f32.mxu0 0.0
  %3358 = vmatmul.mubr.f32.gmra.mrb[0].mxu0 %v3216
  %v3359 = vpop.f32.mrb[0].mxu0
  %v3360 = vadd.f32 %v450, %v3359
  %v3361 = vpop.f32.mrb[0].mxu0
  %3362 = vdwg.mxu0
  %v3363 = vmax.f32 %v3285, 0.0
  %v3364 = vmax.f32 %v3290, 0.0
  %v3365 = vmax.f32 %v3295, 0.0
  %v3366 = vmax.f32 %v3300, 0.0
  %v3367 = vmax.f32 %v3305, 0.0
  %v3368 = vmax.f32 %v3310, 0.0
  %v3369 = vmax.f32 %v3315, 0.0
  %v3370 = vmax.f32 %v3320, 0.0
  %v3371 = vmax.f32 %v3325, 0.0
  %v3372 = vmax.f32 %v3330, 0.0
  %v3373 = vmax.f32 %v3335, 0.0
  %v3374 = vmax.f32 %v3340, 0.0
  %v3375 = vmax.f32 %v3345, 0.0
  %v3376 = vmax.f32 %v3350, 0.0
  %v3377 = vmax.f32 %v3355, 0.0
  %v3378 = vmax.f32 %v3360, 0.0
  %3379 = vst.msk [vmem:[#allocation2 + $0x380] sm:$0xff] %vm666, %v3363
  %3380 = vst.msk [vmem:[#allocation2 + $0x388] sm:$0xff] %vm666, %v3364
  %3381 = vst.msk [vmem:[#allocation2 + $0x390] sm:$0xff] %vm666, %v3365
  %3382 = vst.msk [vmem:[#allocation2 + $0x398] sm:$0xff] %vm666, %v3366
  %3383 = vst.msk [vmem:[#allocation2 + $0x3a0] sm:$0xff] %vm666, %v3367
  %3384 = vst.msk [vmem:[#allocation2 + $0x3a8] sm:$0xff] %vm666, %v3368
  %3385 = vst.msk [vmem:[#allocation2 + $0x3b0] sm:$0xff] %vm666, %v3369
  %3386 = vst.msk [vmem:[#allocation2 + $0x3b8] sm:$0xff] %vm666, %v3370
  %3387 = vst.msk [vmem:[#allocation2 + $0x3c0] sm:$0xff] %vm666, %v3371
  %3388 = vst.msk [vmem:[#allocation2 + $0x3c8] sm:$0xff] %vm666, %v3372
  %3389 = vst.msk [vmem:[#allocation2 + $0x3d0] sm:$0xff] %vm666, %v3373
  %3390 = vst.msk [vmem:[#allocation2 + $0x3d8] sm:$0xff] %vm666, %v3374
  %3391 = vst.msk [vmem:[#allocation2 + $0x3e0] sm:$0xff] %vm666, %v3375
  %3392 = vst.msk [vmem:[#allocation2 + $0x3e8] sm:$0xff] %vm666, %v3376
  %3393 = vst.msk [vmem:[#allocation2 + $0x3f0] sm:$0xff] %vm666, %v3377
  %3394 = vst.msk [vmem:[#allocation2 + $0x3f8] sm:$0xff] %vm666, %v3378
  %v3395 = vld [vmem:[#allocation2] ss:$2 sm:$0xff]
  %s3396 = scalar_lea.vmem [#allocation2], 16
  %v3397 = vld [vmem:[%s3396] ss:$2 sm:$0xff]
  %s3398 = scalar_lea.vmem [#allocation2], 32
  %v3399 = vld [vmem:[%s3398] ss:$2 sm:$0xff]
  %s3400 = scalar_lea.vmem [#allocation2], 48
  %v3401 = vld [vmem:[%s3400] ss:$2 sm:$0xff]
  %s3402 = scalar_lea.vmem [#allocation2], 64
  %v3403 = vld [vmem:[%s3402] ss:$2 sm:$0xff]
  %s3404 = scalar_lea.vmem [#allocation2], 80
  %v3405 = vld [vmem:[%s3404] ss:$2 sm:$0xff]
  %s3406 = scalar_lea.vmem [#allocation2], 96
  %v3407 = vld [vmem:[%s3406] ss:$2 sm:$0xff]
  %s3408 = scalar_lea.vmem [#allocation2], 112
  %v3409 = vld [vmem:[%s3408] ss:$2 sm:$0xff]
  %s3410 = scalar_lea.vmem [#allocation2], 128
  %v3411 = vld [vmem:[%s3410] ss:$2 sm:$0xff]
  %s3412 = scalar_lea.vmem [#allocation2], 144
  %v3413 = vld [vmem:[%s3412] ss:$2 sm:$0xff]
  %s3414 = scalar_lea.vmem [#allocation2], 160
  %v3415 = vld [vmem:[%s3414] ss:$2 sm:$0xff]
  %s3416 = scalar_lea.vmem [#allocation2], 176
  %v3417 = vld [vmem:[%s3416] ss:$2 sm:$0xff]
  %s3418 = scalar_lea.vmem [#allocation2], 192
  %v3419 = vld [vmem:[%s3418] ss:$2 sm:$0xff]
  %s3420 = scalar_lea.vmem [#allocation2], 208
  %v3421 = vld [vmem:[%s3420] ss:$2 sm:$0xff]
  %s3422 = scalar_lea.vmem [#allocation2], 224
  %v3423 = vld [vmem:[%s3422] ss:$2 sm:$0xff]
  %s3424 = scalar_lea.vmem [#allocation2], 240
  %v3425 = vld [vmem:[%s3424] ss:$2 sm:$0xff]
  %s3426 = scalar_lea.vmem [#allocation2], 256
  %v3427 = vld [vmem:[%s3426] ss:$2 sm:$0xff]
  %s3428 = scalar_lea.vmem [#allocation2], 272
  %v3429 = vld [vmem:[%s3428] ss:$2 sm:$0xff]
  %s3430 = scalar_lea.vmem [#allocation2], 288
  %v3431 = vld [vmem:[%s3430] ss:$2 sm:$0xff]
  %s3432 = scalar_lea.vmem [#allocation2], 304
  %v3433 = vld [vmem:[%s3432] ss:$2 sm:$0xff]
  %s3434 = scalar_lea.vmem [#allocation2], 320
  %v3435 = vld [vmem:[%s3434] ss:$2 sm:$0xff]
  %s3436 = scalar_lea.vmem [#allocation2], 336
  %v3437 = vld [vmem:[%s3436] ss:$2 sm:$0xff]
  %s3438 = scalar_lea.vmem [#allocation2], 352
  %v3439 = vld [vmem:[%s3438] ss:$2 sm:$0xff]
  %s3440 = scalar_lea.vmem [#allocation2], 368
  %v3441 = vld [vmem:[%s3440] ss:$2 sm:$0xff]
  %s3442 = scalar_lea.vmem [#allocation2], 384
  %v3443 = vld [vmem:[%s3442] ss:$2 sm:$0xff]
  %s3444 = scalar_lea.vmem [#allocation2], 400
  %v3445 = vld [vmem:[%s3444] ss:$2 sm:$0xff]
  %s3446 = scalar_lea.vmem [#allocation2], 416
  %v3447 = vld [vmem:[%s3446] ss:$2 sm:$0xff]
  %s3448 = scalar_lea.vmem [#allocation2], 432
  %v3449 = vld [vmem:[%s3448] ss:$2 sm:$0xff]
  %s3450 = scalar_lea.vmem [#allocation2], 448
  %v3451 = vld [vmem:[%s3450] ss:$2 sm:$0xff]
  %s3452 = scalar_lea.vmem [#allocation2], 464
  %v3453 = vld [vmem:[%s3452] ss:$2 sm:$0xff]
  %s3454 = scalar_lea.vmem [#allocation2], 480
  %v3455 = vld [vmem:[%s3454] ss:$2 sm:$0xff]
  %s3456 = scalar_lea.vmem [#allocation2], 496
  %v3457 = vld [vmem:[%s3456] ss:$2 sm:$0xff]
  %s3458 = scalar_lea.vmem [#allocation2], 512
  %v3459 = vld [vmem:[%s3458] ss:$2 sm:$0xff]
  %s3460 = scalar_lea.vmem [#allocation2], 528
  %v3461 = vld [vmem:[%s3460] ss:$2 sm:$0xff]
  %s3462 = scalar_lea.vmem [#allocation2], 544
  %v3463 = vld [vmem:[%s3462] ss:$2 sm:$0xff]
  %s3464 = scalar_lea.vmem [#allocation2], 560
  %v3465 = vld [vmem:[%s3464] ss:$2 sm:$0xff]
  %s3466 = scalar_lea.vmem [#allocation2], 576
  %v3467 = vld [vmem:[%s3466] ss:$2 sm:$0xff]
  %s3468 = scalar_lea.vmem [#allocation2], 592
  %v3469 = vld [vmem:[%s3468] ss:$2 sm:$0xff]
  %s3470 = scalar_lea.vmem [#allocation2], 608
  %v3471 = vld [vmem:[%s3470] ss:$2 sm:$0xff]
  %s3472 = scalar_lea.vmem [#allocation2], 624
  %v3473 = vld [vmem:[%s3472] ss:$2 sm:$0xff]
  %s3474 = scalar_lea.vmem [#allocation2], 640
  %v3475 = vld [vmem:[%s3474] ss:$2 sm:$0xff]
  %s3476 = scalar_lea.vmem [#allocation2], 656
  %v3477 = vld [vmem:[%s3476] ss:$2 sm:$0xff]
  %s3478 = scalar_lea.vmem [#allocation2], 672
  %v3479 = vld [vmem:[%s3478] ss:$2 sm:$0xff]
  %s3480 = scalar_lea.vmem [#allocation2], 688
  %v3481 = vld [vmem:[%s3480] ss:$2 sm:$0xff]
  %s3482 = scalar_lea.vmem [#allocation2], 704
  %v3483 = vld [vmem:[%s3482] ss:$2 sm:$0xff]
  %s3484 = scalar_lea.vmem [#allocation2], 720
  %v3485 = vld [vmem:[%s3484] ss:$2 sm:$0xff]
  %s3486 = scalar_lea.vmem [#allocation2], 736
  %v3487 = vld [vmem:[%s3486] ss:$2 sm:$0xff]
  %s3488 = scalar_lea.vmem [#allocation2], 752
  %v3489 = vld [vmem:[%s3488] ss:$2 sm:$0xff]
  %s3490 = scalar_lea.vmem [#allocation2], 768
  %v3491 = vld [vmem:[%s3490] ss:$2 sm:$0xff]
  %s3492 = scalar_lea.vmem [#allocation2], 784
  %v3493 = vld [vmem:[%s3492] ss:$2 sm:$0xff]
  %s3494 = scalar_lea.vmem [#allocation2], 800
  %v3495 = vld [vmem:[%s3494] ss:$2 sm:$0xff]
  %s3496 = scalar_lea.vmem [#allocation2], 816
  %v3497 = vld [vmem:[%s3496] ss:$2 sm:$0xff]
  %s3498 = scalar_lea.vmem [#allocation2], 832
  %v3499 = vld [vmem:[%s3498] ss:$2 sm:$0xff]
  %s3500 = scalar_lea.vmem [#allocation2], 848
  %v3501 = vld [vmem:[%s3500] ss:$2 sm:$0xff]
  %s3502 = scalar_lea.vmem [#allocation2], 864
  %v3503 = vld [vmem:[%s3502] ss:$2 sm:$0xff]
  %s3504 = scalar_lea.vmem [#allocation2], 880
  %v3505 = vld [vmem:[%s3504] ss:$2 sm:$0xff]
  %s3506 = scalar_lea.vmem [#allocation2], 896
  %v3507 = vld [vmem:[%s3506] ss:$2 sm:$0xff]
  %s3508 = scalar_lea.vmem [#allocation2], 912
  %v3509 = vld [vmem:[%s3508] ss:$2 sm:$0xff]
  %s3510 = scalar_lea.vmem [#allocation2], 928
  %v3511 = vld [vmem:[%s3510] ss:$2 sm:$0xff]
  %s3512 = scalar_lea.vmem [#allocation2], 944
  %v3513 = vld [vmem:[%s3512] ss:$2 sm:$0xff]
  %s3514 = scalar_lea.vmem [#allocation2], 960
  %v3515 = vld [vmem:[%s3514] ss:$2 sm:$0xff]
  %s3516 = scalar_lea.vmem [#allocation2], 976
  %v3517 = vld [vmem:[%s3516] ss:$2 sm:$0xff]
  %s3518 = scalar_lea.vmem [#allocation2], 992
  %v3519 = vld [vmem:[%s3518] ss:$2 sm:$0xff]
  %s3520 = scalar_lea.vmem [#allocation2], 1008
  %v3521 = vld [vmem:[%s3520] ss:$2 sm:$0xff]
  %s3522 = scalar_lea.vmem [#allocation2], 1
  %v3523 = vld [vmem:[%s3522] ss:$2 sm:$0xff]
  %s3524 = scalar_lea.vmem [#allocation2], 17
  %v3525 = vld [vmem:[%s3524] ss:$2 sm:$0xff]
  %s3526 = scalar_lea.vmem [#allocation2], 33
  %v3527 = vld [vmem:[%s3526] ss:$2 sm:$0xff]
  %s3528 = scalar_lea.vmem [#allocation2], 49
  %v3529 = vld [vmem:[%s3528] ss:$2 sm:$0xff]
  %s3530 = scalar_lea.vmem [#allocation2], 65
  %v3531 = vld [vmem:[%s3530] ss:$2 sm:$0xff]
  %s3532 = scalar_lea.vmem [#allocation2], 81
  %v3533 = vld [vmem:[%s3532] ss:$2 sm:$0xff]
  %s3534 = scalar_lea.vmem [#allocation2], 97
  %v3535 = vld [vmem:[%s3534] ss:$2 sm:$0xff]
  %s3536 = scalar_lea.vmem [#allocation2], 113
  %v3537 = vld [vmem:[%s3536] ss:$2 sm:$0xff]
  %s3538 = scalar_lea.vmem [#allocation2], 129
  %v3539 = vld [vmem:[%s3538] ss:$2 sm:$0xff]
  %s3540 = scalar_lea.vmem [#allocation2], 145
  %v3541 = vld [vmem:[%s3540] ss:$2 sm:$0xff]
  %s3542 = scalar_lea.vmem [#allocation2], 161
  %v3543 = vld [vmem:[%s3542] ss:$2 sm:$0xff]
  %s3544 = scalar_lea.vmem [#allocation2], 177
  %v3545 = vld [vmem:[%s3544] ss:$2 sm:$0xff]
  %s3546 = scalar_lea.vmem [#allocation2], 193
  %v3547 = vld [vmem:[%s3546] ss:$2 sm:$0xff]
  %s3548 = scalar_lea.vmem [#allocation2], 209
  %v3549 = vld [vmem:[%s3548] ss:$2 sm:$0xff]
  %s3550 = scalar_lea.vmem [#allocation2], 225
  %v3551 = vld [vmem:[%s3550] ss:$2 sm:$0xff]
  %s3552 = scalar_lea.vmem [#allocation2], 241
  %v3553 = vld [vmem:[%s3552] ss:$2 sm:$0xff]
  %s3554 = scalar_lea.vmem [#allocation2], 257
  %v3555 = vld [vmem:[%s3554] ss:$2 sm:$0xff]
  %s3556 = scalar_lea.vmem [#allocation2], 273
  %v3557 = vld [vmem:[%s3556] ss:$2 sm:$0xff]
  %s3558 = scalar_lea.vmem [#allocation2], 289
  %v3559 = vld [vmem:[%s3558] ss:$2 sm:$0xff]
  %s3560 = scalar_lea.vmem [#allocation2], 305
  %v3561 = vld [vmem:[%s3560] ss:$2 sm:$0xff]
  %s3562 = scalar_lea.vmem [#allocation2], 321
  %v3563 = vld [vmem:[%s3562] ss:$2 sm:$0xff]
  %s3564 = scalar_lea.vmem [#allocation2], 337
  %v3565 = vld [vmem:[%s3564] ss:$2 sm:$0xff]
  %s3566 = scalar_lea.vmem [#allocation2], 353
  %v3567 = vld [vmem:[%s3566] ss:$2 sm:$0xff]
  %s3568 = scalar_lea.vmem [#allocation2], 369
  %v3569 = vld [vmem:[%s3568] ss:$2 sm:$0xff]
  %s3570 = scalar_lea.vmem [#allocation2], 385
  %v3571 = vld [vmem:[%s3570] ss:$2 sm:$0xff]
  %s3572 = scalar_lea.vmem [#allocation2], 401
  %v3573 = vld [vmem:[%s3572] ss:$2 sm:$0xff]
  %s3574 = scalar_lea.vmem [#allocation2], 417
  %v3575 = vld [vmem:[%s3574] ss:$2 sm:$0xff]
  %s3576 = scalar_lea.vmem [#allocation2], 433
  %v3577 = vld [vmem:[%s3576] ss:$2 sm:$0xff]
  %s3578 = scalar_lea.vmem [#allocation2], 449
  %v3579 = vld [vmem:[%s3578] ss:$2 sm:$0xff]
  %s3580 = scalar_lea.vmem [#allocation2], 465
  %v3581 = vld [vmem:[%s3580] ss:$2 sm:$0xff]
  %s3582 = scalar_lea.vmem [#allocation2], 481
  %v3583 = vld [vmem:[%s3582] ss:$2 sm:$0xff]
  %s3584 = scalar_lea.vmem [#allocation2], 497
  %v3585 = vld [vmem:[%s3584] ss:$2 sm:$0xff]
  %s3586 = scalar_lea.vmem [#allocation2], 513
  %v3587 = vld [vmem:[%s3586] ss:$2 sm:$0xff]
  %s3588 = scalar_lea.vmem [#allocation2], 529
  %v3589 = vld [vmem:[%s3588] ss:$2 sm:$0xff]
  %s3590 = scalar_lea.vmem [#allocation2], 545
  %v3591 = vld [vmem:[%s3590] ss:$2 sm:$0xff]
  %s3592 = scalar_lea.vmem [#allocation2], 561
  %v3593 = vld [vmem:[%s3592] ss:$2 sm:$0xff]
  %s3594 = scalar_lea.vmem [#allocation2], 577
  %v3595 = vld [vmem:[%s3594] ss:$2 sm:$0xff]
  %s3596 = scalar_lea.vmem [#allocation2], 593
  %v3597 = vld [vmem:[%s3596] ss:$2 sm:$0xff]
  %s3598 = scalar_lea.vmem [#allocation2], 609
  %v3599 = vld [vmem:[%s3598] ss:$2 sm:$0xff]
  %s3600 = scalar_lea.vmem [#allocation2], 625
  %v3601 = vld [vmem:[%s3600] ss:$2 sm:$0xff]
  %s3602 = scalar_lea.vmem [#allocation2], 641
  %v3603 = vld [vmem:[%s3602] ss:$2 sm:$0xff]
  %s3604 = scalar_lea.vmem [#allocation2], 657
  %v3605 = vld [vmem:[%s3604] ss:$2 sm:$0xff]
  %s3606 = scalar_lea.vmem [#allocation2], 673
  %v3607 = vld [vmem:[%s3606] ss:$2 sm:$0xff]
  %s3608 = scalar_lea.vmem [#allocation2], 689
  %v3609 = vld [vmem:[%s3608] ss:$2 sm:$0xff]
  %s3610 = scalar_lea.vmem [#allocation2], 705
  %v3611 = vld [vmem:[%s3610] ss:$2 sm:$0xff]
  %s3612 = scalar_lea.vmem [#allocation2], 721
  %v3613 = vld [vmem:[%s3612] ss:$2 sm:$0xff]
  %s3614 = scalar_lea.vmem [#allocation2], 737
  %v3615 = vld [vmem:[%s3614] ss:$2 sm:$0xff]
  %s3616 = scalar_lea.vmem [#allocation2], 753
  %v3617 = vld [vmem:[%s3616] ss:$2 sm:$0xff]
  %s3618 = scalar_lea.vmem [#allocation2], 769
  %v3619 = vld [vmem:[%s3618] ss:$2 sm:$0xff]
  %s3620 = scalar_lea.vmem [#allocation2], 785
  %v3621 = vld [vmem:[%s3620] ss:$2 sm:$0xff]
  %s3622 = scalar_lea.vmem [#allocation2], 801
  %v3623 = vld [vmem:[%s3622] ss:$2 sm:$0xff]
  %s3624 = scalar_lea.vmem [#allocation2], 817
  %v3625 = vld [vmem:[%s3624] ss:$2 sm:$0xff]
  %s3626 = scalar_lea.vmem [#allocation2], 833
  %v3627 = vld [vmem:[%s3626] ss:$2 sm:$0xff]
  %s3628 = scalar_lea.vmem [#allocation2], 849
  %v3629 = vld [vmem:[%s3628] ss:$2 sm:$0xff]
  %s3630 = scalar_lea.vmem [#allocation2], 865
  %v3631 = vld [vmem:[%s3630] ss:$2 sm:$0xff]
  %s3632 = scalar_lea.vmem [#allocation2], 881
  %v3633 = vld [vmem:[%s3632] ss:$2 sm:$0xff]
  %s3634 = scalar_lea.vmem [#allocation2], 897
  %v3635 = vld [vmem:[%s3634] ss:$2 sm:$0xff]
  %s3636 = scalar_lea.vmem [#allocation2], 913
  %v3637 = vld [vmem:[%s3636] ss:$2 sm:$0xff]
  %s3638 = scalar_lea.vmem [#allocation2], 929
  %v3639 = vld [vmem:[%s3638] ss:$2 sm:$0xff]
  %s3640 = scalar_lea.vmem [#allocation2], 945
  %v3641 = vld [vmem:[%s3640] ss:$2 sm:$0xff]
  %s3642 = scalar_lea.vmem [#allocation2], 961
  %v3643 = vld [vmem:[%s3642] ss:$2 sm:$0xff]
  %s3644 = scalar_lea.vmem [#allocation2], 977
  %v3645 = vld [vmem:[%s3644] ss:$2 sm:$0xff]
  %s3646 = scalar_lea.vmem [#allocation2], 993
  %v3647 = vld [vmem:[%s3646] ss:$2 sm:$0xff]
  %s3648 = scalar_lea.vmem [#allocation2], 1009
  %v3649 = vld [vmem:[%s3648] ss:$2 sm:$0xff]
  %v3650 = vmax.f32 %v3395, %v3523
  %v3651 = vmax.f32 %v3397, %v3525
  %v3652 = vmax.f32 %v3399, %v3527
  %v3653 = vmax.f32 %v3401, %v3529
  %v3654 = vmax.f32 %v3403, %v3531
  %v3655 = vmax.f32 %v3405, %v3533
  %v3656 = vmax.f32 %v3407, %v3535
  %v3657 = vmax.f32 %v3409, %v3537
  %v3658 = vmax.f32 %v3411, %v3539
  %v3659 = vmax.f32 %v3413, %v3541
  %v3660 = vmax.f32 %v3415, %v3543
  %v3661 = vmax.f32 %v3417, %v3545
  %v3662 = vmax.f32 %v3419, %v3547
  %v3663 = vmax.f32 %v3421, %v3549
  %v3664 = vmax.f32 %v3423, %v3551
  %v3665 = vmax.f32 %v3425, %v3553
  %v3666 = vmax.f32 %v3427, %v3555
  %v3667 = vmax.f32 %v3429, %v3557
  %v3668 = vmax.f32 %v3431, %v3559
  %v3669 = vmax.f32 %v3433, %v3561
  %v3670 = vmax.f32 %v3435, %v3563
  %v3671 = vmax.f32 %v3437, %v3565
  %v3672 = vmax.f32 %v3439, %v3567
  %v3673 = vmax.f32 %v3441, %v3569
  %v3674 = vmax.f32 %v3443, %v3571
  %v3675 = vmax.f32 %v3445, %v3573
  %v3676 = vmax.f32 %v3447, %v3575
  %v3677 = vmax.f32 %v3449, %v3577
  %v3678 = vmax.f32 %v3451, %v3579
  %v3679 = vmax.f32 %v3453, %v3581
  %v3680 = vmax.f32 %v3455, %v3583
  %v3681 = vmax.f32 %v3457, %v3585
  %v3682 = vmax.f32 %v3459, %v3587
  %v3683 = vmax.f32 %v3461, %v3589
  %v3684 = vmax.f32 %v3463, %v3591
  %v3685 = vmax.f32 %v3465, %v3593
  %v3686 = vmax.f32 %v3467, %v3595
  %v3687 = vmax.f32 %v3469, %v3597
  %v3688 = vmax.f32 %v3471, %v3599
  %v3689 = vmax.f32 %v3473, %v3601
  %v3690 = vmax.f32 %v3475, %v3603
  %v3691 = vmax.f32 %v3477, %v3605
  %v3692 = vmax.f32 %v3479, %v3607
  %v3693 = vmax.f32 %v3481, %v3609
  %v3694 = vmax.f32 %v3483, %v3611
  %v3695 = vmax.f32 %v3485, %v3613
  %v3696 = vmax.f32 %v3487, %v3615
  %v3697 = vmax.f32 %v3489, %v3617
  %v3698 = vmax.f32 %v3491, %v3619
  %v3699 = vmax.f32 %v3493, %v3621
  %v3700 = vmax.f32 %v3495, %v3623
  %v3701 = vmax.f32 %v3497, %v3625
  %v3702 = vmax.f32 %v3499, %v3627
  %v3703 = vmax.f32 %v3501, %v3629
  %v3704 = vmax.f32 %v3503, %v3631
  %v3705 = vmax.f32 %v3505, %v3633
  %v3706 = vmax.f32 %v3507, %v3635
  %v3707 = vmax.f32 %v3509, %v3637
  %v3708 = vmax.f32 %v3511, %v3639
  %v3709 = vmax.f32 %v3513, %v3641
  %v3710 = vmax.f32 %v3515, %v3643
  %v3711 = vmax.f32 %v3517, %v3645
  %v3712 = vmax.f32 %v3519, %v3647
  %v3713 = vmax.f32 %v3521, %v3649
  %v3714 = vlaneseq
  %v3715 = vshrl.u32 %v3714, 7
  %v3716 = vadd.s32 %v3715, 8
  %v3717 = vadd.s32 %v3715, 16
  %v3718 = vadd.s32 %v3715, 24
  %v3719 = vadd.s32 %v3715, 32
  %v3720 = vadd.s32 %v3715, 40
  %v3721 = vadd.s32 %v3715, 48
  %v3722 = vadd.s32 %v3715, 56
  %v3723 = vadd.s32 %v3715, 64
  %v3724 = vadd.s32 %v3715, 72
  %v3725 = vadd.s32 %v3715, 80
  %v3726 = vadd.s32 %v3715, 88
  %v3727 = vadd.s32 %v3715, 96
  %v3728 = vadd.s32 %v3715, 104
  %v3729 = vadd.s32 %v3715, 112
  %v3730 = vadd.s32 %v3715, 120
  %v3731 = vadd.s32 %v3715, 128
  %v3732 = vadd.s32 %v3715, 136
  %v3733 = vadd.s32 %v3715, 144
  %v3734 = vadd.s32 %v3715, 152
  %v3735 = vadd.s32 %v3715, 160
  %v3736 = vadd.s32 %v3715, 168
  %v3737 = vadd.s32 %v3715, 176
  %v3738 = vadd.s32 %v3715, 184
  %v3739 = vadd.s32 %v3715, 192
  %v3740 = vadd.s32 %v3715, 200
  %v3741 = vadd.s32 %v3715, 208
  %v3742 = vadd.s32 %v3715, 216
  %v3743 = vadd.s32 %v3715, 224
  %v3744 = vadd.s32 %v3715, 232
  %v3745 = vadd.s32 %v3715, 240
  %v3746 = vadd.s32 %v3715, 248
  %v3747 = vadd.s32 %v3715, 256
  %v3748 = vadd.s32 %v3715, 264
  %v3749 = vadd.s32 %v3715, 272
  %v3750 = vadd.s32 %v3715, 280
  %v3751 = vadd.s32 %v3715, 288
  %v3752 = vadd.s32 %v3715, 296
  %v3753 = vadd.s32 %v3715, 304
  %v3754 = vadd.s32 %v3715, 312
  %v3755 = vadd.s32 %v3715, 320
  %v3756 = vadd.s32 %v3715, 328
  %v3757 = vadd.s32 %v3715, 336
  %v3758 = vadd.s32 %v3715, 344
  %v3759 = vadd.s32 %v3715, 352
  %v3760 = vadd.s32 %v3715, 360
  %v3761 = vadd.s32 %v3715, 368
  %v3762 = vadd.s32 %v3715, 376
  %v3763 = vadd.s32 %v3715, 384
  %v3764 = vadd.s32 %v3715, 392
  %v3765 = vadd.s32 %v3715, 400
  %v3766 = vadd.s32 %v3715, 408
  %v3767 = vadd.s32 %v3715, 416
  %v3768 = vadd.s32 %v3715, 424
  %v3769 = vadd.s32 %v3715, 432
  %v3770 = vadd.s32 %v3715, 440
  %v3771 = vadd.s32 %v3715, 448
  %v3772 = vadd.s32 %v3715, 456
  %v3773 = vadd.s32 %v3715, 464
  %v3774 = vadd.s32 %v3715, 472
  %v3775 = vadd.s32 %v3715, 480
  %v3776 = vadd.s32 %v3715, 488
  %v3777 = vadd.s32 %v3715, 496
  %v3778 = vadd.s32 %v3715, 504
  %v3843 = vrot.slane %v3650, 7
  %v3844 = vrot.slane %v3651, 7
  %v3845 = vsel %vm215, %v3843, %v3844
  %v3846 = vrot.slane %v3652, 7
  %v3847 = vsel %vm215, %v3844, %v3846
  %v3848 = vrot.slane %v3653, 7
  %v3849 = vsel %vm215, %v3846, %v3848
  %v3850 = vrot.slane %v3654, 7
  %v3851 = vsel %vm215, %v3848, %v3850
  %v3852 = vrot.slane %v3655, 7
  %v3853 = vsel %vm215, %v3850, %v3852
  %v3854 = vrot.slane %v3656, 7
  %v3855 = vsel %vm215, %v3852, %v3854
  %v3856 = vrot.slane %v3657, 7
  %v3857 = vsel %vm215, %v3854, %v3856
  %v3858 = vrot.slane %v3658, 7
  %v3859 = vsel %vm215, %v3856, %v3858
  %v3860 = vrot.slane %v3659, 7
  %v3861 = vsel %vm215, %v3858, %v3860
  %v3862 = vrot.slane %v3660, 7
  %v3863 = vsel %vm215, %v3860, %v3862
  %v3864 = vrot.slane %v3661, 7
  %v3865 = vsel %vm215, %v3862, %v3864
  %v3866 = vrot.slane %v3662, 7
  %v3867 = vsel %vm215, %v3864, %v3866
  %v3868 = vrot.slane %v3663, 7
  %v3869 = vsel %vm215, %v3866, %v3868
  %v3870 = vrot.slane %v3664, 7
  %v3871 = vsel %vm215, %v3868, %v3870
  %v3872 = vrot.slane %v3665, 7
  %v3873 = vsel %vm215, %v3870, %v3872
  %v3874 = vrot.slane %v3666, 7
  %v3875 = vsel %vm215, %v3872, %v3874
  %v3876 = vrot.slane %v3667, 7
  %v3877 = vsel %vm215, %v3874, %v3876
  %v3878 = vrot.slane %v3668, 7
  %v3879 = vsel %vm215, %v3876, %v3878
  %v3880 = vrot.slane %v3669, 7
  %v3881 = vsel %vm215, %v3878, %v3880
  %v3882 = vrot.slane %v3670, 7
  %v3883 = vsel %vm215, %v3880, %v3882
  %v3884 = vrot.slane %v3671, 7
  %v3885 = vsel %vm215, %v3882, %v3884
  %v3886 = vrot.slane %v3672, 7
  %v3887 = vsel %vm215, %v3884, %v3886
  %v3888 = vrot.slane %v3673, 7
  %v3889 = vsel %vm215, %v3886, %v3888
  %v3890 = vrot.slane %v3674, 7
  %v3891 = vsel %vm215, %v3888, %v3890
  %v3892 = vrot.slane %v3675, 7
  %v3893 = vsel %vm215, %v3890, %v3892
  %v3894 = vrot.slane %v3676, 7
  %v3895 = vsel %vm215, %v3892, %v3894
  %v3896 = vrot.slane %v3677, 7
  %v3897 = vsel %vm215, %v3894, %v3896
  %v3898 = vrot.slane %v3678, 7
  %v3899 = vsel %vm215, %v3896, %v3898
  %v3900 = vrot.slane %v3679, 7
  %v3901 = vsel %vm215, %v3898, %v3900
  %v3902 = vrot.slane %v3680, 7
  %v3903 = vsel %vm215, %v3900, %v3902
  %v3904 = vrot.slane %v3681, 7
  %v3905 = vsel %vm215, %v3902, %v3904
  %v3906 = vrot.slane %v3682, 7
  %v3907 = vsel %vm215, %v3904, %v3906
  %v3908 = vrot.slane %v3683, 7
  %v3909 = vsel %vm215, %v3906, %v3908
  %v3910 = vrot.slane %v3684, 7
  %v3911 = vsel %vm215, %v3908, %v3910
  %v3912 = vrot.slane %v3685, 7
  %v3913 = vsel %vm215, %v3910, %v3912
  %v3914 = vrot.slane %v3686, 7
  %v3915 = vsel %vm215, %v3912, %v3914
  %v3916 = vrot.slane %v3687, 7
  %v3917 = vsel %vm215, %v3914, %v3916
  %v3918 = vrot.slane %v3688, 7
  %v3919 = vsel %vm215, %v3916, %v3918
  %v3920 = vrot.slane %v3689, 7
  %v3921 = vsel %vm215, %v3918, %v3920
  %v3922 = vrot.slane %v3690, 7
  %v3923 = vsel %vm215, %v3920, %v3922
  %v3924 = vrot.slane %v3691, 7
  %v3925 = vsel %vm215, %v3922, %v3924
  %v3926 = vrot.slane %v3692, 7
  %v3927 = vsel %vm215, %v3924, %v3926
  %v3928 = vrot.slane %v3693, 7
  %v3929 = vsel %vm215, %v3926, %v3928
  %v3930 = vrot.slane %v3694, 7
  %v3931 = vsel %vm215, %v3928, %v3930
  %v3932 = vrot.slane %v3695, 7
  %v3933 = vsel %vm215, %v3930, %v3932
  %v3934 = vrot.slane %v3696, 7
  %v3935 = vsel %vm215, %v3932, %v3934
  %v3936 = vrot.slane %v3697, 7
  %v3937 = vsel %vm215, %v3934, %v3936
  %v3938 = vrot.slane %v3698, 7
  %v3939 = vsel %vm215, %v3936, %v3938
  %v3940 = vrot.slane %v3699, 7
  %v3941 = vsel %vm215, %v3938, %v3940
  %v3942 = vrot.slane %v3700, 7
  %v3943 = vsel %vm215, %v3940, %v3942
  %v3944 = vrot.slane %v3701, 7
  %v3945 = vsel %vm215, %v3942, %v3944
  %v3946 = vrot.slane %v3702, 7
  %v3947 = vsel %vm215, %v3944, %v3946
  %v3948 = vrot.slane %v3703, 7
  %v3949 = vsel %vm215, %v3946, %v3948
  %v3950 = vrot.slane %v3704, 7
  %v3951 = vsel %vm215, %v3948, %v3950
  %v3952 = vrot.slane %v3705, 7
  %v3953 = vsel %vm215, %v3950, %v3952
  %v3954 = vrot.slane %v3706, 7
  %v3955 = vsel %vm215, %v3952, %v3954
  %v3956 = vrot.slane %v3707, 7
  %v3957 = vsel %vm215, %v3954, %v3956
  %v3958 = vrot.slane %v3708, 7
  %v3959 = vsel %vm215, %v3956, %v3958
  %v3960 = vrot.slane %v3709, 7
  %v3961 = vsel %vm215, %v3958, %v3960
  %v3962 = vrot.slane %v3710, 7
  %v3963 = vsel %vm215, %v3960, %v3962
  %v3964 = vrot.slane %v3711, 7
  %v3965 = vsel %vm215, %v3962, %v3964
  %v3966 = vrot.slane %v3712, 7
  %v3967 = vsel %vm215, %v3964, %v3966
  %v3968 = vrot.slane %v3713, 7
  %v3969 = vsel %vm215, %v3966, %v3968
  %v4034 = vsel %vm215, 0.0, %v3843
  %vm4035 = vcmp.lt.s32.totalorder %v3715, 0
  %v4036 = vsub.s32 0, %v3715
  %v4037 = vsel %vm4035, %v4036, %v3715
  %v4038 = vshrl.u32 %v4037, 6
  %v4039 = vand.u32 %v4037, 63
  %v4040 = vsub.s32 0, %v4039
  %v4041 = vsel %vm4035, %v4040, %v4039
  %vm4042 = vcmp.lt.s32.totalorder %v3716, 0
  %v4043 = vsub.s32 0, %v3716
  %v4044 = vsel %vm4042, %v4043, %v3716
  %v4045 = vshrl.u32 %v4044, 6
  %v4046 = vand.u32 %v4044, 63
  %v4047 = vsub.s32 0, %v4046
  %v4048 = vsel %vm4042, %v4047, %v4046
  %vm4049 = vcmp.lt.s32.totalorder %v3717, 0
  %v4050 = vsub.s32 0, %v3717
  %v4051 = vsel %vm4049, %v4050, %v3717
  %v4052 = vshrl.u32 %v4051, 6
  %v4053 = vand.u32 %v4051, 63
  %v4054 = vsub.s32 0, %v4053
  %v4055 = vsel %vm4049, %v4054, %v4053
  %vm4056 = vcmp.lt.s32.totalorder %v3718, 0
  %v4057 = vsub.s32 0, %v3718
  %v4058 = vsel %vm4056, %v4057, %v3718
  %v4059 = vshrl.u32 %v4058, 6
  %v4060 = vand.u32 %v4058, 63
  %v4061 = vsub.s32 0, %v4060
  %v4062 = vsel %vm4056, %v4061, %v4060
  %vm4063 = vcmp.lt.s32.totalorder %v3719, 0
  %v4064 = vsub.s32 0, %v3719
  %v4065 = vsel %vm4063, %v4064, %v3719
  %v4066 = vshrl.u32 %v4065, 6
  %v4067 = vand.u32 %v4065, 63
  %v4068 = vsub.s32 0, %v4067
  %v4069 = vsel %vm4063, %v4068, %v4067
  %vm4070 = vcmp.lt.s32.totalorder %v3720, 0
  %v4071 = vsub.s32 0, %v3720
  %v4072 = vsel %vm4070, %v4071, %v3720
  %v4073 = vshrl.u32 %v4072, 6
  %v4074 = vand.u32 %v4072, 63
  %v4075 = vsub.s32 0, %v4074
  %v4076 = vsel %vm4070, %v4075, %v4074
  %vm4077 = vcmp.lt.s32.totalorder %v3721, 0
  %v4078 = vsub.s32 0, %v3721
  %v4079 = vsel %vm4077, %v4078, %v3721
  %v4080 = vshrl.u32 %v4079, 6
  %v4081 = vand.u32 %v4079, 63
  %v4082 = vsub.s32 0, %v4081
  %v4083 = vsel %vm4077, %v4082, %v4081
  %vm4084 = vcmp.lt.s32.totalorder %v3722, 0
  %v4085 = vsub.s32 0, %v3722
  %v4086 = vsel %vm4084, %v4085, %v3722
  %v4087 = vshrl.u32 %v4086, 6
  %v4088 = vand.u32 %v4086, 63
  %v4089 = vsub.s32 0, %v4088
  %v4090 = vsel %vm4084, %v4089, %v4088
  %vm4091 = vcmp.lt.s32.totalorder %v3723, 0
  %v4092 = vsub.s32 0, %v3723
  %v4093 = vsel %vm4091, %v4092, %v3723
  %v4094 = vshrl.u32 %v4093, 6
  %v4095 = vand.u32 %v4093, 63
  %v4096 = vsub.s32 0, %v4095
  %v4097 = vsel %vm4091, %v4096, %v4095
  %vm4098 = vcmp.lt.s32.totalorder %v3724, 0
  %v4099 = vsub.s32 0, %v3724
  %v4100 = vsel %vm4098, %v4099, %v3724
  %v4101 = vshrl.u32 %v4100, 6
  %v4102 = vand.u32 %v4100, 63
  %v4103 = vsub.s32 0, %v4102
  %v4104 = vsel %vm4098, %v4103, %v4102
  %vm4105 = vcmp.lt.s32.totalorder %v3725, 0
  %v4106 = vsub.s32 0, %v3725
  %v4107 = vsel %vm4105, %v4106, %v3725
  %v4108 = vshrl.u32 %v4107, 6
  %v4109 = vand.u32 %v4107, 63
  %v4110 = vsub.s32 0, %v4109
  %v4111 = vsel %vm4105, %v4110, %v4109
  %vm4112 = vcmp.lt.s32.totalorder %v3726, 0
  %v4113 = vsub.s32 0, %v3726
  %v4114 = vsel %vm4112, %v4113, %v3726
  %v4115 = vshrl.u32 %v4114, 6
  %v4116 = vand.u32 %v4114, 63
  %v4117 = vsub.s32 0, %v4116
  %v4118 = vsel %vm4112, %v4117, %v4116
  %vm4119 = vcmp.lt.s32.totalorder %v3727, 0
  %v4120 = vsub.s32 0, %v3727
  %v4121 = vsel %vm4119, %v4120, %v3727
  %v4122 = vshrl.u32 %v4121, 6
  %v4123 = vand.u32 %v4121, 63
  %v4124 = vsub.s32 0, %v4123
  %v4125 = vsel %vm4119, %v4124, %v4123
  %vm4126 = vcmp.lt.s32.totalorder %v3728, 0
  %v4127 = vsub.s32 0, %v3728
  %v4128 = vsel %vm4126, %v4127, %v3728
  %v4129 = vshrl.u32 %v4128, 6
  %v4130 = vand.u32 %v4128, 63
  %v4131 = vsub.s32 0, %v4130
  %v4132 = vsel %vm4126, %v4131, %v4130
  %vm4133 = vcmp.lt.s32.totalorder %v3729, 0
  %v4134 = vsub.s32 0, %v3729
  %v4135 = vsel %vm4133, %v4134, %v3729
  %v4136 = vshrl.u32 %v4135, 6
  %v4137 = vand.u32 %v4135, 63
  %v4138 = vsub.s32 0, %v4137
  %v4139 = vsel %vm4133, %v4138, %v4137
  %vm4140 = vcmp.lt.s32.totalorder %v3730, 0
  %v4141 = vsub.s32 0, %v3730
  %v4142 = vsel %vm4140, %v4141, %v3730
  %v4143 = vshrl.u32 %v4142, 6
  %v4144 = vand.u32 %v4142, 63
  %v4145 = vsub.s32 0, %v4144
  %v4146 = vsel %vm4140, %v4145, %v4144
  %vm4147 = vcmp.lt.s32.totalorder %v3731, 0
  %v4148 = vsub.s32 0, %v3731
  %v4149 = vsel %vm4147, %v4148, %v3731
  %v4150 = vshrl.u32 %v4149, 6
  %v4151 = vand.u32 %v4149, 63
  %v4152 = vsub.s32 0, %v4151
  %v4153 = vsel %vm4147, %v4152, %v4151
  %vm4154 = vcmp.lt.s32.totalorder %v3732, 0
  %v4155 = vsub.s32 0, %v3732
  %v4156 = vsel %vm4154, %v4155, %v3732
  %v4157 = vshrl.u32 %v4156, 6
  %v4158 = vand.u32 %v4156, 63
  %v4159 = vsub.s32 0, %v4158
  %v4160 = vsel %vm4154, %v4159, %v4158
  %vm4161 = vcmp.lt.s32.totalorder %v3733, 0
  %v4162 = vsub.s32 0, %v3733
  %v4163 = vsel %vm4161, %v4162, %v3733
  %v4164 = vshrl.u32 %v4163, 6
  %v4165 = vand.u32 %v4163, 63
  %v4166 = vsub.s32 0, %v4165
  %v4167 = vsel %vm4161, %v4166, %v4165
  %vm4168 = vcmp.lt.s32.totalorder %v3734, 0
  %v4169 = vsub.s32 0, %v3734
  %v4170 = vsel %vm4168, %v4169, %v3734
  %v4171 = vshrl.u32 %v4170, 6
  %v4172 = vand.u32 %v4170, 63
  %v4173 = vsub.s32 0, %v4172
  %v4174 = vsel %vm4168, %v4173, %v4172
  %vm4175 = vcmp.lt.s32.totalorder %v3735, 0
  %v4176 = vsub.s32 0, %v3735
  %v4177 = vsel %vm4175, %v4176, %v3735
  %v4178 = vshrl.u32 %v4177, 6
  %v4179 = vand.u32 %v4177, 63
  %v4180 = vsub.s32 0, %v4179
  %v4181 = vsel %vm4175, %v4180, %v4179
  %vm4182 = vcmp.lt.s32.totalorder %v3736, 0
  %v4183 = vsub.s32 0, %v3736
  %v4184 = vsel %vm4182, %v4183, %v3736
  %v4185 = vshrl.u32 %v4184, 6
  %v4186 = vand.u32 %v4184, 63
  %v4187 = vsub.s32 0, %v4186
  %v4188 = vsel %vm4182, %v4187, %v4186
  %vm4189 = vcmp.lt.s32.totalorder %v3737, 0
  %v4190 = vsub.s32 0, %v3737
  %v4191 = vsel %vm4189, %v4190, %v3737
  %v4192 = vshrl.u32 %v4191, 6
  %v4193 = vand.u32 %v4191, 63
  %v4194 = vsub.s32 0, %v4193
  %v4195 = vsel %vm4189, %v4194, %v4193
  %vm4196 = vcmp.lt.s32.totalorder %v3738, 0
  %v4197 = vsub.s32 0, %v3738
  %v4198 = vsel %vm4196, %v4197, %v3738
  %v4199 = vshrl.u32 %v4198, 6
  %v4200 = vand.u32 %v4198, 63
  %v4201 = vsub.s32 0, %v4200
  %v4202 = vsel %vm4196, %v4201, %v4200
  %vm4203 = vcmp.lt.s32.totalorder %v3739, 0
  %v4204 = vsub.s32 0, %v3739
  %v4205 = vsel %vm4203, %v4204, %v3739
  %v4206 = vshrl.u32 %v4205, 6
  %v4207 = vand.u32 %v4205, 63
  %v4208 = vsub.s32 0, %v4207
  %v4209 = vsel %vm4203, %v4208, %v4207
  %vm4210 = vcmp.lt.s32.totalorder %v3740, 0
  %v4211 = vsub.s32 0, %v3740
  %v4212 = vsel %vm4210, %v4211, %v3740
  %v4213 = vshrl.u32 %v4212, 6
  %v4214 = vand.u32 %v4212, 63
  %v4215 = vsub.s32 0, %v4214
  %v4216 = vsel %vm4210, %v4215, %v4214
  %vm4217 = vcmp.lt.s32.totalorder %v3741, 0
  %v4218 = vsub.s32 0, %v3741
  %v4219 = vsel %vm4217, %v4218, %v3741
  %v4220 = vshrl.u32 %v4219, 6
  %v4221 = vand.u32 %v4219, 63
  %v4222 = vsub.s32 0, %v4221
  %v4223 = vsel %vm4217, %v4222, %v4221
  %vm4224 = vcmp.lt.s32.totalorder %v3742, 0
  %v4225 = vsub.s32 0, %v3742
  %v4226 = vsel %vm4224, %v4225, %v3742
  %v4227 = vshrl.u32 %v4226, 6
  %v4228 = vand.u32 %v4226, 63
  %v4229 = vsub.s32 0, %v4228
  %v4230 = vsel %vm4224, %v4229, %v4228
  %vm4231 = vcmp.lt.s32.totalorder %v3743, 0
  %v4232 = vsub.s32 0, %v3743
  %v4233 = vsel %vm4231, %v4232, %v3743
  %v4234 = vshrl.u32 %v4233, 6
  %v4235 = vand.u32 %v4233, 63
  %v4236 = vsub.s32 0, %v4235
  %v4237 = vsel %vm4231, %v4236, %v4235
  %vm4238 = vcmp.lt.s32.totalorder %v3744, 0
  %v4239 = vsub.s32 0, %v3744
  %v4240 = vsel %vm4238, %v4239, %v3744
  %v4241 = vshrl.u32 %v4240, 6
  %v4242 = vand.u32 %v4240, 63
  %v4243 = vsub.s32 0, %v4242
  %v4244 = vsel %vm4238, %v4243, %v4242
  %vm4245 = vcmp.lt.s32.totalorder %v3745, 0
  %v4246 = vsub.s32 0, %v3745
  %v4247 = vsel %vm4245, %v4246, %v3745
  %v4248 = vshrl.u32 %v4247, 6
  %v4249 = vand.u32 %v4247, 63
  %v4250 = vsub.s32 0, %v4249
  %v4251 = vsel %vm4245, %v4250, %v4249
  %vm4252 = vcmp.lt.s32.totalorder %v3746, 0
  %v4253 = vsub.s32 0, %v3746
  %v4254 = vsel %vm4252, %v4253, %v3746
  %v4255 = vshrl.u32 %v4254, 6
  %v4256 = vand.u32 %v4254, 63
  %v4257 = vsub.s32 0, %v4256
  %v4258 = vsel %vm4252, %v4257, %v4256
  %vm4259 = vcmp.lt.s32.totalorder %v3747, 0
  %v4260 = vsub.s32 0, %v3747
  %v4261 = vsel %vm4259, %v4260, %v3747
  %v4262 = vshrl.u32 %v4261, 6
  %v4263 = vand.u32 %v4261, 63
  %v4264 = vsub.s32 0, %v4263
  %v4265 = vsel %vm4259, %v4264, %v4263
  %vm4266 = vcmp.lt.s32.totalorder %v3748, 0
  %v4267 = vsub.s32 0, %v3748
  %v4268 = vsel %vm4266, %v4267, %v3748
  %v4269 = vshrl.u32 %v4268, 6
  %v4270 = vand.u32 %v4268, 63
  %v4271 = vsub.s32 0, %v4270
  %v4272 = vsel %vm4266, %v4271, %v4270
  %vm4273 = vcmp.lt.s32.totalorder %v3749, 0
  %v4274 = vsub.s32 0, %v3749
  %v4275 = vsel %vm4273, %v4274, %v3749
  %v4276 = vshrl.u32 %v4275, 6
  %v4277 = vand.u32 %v4275, 63
  %v4278 = vsub.s32 0, %v4277
  %v4279 = vsel %vm4273, %v4278, %v4277
  %vm4280 = vcmp.lt.s32.totalorder %v3750, 0
  %v4281 = vsub.s32 0, %v3750
  %v4282 = vsel %vm4280, %v4281, %v3750
  %v4283 = vshrl.u32 %v4282, 6
  %v4284 = vand.u32 %v4282, 63
  %v4285 = vsub.s32 0, %v4284
  %v4286 = vsel %vm4280, %v4285, %v4284
  %vm4287 = vcmp.lt.s32.totalorder %v3751, 0
  %v4288 = vsub.s32 0, %v3751
  %v4289 = vsel %vm4287, %v4288, %v3751
  %v4290 = vshrl.u32 %v4289, 6
  %v4291 = vand.u32 %v4289, 63
  %v4292 = vsub.s32 0, %v4291
  %v4293 = vsel %vm4287, %v4292, %v4291
  %vm4294 = vcmp.lt.s32.totalorder %v3752, 0
  %v4295 = vsub.s32 0, %v3752
  %v4296 = vsel %vm4294, %v4295, %v3752
  %v4297 = vshrl.u32 %v4296, 6
  %v4298 = vand.u32 %v4296, 63
  %v4299 = vsub.s32 0, %v4298
  %v4300 = vsel %vm4294, %v4299, %v4298
  %vm4301 = vcmp.lt.s32.totalorder %v3753, 0
  %v4302 = vsub.s32 0, %v3753
  %v4303 = vsel %vm4301, %v4302, %v3753
  %v4304 = vshrl.u32 %v4303, 6
  %v4305 = vand.u32 %v4303, 63
  %v4306 = vsub.s32 0, %v4305
  %v4307 = vsel %vm4301, %v4306, %v4305
  %vm4308 = vcmp.lt.s32.totalorder %v3754, 0
  %v4309 = vsub.s32 0, %v3754
  %v4310 = vsel %vm4308, %v4309, %v3754
  %v4311 = vshrl.u32 %v4310, 6
  %v4312 = vand.u32 %v4310, 63
  %v4313 = vsub.s32 0, %v4312
  %v4314 = vsel %vm4308, %v4313, %v4312
  %vm4315 = vcmp.lt.s32.totalorder %v3755, 0
  %v4316 = vsub.s32 0, %v3755
  %v4317 = vsel %vm4315, %v4316, %v3755
  %v4318 = vshrl.u32 %v4317, 6
  %v4319 = vand.u32 %v4317, 63
  %v4320 = vsub.s32 0, %v4319
  %v4321 = vsel %vm4315, %v4320, %v4319
  %vm4322 = vcmp.lt.s32.totalorder %v3756, 0
  %v4323 = vsub.s32 0, %v3756
  %v4324 = vsel %vm4322, %v4323, %v3756
  %v4325 = vshrl.u32 %v4324, 6
  %v4326 = vand.u32 %v4324, 63
  %v4327 = vsub.s32 0, %v4326
  %v4328 = vsel %vm4322, %v4327, %v4326
  %vm4329 = vcmp.lt.s32.totalorder %v3757, 0
  %v4330 = vsub.s32 0, %v3757
  %v4331 = vsel %vm4329, %v4330, %v3757
  %v4332 = vshrl.u32 %v4331, 6
  %v4333 = vand.u32 %v4331, 63
  %v4334 = vsub.s32 0, %v4333
  %v4335 = vsel %vm4329, %v4334, %v4333
  %vm4336 = vcmp.lt.s32.totalorder %v3758, 0
  %v4337 = vsub.s32 0, %v3758
  %v4338 = vsel %vm4336, %v4337, %v3758
  %v4339 = vshrl.u32 %v4338, 6
  %v4340 = vand.u32 %v4338, 63
  %v4341 = vsub.s32 0, %v4340
  %v4342 = vsel %vm4336, %v4341, %v4340
  %vm4343 = vcmp.lt.s32.totalorder %v3759, 0
  %v4344 = vsub.s32 0, %v3759
  %v4345 = vsel %vm4343, %v4344, %v3759
  %v4346 = vshrl.u32 %v4345, 6
  %v4347 = vand.u32 %v4345, 63
  %v4348 = vsub.s32 0, %v4347
  %v4349 = vsel %vm4343, %v4348, %v4347
  %vm4350 = vcmp.lt.s32.totalorder %v3760, 0
  %v4351 = vsub.s32 0, %v3760
  %v4352 = vsel %vm4350, %v4351, %v3760
  %v4353 = vshrl.u32 %v4352, 6
  %v4354 = vand.u32 %v4352, 63
  %v4355 = vsub.s32 0, %v4354
  %v4356 = vsel %vm4350, %v4355, %v4354
  %vm4357 = vcmp.lt.s32.totalorder %v3761, 0
  %v4358 = vsub.s32 0, %v3761
  %v4359 = vsel %vm4357, %v4358, %v3761
  %v4360 = vshrl.u32 %v4359, 6
  %v4361 = vand.u32 %v4359, 63
  %v4362 = vsub.s32 0, %v4361
  %v4363 = vsel %vm4357, %v4362, %v4361
  %vm4364 = vcmp.lt.s32.totalorder %v3762, 0
  %v4365 = vsub.s32 0, %v3762
  %v4366 = vsel %vm4364, %v4365, %v3762
  %v4367 = vshrl.u32 %v4366, 6
  %v4368 = vand.u32 %v4366, 63
  %v4369 = vsub.s32 0, %v4368
  %v4370 = vsel %vm4364, %v4369, %v4368
  %vm4371 = vcmp.lt.s32.totalorder %v3763, 0
  %v4372 = vsub.s32 0, %v3763
  %v4373 = vsel %vm4371, %v4372, %v3763
  %v4374 = vshrl.u32 %v4373, 6
  %v4375 = vand.u32 %v4373, 63
  %v4376 = vsub.s32 0, %v4375
  %v4377 = vsel %vm4371, %v4376, %v4375
  %vm4378 = vcmp.lt.s32.totalorder %v3764, 0
  %v4379 = vsub.s32 0, %v3764
  %v4380 = vsel %vm4378, %v4379, %v3764
  %v4381 = vshrl.u32 %v4380, 6
  %v4382 = vand.u32 %v4380, 63
  %v4383 = vsub.s32 0, %v4382
  %v4384 = vsel %vm4378, %v4383, %v4382
  %vm4385 = vcmp.lt.s32.totalorder %v3765, 0
  %v4386 = vsub.s32 0, %v3765
  %v4387 = vsel %vm4385, %v4386, %v3765
  %v4388 = vshrl.u32 %v4387, 6
  %v4389 = vand.u32 %v4387, 63
  %v4390 = vsub.s32 0, %v4389
  %v4391 = vsel %vm4385, %v4390, %v4389
  %vm4392 = vcmp.lt.s32.totalorder %v3766, 0
  %v4393 = vsub.s32 0, %v3766
  %v4394 = vsel %vm4392, %v4393, %v3766
  %v4395 = vshrl.u32 %v4394, 6
  %v4396 = vand.u32 %v4394, 63
  %v4397 = vsub.s32 0, %v4396
  %v4398 = vsel %vm4392, %v4397, %v4396
  %vm4399 = vcmp.lt.s32.totalorder %v3767, 0
  %v4400 = vsub.s32 0, %v3767
  %v4401 = vsel %vm4399, %v4400, %v3767
  %v4402 = vshrl.u32 %v4401, 6
  %v4403 = vand.u32 %v4401, 63
  %v4404 = vsub.s32 0, %v4403
  %v4405 = vsel %vm4399, %v4404, %v4403
  %vm4406 = vcmp.lt.s32.totalorder %v3768, 0
  %v4407 = vsub.s32 0, %v3768
  %v4408 = vsel %vm4406, %v4407, %v3768
  %v4409 = vshrl.u32 %v4408, 6
  %v4410 = vand.u32 %v4408, 63
  %v4411 = vsub.s32 0, %v4410
  %v4412 = vsel %vm4406, %v4411, %v4410
  %vm4413 = vcmp.lt.s32.totalorder %v3769, 0
  %v4414 = vsub.s32 0, %v3769
  %v4415 = vsel %vm4413, %v4414, %v3769
  %v4416 = vshrl.u32 %v4415, 6
  %v4417 = vand.u32 %v4415, 63
  %v4418 = vsub.s32 0, %v4417
  %v4419 = vsel %vm4413, %v4418, %v4417
  %vm4420 = vcmp.lt.s32.totalorder %v3770, 0
  %v4421 = vsub.s32 0, %v3770
  %v4422 = vsel %vm4420, %v4421, %v3770
  %v4423 = vshrl.u32 %v4422, 6
  %v4424 = vand.u32 %v4422, 63
  %v4425 = vsub.s32 0, %v4424
  %v4426 = vsel %vm4420, %v4425, %v4424
  %vm4427 = vcmp.lt.s32.totalorder %v3771, 0
  %v4428 = vsub.s32 0, %v3771
  %v4429 = vsel %vm4427, %v4428, %v3771
  %v4430 = vshrl.u32 %v4429, 6
  %v4431 = vand.u32 %v4429, 63
  %v4432 = vsub.s32 0, %v4431
  %v4433 = vsel %vm4427, %v4432, %v4431
  %vm4434 = vcmp.lt.s32.totalorder %v3772, 0
  %v4435 = vsub.s32 0, %v3772
  %v4436 = vsel %vm4434, %v4435, %v3772
  %v4437 = vshrl.u32 %v4436, 6
  %v4438 = vand.u32 %v4436, 63
  %v4439 = vsub.s32 0, %v4438
  %v4440 = vsel %vm4434, %v4439, %v4438
  %vm4441 = vcmp.lt.s32.totalorder %v3773, 0
  %v4442 = vsub.s32 0, %v3773
  %v4443 = vsel %vm4441, %v4442, %v3773
  %v4444 = vshrl.u32 %v4443, 6
  %v4445 = vand.u32 %v4443, 63
  %v4446 = vsub.s32 0, %v4445
  %v4447 = vsel %vm4441, %v4446, %v4445
  %vm4448 = vcmp.lt.s32.totalorder %v3774, 0
  %v4449 = vsub.s32 0, %v3774
  %v4450 = vsel %vm4448, %v4449, %v3774
  %v4451 = vshrl.u32 %v4450, 6
  %v4452 = vand.u32 %v4450, 63
  %v4453 = vsub.s32 0, %v4452
  %v4454 = vsel %vm4448, %v4453, %v4452
  %vm4455 = vcmp.lt.s32.totalorder %v3775, 0
  %v4456 = vsub.s32 0, %v3775
  %v4457 = vsel %vm4455, %v4456, %v3775
  %v4458 = vshrl.u32 %v4457, 6
  %v4459 = vand.u32 %v4457, 63
  %v4460 = vsub.s32 0, %v4459
  %v4461 = vsel %vm4455, %v4460, %v4459
  %vm4462 = vcmp.lt.s32.totalorder %v3776, 0
  %v4463 = vsub.s32 0, %v3776
  %v4464 = vsel %vm4462, %v4463, %v3776
  %v4465 = vshrl.u32 %v4464, 6
  %v4466 = vand.u32 %v4464, 63
  %v4467 = vsub.s32 0, %v4466
  %v4468 = vsel %vm4462, %v4467, %v4466
  %vm4469 = vcmp.lt.s32.totalorder %v3777, 0
  %v4470 = vsub.s32 0, %v3777
  %v4471 = vsel %vm4469, %v4470, %v3777
  %v4472 = vshrl.u32 %v4471, 6
  %v4473 = vand.u32 %v4471, 63
  %v4474 = vsub.s32 0, %v4473
  %v4475 = vsel %vm4469, %v4474, %v4473
  %vm4476 = vcmp.lt.s32.totalorder %v3778, 0
  %v4477 = vsub.s32 0, %v3778
  %v4478 = vsel %vm4476, %v4477, %v3778
  %v4479 = vshrl.u32 %v4478, 6
  %v4480 = vand.u32 %v4478, 63
  %v4481 = vsub.s32 0, %v4480
  %v4482 = vsel %vm4476, %v4481, %v4480
  %vm4483 = vcmp.ne.s32.totalorder %v4041, 0
  %vm4484 = vcmp.ne.s32.totalorder %v4048, 0
  %vm4485 = vcmp.ne.s32.totalorder %v4055, 0
  %vm4486 = vcmp.ne.s32.totalorder %v4062, 0
  %vm4487 = vcmp.ne.s32.totalorder %v4069, 0
  %vm4488 = vcmp.ne.s32.totalorder %v4076, 0
  %vm4489 = vcmp.ne.s32.totalorder %v4083, 0
  %vm4490 = vcmp.ne.s32.totalorder %v4090, 0
  %vm4491 = vcmp.ne.s32.totalorder %v4097, 0
  %vm4492 = vcmp.ne.s32.totalorder %v4104, 0
  %vm4493 = vcmp.ne.s32.totalorder %v4111, 0
  %vm4494 = vcmp.ne.s32.totalorder %v4118, 0
  %vm4495 = vcmp.ne.s32.totalorder %v4125, 0
  %vm4496 = vcmp.ne.s32.totalorder %v4132, 0
  %vm4497 = vcmp.ne.s32.totalorder %v4139, 0
  %vm4498 = vcmp.ne.s32.totalorder %v4146, 0
  %vm4499 = vcmp.ne.s32.totalorder %v4153, 0
  %vm4500 = vcmp.ne.s32.totalorder %v4160, 0
  %vm4501 = vcmp.ne.s32.totalorder %v4167, 0
  %vm4502 = vcmp.ne.s32.totalorder %v4174, 0
  %vm4503 = vcmp.ne.s32.totalorder %v4181, 0
  %vm4504 = vcmp.ne.s32.totalorder %v4188, 0
  %vm4505 = vcmp.ne.s32.totalorder %v4195, 0
  %vm4506 = vcmp.ne.s32.totalorder %v4202, 0
  %vm4507 = vcmp.ne.s32.totalorder %v4209, 0
  %vm4508 = vcmp.ne.s32.totalorder %v4216, 0
  %vm4509 = vcmp.ne.s32.totalorder %v4223, 0
  %vm4510 = vcmp.ne.s32.totalorder %v4230, 0
  %vm4511 = vcmp.ne.s32.totalorder %v4237, 0
  %vm4512 = vcmp.ne.s32.totalorder %v4244, 0
  %vm4513 = vcmp.ne.s32.totalorder %v4251, 0
  %vm4514 = vcmp.ne.s32.totalorder %v4258, 0
  %vm4515 = vcmp.ne.s32.totalorder %v4265, 0
  %vm4516 = vcmp.ne.s32.totalorder %v4272, 0
  %vm4517 = vcmp.ne.s32.totalorder %v4279, 0
  %vm4518 = vcmp.ne.s32.totalorder %v4286, 0
  %vm4519 = vcmp.ne.s32.totalorder %v4293, 0
  %vm4520 = vcmp.ne.s32.totalorder %v4300, 0
  %vm4521 = vcmp.ne.s32.totalorder %v4307, 0
  %vm4522 = vcmp.ne.s32.totalorder %v4314, 0
  %vm4523 = vcmp.ne.s32.totalorder %v4321, 0
  %vm4524 = vcmp.ne.s32.totalorder %v4328, 0
  %vm4525 = vcmp.ne.s32.totalorder %v4335, 0
  %vm4526 = vcmp.ne.s32.totalorder %v4342, 0
  %vm4527 = vcmp.ne.s32.totalorder %v4349, 0
  %vm4528 = vcmp.ne.s32.totalorder %v4356, 0
  %vm4529 = vcmp.ne.s32.totalorder %v4363, 0
  %vm4530 = vcmp.ne.s32.totalorder %v4370, 0
  %vm4531 = vcmp.ne.s32.totalorder %v4377, 0
  %vm4532 = vcmp.ne.s32.totalorder %v4384, 0
  %vm4533 = vcmp.ne.s32.totalorder %v4391, 0
  %vm4534 = vcmp.ne.s32.totalorder %v4398, 0
  %vm4535 = vcmp.ne.s32.totalorder %v4405, 0
  %vm4536 = vcmp.ne.s32.totalorder %v4412, 0
  %vm4537 = vcmp.ne.s32.totalorder %v4419, 0
  %vm4538 = vcmp.ne.s32.totalorder %v4426, 0
  %vm4539 = vcmp.ne.s32.totalorder %v4433, 0
  %vm4540 = vcmp.ne.s32.totalorder %v4440, 0
  %vm4541 = vcmp.ne.s32.totalorder %v4447, 0
  %vm4542 = vcmp.ne.s32.totalorder %v4454, 0
  %vm4543 = vcmp.ne.s32.totalorder %v4461, 0
  %vm4544 = vcmp.ne.s32.totalorder %v4468, 0
  %vm4545 = vcmp.ne.s32.totalorder %v4475, 0
  %vm4546 = vcmp.ne.s32.totalorder %v4482, 0
  %vm4547 = vcmp.lt.s32.totalorder %v4041, 0
  %vm4548 = vcmp.lt.s32.totalorder %v4048, 0
  %vm4549 = vcmp.lt.s32.totalorder %v4055, 0
  %vm4550 = vcmp.lt.s32.totalorder %v4062, 0
  %vm4551 = vcmp.lt.s32.totalorder %v4069, 0
  %vm4552 = vcmp.lt.s32.totalorder %v4076, 0
  %vm4553 = vcmp.lt.s32.totalorder %v4083, 0
  %vm4554 = vcmp.lt.s32.totalorder %v4090, 0
  %vm4555 = vcmp.lt.s32.totalorder %v4097, 0
  %vm4556 = vcmp.lt.s32.totalorder %v4104, 0
  %vm4557 = vcmp.lt.s32.totalorder %v4111, 0
  %vm4558 = vcmp.lt.s32.totalorder %v4118, 0
  %vm4559 = vcmp.lt.s32.totalorder %v4125, 0
  %vm4560 = vcmp.lt.s32.totalorder %v4132, 0
  %vm4561 = vcmp.lt.s32.totalorder %v4139, 0
  %vm4562 = vcmp.lt.s32.totalorder %v4146, 0
  %vm4563 = vcmp.lt.s32.totalorder %v4153, 0
  %vm4564 = vcmp.lt.s32.totalorder %v4160, 0
  %vm4565 = vcmp.lt.s32.totalorder %v4167, 0
  %vm4566 = vcmp.lt.s32.totalorder %v4174, 0
  %vm4567 = vcmp.lt.s32.totalorder %v4181, 0
  %vm4568 = vcmp.lt.s32.totalorder %v4188, 0
  %vm4569 = vcmp.lt.s32.totalorder %v4195, 0
  %vm4570 = vcmp.lt.s32.totalorder %v4202, 0
  %vm4571 = vcmp.lt.s32.totalorder %v4209, 0
  %vm4572 = vcmp.lt.s32.totalorder %v4216, 0
  %vm4573 = vcmp.lt.s32.totalorder %v4223, 0
  %vm4574 = vcmp.lt.s32.totalorder %v4230, 0
  %vm4575 = vcmp.lt.s32.totalorder %v4237, 0
  %vm4576 = vcmp.lt.s32.totalorder %v4244, 0
  %vm4577 = vcmp.lt.s32.totalorder %v4251, 0
  %vm4578 = vcmp.lt.s32.totalorder %v4258, 0
  %vm4579 = vcmp.lt.s32.totalorder %v4265, 0
  %vm4580 = vcmp.lt.s32.totalorder %v4272, 0
  %vm4581 = vcmp.lt.s32.totalorder %v4279, 0
  %vm4582 = vcmp.lt.s32.totalorder %v4286, 0
  %vm4583 = vcmp.lt.s32.totalorder %v4293, 0
  %vm4584 = vcmp.lt.s32.totalorder %v4300, 0
  %vm4585 = vcmp.lt.s32.totalorder %v4307, 0
  %vm4586 = vcmp.lt.s32.totalorder %v4314, 0
  %vm4587 = vcmp.lt.s32.totalorder %v4321, 0
  %vm4588 = vcmp.lt.s32.totalorder %v4328, 0
  %vm4589 = vcmp.lt.s32.totalorder %v4335, 0
  %vm4590 = vcmp.lt.s32.totalorder %v4342, 0
  %vm4591 = vcmp.lt.s32.totalorder %v4349, 0
  %vm4592 = vcmp.lt.s32.totalorder %v4356, 0
  %vm4593 = vcmp.lt.s32.totalorder %v4363, 0
  %vm4594 = vcmp.lt.s32.totalorder %v4370, 0
  %vm4595 = vcmp.lt.s32.totalorder %v4377, 0
  %vm4596 = vcmp.lt.s32.totalorder %v4384, 0
  %vm4597 = vcmp.lt.s32.totalorder %v4391, 0
  %vm4598 = vcmp.lt.s32.totalorder %v4398, 0
  %vm4599 = vcmp.lt.s32.totalorder %v4405, 0
  %vm4600 = vcmp.lt.s32.totalorder %v4412, 0
  %vm4601 = vcmp.lt.s32.totalorder %v4419, 0
  %vm4602 = vcmp.lt.s32.totalorder %v4426, 0
  %vm4603 = vcmp.lt.s32.totalorder %v4433, 0
  %vm4604 = vcmp.lt.s32.totalorder %v4440, 0
  %vm4605 = vcmp.lt.s32.totalorder %v4447, 0
  %vm4606 = vcmp.lt.s32.totalorder %v4454, 0
  %vm4607 = vcmp.lt.s32.totalorder %v4461, 0
  %vm4608 = vcmp.lt.s32.totalorder %v4468, 0
  %vm4609 = vcmp.lt.s32.totalorder %v4475, 0
  %vm4610 = vcmp.lt.s32.totalorder %v4482, 0
  %vm4611 = vmand %vm4547, %vm4483
  %vm4612 = vmand %vm4548, %vm4484
  %vm4613 = vmand %vm4549, %vm4485
  %vm4614 = vmand %vm4550, %vm4486
  %vm4615 = vmand %vm4551, %vm4487
  %vm4616 = vmand %vm4552, %vm4488
  %vm4617 = vmand %vm4553, %vm4489
  %vm4618 = vmand %vm4554, %vm4490
  %vm4619 = vmand %vm4555, %vm4491
  %vm4620 = vmand %vm4556, %vm4492
  %vm4621 = vmand %vm4557, %vm4493
  %vm4622 = vmand %vm4558, %vm4494
  %vm4623 = vmand %vm4559, %vm4495
  %vm4624 = vmand %vm4560, %vm4496
  %vm4625 = vmand %vm4561, %vm4497
  %vm4626 = vmand %vm4562, %vm4498
  %vm4627 = vmand %vm4563, %vm4499
  %vm4628 = vmand %vm4564, %vm4500
  %vm4629 = vmand %vm4565, %vm4501
  %vm4630 = vmand %vm4566, %vm4502
  %vm4631 = vmand %vm4567, %vm4503
  %vm4632 = vmand %vm4568, %vm4504
  %vm4633 = vmand %vm4569, %vm4505
  %vm4634 = vmand %vm4570, %vm4506
  %vm4635 = vmand %vm4571, %vm4507
  %vm4636 = vmand %vm4572, %vm4508
  %vm4637 = vmand %vm4573, %vm4509
  %vm4638 = vmand %vm4574, %vm4510
  %vm4639 = vmand %vm4575, %vm4511
  %vm4640 = vmand %vm4576, %vm4512
  %vm4641 = vmand %vm4577, %vm4513
  %vm4642 = vmand %vm4578, %vm4514
  %vm4643 = vmand %vm4579, %vm4515
  %vm4644 = vmand %vm4580, %vm4516
  %vm4645 = vmand %vm4581, %vm4517
  %vm4646 = vmand %vm4582, %vm4518
  %vm4647 = vmand %vm4583, %vm4519
  %vm4648 = vmand %vm4584, %vm4520
  %vm4649 = vmand %vm4585, %vm4521
  %vm4650 = vmand %vm4586, %vm4522
  %vm4651 = vmand %vm4587, %vm4523
  %vm4652 = vmand %vm4588, %vm4524
  %vm4653 = vmand %vm4589, %vm4525
  %vm4654 = vmand %vm4590, %vm4526
  %vm4655 = vmand %vm4591, %vm4527
  %vm4656 = vmand %vm4592, %vm4528
  %vm4657 = vmand %vm4593, %vm4529
  %vm4658 = vmand %vm4594, %vm4530
  %vm4659 = vmand %vm4595, %vm4531
  %vm4660 = vmand %vm4596, %vm4532
  %vm4661 = vmand %vm4597, %vm4533
  %vm4662 = vmand %vm4598, %vm4534
  %vm4663 = vmand %vm4599, %vm4535
  %vm4664 = vmand %vm4600, %vm4536
  %vm4665 = vmand %vm4601, %vm4537
  %vm4666 = vmand %vm4602, %vm4538
  %vm4667 = vmand %vm4603, %vm4539
  %vm4668 = vmand %vm4604, %vm4540
  %vm4669 = vmand %vm4605, %vm4541
  %vm4670 = vmand %vm4606, %vm4542
  %vm4671 = vmand %vm4607, %vm4543
  %vm4672 = vmand %vm4608, %vm4544
  %vm4673 = vmand %vm4609, %vm4545
  %vm4674 = vmand %vm4610, %vm4546
  %v4675 = vadd.s32 %v4041, 64
  %v4676 = vadd.s32 %v4048, 64
  %v4677 = vadd.s32 %v4055, 64
  %v4678 = vadd.s32 %v4062, 64
  %v4679 = vadd.s32 %v4069, 64
  %v4680 = vadd.s32 %v4076, 64
  %v4681 = vadd.s32 %v4083, 64
  %v4682 = vadd.s32 %v4090, 64
  %v4683 = vadd.s32 %v4097, 64
  %v4684 = vadd.s32 %v4104, 64
  %v4685 = vadd.s32 %v4111, 64
  %v4686 = vadd.s32 %v4118, 64
  %v4687 = vadd.s32 %v4125, 64
  %v4688 = vadd.s32 %v4132, 64
  %v4689 = vadd.s32 %v4139, 64
  %v4690 = vadd.s32 %v4146, 64
  %v4691 = vadd.s32 %v4153, 64
  %v4692 = vadd.s32 %v4160, 64
  %v4693 = vadd.s32 %v4167, 64
  %v4694 = vadd.s32 %v4174, 64
  %v4695 = vadd.s32 %v4181, 64
  %v4696 = vadd.s32 %v4188, 64
  %v4697 = vadd.s32 %v4195, 64
  %v4698 = vadd.s32 %v4202, 64
  %v4699 = vadd.s32 %v4209, 64
  %v4700 = vadd.s32 %v4216, 64
  %v4701 = vadd.s32 %v4223, 64
  %v4702 = vadd.s32 %v4230, 64
  %v4703 = vadd.s32 %v4237, 64
  %v4704 = vadd.s32 %v4244, 64
  %v4705 = vadd.s32 %v4251, 64
  %v4706 = vadd.s32 %v4258, 64
  %v4707 = vadd.s32 %v4265, 64
  %v4708 = vadd.s32 %v4272, 64
  %v4709 = vadd.s32 %v4279, 64
  %v4710 = vadd.s32 %v4286, 64
  %v4711 = vadd.s32 %v4293, 64
  %v4712 = vadd.s32 %v4300, 64
  %v4713 = vadd.s32 %v4307, 64
  %v4714 = vadd.s32 %v4314, 64
  %v4715 = vadd.s32 %v4321, 64
  %v4716 = vadd.s32 %v4328, 64
  %v4717 = vadd.s32 %v4335, 64
  %v4718 = vadd.s32 %v4342, 64
  %v4719 = vadd.s32 %v4349, 64
  %v4720 = vadd.s32 %v4356, 64
  %v4721 = vadd.s32 %v4363, 64
  %v4722 = vadd.s32 %v4370, 64
  %v4723 = vadd.s32 %v4377, 64
  %v4724 = vadd.s32 %v4384, 64
  %v4725 = vadd.s32 %v4391, 64
  %v4726 = vadd.s32 %v4398, 64
  %v4727 = vadd.s32 %v4405, 64
  %v4728 = vadd.s32 %v4412, 64
  %v4729 = vadd.s32 %v4419, 64
  %v4730 = vadd.s32 %v4426, 64
  %v4731 = vadd.s32 %v4433, 64
  %v4732 = vadd.s32 %v4440, 64
  %v4733 = vadd.s32 %v4447, 64
  %v4734 = vadd.s32 %v4454, 64
  %v4735 = vadd.s32 %v4461, 64
  %v4736 = vadd.s32 %v4468, 64
  %v4737 = vadd.s32 %v4475, 64
  %v4738 = vadd.s32 %v4482, 64
  %v4739 = vsel %vm4611, %v4675, %v4041
  %v4740 = vsel %vm4612, %v4676, %v4048
  %v4741 = vsel %vm4613, %v4677, %v4055
  %v4742 = vsel %vm4614, %v4678, %v4062
  %v4743 = vsel %vm4615, %v4679, %v4069
  %v4744 = vsel %vm4616, %v4680, %v4076
  %v4745 = vsel %vm4617, %v4681, %v4083
  %v4746 = vsel %vm4618, %v4682, %v4090
  %v4747 = vsel %vm4619, %v4683, %v4097
  %v4748 = vsel %vm4620, %v4684, %v4104
  %v4749 = vsel %vm4621, %v4685, %v4111
  %v4750 = vsel %vm4622, %v4686, %v4118
  %v4751 = vsel %vm4623, %v4687, %v4125
  %v4752 = vsel %vm4624, %v4688, %v4132
  %v4753 = vsel %vm4625, %v4689, %v4139
  %v4754 = vsel %vm4626, %v4690, %v4146
  %v4755 = vsel %vm4627, %v4691, %v4153
  %v4756 = vsel %vm4628, %v4692, %v4160
  %v4757 = vsel %vm4629, %v4693, %v4167
  %v4758 = vsel %vm4630, %v4694, %v4174
  %v4759 = vsel %vm4631, %v4695, %v4181
  %v4760 = vsel %vm4632, %v4696, %v4188
  %v4761 = vsel %vm4633, %v4697, %v4195
  %v4762 = vsel %vm4634, %v4698, %v4202
  %v4763 = vsel %vm4635, %v4699, %v4209
  %v4764 = vsel %vm4636, %v4700, %v4216
  %v4765 = vsel %vm4637, %v4701, %v4223
  %v4766 = vsel %vm4638, %v4702, %v4230
  %v4767 = vsel %vm4639, %v4703, %v4237
  %v4768 = vsel %vm4640, %v4704, %v4244
  %v4769 = vsel %vm4641, %v4705, %v4251
  %v4770 = vsel %vm4642, %v4706, %v4258
  %v4771 = vsel %vm4643, %v4707, %v4265
  %v4772 = vsel %vm4644, %v4708, %v4272
  %v4773 = vsel %vm4645, %v4709, %v4279
  %v4774 = vsel %vm4646, %v4710, %v4286
  %v4775 = vsel %vm4647, %v4711, %v4293
  %v4776 = vsel %vm4648, %v4712, %v4300
  %v4777 = vsel %vm4649, %v4713, %v4307
  %v4778 = vsel %vm4650, %v4714, %v4314
  %v4779 = vsel %vm4651, %v4715, %v4321
  %v4780 = vsel %vm4652, %v4716, %v4328
  %v4781 = vsel %vm4653, %v4717, %v4335
  %v4782 = vsel %vm4654, %v4718, %v4342
  %v4783 = vsel %vm4655, %v4719, %v4349
  %v4784 = vsel %vm4656, %v4720, %v4356
  %v4785 = vsel %vm4657, %v4721, %v4363
  %v4786 = vsel %vm4658, %v4722, %v4370
  %v4787 = vsel %vm4659, %v4723, %v4377
  %v4788 = vsel %vm4660, %v4724, %v4384
  %v4789 = vsel %vm4661, %v4725, %v4391
  %v4790 = vsel %vm4662, %v4726, %v4398
  %v4791 = vsel %vm4663, %v4727, %v4405
  %v4792 = vsel %vm4664, %v4728, %v4412
  %v4793 = vsel %vm4665, %v4729, %v4419
  %v4794 = vsel %vm4666, %v4730, %v4426
  %v4795 = vsel %vm4667, %v4731, %v4433
  %v4796 = vsel %vm4668, %v4732, %v4440
  %v4797 = vsel %vm4669, %v4733, %v4447
  %v4798 = vsel %vm4670, %v4734, %v4454
  %v4799 = vsel %vm4671, %v4735, %v4461
  %v4800 = vsel %vm4672, %v4736, %v4468
  %v4801 = vsel %vm4673, %v4737, %v4475
  %v4802 = vsel %vm4674, %v4738, %v4482
  %vm4803 = vcmp.eq.s32.totalorder %v4739, 0
  %vm4804 = vcmp.eq.s32.totalorder %v4740, 0
  %vm4805 = vcmp.eq.s32.totalorder %v4741, 0
  %vm4806 = vcmp.eq.s32.totalorder %v4742, 0
  %vm4807 = vcmp.eq.s32.totalorder %v4743, 0
  %vm4808 = vcmp.eq.s32.totalorder %v4744, 0
  %vm4809 = vcmp.eq.s32.totalorder %v4745, 0
  %vm4810 = vcmp.eq.s32.totalorder %v4746, 0
  %vm4811 = vcmp.eq.s32.totalorder %v4747, 0
  %vm4812 = vcmp.eq.s32.totalorder %v4748, 0
  %vm4813 = vcmp.eq.s32.totalorder %v4749, 0
  %vm4814 = vcmp.eq.s32.totalorder %v4750, 0
  %vm4815 = vcmp.eq.s32.totalorder %v4751, 0
  %vm4816 = vcmp.eq.s32.totalorder %v4752, 0
  %vm4817 = vcmp.eq.s32.totalorder %v4753, 0
  %vm4818 = vcmp.eq.s32.totalorder %v4754, 0
  %vm4819 = vcmp.eq.s32.totalorder %v4755, 0
  %vm4820 = vcmp.eq.s32.totalorder %v4756, 0
  %vm4821 = vcmp.eq.s32.totalorder %v4757, 0
  %vm4822 = vcmp.eq.s32.totalorder %v4758, 0
  %vm4823 = vcmp.eq.s32.totalorder %v4759, 0
  %vm4824 = vcmp.eq.s32.totalorder %v4760, 0
  %vm4825 = vcmp.eq.s32.totalorder %v4761, 0
  %vm4826 = vcmp.eq.s32.totalorder %v4762, 0
  %vm4827 = vcmp.eq.s32.totalorder %v4763, 0
  %vm4828 = vcmp.eq.s32.totalorder %v4764, 0
  %vm4829 = vcmp.eq.s32.totalorder %v4765, 0
  %vm4830 = vcmp.eq.s32.totalorder %v4766, 0
  %vm4831 = vcmp.eq.s32.totalorder %v4767, 0
  %vm4832 = vcmp.eq.s32.totalorder %v4768, 0
  %vm4833 = vcmp.eq.s32.totalorder %v4769, 0
  %vm4834 = vcmp.eq.s32.totalorder %v4770, 0
  %vm4835 = vcmp.eq.s32.totalorder %v4771, 0
  %vm4836 = vcmp.eq.s32.totalorder %v4772, 0
  %vm4837 = vcmp.eq.s32.totalorder %v4773, 0
  %vm4838 = vcmp.eq.s32.totalorder %v4774, 0
  %vm4839 = vcmp.eq.s32.totalorder %v4775, 0
  %vm4840 = vcmp.eq.s32.totalorder %v4776, 0
  %vm4841 = vcmp.eq.s32.totalorder %v4777, 0
  %vm4842 = vcmp.eq.s32.totalorder %v4778, 0
  %vm4843 = vcmp.eq.s32.totalorder %v4779, 0
  %vm4844 = vcmp.eq.s32.totalorder %v4780, 0
  %vm4845 = vcmp.eq.s32.totalorder %v4781, 0
  %vm4846 = vcmp.eq.s32.totalorder %v4782, 0
  %vm4847 = vcmp.eq.s32.totalorder %v4783, 0
  %vm4848 = vcmp.eq.s32.totalorder %v4784, 0
  %vm4849 = vcmp.eq.s32.totalorder %v4785, 0
  %vm4850 = vcmp.eq.s32.totalorder %v4786, 0
  %vm4851 = vcmp.eq.s32.totalorder %v4787, 0
  %vm4852 = vcmp.eq.s32.totalorder %v4788, 0
  %vm4853 = vcmp.eq.s32.totalorder %v4789, 0
  %vm4854 = vcmp.eq.s32.totalorder %v4790, 0
  %vm4855 = vcmp.eq.s32.totalorder %v4791, 0
  %vm4856 = vcmp.eq.s32.totalorder %v4792, 0
  %vm4857 = vcmp.eq.s32.totalorder %v4793, 0
  %vm4858 = vcmp.eq.s32.totalorder %v4794, 0
  %vm4859 = vcmp.eq.s32.totalorder %v4795, 0
  %vm4860 = vcmp.eq.s32.totalorder %v4796, 0
  %vm4861 = vcmp.eq.s32.totalorder %v4797, 0
  %vm4862 = vcmp.eq.s32.totalorder %v4798, 0
  %vm4863 = vcmp.eq.s32.totalorder %v4799, 0
  %vm4864 = vcmp.eq.s32.totalorder %v4800, 0
  %vm4865 = vcmp.eq.s32.totalorder %v4801, 0
  %vm4866 = vcmp.eq.s32.totalorder %v4802, 0
  %v4867 = vsel %vm4803, 0.0, %v4034
  %v4868 = vsel %vm4804, 0.0, %v3845
  %v4869 = vsel %vm4805, 0.0, %v3847
  %v4870 = vsel %vm4806, 0.0, %v3849
  %v4871 = vsel %vm4807, 0.0, %v3851
  %v4872 = vsel %vm4808, 0.0, %v3853
  %v4873 = vsel %vm4809, 0.0, %v3855
  %v4874 = vsel %vm4810, 0.0, %v3857
  %v4875 = vsel %vm4811, 0.0, %v3859
  %v4876 = vsel %vm4812, 0.0, %v3861
  %v4877 = vsel %vm4813, 0.0, %v3863
  %v4878 = vsel %vm4814, 0.0, %v3865
  %v4879 = vsel %vm4815, 0.0, %v3867
  %v4880 = vsel %vm4816, 0.0, %v3869
  %v4881 = vsel %vm4817, 0.0, %v3871
  %v4882 = vsel %vm4818, 0.0, %v3873
  %v4883 = vsel %vm4819, 0.0, %v3875
  %v4884 = vsel %vm4820, 0.0, %v3877
  %v4885 = vsel %vm4821, 0.0, %v3879
  %v4886 = vsel %vm4822, 0.0, %v3881
  %v4887 = vsel %vm4823, 0.0, %v3883
  %v4888 = vsel %vm4824, 0.0, %v3885
  %v4889 = vsel %vm4825, 0.0, %v3887
  %v4890 = vsel %vm4826, 0.0, %v3889
  %v4891 = vsel %vm4827, 0.0, %v3891
  %v4892 = vsel %vm4828, 0.0, %v3893
  %v4893 = vsel %vm4829, 0.0, %v3895
  %v4894 = vsel %vm4830, 0.0, %v3897
  %v4895 = vsel %vm4831, 0.0, %v3899
  %v4896 = vsel %vm4832, 0.0, %v3901
  %v4897 = vsel %vm4833, 0.0, %v3903
  %v4898 = vsel %vm4834, 0.0, %v3905
  %v4899 = vsel %vm4835, 0.0, %v3907
  %v4900 = vsel %vm4836, 0.0, %v3909
  %v4901 = vsel %vm4837, 0.0, %v3911
  %v4902 = vsel %vm4838, 0.0, %v3913
  %v4903 = vsel %vm4839, 0.0, %v3915
  %v4904 = vsel %vm4840, 0.0, %v3917
  %v4905 = vsel %vm4841, 0.0, %v3919
  %v4906 = vsel %vm4842, 0.0, %v3921
  %v4907 = vsel %vm4843, 0.0, %v3923
  %v4908 = vsel %vm4844, 0.0, %v3925
  %v4909 = vsel %vm4845, 0.0, %v3927
  %v4910 = vsel %vm4846, 0.0, %v3929
  %v4911 = vsel %vm4847, 0.0, %v3931
  %v4912 = vsel %vm4848, 0.0, %v3933
  %v4913 = vsel %vm4849, 0.0, %v3935
  %v4914 = vsel %vm4850, 0.0, %v3937
  %v4915 = vsel %vm4851, 0.0, %v3939
  %v4916 = vsel %vm4852, 0.0, %v3941
  %v4917 = vsel %vm4853, 0.0, %v3943
  %v4918 = vsel %vm4854, 0.0, %v3945
  %v4919 = vsel %vm4855, 0.0, %v3947
  %v4920 = vsel %vm4856, 0.0, %v3949
  %v4921 = vsel %vm4857, 0.0, %v3951
  %v4922 = vsel %vm4858, 0.0, %v3953
  %v4923 = vsel %vm4859, 0.0, %v3955
  %v4924 = vsel %vm4860, 0.0, %v3957
  %v4925 = vsel %vm4861, 0.0, %v3959
  %v4926 = vsel %vm4862, 0.0, %v3961
  %v4927 = vsel %vm4863, 0.0, %v3963
  %v4928 = vsel %vm4864, 0.0, %v3965
  %v4929 = vsel %vm4865, 0.0, %v3967
  %v4930 = vsel %vm4866, 0.0, %v3969
  %v4931 = vrot.slane %v3650, 1
  %v4932 = vrot.slane %v3651, 1
  %v4933 = vsel %vm264, %v4931, %v4932
  %v4934 = vrot.slane %v3652, 1
  %v4935 = vsel %vm264, %v4932, %v4934
  %v4936 = vrot.slane %v3653, 1
  %v4937 = vsel %vm264, %v4934, %v4936
  %v4938 = vrot.slane %v3654, 1
  %v4939 = vsel %vm264, %v4936, %v4938
  %v4940 = vrot.slane %v3655, 1
  %v4941 = vsel %vm264, %v4938, %v4940
  %v4942 = vrot.slane %v3656, 1
  %v4943 = vsel %vm264, %v4940, %v4942
  %v4944 = vrot.slane %v3657, 1
  %v4945 = vsel %vm264, %v4942, %v4944
  %v4946 = vrot.slane %v3658, 1
  %v4947 = vsel %vm264, %v4944, %v4946
  %v4948 = vrot.slane %v3659, 1
  %v4949 = vsel %vm264, %v4946, %v4948
  %v4950 = vrot.slane %v3660, 1
  %v4951 = vsel %vm264, %v4948, %v4950
  %v4952 = vrot.slane %v3661, 1
  %v4953 = vsel %vm264, %v4950, %v4952
  %v4954 = vrot.slane %v3662, 1
  %v4955 = vsel %vm264, %v4952, %v4954
  %v4956 = vrot.slane %v3663, 1
  %v4957 = vsel %vm264, %v4954, %v4956
  %v4958 = vrot.slane %v3664, 1
  %v4959 = vsel %vm264, %v4956, %v4958
  %v4960 = vrot.slane %v3665, 1
  %v4961 = vsel %vm264, %v4958, %v4960
  %v4962 = vrot.slane %v3666, 1
  %v4963 = vsel %vm264, %v4960, %v4962
  %v4964 = vrot.slane %v3667, 1
  %v4965 = vsel %vm264, %v4962, %v4964
  %v4966 = vrot.slane %v3668, 1
  %v4967 = vsel %vm264, %v4964, %v4966
  %v4968 = vrot.slane %v3669, 1
  %v4969 = vsel %vm264, %v4966, %v4968
  %v4970 = vrot.slane %v3670, 1
  %v4971 = vsel %vm264, %v4968, %v4970
  %v4972 = vrot.slane %v3671, 1
  %v4973 = vsel %vm264, %v4970, %v4972
  %v4974 = vrot.slane %v3672, 1
  %v4975 = vsel %vm264, %v4972, %v4974
  %v4976 = vrot.slane %v3673, 1
  %v4977 = vsel %vm264, %v4974, %v4976
  %v4978 = vrot.slane %v3674, 1
  %v4979 = vsel %vm264, %v4976, %v4978
  %v4980 = vrot.slane %v3675, 1
  %v4981 = vsel %vm264, %v4978, %v4980
  %v4982 = vrot.slane %v3676, 1
  %v4983 = vsel %vm264, %v4980, %v4982
  %v4984 = vrot.slane %v3677, 1
  %v4985 = vsel %vm264, %v4982, %v4984
  %v4986 = vrot.slane %v3678, 1
  %v4987 = vsel %vm264, %v4984, %v4986
  %v4988 = vrot.slane %v3679, 1
  %v4989 = vsel %vm264, %v4986, %v4988
  %v4990 = vrot.slane %v3680, 1
  %v4991 = vsel %vm264, %v4988, %v4990
  %v4992 = vrot.slane %v3681, 1
  %v4993 = vsel %vm264, %v4990, %v4992
  %v4994 = vrot.slane %v3682, 1
  %v4995 = vsel %vm264, %v4992, %v4994
  %v4996 = vrot.slane %v3683, 1
  %v4997 = vsel %vm264, %v4994, %v4996
  %v4998 = vrot.slane %v3684, 1
  %v4999 = vsel %vm264, %v4996, %v4998
  %v5000 = vrot.slane %v3685, 1
  %v5001 = vsel %vm264, %v4998, %v5000
  %v5002 = vrot.slane %v3686, 1
  %v5003 = vsel %vm264, %v5000, %v5002
  %v5004 = vrot.slane %v3687, 1
  %v5005 = vsel %vm264, %v5002, %v5004
  %v5006 = vrot.slane %v3688, 1
  %v5007 = vsel %vm264, %v5004, %v5006
  %v5008 = vrot.slane %v3689, 1
  %v5009 = vsel %vm264, %v5006, %v5008
  %v5010 = vrot.slane %v3690, 1
  %v5011 = vsel %vm264, %v5008, %v5010
  %v5012 = vrot.slane %v3691, 1
  %v5013 = vsel %vm264, %v5010, %v5012
  %v5014 = vrot.slane %v3692, 1
  %v5015 = vsel %vm264, %v5012, %v5014
  %v5016 = vrot.slane %v3693, 1
  %v5017 = vsel %vm264, %v5014, %v5016
  %v5018 = vrot.slane %v3694, 1
  %v5019 = vsel %vm264, %v5016, %v5018
  %v5020 = vrot.slane %v3695, 1
  %v5021 = vsel %vm264, %v5018, %v5020
  %v5022 = vrot.slane %v3696, 1
  %v5023 = vsel %vm264, %v5020, %v5022
  %v5024 = vrot.slane %v3697, 1
  %v5025 = vsel %vm264, %v5022, %v5024
  %v5026 = vrot.slane %v3698, 1
  %v5027 = vsel %vm264, %v5024, %v5026
  %v5028 = vrot.slane %v3699, 1
  %v5029 = vsel %vm264, %v5026, %v5028
  %v5030 = vrot.slane %v3700, 1
  %v5031 = vsel %vm264, %v5028, %v5030
  %v5032 = vrot.slane %v3701, 1
  %v5033 = vsel %vm264, %v5030, %v5032
  %v5034 = vrot.slane %v3702, 1
  %v5035 = vsel %vm264, %v5032, %v5034
  %v5036 = vrot.slane %v3703, 1
  %v5037 = vsel %vm264, %v5034, %v5036
  %v5038 = vrot.slane %v3704, 1
  %v5039 = vsel %vm264, %v5036, %v5038
  %v5040 = vrot.slane %v3705, 1
  %v5041 = vsel %vm264, %v5038, %v5040
  %v5042 = vrot.slane %v3706, 1
  %v5043 = vsel %vm264, %v5040, %v5042
  %v5044 = vrot.slane %v3707, 1
  %v5045 = vsel %vm264, %v5042, %v5044
  %v5046 = vrot.slane %v3708, 1
  %v5047 = vsel %vm264, %v5044, %v5046
  %v5048 = vrot.slane %v3709, 1
  %v5049 = vsel %vm264, %v5046, %v5048
  %v5050 = vrot.slane %v3710, 1
  %v5051 = vsel %vm264, %v5048, %v5050
  %v5052 = vrot.slane %v3711, 1
  %v5053 = vsel %vm264, %v5050, %v5052
  %v5054 = vrot.slane %v3712, 1
  %v5055 = vsel %vm264, %v5052, %v5054
  %v5056 = vrot.slane %v3713, 1
  %v5057 = vsel %vm264, %v5054, %v5056
  %v5122 = vsel %vm264, %v5056, 0.0
  %vm5123 = vcmp.eq.s32.totalorder %v4739, 63
  %vm5124 = vcmp.eq.s32.totalorder %v4740, 63
  %vm5125 = vcmp.eq.s32.totalorder %v4741, 63
  %vm5126 = vcmp.eq.s32.totalorder %v4742, 63
  %vm5127 = vcmp.eq.s32.totalorder %v4743, 63
  %vm5128 = vcmp.eq.s32.totalorder %v4744, 63
  %vm5129 = vcmp.eq.s32.totalorder %v4745, 63
  %vm5130 = vcmp.eq.s32.totalorder %v4746, 63
  %vm5131 = vcmp.eq.s32.totalorder %v4747, 63
  %vm5132 = vcmp.eq.s32.totalorder %v4748, 63
  %vm5133 = vcmp.eq.s32.totalorder %v4749, 63
  %vm5134 = vcmp.eq.s32.totalorder %v4750, 63
  %vm5135 = vcmp.eq.s32.totalorder %v4751, 63
  %vm5136 = vcmp.eq.s32.totalorder %v4752, 63
  %vm5137 = vcmp.eq.s32.totalorder %v4753, 63
  %vm5138 = vcmp.eq.s32.totalorder %v4754, 63
  %vm5139 = vcmp.eq.s32.totalorder %v4755, 63
  %vm5140 = vcmp.eq.s32.totalorder %v4756, 63
  %vm5141 = vcmp.eq.s32.totalorder %v4757, 63
  %vm5142 = vcmp.eq.s32.totalorder %v4758, 63
  %vm5143 = vcmp.eq.s32.totalorder %v4759, 63
  %vm5144 = vcmp.eq.s32.totalorder %v4760, 63
  %vm5145 = vcmp.eq.s32.totalorder %v4761, 63
  %vm5146 = vcmp.eq.s32.totalorder %v4762, 63
  %vm5147 = vcmp.eq.s32.totalorder %v4763, 63
  %vm5148 = vcmp.eq.s32.totalorder %v4764, 63
  %vm5149 = vcmp.eq.s32.totalorder %v4765, 63
  %vm5150 = vcmp.eq.s32.totalorder %v4766, 63
  %vm5151 = vcmp.eq.s32.totalorder %v4767, 63
  %vm5152 = vcmp.eq.s32.totalorder %v4768, 63
  %vm5153 = vcmp.eq.s32.totalorder %v4769, 63
  %vm5154 = vcmp.eq.s32.totalorder %v4770, 63
  %vm5155 = vcmp.eq.s32.totalorder %v4771, 63
  %vm5156 = vcmp.eq.s32.totalorder %v4772, 63
  %vm5157 = vcmp.eq.s32.totalorder %v4773, 63
  %vm5158 = vcmp.eq.s32.totalorder %v4774, 63
  %vm5159 = vcmp.eq.s32.totalorder %v4775, 63
  %vm5160 = vcmp.eq.s32.totalorder %v4776, 63
  %vm5161 = vcmp.eq.s32.totalorder %v4777, 63
  %vm5162 = vcmp.eq.s32.totalorder %v4778, 63
  %vm5163 = vcmp.eq.s32.totalorder %v4779, 63
  %vm5164 = vcmp.eq.s32.totalorder %v4780, 63
  %vm5165 = vcmp.eq.s32.totalorder %v4781, 63
  %vm5166 = vcmp.eq.s32.totalorder %v4782, 63
  %vm5167 = vcmp.eq.s32.totalorder %v4783, 63
  %vm5168 = vcmp.eq.s32.totalorder %v4784, 63
  %vm5169 = vcmp.eq.s32.totalorder %v4785, 63
  %vm5170 = vcmp.eq.s32.totalorder %v4786, 63
  %vm5171 = vcmp.eq.s32.totalorder %v4787, 63
  %vm5172 = vcmp.eq.s32.totalorder %v4788, 63
  %vm5173 = vcmp.eq.s32.totalorder %v4789, 63
  %vm5174 = vcmp.eq.s32.totalorder %v4790, 63
  %vm5175 = vcmp.eq.s32.totalorder %v4791, 63
  %vm5176 = vcmp.eq.s32.totalorder %v4792, 63
  %vm5177 = vcmp.eq.s32.totalorder %v4793, 63
  %vm5178 = vcmp.eq.s32.totalorder %v4794, 63
  %vm5179 = vcmp.eq.s32.totalorder %v4795, 63
  %vm5180 = vcmp.eq.s32.totalorder %v4796, 63
  %vm5181 = vcmp.eq.s32.totalorder %v4797, 63
  %vm5182 = vcmp.eq.s32.totalorder %v4798, 63
  %vm5183 = vcmp.eq.s32.totalorder %v4799, 63
  %vm5184 = vcmp.eq.s32.totalorder %v4800, 63
  %vm5185 = vcmp.eq.s32.totalorder %v4801, 63
  %vm5186 = vcmp.eq.s32.totalorder %v4802, 63
  %v5187 = vsel %vm5123, 0.0, %v4933
  %v5188 = vsel %vm5124, 0.0, %v4935
  %v5189 = vsel %vm5125, 0.0, %v4937
  %v5190 = vsel %vm5126, 0.0, %v4939
  %v5191 = vsel %vm5127, 0.0, %v4941
  %v5192 = vsel %vm5128, 0.0, %v4943
  %v5193 = vsel %vm5129, 0.0, %v4945
  %v5194 = vsel %vm5130, 0.0, %v4947
  %v5195 = vsel %vm5131, 0.0, %v4949
  %v5196 = vsel %vm5132, 0.0, %v4951
  %v5197 = vsel %vm5133, 0.0, %v4953
  %v5198 = vsel %vm5134, 0.0, %v4955
  %v5199 = vsel %vm5135, 0.0, %v4957
  %v5200 = vsel %vm5136, 0.0, %v4959
  %v5201 = vsel %vm5137, 0.0, %v4961
  %v5202 = vsel %vm5138, 0.0, %v4963
  %v5203 = vsel %vm5139, 0.0, %v4965
  %v5204 = vsel %vm5140, 0.0, %v4967
  %v5205 = vsel %vm5141, 0.0, %v4969
  %v5206 = vsel %vm5142, 0.0, %v4971
  %v5207 = vsel %vm5143, 0.0, %v4973
  %v5208 = vsel %vm5144, 0.0, %v4975
  %v5209 = vsel %vm5145, 0.0, %v4977
  %v5210 = vsel %vm5146, 0.0, %v4979
  %v5211 = vsel %vm5147, 0.0, %v4981
  %v5212 = vsel %vm5148, 0.0, %v4983
  %v5213 = vsel %vm5149, 0.0, %v4985
  %v5214 = vsel %vm5150, 0.0, %v4987
  %v5215 = vsel %vm5151, 0.0, %v4989
  %v5216 = vsel %vm5152, 0.0, %v4991
  %v5217 = vsel %vm5153, 0.0, %v4993
  %v5218 = vsel %vm5154, 0.0, %v4995
  %v5219 = vsel %vm5155, 0.0, %v4997
  %v5220 = vsel %vm5156, 0.0, %v4999
  %v5221 = vsel %vm5157, 0.0, %v5001
  %v5222 = vsel %vm5158, 0.0, %v5003
  %v5223 = vsel %vm5159, 0.0, %v5005
  %v5224 = vsel %vm5160, 0.0, %v5007
  %v5225 = vsel %vm5161, 0.0, %v5009
  %v5226 = vsel %vm5162, 0.0, %v5011
  %v5227 = vsel %vm5163, 0.0, %v5013
  %v5228 = vsel %vm5164, 0.0, %v5015
  %v5229 = vsel %vm5165, 0.0, %v5017
  %v5230 = vsel %vm5166, 0.0, %v5019
  %v5231 = vsel %vm5167, 0.0, %v5021
  %v5232 = vsel %vm5168, 0.0, %v5023
  %v5233 = vsel %vm5169, 0.0, %v5025
  %v5234 = vsel %vm5170, 0.0, %v5027
  %v5235 = vsel %vm5171, 0.0, %v5029
  %v5236 = vsel %vm5172, 0.0, %v5031
  %v5237 = vsel %vm5173, 0.0, %v5033
  %v5238 = vsel %vm5174, 0.0, %v5035
  %v5239 = vsel %vm5175, 0.0, %v5037
  %v5240 = vsel %vm5176, 0.0, %v5039
  %v5241 = vsel %vm5177, 0.0, %v5041
  %v5242 = vsel %vm5178, 0.0, %v5043
  %v5243 = vsel %vm5179, 0.0, %v5045
  %v5244 = vsel %vm5180, 0.0, %v5047
  %v5245 = vsel %vm5181, 0.0, %v5049
  %v5246 = vsel %vm5182, 0.0, %v5051
  %v5247 = vsel %vm5183, 0.0, %v5053
  %v5248 = vsel %vm5184, 0.0, %v5055
  %v5249 = vsel %vm5185, 0.0, %v5057
  %v5250 = vsel %vm5186, 0.0, %v5122
  %5251 = vrot.lane.b32.xlu0 %v3650, 16
  %v5252 = vpop.permute.xlu0 %5251
  %5253 = vrot.lane.b32.xlu0 %v3651, 16
  %v5254 = vpop.permute.xlu0 %5253
  %5255 = vrot.lane.b32.xlu0 %v3652, 16
  %v5256 = vpop.permute.xlu0 %5255
  %5257 = vrot.lane.b32.xlu0 %v3653, 16
  %v5258 = vpop.permute.xlu0 %5257
  %5259 = vrot.lane.b32.xlu0 %v3654, 16
  %v5260 = vpop.permute.xlu0 %5259
  %5261 = vrot.lane.b32.xlu0 %v3655, 16
  %v5262 = vpop.permute.xlu0 %5261
  %5263 = vrot.lane.b32.xlu0 %v3656, 16
  %v5264 = vpop.permute.xlu0 %5263
  %5265 = vrot.lane.b32.xlu0 %v3657, 16
  %v5266 = vpop.permute.xlu0 %5265
  %5267 = vrot.lane.b32.xlu0 %v3658, 16
  %v5268 = vpop.permute.xlu0 %5267
  %5269 = vrot.lane.b32.xlu0 %v3659, 16
  %v5270 = vpop.permute.xlu0 %5269
  %5271 = vrot.lane.b32.xlu0 %v3660, 16
  %v5272 = vpop.permute.xlu0 %5271
  %5273 = vrot.lane.b32.xlu0 %v3661, 16
  %v5274 = vpop.permute.xlu0 %5273
  %5275 = vrot.lane.b32.xlu0 %v3662, 16
  %v5276 = vpop.permute.xlu0 %5275
  %5277 = vrot.lane.b32.xlu0 %v3663, 16
  %v5278 = vpop.permute.xlu0 %5277
  %5279 = vrot.lane.b32.xlu0 %v3664, 16
  %v5280 = vpop.permute.xlu0 %5279
  %5281 = vrot.lane.b32.xlu0 %v3665, 16
  %v5282 = vpop.permute.xlu0 %5281
  %5283 = vrot.lane.b32.xlu0 %v3666, 16
  %v5284 = vpop.permute.xlu0 %5283
  %5285 = vrot.lane.b32.xlu0 %v3667, 16
  %v5286 = vpop.permute.xlu0 %5285
  %5287 = vrot.lane.b32.xlu0 %v3668, 16
  %v5288 = vpop.permute.xlu0 %5287
  %5289 = vrot.lane.b32.xlu0 %v3669, 16
  %v5290 = vpop.permute.xlu0 %5289
  %5291 = vrot.lane.b32.xlu0 %v3670, 16
  %v5292 = vpop.permute.xlu0 %5291
  %5293 = vrot.lane.b32.xlu0 %v3671, 16
  %v5294 = vpop.permute.xlu0 %5293
  %5295 = vrot.lane.b32.xlu0 %v3672, 16
  %v5296 = vpop.permute.xlu0 %5295
  %5297 = vrot.lane.b32.xlu0 %v3673, 16
  %v5298 = vpop.permute.xlu0 %5297
  %5299 = vrot.lane.b32.xlu0 %v3674, 16
  %v5300 = vpop.permute.xlu0 %5299
  %5301 = vrot.lane.b32.xlu0 %v3675, 16
  %v5302 = vpop.permute.xlu0 %5301
  %5303 = vrot.lane.b32.xlu0 %v3676, 16
  %v5304 = vpop.permute.xlu0 %5303
  %5305 = vrot.lane.b32.xlu0 %v3677, 16
  %v5306 = vpop.permute.xlu0 %5305
  %5307 = vrot.lane.b32.xlu0 %v3678, 16
  %v5308 = vpop.permute.xlu0 %5307
  %5309 = vrot.lane.b32.xlu0 %v3679, 16
  %v5310 = vpop.permute.xlu0 %5309
  %5311 = vrot.lane.b32.xlu0 %v3680, 16
  %v5312 = vpop.permute.xlu0 %5311
  %5313 = vrot.lane.b32.xlu0 %v3681, 16
  %v5314 = vpop.permute.xlu0 %5313
  %5315 = vrot.lane.b32.xlu0 %v3682, 16
  %v5316 = vpop.permute.xlu0 %5315
  %5317 = vrot.lane.b32.xlu0 %v3683, 16
  %v5318 = vpop.permute.xlu0 %5317
  %5319 = vrot.lane.b32.xlu0 %v3684, 16
  %v5320 = vpop.permute.xlu0 %5319
  %5321 = vrot.lane.b32.xlu0 %v3685, 16
  %v5322 = vpop.permute.xlu0 %5321
  %5323 = vrot.lane.b32.xlu0 %v3686, 16
  %v5324 = vpop.permute.xlu0 %5323
  %5325 = vrot.lane.b32.xlu0 %v3687, 16
  %v5326 = vpop.permute.xlu0 %5325
  %5327 = vrot.lane.b32.xlu0 %v3688, 16
  %v5328 = vpop.permute.xlu0 %5327
  %5329 = vrot.lane.b32.xlu0 %v3689, 16
  %v5330 = vpop.permute.xlu0 %5329
  %5331 = vrot.lane.b32.xlu0 %v3690, 16
  %v5332 = vpop.permute.xlu0 %5331
  %5333 = vrot.lane.b32.xlu0 %v3691, 16
  %v5334 = vpop.permute.xlu0 %5333
  %5335 = vrot.lane.b32.xlu0 %v3692, 16
  %v5336 = vpop.permute.xlu0 %5335
  %5337 = vrot.lane.b32.xlu0 %v3693, 16
  %v5338 = vpop.permute.xlu0 %5337
  %5339 = vrot.lane.b32.xlu0 %v3694, 16
  %v5340 = vpop.permute.xlu0 %5339
  %5341 = vrot.lane.b32.xlu0 %v3695, 16
  %v5342 = vpop.permute.xlu0 %5341
  %5343 = vrot.lane.b32.xlu0 %v3696, 16
  %v5344 = vpop.permute.xlu0 %5343
  %5345 = vrot.lane.b32.xlu0 %v3697, 16
  %v5346 = vpop.permute.xlu0 %5345
  %5347 = vrot.lane.b32.xlu0 %v3698, 16
  %v5348 = vpop.permute.xlu0 %5347
  %5349 = vrot.lane.b32.xlu0 %v3699, 16
  %v5350 = vpop.permute.xlu0 %5349
  %5351 = vrot.lane.b32.xlu0 %v3700, 16
  %v5352 = vpop.permute.xlu0 %5351
  %5353 = vrot.lane.b32.xlu0 %v3701, 16
  %v5354 = vpop.permute.xlu0 %5353
  %5355 = vrot.lane.b32.xlu0 %v3702, 16
  %v5356 = vpop.permute.xlu0 %5355
  %5357 = vrot.lane.b32.xlu0 %v3703, 16
  %v5358 = vpop.permute.xlu0 %5357
  %5359 = vrot.lane.b32.xlu0 %v3704, 16
  %v5360 = vpop.permute.xlu0 %5359
  %5361 = vrot.lane.b32.xlu0 %v3705, 16
  %v5362 = vpop.permute.xlu0 %5361
  %5363 = vrot.lane.b32.xlu0 %v3706, 16
  %v5364 = vpop.permute.xlu0 %5363
  %5365 = vrot.lane.b32.xlu0 %v3707, 16
  %v5366 = vpop.permute.xlu0 %5365
  %5367 = vrot.lane.b32.xlu0 %v3708, 16
  %v5368 = vpop.permute.xlu0 %5367
  %5369 = vrot.lane.b32.xlu0 %v3709, 16
  %v5370 = vpop.permute.xlu0 %5369
  %5371 = vrot.lane.b32.xlu0 %v3710, 16
  %v5372 = vpop.permute.xlu0 %5371
  %5373 = vrot.lane.b32.xlu0 %v3711, 16
  %v5374 = vpop.permute.xlu0 %5373
  %5375 = vrot.lane.b32.xlu0 %v3712, 16
  %v5376 = vpop.permute.xlu0 %5375
  %5377 = vrot.lane.b32.xlu0 %v3713, 16
  %v5378 = vpop.permute.xlu0 %5377
  %5507 = vrot.lane.b32.xlu0 %v5187, 32
  %v5508 = vpop.permute.xlu0 %5507
  %5509 = vrot.lane.b32.xlu0 %v5188, 32
  %v5510 = vpop.permute.xlu0 %5509
  %5511 = vrot.lane.b32.xlu0 %v5189, 32
  %v5512 = vpop.permute.xlu0 %5511
  %5513 = vrot.lane.b32.xlu0 %v5190, 32
  %v5514 = vpop.permute.xlu0 %5513
  %5515 = vrot.lane.b32.xlu0 %v5191, 32
  %v5516 = vpop.permute.xlu0 %5515
  %5517 = vrot.lane.b32.xlu0 %v5192, 32
  %v5518 = vpop.permute.xlu0 %5517
  %5519 = vrot.lane.b32.xlu0 %v5193, 32
  %v5520 = vpop.permute.xlu0 %5519
  %5521 = vrot.lane.b32.xlu0 %v5194, 32
  %v5522 = vpop.permute.xlu0 %5521
  %5523 = vrot.lane.b32.xlu0 %v5195, 32
  %v5524 = vpop.permute.xlu0 %5523
  %5525 = vrot.lane.b32.xlu0 %v5196, 32
  %v5526 = vpop.permute.xlu0 %5525
  %5527 = vrot.lane.b32.xlu0 %v5197, 32
  %v5528 = vpop.permute.xlu0 %5527
  %5529 = vrot.lane.b32.xlu0 %v5198, 32
  %v5530 = vpop.permute.xlu0 %5529
  %5531 = vrot.lane.b32.xlu0 %v5199, 32
  %v5532 = vpop.permute.xlu0 %5531
  %5533 = vrot.lane.b32.xlu0 %v5200, 32
  %v5534 = vpop.permute.xlu0 %5533
  %5535 = vrot.lane.b32.xlu0 %v5201, 32
  %v5536 = vpop.permute.xlu0 %5535
  %5537 = vrot.lane.b32.xlu0 %v5202, 32
  %v5538 = vpop.permute.xlu0 %5537
  %5539 = vrot.lane.b32.xlu0 %v5203, 32
  %v5540 = vpop.permute.xlu0 %5539
  %5541 = vrot.lane.b32.xlu0 %v5204, 32
  %v5542 = vpop.permute.xlu0 %5541
  %5543 = vrot.lane.b32.xlu0 %v5205, 32
  %v5544 = vpop.permute.xlu0 %5543
  %5545 = vrot.lane.b32.xlu0 %v5206, 32
  %v5546 = vpop.permute.xlu0 %5545
  %5547 = vrot.lane.b32.xlu0 %v5207, 32
  %v5548 = vpop.permute.xlu0 %5547
  %5549 = vrot.lane.b32.xlu0 %v5208, 32
  %v5550 = vpop.permute.xlu0 %5549
  %5551 = vrot.lane.b32.xlu0 %v5209, 32
  %v5552 = vpop.permute.xlu0 %5551
  %5553 = vrot.lane.b32.xlu0 %v5210, 32
  %v5554 = vpop.permute.xlu0 %5553
  %5555 = vrot.lane.b32.xlu0 %v5211, 32
  %v5556 = vpop.permute.xlu0 %5555
  %5557 = vrot.lane.b32.xlu0 %v5212, 32
  %v5558 = vpop.permute.xlu0 %5557
  %5559 = vrot.lane.b32.xlu0 %v5213, 32
  %v5560 = vpop.permute.xlu0 %5559
  %5561 = vrot.lane.b32.xlu0 %v5214, 32
  %v5562 = vpop.permute.xlu0 %5561
  %5563 = vrot.lane.b32.xlu0 %v5215, 32
  %v5564 = vpop.permute.xlu0 %5563
  %5565 = vrot.lane.b32.xlu0 %v5216, 32
  %v5566 = vpop.permute.xlu0 %5565
  %5567 = vrot.lane.b32.xlu0 %v5217, 32
  %v5568 = vpop.permute.xlu0 %5567
  %5569 = vrot.lane.b32.xlu0 %v5218, 32
  %v5570 = vpop.permute.xlu0 %5569
  %5571 = vrot.lane.b32.xlu0 %v5219, 32
  %v5572 = vpop.permute.xlu0 %5571
  %5573 = vrot.lane.b32.xlu0 %v5220, 32
  %v5574 = vpop.permute.xlu0 %5573
  %5575 = vrot.lane.b32.xlu0 %v5221, 32
  %v5576 = vpop.permute.xlu0 %5575
  %5577 = vrot.lane.b32.xlu0 %v5222, 32
  %v5578 = vpop.permute.xlu0 %5577
  %5579 = vrot.lane.b32.xlu0 %v5223, 32
  %v5580 = vpop.permute.xlu0 %5579
  %5581 = vrot.lane.b32.xlu0 %v5224, 32
  %v5582 = vpop.permute.xlu0 %5581
  %5583 = vrot.lane.b32.xlu0 %v5225, 32
  %v5584 = vpop.permute.xlu0 %5583
  %5585 = vrot.lane.b32.xlu0 %v5226, 32
  %v5586 = vpop.permute.xlu0 %5585
  %5587 = vrot.lane.b32.xlu0 %v5227, 32
  %v5588 = vpop.permute.xlu0 %5587
  %5589 = vrot.lane.b32.xlu0 %v5228, 32
  %v5590 = vpop.permute.xlu0 %5589
  %5591 = vrot.lane.b32.xlu0 %v5229, 32
  %v5592 = vpop.permute.xlu0 %5591
  %5593 = vrot.lane.b32.xlu0 %v5230, 32
  %v5594 = vpop.permute.xlu0 %5593
  %5595 = vrot.lane.b32.xlu0 %v5231, 32
  %v5596 = vpop.permute.xlu0 %5595
  %5597 = vrot.lane.b32.xlu0 %v5232, 32
  %v5598 = vpop.permute.xlu0 %5597
  %5599 = vrot.lane.b32.xlu0 %v5233, 32
  %v5600 = vpop.permute.xlu0 %5599
  %5601 = vrot.lane.b32.xlu0 %v5234, 32
  %v5602 = vpop.permute.xlu0 %5601
  %5603 = vrot.lane.b32.xlu0 %v5235, 32
  %v5604 = vpop.permute.xlu0 %5603
  %5605 = vrot.lane.b32.xlu0 %v5236, 32
  %v5606 = vpop.permute.xlu0 %5605
  %5607 = vrot.lane.b32.xlu0 %v5237, 32
  %v5608 = vpop.permute.xlu0 %5607
  %5609 = vrot.lane.b32.xlu0 %v5238, 32
  %v5610 = vpop.permute.xlu0 %5609
  %5611 = vrot.lane.b32.xlu0 %v5239, 32
  %v5612 = vpop.permute.xlu0 %5611
  %5613 = vrot.lane.b32.xlu0 %v5240, 32
  %v5614 = vpop.permute.xlu0 %5613
  %5615 = vrot.lane.b32.xlu0 %v5241, 32
  %v5616 = vpop.permute.xlu0 %5615
  %5617 = vrot.lane.b32.xlu0 %v5242, 32
  %v5618 = vpop.permute.xlu0 %5617
  %5619 = vrot.lane.b32.xlu0 %v5243, 32
  %v5620 = vpop.permute.xlu0 %5619
  %5621 = vrot.lane.b32.xlu0 %v5244, 32
  %v5622 = vpop.permute.xlu0 %5621
  %5623 = vrot.lane.b32.xlu0 %v5245, 32
  %v5624 = vpop.permute.xlu0 %5623
  %5625 = vrot.lane.b32.xlu0 %v5246, 32
  %v5626 = vpop.permute.xlu0 %5625
  %5627 = vrot.lane.b32.xlu0 %v5247, 32
  %v5628 = vpop.permute.xlu0 %5627
  %5629 = vrot.lane.b32.xlu0 %v5248, 32
  %v5630 = vpop.permute.xlu0 %5629
  %5631 = vrot.lane.b32.xlu0 %v5249, 32
  %v5632 = vpop.permute.xlu0 %5631
  %5633 = vrot.lane.b32.xlu0 %v5250, 32
  %v5634 = vpop.permute.xlu0 %5633
  %v5699 = vsel %vm666, %v4867, %v5252
  %v5700 = vsel %vm666, %v4868, %v5254
  %v5701 = vsel %vm666, %v4869, %v5256
  %v5702 = vsel %vm666, %v4870, %v5258
  %v5703 = vsel %vm666, %v4871, %v5260
  %v5704 = vsel %vm666, %v4872, %v5262
  %v5705 = vsel %vm666, %v4873, %v5264
  %v5706 = vsel %vm666, %v4874, %v5266
  %v5707 = vsel %vm666, %v4875, %v5268
  %v5708 = vsel %vm666, %v4876, %v5270
  %v5709 = vsel %vm666, %v4877, %v5272
  %v5710 = vsel %vm666, %v4878, %v5274
  %v5711 = vsel %vm666, %v4879, %v5276
  %v5712 = vsel %vm666, %v4880, %v5278
  %v5713 = vsel %vm666, %v4881, %v5280
  %v5714 = vsel %vm666, %v4882, %v5282
  %v5715 = vsel %vm666, %v4883, %v5284
  %v5716 = vsel %vm666, %v4884, %v5286
  %v5717 = vsel %vm666, %v4885, %v5288
  %v5718 = vsel %vm666, %v4886, %v5290
  %v5719 = vsel %vm666, %v4887, %v5292
  %v5720 = vsel %vm666, %v4888, %v5294
  %v5721 = vsel %vm666, %v4889, %v5296
  %v5722 = vsel %vm666, %v4890, %v5298
  %v5723 = vsel %vm666, %v4891, %v5300
  %v5724 = vsel %vm666, %v4892, %v5302
  %v5725 = vsel %vm666, %v4893, %v5304
  %v5726 = vsel %vm666, %v4894, %v5306
  %v5727 = vsel %vm666, %v4895, %v5308
  %v5728 = vsel %vm666, %v4896, %v5310
  %v5729 = vsel %vm666, %v4897, %v5312
  %v5730 = vsel %vm666, %v4898, %v5314
  %v5731 = vsel %vm666, %v4899, %v5316
  %v5732 = vsel %vm666, %v4900, %v5318
  %v5733 = vsel %vm666, %v4901, %v5320
  %v5734 = vsel %vm666, %v4902, %v5322
  %v5735 = vsel %vm666, %v4903, %v5324
  %v5736 = vsel %vm666, %v4904, %v5326
  %v5737 = vsel %vm666, %v4905, %v5328
  %v5738 = vsel %vm666, %v4906, %v5330
  %v5739 = vsel %vm666, %v4907, %v5332
  %v5740 = vsel %vm666, %v4908, %v5334
  %v5741 = vsel %vm666, %v4909, %v5336
  %v5742 = vsel %vm666, %v4910, %v5338
  %v5743 = vsel %vm666, %v4911, %v5340
  %v5744 = vsel %vm666, %v4912, %v5342
  %v5745 = vsel %vm666, %v4913, %v5344
  %v5746 = vsel %vm666, %v4914, %v5346
  %v5747 = vsel %vm666, %v4915, %v5348
  %v5748 = vsel %vm666, %v4916, %v5350
  %v5749 = vsel %vm666, %v4917, %v5352
  %v5750 = vsel %vm666, %v4918, %v5354
  %v5751 = vsel %vm666, %v4919, %v5356
  %v5752 = vsel %vm666, %v4920, %v5358
  %v5753 = vsel %vm666, %v4921, %v5360
  %v5754 = vsel %vm666, %v4922, %v5362
  %v5755 = vsel %vm666, %v4923, %v5364
  %v5756 = vsel %vm666, %v4924, %v5366
  %v5757 = vsel %vm666, %v4925, %v5368
  %v5758 = vsel %vm666, %v4926, %v5370
  %v5759 = vsel %vm666, %v4927, %v5372
  %v5760 = vsel %vm666, %v4928, %v5374
  %v5761 = vsel %vm666, %v4929, %v5376
  %v5762 = vsel %vm666, %v4930, %v5378
  %vm5763 = vcmask 261120
  %v5764 = vsel %vm5763, %v5699, %v5508
  %v5765 = vsel %vm5763, %v5700, %v5510
  %v5766 = vsel %vm5763, %v5701, %v5512
  %v5767 = vsel %vm5763, %v5702, %v5514
  %v5768 = vsel %vm5763, %v5703, %v5516
  %v5769 = vsel %vm5763, %v5704, %v5518
  %v5770 = vsel %vm5763, %v5705, %v5520
  %v5771 = vsel %vm5763, %v5706, %v5522
  %v5772 = vsel %vm5763, %v5707, %v5524
  %v5773 = vsel %vm5763, %v5708, %v5526
  %v5774 = vsel %vm5763, %v5709, %v5528
  %v5775 = vsel %vm5763, %v5710, %v5530
  %v5776 = vsel %vm5763, %v5711, %v5532
  %v5777 = vsel %vm5763, %v5712, %v5534
  %v5778 = vsel %vm5763, %v5713, %v5536
  %v5779 = vsel %vm5763, %v5714, %v5538
  %v5780 = vsel %vm5763, %v5715, %v5540
  %v5781 = vsel %vm5763, %v5716, %v5542
  %v5782 = vsel %vm5763, %v5717, %v5544
  %v5783 = vsel %vm5763, %v5718, %v5546
  %v5784 = vsel %vm5763, %v5719, %v5548
  %v5785 = vsel %vm5763, %v5720, %v5550
  %v5786 = vsel %vm5763, %v5721, %v5552
  %v5787 = vsel %vm5763, %v5722, %v5554
  %v5788 = vsel %vm5763, %v5723, %v5556
  %v5789 = vsel %vm5763, %v5724, %v5558
  %v5790 = vsel %vm5763, %v5725, %v5560
  %v5791 = vsel %vm5763, %v5726, %v5562
  %v5792 = vsel %vm5763, %v5727, %v5564
  %v5793 = vsel %vm5763, %v5728, %v5566
  %v5794 = vsel %vm5763, %v5729, %v5568
  %v5795 = vsel %vm5763, %v5730, %v5570
  %v5796 = vsel %vm5763, %v5731, %v5572
  %v5797 = vsel %vm5763, %v5732, %v5574
  %v5798 = vsel %vm5763, %v5733, %v5576
  %v5799 = vsel %vm5763, %v5734, %v5578
  %v5800 = vsel %vm5763, %v5735, %v5580
  %v5801 = vsel %vm5763, %v5736, %v5582
  %v5802 = vsel %vm5763, %v5737, %v5584
  %v5803 = vsel %vm5763, %v5738, %v5586
  %v5804 = vsel %vm5763, %v5739, %v5588
  %v5805 = vsel %vm5763, %v5740, %v5590
  %v5806 = vsel %vm5763, %v5741, %v5592
  %v5807 = vsel %vm5763, %v5742, %v5594
  %v5808 = vsel %vm5763, %v5743, %v5596
  %v5809 = vsel %vm5763, %v5744, %v5598
  %v5810 = vsel %vm5763, %v5745, %v5600
  %v5811 = vsel %vm5763, %v5746, %v5602
  %v5812 = vsel %vm5763, %v5747, %v5604
  %v5813 = vsel %vm5763, %v5748, %v5606
  %v5814 = vsel %vm5763, %v5749, %v5608
  %v5815 = vsel %vm5763, %v5750, %v5610
  %v5816 = vsel %vm5763, %v5751, %v5612
  %v5817 = vsel %vm5763, %v5752, %v5614
  %v5818 = vsel %vm5763, %v5753, %v5616
  %v5819 = vsel %vm5763, %v5754, %v5618
  %v5820 = vsel %vm5763, %v5755, %v5620
  %v5821 = vsel %vm5763, %v5756, %v5622
  %v5822 = vsel %vm5763, %v5757, %v5624
  %v5823 = vsel %vm5763, %v5758, %v5626
  %v5824 = vsel %vm5763, %v5759, %v5628
  %v5825 = vsel %vm5763, %v5760, %v5630
  %v5826 = vsel %vm5763, %v5761, %v5632
  %v5827 = vsel %vm5763, %v5762, %v5634
  %v5828 = vld [vmem:[%s4] sm:$0xff]
  %v5829 = vld [vmem:[%s4 + $0x8] sm:$0xff]
  %v5830 = vld [vmem:[%s4 + $0x10] sm:$0xff]
  %v5831 = vld [vmem:[%s4 + $0x18] sm:$0xff]
  %v5832 = vld [vmem:[%s4 + $0x20] sm:$0xff]
  %v5833 = vld [vmem:[%s4 + $0x28] sm:$0xff]
  %v5834 = vld [vmem:[%s5] sm:$0x1]
  %v5836 = vlaneseq
  %v5837 = vshrl.u32 %v5836, 7
  %v5838 = vsub.s32 0, %v5837
  %v5839 = vrot.slane %v5834, %v5838
  %vm5841 = vcmask 392192
  %v5843 = vsel %vm5841, %v5764, 0
  %v5846 = vsel %vm5841, %v5765, 0
  %v5849 = vsel %vm5841, %v5766, 0
  %v5852 = vsel %vm5841, %v5767, 0
  %v5855 = vsel %vm5841, %v5768, 0
  %v5858 = vsel %vm5841, %v5769, 0
  %v5861 = vsel %vm5841, %v5770, 0
  %v5864 = vsel %vm5841, %v5771, 0
  %v5867 = vsel %vm5841, %v5772, 0
  %v5870 = vsel %vm5841, %v5773, 0
  %v5873 = vsel %vm5841, %v5774, 0
  %v5876 = vsel %vm5841, %v5775, 0
  %v5879 = vsel %vm5841, %v5776, 0
  %v5882 = vsel %vm5841, %v5777, 0
  %v5885 = vsel %vm5841, %v5778, 0
  %v5888 = vsel %vm5841, %v5779, 0
  %v5891 = vsel %vm5841, %v5780, 0
  %v5894 = vsel %vm5841, %v5781, 0
  %v5897 = vsel %vm5841, %v5782, 0
  %v5900 = vsel %vm5841, %v5783, 0
  %v5903 = vsel %vm5841, %v5784, 0
  %v5906 = vsel %vm5841, %v5785, 0
  %v5909 = vsel %vm5841, %v5786, 0
  %v5912 = vsel %vm5841, %v5787, 0
  %v5915 = vsel %vm5841, %v5788, 0
  %v5918 = vsel %vm5841, %v5789, 0
  %v5921 = vsel %vm5841, %v5790, 0
  %v5924 = vsel %vm5841, %v5791, 0
  %v5927 = vsel %vm5841, %v5792, 0
  %v5930 = vsel %vm5841, %v5793, 0
  %v5933 = vsel %vm5841, %v5794, 0
  %v5936 = vsel %vm5841, %v5795, 0
  %v5939 = vsel %vm5841, %v5796, 0
  %v5942 = vsel %vm5841, %v5797, 0
  %v5945 = vsel %vm5841, %v5798, 0
  %v5948 = vsel %vm5841, %v5799, 0
  %v5951 = vsel %vm5841, %v5800, 0
  %v5954 = vsel %vm5841, %v5801, 0
  %v5957 = vsel %vm5841, %v5802, 0
  %v5960 = vsel %vm5841, %v5803, 0
  %v5963 = vsel %vm5841, %v5804, 0
  %v5966 = vsel %vm5841, %v5805, 0
  %v5969 = vsel %vm5841, %v5806, 0
  %v5972 = vsel %vm5841, %v5807, 0
  %v5975 = vsel %vm5841, %v5808, 0
  %v5978 = vsel %vm5841, %v5809, 0
  %v5981 = vsel %vm5841, %v5810, 0
  %v5984 = vsel %vm5841, %v5811, 0
  %v5987 = vsel %vm5841, %v5812, 0
  %v5990 = vsel %vm5841, %v5813, 0
  %v5993 = vsel %vm5841, %v5814, 0
  %v5996 = vsel %vm5841, %v5815, 0
  %v5999 = vsel %vm5841, %v5816, 0
  %v6002 = vsel %vm5841, %v5817, 0
  %v6005 = vsel %vm5841, %v5818, 0
  %v6008 = vsel %vm5841, %v5819, 0
  %v6011 = vsel %vm5841, %v5820, 0
  %v6014 = vsel %vm5841, %v5821, 0
  %v6017 = vsel %vm5841, %v5822, 0
  %v6020 = vsel %vm5841, %v5823, 0
  %v6023 = vsel %vm5841, %v5824, 0
  %v6026 = vsel %vm5841, %v5825, 0
  %v6029 = vsel %vm5841, %v5826, 0
  %v6032 = vsel %vm5841, %v5827, 0
  %6034 = vmatprep.subr.mxu0 0.0
  %6035 = vmatpush1.msra.mxu0 %v5828
  %6036 = vmatprep.subr.mxu0 0.0
  %6037 = vmatpush1.msra.mxu0 %v5829
  %6038 = vmatprep.subr.mxu0 0.0
  %6039 = vmatpush1.msra.mxu0 %v5830
  %6040 = vmatprep.subr.mxu0 0.0
  %6041 = vmatpush1.msra.mxu0 %v5831
  %6042 = vmatprep.subr.mxu0 0.0
  %6043 = vmatpush1.msra.mxu0 %v5832
  %6044 = vmatprep.subr.mxu0 0.0
  %6045 = vmatpush1.msra.mxu0 %v5833
  %6046 = vmatprep.subr.mxu0 0.0
  %6047 = vmatpush1.msra.mxu0 0.0
  %6048 = vmatprep.subr.mxu0 0.0
  %6049 = vmatpush1.msra.mxu0 0.0
  %6050 = vmatprep.subr.mxu0 0.0
  %6051 = vmatpush1.msra.mxu0 0.0
  %6052 = vmatprep.subr.mxu0 0.0
  %6053 = vmatpush1.msra.mxu0 0.0
  %6054 = vmatprep.subr.mxu0 0.0
  %6055 = vmatpush1.msra.mxu0 0.0
  %6056 = vmatprep.subr.mxu0 0.0
  %6057 = vmatpush1.msra.mxu0 0.0
  %6058 = vmatprep.subr.mxu0 0.0
  %6059 = vmatpush1.msra.mxu0 0.0
  %6060 = vmatprep.subr.mxu0 0.0
  %6061 = vmatpush1.msra.mxu0 0.0
  %6062 = vmatprep.subr.mxu0 0.0
  %6063 = vmatpush1.msra.mxu0 0.0
  %6064 = vmatprep.subr.mxu0 0.0
  %6065 = vmatpush1.msra.mxu0 0.0
  %6066 = vmatprep.subr.mxu0 0.0
  %6067 = vmatpush1.msra.mxu0 0.0
  %6068 = vmatprep.subr.mxu0 0.0
  %6069 = vmatpush1.msra.mxu0 0.0
  %6070 = vmatprep.subr.mxu0 0.0
  %6071 = vmatpush1.msra.mxu0 0.0
  %6072 = vmatprep.subr.mxu0 0.0
  %6073 = vmatpush1.msra.mxu0 0.0
  %6074 = vmatprep.subr.mxu0 0.0
  %6075 = vmatpush1.msra.mxu0 0.0
  %6076 = vmatprep.subr.mxu0 0.0
  %6077 = vmatpush1.msra.mxu0 0.0
  %6078 = vmatprep.subr.mxu0 0.0
  %6079 = vmatpush1.msra.mxu0 0.0
  %6080 = vmatprep.subr.mxu0 0.0
  %6081 = vmatpush1.msra.mxu0 0.0
  %6082 = vmatprep.subr.mxu0 0.0
  %6083 = vmatpush1.msra.mxu0 0.0
  %6084 = vmatprep.subr.mxu0 0.0
  %6085 = vmatpush1.msra.mxu0 0.0
  %6086 = vmatprep.subr.mxu0 0.0
  %6087 = vmatpush1.msra.mxu0 0.0
  %6088 = vmatprep.subr.mxu0 0.0
  %6089 = vmatpush1.msra.mxu0 0.0
  %6090 = vmatprep.subr.mxu0 0.0
  %6091 = vmatpush1.msra.mxu0 0.0
  %6092 = vmatprep.subr.mxu0 0.0
  %6093 = vmatpush1.msra.mxu0 0.0
  %6094 = vmatprep.subr.mxu0 0.0
  %6095 = vmatpush1.msra.mxu0 0.0
  %6096 = vmatprep.subr.mxu0 0.0
  %6097 = vmatpush1.msra.mxu0 0.0
  %6098 = vmatprep.mubr.f32.mxu0 0.0
  %6099 = vmatmul.mubr.f32.gmra.mrb[0].mxu0 %v5843
  %v6100 = vpop.f32.mrb[0].mxu0
  %v6101 = vadd.f32 %v5839, %v6100
  %v6102 = vpop.f32.mrb[0].mxu0
  %6103 = vmatprep.mubr.f32.mxu0 0.0
  %6104 = vmatmul.mubr.f32.gmra.mrb[0].mxu0 %v5846
  %v6105 = vpop.f32.mrb[0].mxu0
  %v6106 = vadd.f32 %v5839, %v6105
  %v6107 = vpop.f32.mrb[0].mxu0
  %6108 = vmatprep.mubr.f32.mxu0 0.0
  %6109 = vmatmul.mubr.f32.gmra.mrb[0].mxu0 %v5849
  %v6110 = vpop.f32.mrb[0].mxu0
  %v6111 = vadd.f32 %v5839, %v6110
  %v6112 = vpop.f32.mrb[0].mxu0
  %6113 = vmatprep.mubr.f32.mxu0 0.0
  %6114 = vmatmul.mubr.f32.gmra.mrb[0].mxu0 %v5852
  %v6115 = vpop.f32.mrb[0].mxu0
  %v6116 = vadd.f32 %v5839, %v6115
  %v6117 = vpop.f32.mrb[0].mxu0
  %6118 = vmatprep.mubr.f32.mxu0 0.0
  %6119 = vmatmul.mubr.f32.gmra.mrb[0].mxu0 %v5855
  %v6120 = vpop.f32.mrb[0].mxu0
  %v6121 = vadd.f32 %v5839, %v6120
  %v6122 = vpop.f32.mrb[0].mxu0
  %6123 = vmatprep.mubr.f32.mxu0 0.0
  %6124 = vmatmul.mubr.f32.gmra.mrb[0].mxu0 %v5858
  %v6125 = vpop.f32.mrb[0].mxu0
  %v6126 = vadd.f32 %v5839, %v6125
  %v6127 = vpop.f32.mrb[0].mxu0
  %6128 = vmatprep.mubr.f32.mxu0 0.0
  %6129 = vmatmul.mubr.f32.gmra.mrb[0].mxu0 %v5861
  %v6130 = vpop.f32.mrb[0].mxu0
  %v6131 = vadd.f32 %v5839, %v6130
  %v6132 = vpop.f32.mrb[0].mxu0
  %6133 = vmatprep.mubr.f32.mxu0 0.0
  %6134 = vmatmul.mubr.f32.gmra.mrb[0].mxu0 %v5864
  %v6135 = vpop.f32.mrb[0].mxu0
  %v6136 = vadd.f32 %v5839, %v6135
  %v6137 = vpop.f32.mrb[0].mxu0
  %6138 = vmatprep.mubr.f32.mxu0 0.0
  %6139 = vmatmul.mubr.f32.gmra.mrb[0].mxu0 %v5867
  %v6140 = vpop.f32.mrb[0].mxu0
  %v6141 = vadd.f32 %v5839, %v6140
  %v6142 = vpop.f32.mrb[0].mxu0
  %6143 = vmatprep.mubr.f32.mxu0 0.0
  %6144 = vmatmul.mubr.f32.gmra.mrb[0].mxu0 %v5870
  %v6145 = vpop.f32.mrb[0].mxu0
  %v6146 = vadd.f32 %v5839, %v6145
  %v6147 = vpop.f32.mrb[0].mxu0
  %6148 = vmatprep.mubr.f32.mxu0 0.0
  %6149 = vmatmul.mubr.f32.gmra.mrb[0].mxu0 %v5873
  %v6150 = vpop.f32.mrb[0].mxu0
  %v6151 = vadd.f32 %v5839, %v6150
  %v6152 = vpop.f32.mrb[0].mxu0
  %6153 = vmatprep.mubr.f32.mxu0 0.0
  %6154 = vmatmul.mubr.f32.gmra.mrb[0].mxu0 %v5876
  %v6155 = vpop.f32.mrb[0].mxu0
  %v6156 = vadd.f32 %v5839, %v6155
  %v6157 = vpop.f32.mrb[0].mxu0
  %6158 = vmatprep.mubr.f32.mxu0 0.0
  %6159 = vmatmul.mubr.f32.gmra.mrb[0].mxu0 %v5879
  %v6160 = vpop.f32.mrb[0].mxu0
  %v6161 = vadd.f32 %v5839, %v6160
  %v6162 = vpop.f32.mrb[0].mxu0
  %6163 = vmatprep.mubr.f32.mxu0 0.0
  %6164 = vmatmul.mubr.f32.gmra.mrb[0].mxu0 %v5882
  %v6165 = vpop.f32.mrb[0].mxu0
  %v6166 = vadd.f32 %v5839, %v6165
  %v6167 = vpop.f32.mrb[0].mxu0
  %6168 = vmatprep.mubr.f32.mxu0 0.0
  %6169 = vmatmul.mubr.f32.gmra.mrb[0].mxu0 %v5885
  %v6170 = vpop.f32.mrb[0].mxu0
  %v6171 = vadd.f32 %v5839, %v6170
  %v6172 = vpop.f32.mrb[0].mxu0
  %6173 = vmatprep.mubr.f32.mxu0 0.0
  %6174 = vmatmul.mubr.f32.gmra.mrb[0].mxu0 %v5888
  %v6175 = vpop.f32.mrb[0].mxu0
  %v6176 = vadd.f32 %v5839, %v6175
  %v6177 = vpop.f32.mrb[0].mxu0
  %6178 = vmatprep.mubr.f32.mxu0 0.0
  %6179 = vmatmul.mubr.f32.gmra.mrb[0].mxu0 %v5891
  %v6180 = vpop.f32.mrb[0].mxu0
  %v6181 = vadd.f32 %v5839, %v6180
  %v6182 = vpop.f32.mrb[0].mxu0
  %6183 = vmatprep.mubr.f32.mxu0 0.0
  %6184 = vmatmul.mubr.f32.gmra.mrb[0].mxu0 %v5894
  %v6185 = vpop.f32.mrb[0].mxu0
  %v6186 = vadd.f32 %v5839, %v6185
  %v6187 = vpop.f32.mrb[0].mxu0
  %6188 = vmatprep.mubr.f32.mxu0 0.0
  %6189 = vmatmul.mubr.f32.gmra.mrb[0].mxu0 %v5897
  %v6190 = vpop.f32.mrb[0].mxu0
  %v6191 = vadd.f32 %v5839, %v6190
  %v6192 = vpop.f32.mrb[0].mxu0
  %6193 = vmatprep.mubr.f32.mxu0 0.0
  %6194 = vmatmul.mubr.f32.gmra.mrb[0].mxu0 %v5900
  %v6195 = vpop.f32.mrb[0].mxu0
  %v6196 = vadd.f32 %v5839, %v6195
  %v6197 = vpop.f32.mrb[0].mxu0
  %6198 = vmatprep.mubr.f32.mxu0 0.0
  %6199 = vmatmul.mubr.f32.gmra.mrb[0].mxu0 %v5903
  %v6200 = vpop.f32.mrb[0].mxu0
  %v6201 = vadd.f32 %v5839, %v6200
  %v6202 = vpop.f32.mrb[0].mxu0
  %6203 = vmatprep.mubr.f32.mxu0 0.0
  %6204 = vmatmul.mubr.f32.gmra.mrb[0].mxu0 %v5906
  %v6205 = vpop.f32.mrb[0].mxu0
  %v6206 = vadd.f32 %v5839, %v6205
  %v6207 = vpop.f32.mrb[0].mxu0
  %6208 = vmatprep.mubr.f32.mxu0 0.0
  %6209 = vmatmul.mubr.f32.gmra.mrb[0].mxu0 %v5909
  %v6210 = vpop.f32.mrb[0].mxu0
  %v6211 = vadd.f32 %v5839, %v6210
  %v6212 = vpop.f32.mrb[0].mxu0
  %6213 = vmatprep.mubr.f32.mxu0 0.0
  %6214 = vmatmul.mubr.f32.gmra.mrb[0].mxu0 %v5912
  %v6215 = vpop.f32.mrb[0].mxu0
  %v6216 = vadd.f32 %v5839, %v6215
  %v6217 = vpop.f32.mrb[0].mxu0
  %6218 = vmatprep.mubr.f32.mxu0 0.0
  %6219 = vmatmul.mubr.f32.gmra.mrb[0].mxu0 %v5915
  %v6220 = vpop.f32.mrb[0].mxu0
  %v6221 = vadd.f32 %v5839, %v6220
  %v6222 = vpop.f32.mrb[0].mxu0
  %6223 = vmatprep.mubr.f32.mxu0 0.0
  %6224 = vmatmul.mubr.f32.gmra.mrb[0].mxu0 %v5918
  %v6225 = vpop.f32.mrb[0].mxu0
  %v6226 = vadd.f32 %v5839, %v6225
  %v6227 = vpop.f32.mrb[0].mxu0
  %6228 = vmatprep.mubr.f32.mxu0 0.0
  %6229 = vmatmul.mubr.f32.gmra.mrb[0].mxu0 %v5921
  %v6230 = vpop.f32.mrb[0].mxu0
  %v6231 = vadd.f32 %v5839, %v6230
  %v6232 = vpop.f32.mrb[0].mxu0
  %6233 = vmatprep.mubr.f32.mxu0 0.0
  %6234 = vmatmul.mubr.f32.gmra.mrb[0].mxu0 %v5924
  %v6235 = vpop.f32.mrb[0].mxu0
  %v6236 = vadd.f32 %v5839, %v6235
  %v6237 = vpop.f32.mrb[0].mxu0
  %6238 = vmatprep.mubr.f32.mxu0 0.0
  %6239 = vmatmul.mubr.f32.gmra.mrb[0].mxu0 %v5927
  %v6240 = vpop.f32.mrb[0].mxu0
  %v6241 = vadd.f32 %v5839, %v6240
  %v6242 = vpop.f32.mrb[0].mxu0
  %6243 = vmatprep.mubr.f32.mxu0 0.0
  %6244 = vmatmul.mubr.f32.gmra.mrb[0].mxu0 %v5930
  %v6245 = vpop.f32.mrb[0].mxu0
  %v6246 = vadd.f32 %v5839, %v6245
  %v6247 = vpop.f32.mrb[0].mxu0
  %6248 = vmatprep.mubr.f32.mxu0 0.0
  %6249 = vmatmul.mubr.f32.gmra.mrb[0].mxu0 %v5933
  %v6250 = vpop.f32.mrb[0].mxu0
  %v6251 = vadd.f32 %v5839, %v6250
  %v6252 = vpop.f32.mrb[0].mxu0
  %6253 = vmatprep.mubr.f32.mxu0 0.0
  %6254 = vmatmul.mubr.f32.gmra.mrb[0].mxu0 %v5936
  %v6255 = vpop.f32.mrb[0].mxu0
  %v6256 = vadd.f32 %v5839, %v6255
  %v6257 = vpop.f32.mrb[0].mxu0
  %6258 = vmatprep.mubr.f32.mxu0 0.0
  %6259 = vmatmul.mubr.f32.gmra.mrb[0].mxu0 %v5939
  %v6260 = vpop.f32.mrb[0].mxu0
  %v6261 = vadd.f32 %v5839, %v6260
  %v6262 = vpop.f32.mrb[0].mxu0
  %6263 = vmatprep.mubr.f32.mxu0 0.0
  %6264 = vmatmul.mubr.f32.gmra.mrb[0].mxu0 %v5942
  %v6265 = vpop.f32.mrb[0].mxu0
  %v6266 = vadd.f32 %v5839, %v6265
  %v6267 = vpop.f32.mrb[0].mxu0
  %6268 = vmatprep.mubr.f32.mxu0 0.0
  %6269 = vmatmul.mubr.f32.gmra.mrb[0].mxu0 %v5945
  %v6270 = vpop.f32.mrb[0].mxu0
  %v6271 = vadd.f32 %v5839, %v6270
  %v6272 = vpop.f32.mrb[0].mxu0
  %6273 = vmatprep.mubr.f32.mxu0 0.0
  %6274 = vmatmul.mubr.f32.gmra.mrb[0].mxu0 %v5948
  %v6275 = vpop.f32.mrb[0].mxu0
  %v6276 = vadd.f32 %v5839, %v6275
  %v6277 = vpop.f32.mrb[0].mxu0
  %6278 = vmatprep.mubr.f32.mxu0 0.0
  %6279 = vmatmul.mubr.f32.gmra.mrb[0].mxu0 %v5951
  %v6280 = vpop.f32.mrb[0].mxu0
  %v6281 = vadd.f32 %v5839, %v6280
  %v6282 = vpop.f32.mrb[0].mxu0
  %6283 = vmatprep.mubr.f32.mxu0 0.0
  %6284 = vmatmul.mubr.f32.gmra.mrb[0].mxu0 %v5954
  %v6285 = vpop.f32.mrb[0].mxu0
  %v6286 = vadd.f32 %v5839, %v6285
  %v6287 = vpop.f32.mrb[0].mxu0
  %6288 = vmatprep.mubr.f32.mxu0 0.0
  %6289 = vmatmul.mubr.f32.gmra.mrb[0].mxu0 %v5957
  %v6290 = vpop.f32.mrb[0].mxu0
  %v6291 = vadd.f32 %v5839, %v6290
  %v6292 = vpop.f32.mrb[0].mxu0
  %6293 = vmatprep.mubr.f32.mxu0 0.0
  %6294 = vmatmul.mubr.f32.gmra.mrb[0].mxu0 %v5960
  %v6295 = vpop.f32.mrb[0].mxu0
  %v6296 = vadd.f32 %v5839, %v6295
  %v6297 = vpop.f32.mrb[0].mxu0
  %6298 = vmatprep.mubr.f32.mxu0 0.0
  %6299 = vmatmul.mubr.f32.gmra.mrb[0].mxu0 %v5963
  %v6300 = vpop.f32.mrb[0].mxu0
  %v6301 = vadd.f32 %v5839, %v6300
  %v6302 = vpop.f32.mrb[0].mxu0
  %6303 = vmatprep.mubr.f32.mxu0 0.0
  %6304 = vmatmul.mubr.f32.gmra.mrb[0].mxu0 %v5966
  %v6305 = vpop.f32.mrb[0].mxu0
  %v6306 = vadd.f32 %v5839, %v6305
  %v6307 = vpop.f32.mrb[0].mxu0
  %6308 = vmatprep.mubr.f32.mxu0 0.0
  %6309 = vmatmul.mubr.f32.gmra.mrb[0].mxu0 %v5969
  %v6310 = vpop.f32.mrb[0].mxu0
  %v6311 = vadd.f32 %v5839, %v6310
  %v6312 = vpop.f32.mrb[0].mxu0
  %6313 = vmatprep.mubr.f32.mxu0 0.0
  %6314 = vmatmul.mubr.f32.gmra.mrb[0].mxu0 %v5972
  %v6315 = vpop.f32.mrb[0].mxu0
  %v6316 = vadd.f32 %v5839, %v6315
  %v6317 = vpop.f32.mrb[0].mxu0
  %6318 = vmatprep.mubr.f32.mxu0 0.0
  %6319 = vmatmul.mubr.f32.gmra.mrb[0].mxu0 %v5975
  %v6320 = vpop.f32.mrb[0].mxu0
  %v6321 = vadd.f32 %v5839, %v6320
  %v6322 = vpop.f32.mrb[0].mxu0
  %6323 = vmatprep.mubr.f32.mxu0 0.0
  %6324 = vmatmul.mubr.f32.gmra.mrb[0].mxu0 %v5978
  %v6325 = vpop.f32.mrb[0].mxu0
  %v6326 = vadd.f32 %v5839, %v6325
  %v6327 = vpop.f32.mrb[0].mxu0
  %6328 = vmatprep.mubr.f32.mxu0 0.0
  %6329 = vmatmul.mubr.f32.gmra.mrb[0].mxu0 %v5981
  %v6330 = vpop.f32.mrb[0].mxu0
  %v6331 = vadd.f32 %v5839, %v6330
  %v6332 = vpop.f32.mrb[0].mxu0
  %6333 = vmatprep.mubr.f32.mxu0 0.0
  %6334 = vmatmul.mubr.f32.gmra.mrb[0].mxu0 %v5984
  %v6335 = vpop.f32.mrb[0].mxu0
  %v6336 = vadd.f32 %v5839, %v6335
  %v6337 = vpop.f32.mrb[0].mxu0
  %6338 = vmatprep.mubr.f32.mxu0 0.0
  %6339 = vmatmul.mubr.f32.gmra.mrb[0].mxu0 %v5987
  %v6340 = vpop.f32.mrb[0].mxu0
  %v6341 = vadd.f32 %v5839, %v6340
  %v6342 = vpop.f32.mrb[0].mxu0
  %6343 = vmatprep.mubr.f32.mxu0 0.0
  %6344 = vmatmul.mubr.f32.gmra.mrb[0].mxu0 %v5990
  %v6345 = vpop.f32.mrb[0].mxu0
  %v6346 = vadd.f32 %v5839, %v6345
  %v6347 = vpop.f32.mrb[0].mxu0
  %6348 = vmatprep.mubr.f32.mxu0 0.0
  %6349 = vmatmul.mubr.f32.gmra.mrb[0].mxu0 %v5993
  %v6350 = vpop.f32.mrb[0].mxu0
  %v6351 = vadd.f32 %v5839, %v6350
  %v6352 = vpop.f32.mrb[0].mxu0
  %6353 = vmatprep.mubr.f32.mxu0 0.0
  %6354 = vmatmul.mubr.f32.gmra.mrb[0].mxu0 %v5996
  %v6355 = vpop.f32.mrb[0].mxu0
  %v6356 = vadd.f32 %v5839, %v6355
  %v6357 = vpop.f32.mrb[0].mxu0
  %6358 = vmatprep.mubr.f32.mxu0 0.0
  %6359 = vmatmul.mubr.f32.gmra.mrb[0].mxu0 %v5999
  %v6360 = vpop.f32.mrb[0].mxu0
  %v6361 = vadd.f32 %v5839, %v6360
  %v6362 = vpop.f32.mrb[0].mxu0
  %6363 = vmatprep.mubr.f32.mxu0 0.0
  %6364 = vmatmul.mubr.f32.gmra.mrb[0].mxu0 %v6002
  %v6365 = vpop.f32.mrb[0].mxu0
  %v6366 = vadd.f32 %v5839, %v6365
  %v6367 = vpop.f32.mrb[0].mxu0
  %6368 = vmatprep.mubr.f32.mxu0 0.0
  %6369 = vmatmul.mubr.f32.gmra.mrb[0].mxu0 %v6005
  %v6370 = vpop.f32.mrb[0].mxu0
  %v6371 = vadd.f32 %v5839, %v6370
  %v6372 = vpop.f32.mrb[0].mxu0
  %6373 = vmatprep.mubr.f32.mxu0 0.0
  %6374 = vmatmul.mubr.f32.gmra.mrb[0].mxu0 %v6008
  %v6375 = vpop.f32.mrb[0].mxu0
  %v6376 = vadd.f32 %v5839, %v6375
  %v6377 = vpop.f32.mrb[0].mxu0
  %6378 = vmatprep.mubr.f32.mxu0 0.0
  %6379 = vmatmul.mubr.f32.gmra.mrb[0].mxu0 %v6011
  %v6380 = vpop.f32.mrb[0].mxu0
  %v6381 = vadd.f32 %v5839, %v6380
  %v6382 = vpop.f32.mrb[0].mxu0
  %6383 = vmatprep.mubr.f32.mxu0 0.0
  %6384 = vmatmul.mubr.f32.gmra.mrb[0].mxu0 %v6014
  %v6385 = vpop.f32.mrb[0].mxu0
  %v6386 = vadd.f32 %v5839, %v6385
  %v6387 = vpop.f32.mrb[0].mxu0
  %6388 = vmatprep.mubr.f32.mxu0 0.0
  %6389 = vmatmul.mubr.f32.gmra.mrb[0].mxu0 %v6017
  %v6390 = vpop.f32.mrb[0].mxu0
  %v6391 = vadd.f32 %v5839, %v6390
  %v6392 = vpop.f32.mrb[0].mxu0
  %6393 = vmatprep.mubr.f32.mxu0 0.0
  %6394 = vmatmul.mubr.f32.gmra.mrb[0].mxu0 %v6020
  %v6395 = vpop.f32.mrb[0].mxu0
  %v6396 = vadd.f32 %v5839, %v6395
  %v6397 = vpop.f32.mrb[0].mxu0
  %6398 = vmatprep.mubr.f32.mxu0 0.0
  %6399 = vmatmul.mubr.f32.gmra.mrb[0].mxu0 %v6023
  %v6400 = vpop.f32.mrb[0].mxu0
  %v6401 = vadd.f32 %v5839, %v6400
  %v6402 = vpop.f32.mrb[0].mxu0
  %6403 = vmatprep.mubr.f32.mxu0 0.0
  %6404 = vmatmul.mubr.f32.gmra.mrb[0].mxu0 %v6026
  %v6405 = vpop.f32.mrb[0].mxu0
  %v6406 = vadd.f32 %v5839, %v6405
  %v6407 = vpop.f32.mrb[0].mxu0
  %6408 = vmatprep.mubr.f32.mxu0 0.0
  %6409 = vmatmul.mubr.f32.gmra.mrb[0].mxu0 %v6029
  %v6410 = vpop.f32.mrb[0].mxu0
  %v6411 = vadd.f32 %v5839, %v6410
  %v6412 = vpop.f32.mrb[0].mxu0
  %6413 = vmatprep.mubr.f32.mxu0 0.0
  %6414 = vmatmul.mubr.f32.gmra.mrb[0].mxu0 %v6032
  %v6415 = vpop.f32.mrb[0].mxu0
  %v6416 = vadd.f32 %v5839, %v6415
  %v6417 = vpop.f32.mrb[0].mxu0
  %6418 = vdwg.mxu0
  %v6419 = vmax.f32 %v6101, 0.0
  %v6420 = vmax.f32 %v6106, 0.0
  %v6421 = vmax.f32 %v6111, 0.0
  %v6422 = vmax.f32 %v6116, 0.0
  %v6423 = vmax.f32 %v6121, 0.0
  %v6424 = vmax.f32 %v6126, 0.0
  %v6425 = vmax.f32 %v6131, 0.0
  %v6426 = vmax.f32 %v6136, 0.0
  %v6427 = vmax.f32 %v6141, 0.0
  %v6428 = vmax.f32 %v6146, 0.0
  %v6429 = vmax.f32 %v6151, 0.0
  %v6430 = vmax.f32 %v6156, 0.0
  %v6431 = vmax.f32 %v6161, 0.0
  %v6432 = vmax.f32 %v6166, 0.0
  %v6433 = vmax.f32 %v6171, 0.0
  %v6434 = vmax.f32 %v6176, 0.0
  %v6435 = vmax.f32 %v6181, 0.0
  %v6436 = vmax.f32 %v6186, 0.0
  %v6437 = vmax.f32 %v6191, 0.0
  %v6438 = vmax.f32 %v6196, 0.0
  %v6439 = vmax.f32 %v6201, 0.0
  %v6440 = vmax.f32 %v6206, 0.0
  %v6441 = vmax.f32 %v6211, 0.0
  %v6442 = vmax.f32 %v6216, 0.0
  %v6443 = vmax.f32 %v6221, 0.0
  %v6444 = vmax.f32 %v6226, 0.0
  %v6445 = vmax.f32 %v6231, 0.0
  %v6446 = vmax.f32 %v6236, 0.0
  %v6447 = vmax.f32 %v6241, 0.0
  %v6448 = vmax.f32 %v6246, 0.0
  %v6449 = vmax.f32 %v6251, 0.0
  %v6450 = vmax.f32 %v6256, 0.0
  %v6451 = vmax.f32 %v6261, 0.0
  %v6452 = vmax.f32 %v6266, 0.0
  %v6453 = vmax.f32 %v6271, 0.0
  %v6454 = vmax.f32 %v6276, 0.0
  %v6455 = vmax.f32 %v6281, 0.0
  %v6456 = vmax.f32 %v6286, 0.0
  %v6457 = vmax.f32 %v6291, 0.0
  %v6458 = vmax.f32 %v6296, 0.0
  %v6459 = vmax.f32 %v6301, 0.0
  %v6460 = vmax.f32 %v6306, 0.0
  %v6461 = vmax.f32 %v6311, 0.0
  %v6462 = vmax.f32 %v6316, 0.0
  %v6463 = vmax.f32 %v6321, 0.0
  %v6464 = vmax.f32 %v6326, 0.0
  %v6465 = vmax.f32 %v6331, 0.0
  %v6466 = vmax.f32 %v6336, 0.0
  %v6467 = vmax.f32 %v6341, 0.0
  %v6468 = vmax.f32 %v6346, 0.0
  %v6469 = vmax.f32 %v6351, 0.0
  %v6470 = vmax.f32 %v6356, 0.0
  %v6471 = vmax.f32 %v6361, 0.0
  %v6472 = vmax.f32 %v6366, 0.0
  %v6473 = vmax.f32 %v6371, 0.0
  %v6474 = vmax.f32 %v6376, 0.0
  %v6475 = vmax.f32 %v6381, 0.0
  %v6476 = vmax.f32 %v6386, 0.0
  %v6477 = vmax.f32 %v6391, 0.0
  %v6478 = vmax.f32 %v6396, 0.0
  %v6479 = vmax.f32 %v6401, 0.0
  %v6480 = vmax.f32 %v6406, 0.0
  %v6481 = vmax.f32 %v6411, 0.0
  %v6482 = vmax.f32 %v6416, 0.0
  %6483 = vst.msk [vmem:[#allocation3] sm:$0xff] %vm5763, %v6419
  %6484 = vst.msk [vmem:[#allocation3 + $0x8] sm:$0xff] %vm5763, %v6420
  %6485 = vst.msk [vmem:[#allocation3 + $0x10] sm:$0xff] %vm5763, %v6421
  %6486 = vst.msk [vmem:[#allocation3 + $0x18] sm:$0xff] %vm5763, %v6422
  %6487 = vst.msk [vmem:[#allocation3 + $0x20] sm:$0xff] %vm5763, %v6423
  %6488 = vst.msk [vmem:[#allocation3 + $0x28] sm:$0xff] %vm5763, %v6424
  %6489 = vst.msk [vmem:[#allocation3 + $0x30] sm:$0xff] %vm5763, %v6425
  %6490 = vst.msk [vmem:[#allocation3 + $0x38] sm:$0xff] %vm5763, %v6426
  %6491 = vst.msk [vmem:[#allocation3 + $0x40] sm:$0xff] %vm5763, %v6427
  %6492 = vst.msk [vmem:[#allocation3 + $0x48] sm:$0xff] %vm5763, %v6428
  %6493 = vst.msk [vmem:[#allocation3 + $0x50] sm:$0xff] %vm5763, %v6429
  %6494 = vst.msk [vmem:[#allocation3 + $0x58] sm:$0xff] %vm5763, %v6430
  %6495 = vst.msk [vmem:[#allocation3 + $0x60] sm:$0xff] %vm5763, %v6431
  %6496 = vst.msk [vmem:[#allocation3 + $0x68] sm:$0xff] %vm5763, %v6432
  %6497 = vst.msk [vmem:[#allocation3 + $0x70] sm:$0xff] %vm5763, %v6433
  %6498 = vst.msk [vmem:[#allocation3 + $0x78] sm:$0xff] %vm5763, %v6434
  %6499 = vst.msk [vmem:[#allocation3 + $0x80] sm:$0xff] %vm5763, %v6435
  %6500 = vst.msk [vmem:[#allocation3 + $0x88] sm:$0xff] %vm5763, %v6436
  %6501 = vst.msk [vmem:[#allocation3 + $0x90] sm:$0xff] %vm5763, %v6437
  %6502 = vst.msk [vmem:[#allocation3 + $0x98] sm:$0xff] %vm5763, %v6438
  %6503 = vst.msk [vmem:[#allocation3 + $0xa0] sm:$0xff] %vm5763, %v6439
  %6504 = vst.msk [vmem:[#allocation3 + $0xa8] sm:$0xff] %vm5763, %v6440
  %6505 = vst.msk [vmem:[#allocation3 + $0xb0] sm:$0xff] %vm5763, %v6441
  %6506 = vst.msk [vmem:[#allocation3 + $0xb8] sm:$0xff] %vm5763, %v6442
  %6507 = vst.msk [vmem:[#allocation3 + $0xc0] sm:$0xff] %vm5763, %v6443
  %6508 = vst.msk [vmem:[#allocation3 + $0xc8] sm:$0xff] %vm5763, %v6444
  %6509 = vst.msk [vmem:[#allocation3 + $0xd0] sm:$0xff] %vm5763, %v6445
  %6510 = vst.msk [vmem:[#allocation3 + $0xd8] sm:$0xff] %vm5763, %v6446
  %6511 = vst.msk [vmem:[#allocation3 + $0xe0] sm:$0xff] %vm5763, %v6447
  %6512 = vst.msk [vmem:[#allocation3 + $0xe8] sm:$0xff] %vm5763, %v6448
  %6513 = vst.msk [vmem:[#allocation3 + $0xf0] sm:$0xff] %vm5763, %v6449
  %6514 = vst.msk [vmem:[#allocation3 + $0xf8] sm:$0xff] %vm5763, %v6450
  %6515 = vst.msk [vmem:[#allocation3 + $0x100] sm:$0xff] %vm5763, %v6451
  %6516 = vst.msk [vmem:[#allocation3 + $0x108] sm:$0xff] %vm5763, %v6452
  %6517 = vst.msk [vmem:[#allocation3 + $0x110] sm:$0xff] %vm5763, %v6453
  %6518 = vst.msk [vmem:[#allocation3 + $0x118] sm:$0xff] %vm5763, %v6454
  %6519 = vst.msk [vmem:[#allocation3 + $0x120] sm:$0xff] %vm5763, %v6455
  %6520 = vst.msk [vmem:[#allocation3 + $0x128] sm:$0xff] %vm5763, %v6456
  %6521 = vst.msk [vmem:[#allocation3 + $0x130] sm:$0xff] %vm5763, %v6457
  %6522 = vst.msk [vmem:[#allocation3 + $0x138] sm:$0xff] %vm5763, %v6458
  %6523 = vst.msk [vmem:[#allocation3 + $0x140] sm:$0xff] %vm5763, %v6459
  %6524 = vst.msk [vmem:[#allocation3 + $0x148] sm:$0xff] %vm5763, %v6460
  %6525 = vst.msk [vmem:[#allocation3 + $0x150] sm:$0xff] %vm5763, %v6461
  %6526 = vst.msk [vmem:[#allocation3 + $0x158] sm:$0xff] %vm5763, %v6462
  %6527 = vst.msk [vmem:[#allocation3 + $0x160] sm:$0xff] %vm5763, %v6463
  %6528 = vst.msk [vmem:[#allocation3 + $0x168] sm:$0xff] %vm5763, %v6464
  %6529 = vst.msk [vmem:[#allocation3 + $0x170] sm:$0xff] %vm5763, %v6465
  %6530 = vst.msk [vmem:[#allocation3 + $0x178] sm:$0xff] %vm5763, %v6466
  %6531 = vst.msk [vmem:[#allocation3 + $0x180] sm:$0xff] %vm5763, %v6467
  %6532 = vst.msk [vmem:[#allocation3 + $0x188] sm:$0xff] %vm5763, %v6468
  %6533 = vst.msk [vmem:[#allocation3 + $0x190] sm:$0xff] %vm5763, %v6469
  %6534 = vst.msk [vmem:[#allocation3 + $0x198] sm:$0xff] %vm5763, %v6470
  %6535 = vst.msk [vmem:[#allocation3 + $0x1a0] sm:$0xff] %vm5763, %v6471
  %6536 = vst.msk [vmem:[#allocation3 + $0x1a8] sm:$0xff] %vm5763, %v6472
  %6537 = vst.msk [vmem:[#allocation3 + $0x1b0] sm:$0xff] %vm5763, %v6473
  %6538 = vst.msk [vmem:[#allocation3 + $0x1b8] sm:$0xff] %vm5763, %v6474
  %6539 = vst.msk [vmem:[#allocation3 + $0x1c0] sm:$0xff] %vm5763, %v6475
  %6540 = vst.msk [vmem:[#allocation3 + $0x1c8] sm:$0xff] %vm5763, %v6476
  %6541 = vst.msk [vmem:[#allocation3 + $0x1d0] sm:$0xff] %vm5763, %v6477
  %6542 = vst.msk [vmem:[#allocation3 + $0x1d8] sm:$0xff] %vm5763, %v6478
  %6543 = vst.msk [vmem:[#allocation3 + $0x1e0] sm:$0xff] %vm5763, %v6479
  %6544 = vst.msk [vmem:[#allocation3 + $0x1e8] sm:$0xff] %vm5763, %v6480
  %6545 = vst.msk [vmem:[#allocation3 + $0x1f0] sm:$0xff] %vm5763, %v6481
  %6546 = vst.msk [vmem:[#allocation3 + $0x1f8] sm:$0xff] %vm5763, %v6482
  %v6547 = vld [vmem:[#allocation3] ss:$64 sm:$0x1]
  %v6548 = vld [vmem:[#allocation3] ss:$64 sm:$0x2]
  %v6549 = vor.u32 %v6547, %v6548
  %v6550 = vld [vmem:[#allocation3] ss:$64 sm:$0x4]
  %v6551 = vor.u32 %v6549, %v6550
  %v6552 = vld [vmem:[#allocation3] ss:$64 sm:$0x8]
  %v6553 = vor.u32 %v6551, %v6552
  %v6554 = vld [vmem:[#allocation3] ss:$64 sm:$0x10]
  %v6555 = vor.u32 %v6553, %v6554
  %v6556 = vld [vmem:[#allocation3] ss:$64 sm:$0x20]
  %v6557 = vor.u32 %v6555, %v6556
  %v6558 = vld [vmem:[#allocation3] ss:$64 sm:$0x40]
  %v6559 = vor.u32 %v6557, %v6558
  %v6560 = vld [vmem:[#allocation3] ss:$64 sm:$0x80]
  %v6561 = vor.u32 %v6559, %v6560
  %s6562 = scalar_lea.vmem [#allocation3], 1
  %v6563 = vld [vmem:[%s6562] ss:$64 sm:$0x1]
  %v6564 = vld [vmem:[%s6562] ss:$64 sm:$0x2]
  %v6565 = vor.u32 %v6563, %v6564
  %v6566 = vld [vmem:[%s6562] ss:$64 sm:$0x4]
  %v6567 = vor.u32 %v6565, %v6566
  %v6568 = vld [vmem:[%s6562] ss:$64 sm:$0x8]
  %v6569 = vor.u32 %v6567, %v6568
  %v6570 = vld [vmem:[%s6562] ss:$64 sm:$0x10]
  %v6571 = vor.u32 %v6569, %v6570
  %v6572 = vld [vmem:[%s6562] ss:$64 sm:$0x20]
  %v6573 = vor.u32 %v6571, %v6572
  %v6574 = vld [vmem:[%s6562] ss:$64 sm:$0x40]
  %v6575 = vor.u32 %v6573, %v6574
  %v6576 = vld [vmem:[%s6562] ss:$64 sm:$0x80]
  %v6577 = vor.u32 %v6575, %v6576
  %v6578 = vmax.f32 %v6561, %v6577
  %s6579 = scalar_lea.vmem [#allocation3], 2
  %v6580 = vld [vmem:[%s6579] ss:$64 sm:$0x1]
  %v6581 = vld [vmem:[%s6579] ss:$64 sm:$0x2]
  %v6582 = vor.u32 %v6580, %v6581
  %v6583 = vld [vmem:[%s6579] ss:$64 sm:$0x4]
  %v6584 = vor.u32 %v6582, %v6583
  %v6585 = vld [vmem:[%s6579] ss:$64 sm:$0x8]
  %v6586 = vor.u32 %v6584, %v6585
  %v6587 = vld [vmem:[%s6579] ss:$64 sm:$0x10]
  %v6588 = vor.u32 %v6586, %v6587
  %v6589 = vld [vmem:[%s6579] ss:$64 sm:$0x20]
  %v6590 = vor.u32 %v6588, %v6589
  %v6591 = vld [vmem:[%s6579] ss:$64 sm:$0x40]
  %v6592 = vor.u32 %v6590, %v6591
  %v6593 = vld [vmem:[%s6579] ss:$64 sm:$0x80]
  %v6594 = vor.u32 %v6592, %v6593
  %s6595 = scalar_lea.vmem [#allocation3], 3
  %v6596 = vld [vmem:[%s6595] ss:$64 sm:$0x1]
  %v6597 = vld [vmem:[%s6595] ss:$64 sm:$0x2]
  %v6598 = vor.u32 %v6596, %v6597
  %v6599 = vld [vmem:[%s6595] ss:$64 sm:$0x4]
  %v6600 = vor.u32 %v6598, %v6599
  %v6601 = vld [vmem:[%s6595] ss:$64 sm:$0x8]
  %v6602 = vor.u32 %v6600, %v6601
  %v6603 = vld [vmem:[%s6595] ss:$64 sm:$0x10]
  %v6604 = vor.u32 %v6602, %v6603
  %v6605 = vld [vmem:[%s6595] ss:$64 sm:$0x20]
  %v6606 = vor.u32 %v6604, %v6605
  %v6607 = vld [vmem:[%s6595] ss:$64 sm:$0x40]
  %v6608 = vor.u32 %v6606, %v6607
  %v6609 = vld [vmem:[%s6595] ss:$64 sm:$0x80]
  %v6610 = vor.u32 %v6608, %v6609
  %v6611 = vmax.f32 %v6594, %v6610
  %s6612 = scalar_lea.vmem [#allocation3], 4
  %v6613 = vld [vmem:[%s6612] ss:$64 sm:$0x1]
  %v6614 = vld [vmem:[%s6612] ss:$64 sm:$0x2]
  %v6615 = vor.u32 %v6613, %v6614
  %v6616 = vld [vmem:[%s6612] ss:$64 sm:$0x4]
  %v6617 = vor.u32 %v6615, %v6616
  %v6618 = vld [vmem:[%s6612] ss:$64 sm:$0x8]
  %v6619 = vor.u32 %v6617, %v6618
  %v6620 = vld [vmem:[%s6612] ss:$64 sm:$0x10]
  %v6621 = vor.u32 %v6619, %v6620
  %v6622 = vld [vmem:[%s6612] ss:$64 sm:$0x20]
  %v6623 = vor.u32 %v6621, %v6622
  %v6624 = vld [vmem:[%s6612] ss:$64 sm:$0x40]
  %v6625 = vor.u32 %v6623, %v6624
  %v6626 = vld [vmem:[%s6612] ss:$64 sm:$0x80]
  %v6627 = vor.u32 %v6625, %v6626
  %s6628 = scalar_lea.vmem [#allocation3], 5
  %v6629 = vld [vmem:[%s6628] ss:$64 sm:$0x1]
  %v6630 = vld [vmem:[%s6628] ss:$64 sm:$0x2]
  %v6631 = vor.u32 %v6629, %v6630
  %v6632 = vld [vmem:[%s6628] ss:$64 sm:$0x4]
  %v6633 = vor.u32 %v6631, %v6632
  %v6634 = vld [vmem:[%s6628] ss:$64 sm:$0x8]
  %v6635 = vor.u32 %v6633, %v6634
  %v6636 = vld [vmem:[%s6628] ss:$64 sm:$0x10]
  %v6637 = vor.u32 %v6635, %v6636
  %v6638 = vld [vmem:[%s6628] ss:$64 sm:$0x20]
  %v6639 = vor.u32 %v6637, %v6638
  %v6640 = vld [vmem:[%s6628] ss:$64 sm:$0x40]
  %v6641 = vor.u32 %v6639, %v6640
  %v6642 = vld [vmem:[%s6628] ss:$64 sm:$0x80]
  %v6643 = vor.u32 %v6641, %v6642
  %v6644 = vmax.f32 %v6627, %v6643
  %s6645 = scalar_lea.vmem [#allocation3], 6
  %v6646 = vld [vmem:[%s6645] ss:$64 sm:$0x1]
  %v6647 = vld [vmem:[%s6645] ss:$64 sm:$0x2]
  %v6648 = vor.u32 %v6646, %v6647
  %v6649 = vld [vmem:[%s6645] ss:$64 sm:$0x4]
  %v6650 = vor.u32 %v6648, %v6649
  %v6651 = vld [vmem:[%s6645] ss:$64 sm:$0x8]
  %v6652 = vor.u32 %v6650, %v6651
  %v6653 = vld [vmem:[%s6645] ss:$64 sm:$0x10]
  %v6654 = vor.u32 %v6652, %v6653
  %v6655 = vld [vmem:[%s6645] ss:$64 sm:$0x20]
  %v6656 = vor.u32 %v6654, %v6655
  %v6657 = vld [vmem:[%s6645] ss:$64 sm:$0x40]
  %v6658 = vor.u32 %v6656, %v6657
  %v6659 = vld [vmem:[%s6645] ss:$64 sm:$0x80]
  %v6660 = vor.u32 %v6658, %v6659
  %s6661 = scalar_lea.vmem [#allocation3], 7
  %v6662 = vld [vmem:[%s6661] ss:$64 sm:$0x1]
  %v6663 = vld [vmem:[%s6661] ss:$64 sm:$0x2]
  %v6664 = vor.u32 %v6662, %v6663
  %v6665 = vld [vmem:[%s6661] ss:$64 sm:$0x4]
  %v6666 = vor.u32 %v6664, %v6665
  %v6667 = vld [vmem:[%s6661] ss:$64 sm:$0x8]
  %v6668 = vor.u32 %v6666, %v6667
  %v6669 = vld [vmem:[%s6661] ss:$64 sm:$0x10]
  %v6670 = vor.u32 %v6668, %v6669
  %v6671 = vld [vmem:[%s6661] ss:$64 sm:$0x20]
  %v6672 = vor.u32 %v6670, %v6671
  %v6673 = vld [vmem:[%s6661] ss:$64 sm:$0x40]
  %v6674 = vor.u32 %v6672, %v6673
  %v6675 = vld [vmem:[%s6661] ss:$64 sm:$0x80]
  %v6676 = vor.u32 %v6674, %v6675
  %v6677 = vmax.f32 %v6660, %v6676
  %s6678 = scalar_lea.vmem [#allocation3], 8
  %v6679 = vld [vmem:[%s6678] ss:$64 sm:$0x1]
  %v6680 = vld [vmem:[%s6678] ss:$64 sm:$0x2]
  %v6681 = vor.u32 %v6679, %v6680
  %v6682 = vld [vmem:[%s6678] ss:$64 sm:$0x4]
  %v6683 = vor.u32 %v6681, %v6682
  %v6684 = vld [vmem:[%s6678] ss:$64 sm:$0x8]
  %v6685 = vor.u32 %v6683, %v6684
  %v6686 = vld [vmem:[%s6678] ss:$64 sm:$0x10]
  %v6687 = vor.u32 %v6685, %v6686
  %v6688 = vld [vmem:[%s6678] ss:$64 sm:$0x20]
  %v6689 = vor.u32 %v6687, %v6688
  %v6690 = vld [vmem:[%s6678] ss:$64 sm:$0x40]
  %v6691 = vor.u32 %v6689, %v6690
  %v6692 = vld [vmem:[%s6678] ss:$64 sm:$0x80]
  %v6693 = vor.u32 %v6691, %v6692
  %s6694 = scalar_lea.vmem [#allocation3], 9
  %v6695 = vld [vmem:[%s6694] ss:$64 sm:$0x1]
  %v6696 = vld [vmem:[%s6694] ss:$64 sm:$0x2]
  %v6697 = vor.u32 %v6695, %v6696
  %v6698 = vld [vmem:[%s6694] ss:$64 sm:$0x4]
  %v6699 = vor.u32 %v6697, %v6698
  %v6700 = vld [vmem:[%s6694] ss:$64 sm:$0x8]
  %v6701 = vor.u32 %v6699, %v6700
  %v6702 = vld [vmem:[%s6694] ss:$64 sm:$0x10]
  %v6703 = vor.u32 %v6701, %v6702
  %v6704 = vld [vmem:[%s6694] ss:$64 sm:$0x20]
  %v6705 = vor.u32 %v6703, %v6704
  %v6706 = vld [vmem:[%s6694] ss:$64 sm:$0x40]
  %v6707 = vor.u32 %v6705, %v6706
  %v6708 = vld [vmem:[%s6694] ss:$64 sm:$0x80]
  %v6709 = vor.u32 %v6707, %v6708
  %v6710 = vmax.f32 %v6693, %v6709
  %s6711 = scalar_lea.vmem [#allocation3], 10
  %v6712 = vld [vmem:[%s6711] ss:$64 sm:$0x1]
  %v6713 = vld [vmem:[%s6711] ss:$64 sm:$0x2]
  %v6714 = vor.u32 %v6712, %v6713
  %v6715 = vld [vmem:[%s6711] ss:$64 sm:$0x4]
  %v6716 = vor.u32 %v6714, %v6715
  %v6717 = vld [vmem:[%s6711] ss:$64 sm:$0x8]
  %v6718 = vor.u32 %v6716, %v6717
  %v6719 = vld [vmem:[%s6711] ss:$64 sm:$0x10]
  %v6720 = vor.u32 %v6718, %v6719
  %v6721 = vld [vmem:[%s6711] ss:$64 sm:$0x20]
  %v6722 = vor.u32 %v6720, %v6721
  %v6723 = vld [vmem:[%s6711] ss:$64 sm:$0x40]
  %v6724 = vor.u32 %v6722, %v6723
  %v6725 = vld [vmem:[%s6711] ss:$64 sm:$0x80]
  %v6726 = vor.u32 %v6724, %v6725
  %s6727 = scalar_lea.vmem [#allocation3], 11
  %v6728 = vld [vmem:[%s6727] ss:$64 sm:$0x1]
  %v6729 = vld [vmem:[%s6727] ss:$64 sm:$0x2]
  %v6730 = vor.u32 %v6728, %v6729
  %v6731 = vld [vmem:[%s6727] ss:$64 sm:$0x4]
  %v6732 = vor.u32 %v6730, %v6731
  %v6733 = vld [vmem:[%s6727] ss:$64 sm:$0x8]
  %v6734 = vor.u32 %v6732, %v6733
  %v6735 = vld [vmem:[%s6727] ss:$64 sm:$0x10]
  %v6736 = vor.u32 %v6734, %v6735
  %v6737 = vld [vmem:[%s6727] ss:$64 sm:$0x20]
  %v6738 = vor.u32 %v6736, %v6737
  %v6739 = vld [vmem:[%s6727] ss:$64 sm:$0x40]
  %v6740 = vor.u32 %v6738, %v6739
  %v6741 = vld [vmem:[%s6727] ss:$64 sm:$0x80]
  %v6742 = vor.u32 %v6740, %v6741
  %v6743 = vmax.f32 %v6726, %v6742
  %s6744 = scalar_lea.vmem [#allocation3], 12
  %v6745 = vld [vmem:[%s6744] ss:$64 sm:$0x1]
  %v6746 = vld [vmem:[%s6744] ss:$64 sm:$0x2]
  %v6747 = vor.u32 %v6745, %v6746
  %v6748 = vld [vmem:[%s6744] ss:$64 sm:$0x4]
  %v6749 = vor.u32 %v6747, %v6748
  %v6750 = vld [vmem:[%s6744] ss:$64 sm:$0x8]
  %v6751 = vor.u32 %v6749, %v6750
  %v6752 = vld [vmem:[%s6744] ss:$64 sm:$0x10]
  %v6753 = vor.u32 %v6751, %v6752
  %v6754 = vld [vmem:[%s6744] ss:$64 sm:$0x20]
  %v6755 = vor.u32 %v6753, %v6754
  %v6756 = vld [vmem:[%s6744] ss:$64 sm:$0x40]
  %v6757 = vor.u32 %v6755, %v6756
  %v6758 = vld [vmem:[%s6744] ss:$64 sm:$0x80]
  %v6759 = vor.u32 %v6757, %v6758
  %s6760 = scalar_lea.vmem [#allocation3], 13
  %v6761 = vld [vmem:[%s6760] ss:$64 sm:$0x1]
  %v6762 = vld [vmem:[%s6760] ss:$64 sm:$0x2]
  %v6763 = vor.u32 %v6761, %v6762
  %v6764 = vld [vmem:[%s6760] ss:$64 sm:$0x4]
  %v6765 = vor.u32 %v6763, %v6764
  %v6766 = vld [vmem:[%s6760] ss:$64 sm:$0x8]
  %v6767 = vor.u32 %v6765, %v6766
  %v6768 = vld [vmem:[%s6760] ss:$64 sm:$0x10]
  %v6769 = vor.u32 %v6767, %v6768
  %v6770 = vld [vmem:[%s6760] ss:$64 sm:$0x20]
  %v6771 = vor.u32 %v6769, %v6770
  %v6772 = vld [vmem:[%s6760] ss:$64 sm:$0x40]
  %v6773 = vor.u32 %v6771, %v6772
  %v6774 = vld [vmem:[%s6760] ss:$64 sm:$0x80]
  %v6775 = vor.u32 %v6773, %v6774
  %v6776 = vmax.f32 %v6759, %v6775
  %s6777 = scalar_lea.vmem [#allocation3], 14
  %v6778 = vld [vmem:[%s6777] ss:$64 sm:$0x1]
  %v6779 = vld [vmem:[%s6777] ss:$64 sm:$0x2]
  %v6780 = vor.u32 %v6778, %v6779
  %v6781 = vld [vmem:[%s6777] ss:$64 sm:$0x4]
  %v6782 = vor.u32 %v6780, %v6781
  %v6783 = vld [vmem:[%s6777] ss:$64 sm:$0x8]
  %v6784 = vor.u32 %v6782, %v6783
  %v6785 = vld [vmem:[%s6777] ss:$64 sm:$0x10]
  %v6786 = vor.u32 %v6784, %v6785
  %v6787 = vld [vmem:[%s6777] ss:$64 sm:$0x20]
  %v6788 = vor.u32 %v6786, %v6787
  %v6789 = vld [vmem:[%s6777] ss:$64 sm:$0x40]
  %v6790 = vor.u32 %v6788, %v6789
  %v6791 = vld [vmem:[%s6777] ss:$64 sm:$0x80]
  %v6792 = vor.u32 %v6790, %v6791
  %s6793 = scalar_lea.vmem [#allocation3], 15
  %v6794 = vld [vmem:[%s6793] ss:$64 sm:$0x1]
  %v6795 = vld [vmem:[%s6793] ss:$64 sm:$0x2]
  %v6796 = vor.u32 %v6794, %v6795
  %v6797 = vld [vmem:[%s6793] ss:$64 sm:$0x4]
  %v6798 = vor.u32 %v6796, %v6797
  %v6799 = vld [vmem:[%s6793] ss:$64 sm:$0x8]
  %v6800 = vor.u32 %v6798, %v6799
  %v6801 = vld [vmem:[%s6793] ss:$64 sm:$0x10]
  %v6802 = vor.u32 %v6800, %v6801
  %v6803 = vld [vmem:[%s6793] ss:$64 sm:$0x20]
  %v6804 = vor.u32 %v6802, %v6803
  %v6805 = vld [vmem:[%s6793] ss:$64 sm:$0x40]
  %v6806 = vor.u32 %v6804, %v6805
  %v6807 = vld [vmem:[%s6793] ss:$64 sm:$0x80]
  %v6808 = vor.u32 %v6806, %v6807
  %v6809 = vmax.f32 %v6792, %v6808
  %s6810 = scalar_lea.vmem [#allocation3], 16
  %v6811 = vld [vmem:[%s6810] ss:$64 sm:$0x1]
  %v6812 = vld [vmem:[%s6810] ss:$64 sm:$0x2]
  %v6813 = vor.u32 %v6811, %v6812
  %v6814 = vld [vmem:[%s6810] ss:$64 sm:$0x4]
  %v6815 = vor.u32 %v6813, %v6814
  %v6816 = vld [vmem:[%s6810] ss:$64 sm:$0x8]
  %v6817 = vor.u32 %v6815, %v6816
  %v6818 = vld [vmem:[%s6810] ss:$64 sm:$0x10]
  %v6819 = vor.u32 %v6817, %v6818
  %v6820 = vld [vmem:[%s6810] ss:$64 sm:$0x20]
  %v6821 = vor.u32 %v6819, %v6820
  %v6822 = vld [vmem:[%s6810] ss:$64 sm:$0x40]
  %v6823 = vor.u32 %v6821, %v6822
  %v6824 = vld [vmem:[%s6810] ss:$64 sm:$0x80]
  %v6825 = vor.u32 %v6823, %v6824
  %s6826 = scalar_lea.vmem [#allocation3], 17
  %v6827 = vld [vmem:[%s6826] ss:$64 sm:$0x1]
  %v6828 = vld [vmem:[%s6826] ss:$64 sm:$0x2]
  %v6829 = vor.u32 %v6827, %v6828
  %v6830 = vld [vmem:[%s6826] ss:$64 sm:$0x4]
  %v6831 = vor.u32 %v6829, %v6830
  %v6832 = vld [vmem:[%s6826] ss:$64 sm:$0x8]
  %v6833 = vor.u32 %v6831, %v6832
  %v6834 = vld [vmem:[%s6826] ss:$64 sm:$0x10]
  %v6835 = vor.u32 %v6833, %v6834
  %v6836 = vld [vmem:[%s6826] ss:$64 sm:$0x20]
  %v6837 = vor.u32 %v6835, %v6836
  %v6838 = vld [vmem:[%s6826] ss:$64 sm:$0x40]
  %v6839 = vor.u32 %v6837, %v6838
  %v6840 = vld [vmem:[%s6826] ss:$64 sm:$0x80]
  %v6841 = vor.u32 %v6839, %v6840
  %v6842 = vmax.f32 %v6825, %v6841
  %s6843 = scalar_lea.vmem [#allocation3], 18
  %v6844 = vld [vmem:[%s6843] ss:$64 sm:$0x1]
  %v6845 = vld [vmem:[%s6843] ss:$64 sm:$0x2]
  %v6846 = vor.u32 %v6844, %v6845
  %v6847 = vld [vmem:[%s6843] ss:$64 sm:$0x4]
  %v6848 = vor.u32 %v6846, %v6847
  %v6849 = vld [vmem:[%s6843] ss:$64 sm:$0x8]
  %v6850 = vor.u32 %v6848, %v6849
  %v6851 = vld [vmem:[%s6843] ss:$64 sm:$0x10]
  %v6852 = vor.u32 %v6850, %v6851
  %v6853 = vld [vmem:[%s6843] ss:$64 sm:$0x20]
  %v6854 = vor.u32 %v6852, %v6853
  %v6855 = vld [vmem:[%s6843] ss:$64 sm:$0x40]
  %v6856 = vor.u32 %v6854, %v6855
  %v6857 = vld [vmem:[%s6843] ss:$64 sm:$0x80]
  %v6858 = vor.u32 %v6856, %v6857
  %s6859 = scalar_lea.vmem [#allocation3], 19
  %v6860 = vld [vmem:[%s6859] ss:$64 sm:$0x1]
  %v6861 = vld [vmem:[%s6859] ss:$64 sm:$0x2]
  %v6862 = vor.u32 %v6860, %v6861
  %v6863 = vld [vmem:[%s6859] ss:$64 sm:$0x4]
  %v6864 = vor.u32 %v6862, %v6863
  %v6865 = vld [vmem:[%s6859] ss:$64 sm:$0x8]
  %v6866 = vor.u32 %v6864, %v6865
  %v6867 = vld [vmem:[%s6859] ss:$64 sm:$0x10]
  %v6868 = vor.u32 %v6866, %v6867
  %v6869 = vld [vmem:[%s6859] ss:$64 sm:$0x20]
  %v6870 = vor.u32 %v6868, %v6869
  %v6871 = vld [vmem:[%s6859] ss:$64 sm:$0x40]
  %v6872 = vor.u32 %v6870, %v6871
  %v6873 = vld [vmem:[%s6859] ss:$64 sm:$0x80]
  %v6874 = vor.u32 %v6872, %v6873
  %v6875 = vmax.f32 %v6858, %v6874
  %s6876 = scalar_lea.vmem [#allocation3], 20
  %v6877 = vld [vmem:[%s6876] ss:$64 sm:$0x1]
  %v6878 = vld [vmem:[%s6876] ss:$64 sm:$0x2]
  %v6879 = vor.u32 %v6877, %v6878
  %v6880 = vld [vmem:[%s6876] ss:$64 sm:$0x4]
  %v6881 = vor.u32 %v6879, %v6880
  %v6882 = vld [vmem:[%s6876] ss:$64 sm:$0x8]
  %v6883 = vor.u32 %v6881, %v6882
  %v6884 = vld [vmem:[%s6876] ss:$64 sm:$0x10]
  %v6885 = vor.u32 %v6883, %v6884
  %v6886 = vld [vmem:[%s6876] ss:$64 sm:$0x20]
  %v6887 = vor.u32 %v6885, %v6886
  %v6888 = vld [vmem:[%s6876] ss:$64 sm:$0x40]
  %v6889 = vor.u32 %v6887, %v6888
  %v6890 = vld [vmem:[%s6876] ss:$64 sm:$0x80]
  %v6891 = vor.u32 %v6889, %v6890
  %s6892 = scalar_lea.vmem [#allocation3], 21
  %v6893 = vld [vmem:[%s6892] ss:$64 sm:$0x1]
  %v6894 = vld [vmem:[%s6892] ss:$64 sm:$0x2]
  %v6895 = vor.u32 %v6893, %v6894
  %v6896 = vld [vmem:[%s6892] ss:$64 sm:$0x4]
  %v6897 = vor.u32 %v6895, %v6896
  %v6898 = vld [vmem:[%s6892] ss:$64 sm:$0x8]
  %v6899 = vor.u32 %v6897, %v6898
  %v6900 = vld [vmem:[%s6892] ss:$64 sm:$0x10]
  %v6901 = vor.u32 %v6899, %v6900
  %v6902 = vld [vmem:[%s6892] ss:$64 sm:$0x20]
  %v6903 = vor.u32 %v6901, %v6902
  %v6904 = vld [vmem:[%s6892] ss:$64 sm:$0x40]
  %v6905 = vor.u32 %v6903, %v6904
  %v6906 = vld [vmem:[%s6892] ss:$64 sm:$0x80]
  %v6907 = vor.u32 %v6905, %v6906
  %v6908 = vmax.f32 %v6891, %v6907
  %s6909 = scalar_lea.vmem [#allocation3], 22
  %v6910 = vld [vmem:[%s6909] ss:$64 sm:$0x1]
  %v6911 = vld [vmem:[%s6909] ss:$64 sm:$0x2]
  %v6912 = vor.u32 %v6910, %v6911
  %v6913 = vld [vmem:[%s6909] ss:$64 sm:$0x4]
  %v6914 = vor.u32 %v6912, %v6913
  %v6915 = vld [vmem:[%s6909] ss:$64 sm:$0x8]
  %v6916 = vor.u32 %v6914, %v6915
  %v6917 = vld [vmem:[%s6909] ss:$64 sm:$0x10]
  %v6918 = vor.u32 %v6916, %v6917
  %v6919 = vld [vmem:[%s6909] ss:$64 sm:$0x20]
  %v6920 = vor.u32 %v6918, %v6919
  %v6921 = vld [vmem:[%s6909] ss:$64 sm:$0x40]
  %v6922 = vor.u32 %v6920, %v6921
  %v6923 = vld [vmem:[%s6909] ss:$64 sm:$0x80]
  %v6924 = vor.u32 %v6922, %v6923
  %s6925 = scalar_lea.vmem [#allocation3], 23
  %v6926 = vld [vmem:[%s6925] ss:$64 sm:$0x1]
  %v6927 = vld [vmem:[%s6925] ss:$64 sm:$0x2]
  %v6928 = vor.u32 %v6926, %v6927
  %v6929 = vld [vmem:[%s6925] ss:$64 sm:$0x4]
  %v6930 = vor.u32 %v6928, %v6929
  %v6931 = vld [vmem:[%s6925] ss:$64 sm:$0x8]
  %v6932 = vor.u32 %v6930, %v6931
  %v6933 = vld [vmem:[%s6925] ss:$64 sm:$0x10]
  %v6934 = vor.u32 %v6932, %v6933
  %v6935 = vld [vmem:[%s6925] ss:$64 sm:$0x20]
  %v6936 = vor.u32 %v6934, %v6935
  %v6937 = vld [vmem:[%s6925] ss:$64 sm:$0x40]
  %v6938 = vor.u32 %v6936, %v6937
  %v6939 = vld [vmem:[%s6925] ss:$64 sm:$0x80]
  %v6940 = vor.u32 %v6938, %v6939
  %v6941 = vmax.f32 %v6924, %v6940
  %s6942 = scalar_lea.vmem [#allocation3], 24
  %v6943 = vld [vmem:[%s6942] ss:$64 sm:$0x1]
  %v6944 = vld [vmem:[%s6942] ss:$64 sm:$0x2]
  %v6945 = vor.u32 %v6943, %v6944
  %v6946 = vld [vmem:[%s6942] ss:$64 sm:$0x4]
  %v6947 = vor.u32 %v6945, %v6946
  %v6948 = vld [vmem:[%s6942] ss:$64 sm:$0x8]
  %v6949 = vor.u32 %v6947, %v6948
  %v6950 = vld [vmem:[%s6942] ss:$64 sm:$0x10]
  %v6951 = vor.u32 %v6949, %v6950
  %v6952 = vld [vmem:[%s6942] ss:$64 sm:$0x20]
  %v6953 = vor.u32 %v6951, %v6952
  %v6954 = vld [vmem:[%s6942] ss:$64 sm:$0x40]
  %v6955 = vor.u32 %v6953, %v6954
  %v6956 = vld [vmem:[%s6942] ss:$64 sm:$0x80]
  %v6957 = vor.u32 %v6955, %v6956
  %s6958 = scalar_lea.vmem [#allocation3], 25
  %v6959 = vld [vmem:[%s6958] ss:$64 sm:$0x1]
  %v6960 = vld [vmem:[%s6958] ss:$64 sm:$0x2]
  %v6961 = vor.u32 %v6959, %v6960
  %v6962 = vld [vmem:[%s6958] ss:$64 sm:$0x4]
  %v6963 = vor.u32 %v6961, %v6962
  %v6964 = vld [vmem:[%s6958] ss:$64 sm:$0x8]
  %v6965 = vor.u32 %v6963, %v6964
  %v6966 = vld [vmem:[%s6958] ss:$64 sm:$0x10]
  %v6967 = vor.u32 %v6965, %v6966
  %v6968 = vld [vmem:[%s6958] ss:$64 sm:$0x20]
  %v6969 = vor.u32 %v6967, %v6968
  %v6970 = vld [vmem:[%s6958] ss:$64 sm:$0x40]
  %v6971 = vor.u32 %v6969, %v6970
  %v6972 = vld [vmem:[%s6958] ss:$64 sm:$0x80]
  %v6973 = vor.u32 %v6971, %v6972
  %v6974 = vmax.f32 %v6957, %v6973
  %s6975 = scalar_lea.vmem [#allocation3], 26
  %v6976 = vld [vmem:[%s6975] ss:$64 sm:$0x1]
  %v6977 = vld [vmem:[%s6975] ss:$64 sm:$0x2]
  %v6978 = vor.u32 %v6976, %v6977
  %v6979 = vld [vmem:[%s6975] ss:$64 sm:$0x4]
  %v6980 = vor.u32 %v6978, %v6979
  %v6981 = vld [vmem:[%s6975] ss:$64 sm:$0x8]
  %v6982 = vor.u32 %v6980, %v6981
  %v6983 = vld [vmem:[%s6975] ss:$64 sm:$0x10]
  %v6984 = vor.u32 %v6982, %v6983
  %v6985 = vld [vmem:[%s6975] ss:$64 sm:$0x20]
  %v6986 = vor.u32 %v6984, %v6985
  %v6987 = vld [vmem:[%s6975] ss:$64 sm:$0x40]
  %v6988 = vor.u32 %v6986, %v6987
  %v6989 = vld [vmem:[%s6975] ss:$64 sm:$0x80]
  %v6990 = vor.u32 %v6988, %v6989
  %s6991 = scalar_lea.vmem [#allocation3], 27
  %v6992 = vld [vmem:[%s6991] ss:$64 sm:$0x1]
  %v6993 = vld [vmem:[%s6991] ss:$64 sm:$0x2]
  %v6994 = vor.u32 %v6992, %v6993
  %v6995 = vld [vmem:[%s6991] ss:$64 sm:$0x4]
  %v6996 = vor.u32 %v6994, %v6995
  %v6997 = vld [vmem:[%s6991] ss:$64 sm:$0x8]
  %v6998 = vor.u32 %v6996, %v6997
  %v6999 = vld [vmem:[%s6991] ss:$64 sm:$0x10]
  %v7000 = vor.u32 %v6998, %v6999
  %v7001 = vld [vmem:[%s6991] ss:$64 sm:$0x20]
  %v7002 = vor.u32 %v7000, %v7001
  %v7003 = vld [vmem:[%s6991] ss:$64 sm:$0x40]
  %v7004 = vor.u32 %v7002, %v7003
  %v7005 = vld [vmem:[%s6991] ss:$64 sm:$0x80]
  %v7006 = vor.u32 %v7004, %v7005
  %v7007 = vmax.f32 %v6990, %v7006
  %s7008 = scalar_lea.vmem [#allocation3], 28
  %v7009 = vld [vmem:[%s7008] ss:$64 sm:$0x1]
  %v7010 = vld [vmem:[%s7008] ss:$64 sm:$0x2]
  %v7011 = vor.u32 %v7009, %v7010
  %v7012 = vld [vmem:[%s7008] ss:$64 sm:$0x4]
  %v7013 = vor.u32 %v7011, %v7012
  %v7014 = vld [vmem:[%s7008] ss:$64 sm:$0x8]
  %v7015 = vor.u32 %v7013, %v7014
  %v7016 = vld [vmem:[%s7008] ss:$64 sm:$0x10]
  %v7017 = vor.u32 %v7015, %v7016
  %v7018 = vld [vmem:[%s7008] ss:$64 sm:$0x20]
  %v7019 = vor.u32 %v7017, %v7018
  %v7020 = vld [vmem:[%s7008] ss:$64 sm:$0x40]
  %v7021 = vor.u32 %v7019, %v7020
  %v7022 = vld [vmem:[%s7008] ss:$64 sm:$0x80]
  %v7023 = vor.u32 %v7021, %v7022
  %s7024 = scalar_lea.vmem [#allocation3], 29
  %v7025 = vld [vmem:[%s7024] ss:$64 sm:$0x1]
  %v7026 = vld [vmem:[%s7024] ss:$64 sm:$0x2]
  %v7027 = vor.u32 %v7025, %v7026
  %v7028 = vld [vmem:[%s7024] ss:$64 sm:$0x4]
  %v7029 = vor.u32 %v7027, %v7028
  %v7030 = vld [vmem:[%s7024] ss:$64 sm:$0x8]
  %v7031 = vor.u32 %v7029, %v7030
  %v7032 = vld [vmem:[%s7024] ss:$64 sm:$0x10]
  %v7033 = vor.u32 %v7031, %v7032
  %v7034 = vld [vmem:[%s7024] ss:$64 sm:$0x20]
  %v7035 = vor.u32 %v7033, %v7034
  %v7036 = vld [vmem:[%s7024] ss:$64 sm:$0x40]
  %v7037 = vor.u32 %v7035, %v7036
  %v7038 = vld [vmem:[%s7024] ss:$64 sm:$0x80]
  %v7039 = vor.u32 %v7037, %v7038
  %v7040 = vmax.f32 %v7023, %v7039
  %s7041 = scalar_lea.vmem [#allocation3], 30
  %v7042 = vld [vmem:[%s7041] ss:$64 sm:$0x1]
  %v7043 = vld [vmem:[%s7041] ss:$64 sm:$0x2]
  %v7044 = vor.u32 %v7042, %v7043
  %v7045 = vld [vmem:[%s7041] ss:$64 sm:$0x4]
  %v7046 = vor.u32 %v7044, %v7045
  %v7047 = vld [vmem:[%s7041] ss:$64 sm:$0x8]
  %v7048 = vor.u32 %v7046, %v7047
  %v7049 = vld [vmem:[%s7041] ss:$64 sm:$0x10]
  %v7050 = vor.u32 %v7048, %v7049
  %v7051 = vld [vmem:[%s7041] ss:$64 sm:$0x20]
  %v7052 = vor.u32 %v7050, %v7051
  %v7053 = vld [vmem:[%s7041] ss:$64 sm:$0x40]
  %v7054 = vor.u32 %v7052, %v7053
  %v7055 = vld [vmem:[%s7041] ss:$64 sm:$0x80]
  %v7056 = vor.u32 %v7054, %v7055
  %s7057 = scalar_lea.vmem [#allocation3], 31
  %v7058 = vld [vmem:[%s7057] ss:$64 sm:$0x1]
  %v7059 = vld [vmem:[%s7057] ss:$64 sm:$0x2]
  %v7060 = vor.u32 %v7058, %v7059
  %v7061 = vld [vmem:[%s7057] ss:$64 sm:$0x4]
  %v7062 = vor.u32 %v7060, %v7061
  %v7063 = vld [vmem:[%s7057] ss:$64 sm:$0x8]
  %v7064 = vor.u32 %v7062, %v7063
  %v7065 = vld [vmem:[%s7057] ss:$64 sm:$0x10]
  %v7066 = vor.u32 %v7064, %v7065
  %v7067 = vld [vmem:[%s7057] ss:$64 sm:$0x20]
  %v7068 = vor.u32 %v7066, %v7067
  %v7069 = vld [vmem:[%s7057] ss:$64 sm:$0x40]
  %v7070 = vor.u32 %v7068, %v7069
  %v7071 = vld [vmem:[%s7057] ss:$64 sm:$0x80]
  %v7072 = vor.u32 %v7070, %v7071
  %v7073 = vmax.f32 %v7056, %v7072
  %s7074 = scalar_lea.vmem [#allocation3], 32
  %v7075 = vld [vmem:[%s7074] ss:$64 sm:$0x1]
  %v7076 = vld [vmem:[%s7074] ss:$64 sm:$0x2]
  %v7077 = vor.u32 %v7075, %v7076
  %v7078 = vld [vmem:[%s7074] ss:$64 sm:$0x4]
  %v7079 = vor.u32 %v7077, %v7078
  %v7080 = vld [vmem:[%s7074] ss:$64 sm:$0x8]
  %v7081 = vor.u32 %v7079, %v7080
  %v7082 = vld [vmem:[%s7074] ss:$64 sm:$0x10]
  %v7083 = vor.u32 %v7081, %v7082
  %v7084 = vld [vmem:[%s7074] ss:$64 sm:$0x20]
  %v7085 = vor.u32 %v7083, %v7084
  %v7086 = vld [vmem:[%s7074] ss:$64 sm:$0x40]
  %v7087 = vor.u32 %v7085, %v7086
  %v7088 = vld [vmem:[%s7074] ss:$64 sm:$0x80]
  %v7089 = vor.u32 %v7087, %v7088
  %s7090 = scalar_lea.vmem [#allocation3], 33
  %v7091 = vld [vmem:[%s7090] ss:$64 sm:$0x1]
  %v7092 = vld [vmem:[%s7090] ss:$64 sm:$0x2]
  %v7093 = vor.u32 %v7091, %v7092
  %v7094 = vld [vmem:[%s7090] ss:$64 sm:$0x4]
  %v7095 = vor.u32 %v7093, %v7094
  %v7096 = vld [vmem:[%s7090] ss:$64 sm:$0x8]
  %v7097 = vor.u32 %v7095, %v7096
  %v7098 = vld [vmem:[%s7090] ss:$64 sm:$0x10]
  %v7099 = vor.u32 %v7097, %v7098
  %v7100 = vld [vmem:[%s7090] ss:$64 sm:$0x20]
  %v7101 = vor.u32 %v7099, %v7100
  %v7102 = vld [vmem:[%s7090] ss:$64 sm:$0x40]
  %v7103 = vor.u32 %v7101, %v7102
  %v7104 = vld [vmem:[%s7090] ss:$64 sm:$0x80]
  %v7105 = vor.u32 %v7103, %v7104
  %v7106 = vmax.f32 %v7089, %v7105
  %s7107 = scalar_lea.vmem [#allocation3], 34
  %v7108 = vld [vmem:[%s7107] ss:$64 sm:$0x1]
  %v7109 = vld [vmem:[%s7107] ss:$64 sm:$0x2]
  %v7110 = vor.u32 %v7108, %v7109
  %v7111 = vld [vmem:[%s7107] ss:$64 sm:$0x4]
  %v7112 = vor.u32 %v7110, %v7111
  %v7113 = vld [vmem:[%s7107] ss:$64 sm:$0x8]
  %v7114 = vor.u32 %v7112, %v7113
  %v7115 = vld [vmem:[%s7107] ss:$64 sm:$0x10]
  %v7116 = vor.u32 %v7114, %v7115
  %v7117 = vld [vmem:[%s7107] ss:$64 sm:$0x20]
  %v7118 = vor.u32 %v7116, %v7117
  %v7119 = vld [vmem:[%s7107] ss:$64 sm:$0x40]
  %v7120 = vor.u32 %v7118, %v7119
  %v7121 = vld [vmem:[%s7107] ss:$64 sm:$0x80]
  %v7122 = vor.u32 %v7120, %v7121
  %s7123 = scalar_lea.vmem [#allocation3], 35
  %v7124 = vld [vmem:[%s7123] ss:$64 sm:$0x1]
  %v7125 = vld [vmem:[%s7123] ss:$64 sm:$0x2]
  %v7126 = vor.u32 %v7124, %v7125
  %v7127 = vld [vmem:[%s7123] ss:$64 sm:$0x4]
  %v7128 = vor.u32 %v7126, %v7127
  %v7129 = vld [vmem:[%s7123] ss:$64 sm:$0x8]
  %v7130 = vor.u32 %v7128, %v7129
  %v7131 = vld [vmem:[%s7123] ss:$64 sm:$0x10]
  %v7132 = vor.u32 %v7130, %v7131
  %v7133 = vld [vmem:[%s7123] ss:$64 sm:$0x20]
  %v7134 = vor.u32 %v7132, %v7133
  %v7135 = vld [vmem:[%s7123] ss:$64 sm:$0x40]
  %v7136 = vor.u32 %v7134, %v7135
  %v7137 = vld [vmem:[%s7123] ss:$64 sm:$0x80]
  %v7138 = vor.u32 %v7136, %v7137
  %v7139 = vmax.f32 %v7122, %v7138
  %s7140 = scalar_lea.vmem [#allocation3], 36
  %v7141 = vld [vmem:[%s7140] ss:$64 sm:$0x1]
  %v7142 = vld [vmem:[%s7140] ss:$64 sm:$0x2]
  %v7143 = vor.u32 %v7141, %v7142
  %v7144 = vld [vmem:[%s7140] ss:$64 sm:$0x4]
  %v7145 = vor.u32 %v7143, %v7144
  %v7146 = vld [vmem:[%s7140] ss:$64 sm:$0x8]
  %v7147 = vor.u32 %v7145, %v7146
  %v7148 = vld [vmem:[%s7140] ss:$64 sm:$0x10]
  %v7149 = vor.u32 %v7147, %v7148
  %v7150 = vld [vmem:[%s7140] ss:$64 sm:$0x20]
  %v7151 = vor.u32 %v7149, %v7150
  %v7152 = vld [vmem:[%s7140] ss:$64 sm:$0x40]
  %v7153 = vor.u32 %v7151, %v7152
  %v7154 = vld [vmem:[%s7140] ss:$64 sm:$0x80]
  %v7155 = vor.u32 %v7153, %v7154
  %s7156 = scalar_lea.vmem [#allocation3], 37
  %v7157 = vld [vmem:[%s7156] ss:$64 sm:$0x1]
  %v7158 = vld [vmem:[%s7156] ss:$64 sm:$0x2]
  %v7159 = vor.u32 %v7157, %v7158
  %v7160 = vld [vmem:[%s7156] ss:$64 sm:$0x4]
  %v7161 = vor.u32 %v7159, %v7160
  %v7162 = vld [vmem:[%s7156] ss:$64 sm:$0x8]
  %v7163 = vor.u32 %v7161, %v7162
  %v7164 = vld [vmem:[%s7156] ss:$64 sm:$0x10]
  %v7165 = vor.u32 %v7163, %v7164
  %v7166 = vld [vmem:[%s7156] ss:$64 sm:$0x20]
  %v7167 = vor.u32 %v7165, %v7166
  %v7168 = vld [vmem:[%s7156] ss:$64 sm:$0x40]
  %v7169 = vor.u32 %v7167, %v7168
  %v7170 = vld [vmem:[%s7156] ss:$64 sm:$0x80]
  %v7171 = vor.u32 %v7169, %v7170
  %v7172 = vmax.f32 %v7155, %v7171
  %s7173 = scalar_lea.vmem [#allocation3], 38
  %v7174 = vld [vmem:[%s7173] ss:$64 sm:$0x1]
  %v7175 = vld [vmem:[%s7173] ss:$64 sm:$0x2]
  %v7176 = vor.u32 %v7174, %v7175
  %v7177 = vld [vmem:[%s7173] ss:$64 sm:$0x4]
  %v7178 = vor.u32 %v7176, %v7177
  %v7179 = vld [vmem:[%s7173] ss:$64 sm:$0x8]
  %v7180 = vor.u32 %v7178, %v7179
  %v7181 = vld [vmem:[%s7173] ss:$64 sm:$0x10]
  %v7182 = vor.u32 %v7180, %v7181
  %v7183 = vld [vmem:[%s7173] ss:$64 sm:$0x20]
  %v7184 = vor.u32 %v7182, %v7183
  %v7185 = vld [vmem:[%s7173] ss:$64 sm:$0x40]
  %v7186 = vor.u32 %v7184, %v7185
  %v7187 = vld [vmem:[%s7173] ss:$64 sm:$0x80]
  %v7188 = vor.u32 %v7186, %v7187
  %s7189 = scalar_lea.vmem [#allocation3], 39
  %v7190 = vld [vmem:[%s7189] ss:$64 sm:$0x1]
  %v7191 = vld [vmem:[%s7189] ss:$64 sm:$0x2]
  %v7192 = vor.u32 %v7190, %v7191
  %v7193 = vld [vmem:[%s7189] ss:$64 sm:$0x4]
  %v7194 = vor.u32 %v7192, %v7193
  %v7195 = vld [vmem:[%s7189] ss:$64 sm:$0x8]
  %v7196 = vor.u32 %v7194, %v7195
  %v7197 = vld [vmem:[%s7189] ss:$64 sm:$0x10]
  %v7198 = vor.u32 %v7196, %v7197
  %v7199 = vld [vmem:[%s7189] ss:$64 sm:$0x20]
  %v7200 = vor.u32 %v7198, %v7199
  %v7201 = vld [vmem:[%s7189] ss:$64 sm:$0x40]
  %v7202 = vor.u32 %v7200, %v7201
  %v7203 = vld [vmem:[%s7189] ss:$64 sm:$0x80]
  %v7204 = vor.u32 %v7202, %v7203
  %v7205 = vmax.f32 %v7188, %v7204
  %s7206 = scalar_lea.vmem [#allocation3], 40
  %v7207 = vld [vmem:[%s7206] ss:$64 sm:$0x1]
  %v7208 = vld [vmem:[%s7206] ss:$64 sm:$0x2]
  %v7209 = vor.u32 %v7207, %v7208
  %v7210 = vld [vmem:[%s7206] ss:$64 sm:$0x4]
  %v7211 = vor.u32 %v7209, %v7210
  %v7212 = vld [vmem:[%s7206] ss:$64 sm:$0x8]
  %v7213 = vor.u32 %v7211, %v7212
  %v7214 = vld [vmem:[%s7206] ss:$64 sm:$0x10]
  %v7215 = vor.u32 %v7213, %v7214
  %v7216 = vld [vmem:[%s7206] ss:$64 sm:$0x20]
  %v7217 = vor.u32 %v7215, %v7216
  %v7218 = vld [vmem:[%s7206] ss:$64 sm:$0x40]
  %v7219 = vor.u32 %v7217, %v7218
  %v7220 = vld [vmem:[%s7206] ss:$64 sm:$0x80]
  %v7221 = vor.u32 %v7219, %v7220
  %s7222 = scalar_lea.vmem [#allocation3], 41
  %v7223 = vld [vmem:[%s7222] ss:$64 sm:$0x1]
  %v7224 = vld [vmem:[%s7222] ss:$64 sm:$0x2]
  %v7225 = vor.u32 %v7223, %v7224
  %v7226 = vld [vmem:[%s7222] ss:$64 sm:$0x4]
  %v7227 = vor.u32 %v7225, %v7226
  %v7228 = vld [vmem:[%s7222] ss:$64 sm:$0x8]
  %v7229 = vor.u32 %v7227, %v7228
  %v7230 = vld [vmem:[%s7222] ss:$64 sm:$0x10]
  %v7231 = vor.u32 %v7229, %v7230
  %v7232 = vld [vmem:[%s7222] ss:$64 sm:$0x20]
  %v7233 = vor.u32 %v7231, %v7232
  %v7234 = vld [vmem:[%s7222] ss:$64 sm:$0x40]
  %v7235 = vor.u32 %v7233, %v7234
  %v7236 = vld [vmem:[%s7222] ss:$64 sm:$0x80]
  %v7237 = vor.u32 %v7235, %v7236
  %v7238 = vmax.f32 %v7221, %v7237
  %s7239 = scalar_lea.vmem [#allocation3], 42
  %v7240 = vld [vmem:[%s7239] ss:$64 sm:$0x1]
  %v7241 = vld [vmem:[%s7239] ss:$64 sm:$0x2]
  %v7242 = vor.u32 %v7240, %v7241
  %v7243 = vld [vmem:[%s7239] ss:$64 sm:$0x4]
  %v7244 = vor.u32 %v7242, %v7243
  %v7245 = vld [vmem:[%s7239] ss:$64 sm:$0x8]
  %v7246 = vor.u32 %v7244, %v7245
  %v7247 = vld [vmem:[%s7239] ss:$64 sm:$0x10]
  %v7248 = vor.u32 %v7246, %v7247
  %v7249 = vld [vmem:[%s7239] ss:$64 sm:$0x20]
  %v7250 = vor.u32 %v7248, %v7249
  %v7251 = vld [vmem:[%s7239] ss:$64 sm:$0x40]
  %v7252 = vor.u32 %v7250, %v7251
  %v7253 = vld [vmem:[%s7239] ss:$64 sm:$0x80]
  %v7254 = vor.u32 %v7252, %v7253
  %s7255 = scalar_lea.vmem [#allocation3], 43
  %v7256 = vld [vmem:[%s7255] ss:$64 sm:$0x1]
  %v7257 = vld [vmem:[%s7255] ss:$64 sm:$0x2]
  %v7258 = vor.u32 %v7256, %v7257
  %v7259 = vld [vmem:[%s7255] ss:$64 sm:$0x4]
  %v7260 = vor.u32 %v7258, %v7259
  %v7261 = vld [vmem:[%s7255] ss:$64 sm:$0x8]
  %v7262 = vor.u32 %v7260, %v7261
  %v7263 = vld [vmem:[%s7255] ss:$64 sm:$0x10]
  %v7264 = vor.u32 %v7262, %v7263
  %v7265 = vld [vmem:[%s7255] ss:$64 sm:$0x20]
  %v7266 = vor.u32 %v7264, %v7265
  %v7267 = vld [vmem:[%s7255] ss:$64 sm:$0x40]
  %v7268 = vor.u32 %v7266, %v7267
  %v7269 = vld [vmem:[%s7255] ss:$64 sm:$0x80]
  %v7270 = vor.u32 %v7268, %v7269
  %v7271 = vmax.f32 %v7254, %v7270
  %s7272 = scalar_lea.vmem [#allocation3], 44
  %v7273 = vld [vmem:[%s7272] ss:$64 sm:$0x1]
  %v7274 = vld [vmem:[%s7272] ss:$64 sm:$0x2]
  %v7275 = vor.u32 %v7273, %v7274
  %v7276 = vld [vmem:[%s7272] ss:$64 sm:$0x4]
  %v7277 = vor.u32 %v7275, %v7276
  %v7278 = vld [vmem:[%s7272] ss:$64 sm:$0x8]
  %v7279 = vor.u32 %v7277, %v7278
  %v7280 = vld [vmem:[%s7272] ss:$64 sm:$0x10]
  %v7281 = vor.u32 %v7279, %v7280
  %v7282 = vld [vmem:[%s7272] ss:$64 sm:$0x20]
  %v7283 = vor.u32 %v7281, %v7282
  %v7284 = vld [vmem:[%s7272] ss:$64 sm:$0x40]
  %v7285 = vor.u32 %v7283, %v7284
  %v7286 = vld [vmem:[%s7272] ss:$64 sm:$0x80]
  %v7287 = vor.u32 %v7285, %v7286
  %s7288 = scalar_lea.vmem [#allocation3], 45
  %v7289 = vld [vmem:[%s7288] ss:$64 sm:$0x1]
  %v7290 = vld [vmem:[%s7288] ss:$64 sm:$0x2]
  %v7291 = vor.u32 %v7289, %v7290
  %v7292 = vld [vmem:[%s7288] ss:$64 sm:$0x4]
  %v7293 = vor.u32 %v7291, %v7292
  %v7294 = vld [vmem:[%s7288] ss:$64 sm:$0x8]
  %v7295 = vor.u32 %v7293, %v7294
  %v7296 = vld [vmem:[%s7288] ss:$64 sm:$0x10]
  %v7297 = vor.u32 %v7295, %v7296
  %v7298 = vld [vmem:[%s7288] ss:$64 sm:$0x20]
  %v7299 = vor.u32 %v7297, %v7298
  %v7300 = vld [vmem:[%s7288] ss:$64 sm:$0x40]
  %v7301 = vor.u32 %v7299, %v7300
  %v7302 = vld [vmem:[%s7288] ss:$64 sm:$0x80]
  %v7303 = vor.u32 %v7301, %v7302
  %v7304 = vmax.f32 %v7287, %v7303
  %s7305 = scalar_lea.vmem [#allocation3], 46
  %v7306 = vld [vmem:[%s7305] ss:$64 sm:$0x1]
  %v7307 = vld [vmem:[%s7305] ss:$64 sm:$0x2]
  %v7308 = vor.u32 %v7306, %v7307
  %v7309 = vld [vmem:[%s7305] ss:$64 sm:$0x4]
  %v7310 = vor.u32 %v7308, %v7309
  %v7311 = vld [vmem:[%s7305] ss:$64 sm:$0x8]
  %v7312 = vor.u32 %v7310, %v7311
  %v7313 = vld [vmem:[%s7305] ss:$64 sm:$0x10]
  %v7314 = vor.u32 %v7312, %v7313
  %v7315 = vld [vmem:[%s7305] ss:$64 sm:$0x20]
  %v7316 = vor.u32 %v7314, %v7315
  %v7317 = vld [vmem:[%s7305] ss:$64 sm:$0x40]
  %v7318 = vor.u32 %v7316, %v7317
  %v7319 = vld [vmem:[%s7305] ss:$64 sm:$0x80]
  %v7320 = vor.u32 %v7318, %v7319
  %s7321 = scalar_lea.vmem [#allocation3], 47
  %v7322 = vld [vmem:[%s7321] ss:$64 sm:$0x1]
  %v7323 = vld [vmem:[%s7321] ss:$64 sm:$0x2]
  %v7324 = vor.u32 %v7322, %v7323
  %v7325 = vld [vmem:[%s7321] ss:$64 sm:$0x4]
  %v7326 = vor.u32 %v7324, %v7325
  %v7327 = vld [vmem:[%s7321] ss:$64 sm:$0x8]
  %v7328 = vor.u32 %v7326, %v7327
  %v7329 = vld [vmem:[%s7321] ss:$64 sm:$0x10]
  %v7330 = vor.u32 %v7328, %v7329
  %v7331 = vld [vmem:[%s7321] ss:$64 sm:$0x20]
  %v7332 = vor.u32 %v7330, %v7331
  %v7333 = vld [vmem:[%s7321] ss:$64 sm:$0x40]
  %v7334 = vor.u32 %v7332, %v7333
  %v7335 = vld [vmem:[%s7321] ss:$64 sm:$0x80]
  %v7336 = vor.u32 %v7334, %v7335
  %v7337 = vmax.f32 %v7320, %v7336
  %s7338 = scalar_lea.vmem [#allocation3], 48
  %v7339 = vld [vmem:[%s7338] ss:$64 sm:$0x1]
  %v7340 = vld [vmem:[%s7338] ss:$64 sm:$0x2]
  %v7341 = vor.u32 %v7339, %v7340
  %v7342 = vld [vmem:[%s7338] ss:$64 sm:$0x4]
  %v7343 = vor.u32 %v7341, %v7342
  %v7344 = vld [vmem:[%s7338] ss:$64 sm:$0x8]
  %v7345 = vor.u32 %v7343, %v7344
  %v7346 = vld [vmem:[%s7338] ss:$64 sm:$0x10]
  %v7347 = vor.u32 %v7345, %v7346
  %v7348 = vld [vmem:[%s7338] ss:$64 sm:$0x20]
  %v7349 = vor.u32 %v7347, %v7348
  %v7350 = vld [vmem:[%s7338] ss:$64 sm:$0x40]
  %v7351 = vor.u32 %v7349, %v7350
  %v7352 = vld [vmem:[%s7338] ss:$64 sm:$0x80]
  %v7353 = vor.u32 %v7351, %v7352
  %s7354 = scalar_lea.vmem [#allocation3], 49
  %v7355 = vld [vmem:[%s7354] ss:$64 sm:$0x1]
  %v7356 = vld [vmem:[%s7354] ss:$64 sm:$0x2]
  %v7357 = vor.u32 %v7355, %v7356
  %v7358 = vld [vmem:[%s7354] ss:$64 sm:$0x4]
  %v7359 = vor.u32 %v7357, %v7358
  %v7360 = vld [vmem:[%s7354] ss:$64 sm:$0x8]
  %v7361 = vor.u32 %v7359, %v7360
  %v7362 = vld [vmem:[%s7354] ss:$64 sm:$0x10]
  %v7363 = vor.u32 %v7361, %v7362
  %v7364 = vld [vmem:[%s7354] ss:$64 sm:$0x20]
  %v7365 = vor.u32 %v7363, %v7364
  %v7366 = vld [vmem:[%s7354] ss:$64 sm:$0x40]
  %v7367 = vor.u32 %v7365, %v7366
  %v7368 = vld [vmem:[%s7354] ss:$64 sm:$0x80]
  %v7369 = vor.u32 %v7367, %v7368
  %v7370 = vmax.f32 %v7353, %v7369
  %s7371 = scalar_lea.vmem [#allocation3], 50
  %v7372 = vld [vmem:[%s7371] ss:$64 sm:$0x1]
  %v7373 = vld [vmem:[%s7371] ss:$64 sm:$0x2]
  %v7374 = vor.u32 %v7372, %v7373
  %v7375 = vld [vmem:[%s7371] ss:$64 sm:$0x4]
  %v7376 = vor.u32 %v7374, %v7375
  %v7377 = vld [vmem:[%s7371] ss:$64 sm:$0x8]
  %v7378 = vor.u32 %v7376, %v7377
  %v7379 = vld [vmem:[%s7371] ss:$64 sm:$0x10]
  %v7380 = vor.u32 %v7378, %v7379
  %v7381 = vld [vmem:[%s7371] ss:$64 sm:$0x20]
  %v7382 = vor.u32 %v7380, %v7381
  %v7383 = vld [vmem:[%s7371] ss:$64 sm:$0x40]
  %v7384 = vor.u32 %v7382, %v7383
  %v7385 = vld [vmem:[%s7371] ss:$64 sm:$0x80]
  %v7386 = vor.u32 %v7384, %v7385
  %s7387 = scalar_lea.vmem [#allocation3], 51
  %v7388 = vld [vmem:[%s7387] ss:$64 sm:$0x1]
  %v7389 = vld [vmem:[%s7387] ss:$64 sm:$0x2]
  %v7390 = vor.u32 %v7388, %v7389
  %v7391 = vld [vmem:[%s7387] ss:$64 sm:$0x4]
  %v7392 = vor.u32 %v7390, %v7391
  %v7393 = vld [vmem:[%s7387] ss:$64 sm:$0x8]
  %v7394 = vor.u32 %v7392, %v7393
  %v7395 = vld [vmem:[%s7387] ss:$64 sm:$0x10]
  %v7396 = vor.u32 %v7394, %v7395
  %v7397 = vld [vmem:[%s7387] ss:$64 sm:$0x20]
  %v7398 = vor.u32 %v7396, %v7397
  %v7399 = vld [vmem:[%s7387] ss:$64 sm:$0x40]
  %v7400 = vor.u32 %v7398, %v7399
  %v7401 = vld [vmem:[%s7387] ss:$64 sm:$0x80]
  %v7402 = vor.u32 %v7400, %v7401
  %v7403 = vmax.f32 %v7386, %v7402
  %s7404 = scalar_lea.vmem [#allocation3], 52
  %v7405 = vld [vmem:[%s7404] ss:$64 sm:$0x1]
  %v7406 = vld [vmem:[%s7404] ss:$64 sm:$0x2]
  %v7407 = vor.u32 %v7405, %v7406
  %v7408 = vld [vmem:[%s7404] ss:$64 sm:$0x4]
  %v7409 = vor.u32 %v7407, %v7408
  %v7410 = vld [vmem:[%s7404] ss:$64 sm:$0x8]
  %v7411 = vor.u32 %v7409, %v7410
  %v7412 = vld [vmem:[%s7404] ss:$64 sm:$0x10]
  %v7413 = vor.u32 %v7411, %v7412
  %v7414 = vld [vmem:[%s7404] ss:$64 sm:$0x20]
  %v7415 = vor.u32 %v7413, %v7414
  %v7416 = vld [vmem:[%s7404] ss:$64 sm:$0x40]
  %v7417 = vor.u32 %v7415, %v7416
  %v7418 = vld [vmem:[%s7404] ss:$64 sm:$0x80]
  %v7419 = vor.u32 %v7417, %v7418
  %s7420 = scalar_lea.vmem [#allocation3], 53
  %v7421 = vld [vmem:[%s7420] ss:$64 sm:$0x1]
  %v7422 = vld [vmem:[%s7420] ss:$64 sm:$0x2]
  %v7423 = vor.u32 %v7421, %v7422
  %v7424 = vld [vmem:[%s7420] ss:$64 sm:$0x4]
  %v7425 = vor.u32 %v7423, %v7424
  %v7426 = vld [vmem:[%s7420] ss:$64 sm:$0x8]
  %v7427 = vor.u32 %v7425, %v7426
  %v7428 = vld [vmem:[%s7420] ss:$64 sm:$0x10]
  %v7429 = vor.u32 %v7427, %v7428
  %v7430 = vld [vmem:[%s7420] ss:$64 sm:$0x20]
  %v7431 = vor.u32 %v7429, %v7430
  %v7432 = vld [vmem:[%s7420] ss:$64 sm:$0x40]
  %v7433 = vor.u32 %v7431, %v7432
  %v7434 = vld [vmem:[%s7420] ss:$64 sm:$0x80]
  %v7435 = vor.u32 %v7433, %v7434
  %v7436 = vmax.f32 %v7419, %v7435
  %s7437 = scalar_lea.vmem [#allocation3], 54
  %v7438 = vld [vmem:[%s7437] ss:$64 sm:$0x1]
  %v7439 = vld [vmem:[%s7437] ss:$64 sm:$0x2]
  %v7440 = vor.u32 %v7438, %v7439
  %v7441 = vld [vmem:[%s7437] ss:$64 sm:$0x4]
  %v7442 = vor.u32 %v7440, %v7441
  %v7443 = vld [vmem:[%s7437] ss:$64 sm:$0x8]
  %v7444 = vor.u32 %v7442, %v7443
  %v7445 = vld [vmem:[%s7437] ss:$64 sm:$0x10]
  %v7446 = vor.u32 %v7444, %v7445
  %v7447 = vld [vmem:[%s7437] ss:$64 sm:$0x20]
  %v7448 = vor.u32 %v7446, %v7447
  %v7449 = vld [vmem:[%s7437] ss:$64 sm:$0x40]
  %v7450 = vor.u32 %v7448, %v7449
  %v7451 = vld [vmem:[%s7437] ss:$64 sm:$0x80]
  %v7452 = vor.u32 %v7450, %v7451
  %s7453 = scalar_lea.vmem [#allocation3], 55
  %v7454 = vld [vmem:[%s7453] ss:$64 sm:$0x1]
  %v7455 = vld [vmem:[%s7453] ss:$64 sm:$0x2]
  %v7456 = vor.u32 %v7454, %v7455
  %v7457 = vld [vmem:[%s7453] ss:$64 sm:$0x4]
  %v7458 = vor.u32 %v7456, %v7457
  %v7459 = vld [vmem:[%s7453] ss:$64 sm:$0x8]
  %v7460 = vor.u32 %v7458, %v7459
  %v7461 = vld [vmem:[%s7453] ss:$64 sm:$0x10]
  %v7462 = vor.u32 %v7460, %v7461
  %v7463 = vld [vmem:[%s7453] ss:$64 sm:$0x20]
  %v7464 = vor.u32 %v7462, %v7463
  %v7465 = vld [vmem:[%s7453] ss:$64 sm:$0x40]
  %v7466 = vor.u32 %v7464, %v7465
  %v7467 = vld [vmem:[%s7453] ss:$64 sm:$0x80]
  %v7468 = vor.u32 %v7466, %v7467
  %v7469 = vmax.f32 %v7452, %v7468
  %s7470 = scalar_lea.vmem [#allocation3], 56
  %v7471 = vld [vmem:[%s7470] ss:$64 sm:$0x1]
  %v7472 = vld [vmem:[%s7470] ss:$64 sm:$0x2]
  %v7473 = vor.u32 %v7471, %v7472
  %v7474 = vld [vmem:[%s7470] ss:$64 sm:$0x4]
  %v7475 = vor.u32 %v7473, %v7474
  %v7476 = vld [vmem:[%s7470] ss:$64 sm:$0x8]
  %v7477 = vor.u32 %v7475, %v7476
  %v7478 = vld [vmem:[%s7470] ss:$64 sm:$0x10]
  %v7479 = vor.u32 %v7477, %v7478
  %v7480 = vld [vmem:[%s7470] ss:$64 sm:$0x20]
  %v7481 = vor.u32 %v7479, %v7480
  %v7482 = vld [vmem:[%s7470] ss:$64 sm:$0x40]
  %v7483 = vor.u32 %v7481, %v7482
  %v7484 = vld [vmem:[%s7470] ss:$64 sm:$0x80]
  %v7485 = vor.u32 %v7483, %v7484
  %s7486 = scalar_lea.vmem [#allocation3], 57
  %v7487 = vld [vmem:[%s7486] ss:$64 sm:$0x1]
  %v7488 = vld [vmem:[%s7486] ss:$64 sm:$0x2]
  %v7489 = vor.u32 %v7487, %v7488
  %v7490 = vld [vmem:[%s7486] ss:$64 sm:$0x4]
  %v7491 = vor.u32 %v7489, %v7490
  %v7492 = vld [vmem:[%s7486] ss:$64 sm:$0x8]
  %v7493 = vor.u32 %v7491, %v7492
  %v7494 = vld [vmem:[%s7486] ss:$64 sm:$0x10]
  %v7495 = vor.u32 %v7493, %v7494
  %v7496 = vld [vmem:[%s7486] ss:$64 sm:$0x20]
  %v7497 = vor.u32 %v7495, %v7496
  %v7498 = vld [vmem:[%s7486] ss:$64 sm:$0x40]
  %v7499 = vor.u32 %v7497, %v7498
  %v7500 = vld [vmem:[%s7486] ss:$64 sm:$0x80]
  %v7501 = vor.u32 %v7499, %v7500
  %v7502 = vmax.f32 %v7485, %v7501
  %s7503 = scalar_lea.vmem [#allocation3], 58
  %v7504 = vld [vmem:[%s7503] ss:$64 sm:$0x1]
  %v7505 = vld [vmem:[%s7503] ss:$64 sm:$0x2]
  %v7506 = vor.u32 %v7504, %v7505
  %v7507 = vld [vmem:[%s7503] ss:$64 sm:$0x4]
  %v7508 = vor.u32 %v7506, %v7507
  %v7509 = vld [vmem:[%s7503] ss:$64 sm:$0x8]
  %v7510 = vor.u32 %v7508, %v7509
  %v7511 = vld [vmem:[%s7503] ss:$64 sm:$0x10]
  %v7512 = vor.u32 %v7510, %v7511
  %v7513 = vld [vmem:[%s7503] ss:$64 sm:$0x20]
  %v7514 = vor.u32 %v7512, %v7513
  %v7515 = vld [vmem:[%s7503] ss:$64 sm:$0x40]
  %v7516 = vor.u32 %v7514, %v7515
  %v7517 = vld [vmem:[%s7503] ss:$64 sm:$0x80]
  %v7518 = vor.u32 %v7516, %v7517
  %s7519 = scalar_lea.vmem [#allocation3], 59
  %v7520 = vld [vmem:[%s7519] ss:$64 sm:$0x1]
  %v7521 = vld [vmem:[%s7519] ss:$64 sm:$0x2]
  %v7522 = vor.u32 %v7520, %v7521
  %v7523 = vld [vmem:[%s7519] ss:$64 sm:$0x4]
  %v7524 = vor.u32 %v7522, %v7523
  %v7525 = vld [vmem:[%s7519] ss:$64 sm:$0x8]
  %v7526 = vor.u32 %v7524, %v7525
  %v7527 = vld [vmem:[%s7519] ss:$64 sm:$0x10]
  %v7528 = vor.u32 %v7526, %v7527
  %v7529 = vld [vmem:[%s7519] ss:$64 sm:$0x20]
  %v7530 = vor.u32 %v7528, %v7529
  %v7531 = vld [vmem:[%s7519] ss:$64 sm:$0x40]
  %v7532 = vor.u32 %v7530, %v7531
  %v7533 = vld [vmem:[%s7519] ss:$64 sm:$0x80]
  %v7534 = vor.u32 %v7532, %v7533
  %v7535 = vmax.f32 %v7518, %v7534
  %s7536 = scalar_lea.vmem [#allocation3], 60
  %v7537 = vld [vmem:[%s7536] ss:$64 sm:$0x1]
  %v7538 = vld [vmem:[%s7536] ss:$64 sm:$0x2]
  %v7539 = vor.u32 %v7537, %v7538
  %v7540 = vld [vmem:[%s7536] ss:$64 sm:$0x4]
  %v7541 = vor.u32 %v7539, %v7540
  %v7542 = vld [vmem:[%s7536] ss:$64 sm:$0x8]
  %v7543 = vor.u32 %v7541, %v7542
  %v7544 = vld [vmem:[%s7536] ss:$64 sm:$0x10]
  %v7545 = vor.u32 %v7543, %v7544
  %v7546 = vld [vmem:[%s7536] ss:$64 sm:$0x20]
  %v7547 = vor.u32 %v7545, %v7546
  %v7548 = vld [vmem:[%s7536] ss:$64 sm:$0x40]
  %v7549 = vor.u32 %v7547, %v7548
  %v7550 = vld [vmem:[%s7536] ss:$64 sm:$0x80]
  %v7551 = vor.u32 %v7549, %v7550
  %s7552 = scalar_lea.vmem [#allocation3], 61
  %v7553 = vld [vmem:[%s7552] ss:$64 sm:$0x1]
  %v7554 = vld [vmem:[%s7552] ss:$64 sm:$0x2]
  %v7555 = vor.u32 %v7553, %v7554
  %v7556 = vld [vmem:[%s7552] ss:$64 sm:$0x4]
  %v7557 = vor.u32 %v7555, %v7556
  %v7558 = vld [vmem:[%s7552] ss:$64 sm:$0x8]
  %v7559 = vor.u32 %v7557, %v7558
  %v7560 = vld [vmem:[%s7552] ss:$64 sm:$0x10]
  %v7561 = vor.u32 %v7559, %v7560
  %v7562 = vld [vmem:[%s7552] ss:$64 sm:$0x20]
  %v7563 = vor.u32 %v7561, %v7562
  %v7564 = vld [vmem:[%s7552] ss:$64 sm:$0x40]
  %v7565 = vor.u32 %v7563, %v7564
  %v7566 = vld [vmem:[%s7552] ss:$64 sm:$0x80]
  %v7567 = vor.u32 %v7565, %v7566
  %v7568 = vmax.f32 %v7551, %v7567
  %s7569 = scalar_lea.vmem [#allocation3], 62
  %v7570 = vld [vmem:[%s7569] ss:$64 sm:$0x1]
  %v7571 = vld [vmem:[%s7569] ss:$64 sm:$0x2]
  %v7572 = vor.u32 %v7570, %v7571
  %v7573 = vld [vmem:[%s7569] ss:$64 sm:$0x4]
  %v7574 = vor.u32 %v7572, %v7573
  %v7575 = vld [vmem:[%s7569] ss:$64 sm:$0x8]
  %v7576 = vor.u32 %v7574, %v7575
  %v7577 = vld [vmem:[%s7569] ss:$64 sm:$0x10]
  %v7578 = vor.u32 %v7576, %v7577
  %v7579 = vld [vmem:[%s7569] ss:$64 sm:$0x20]
  %v7580 = vor.u32 %v7578, %v7579
  %v7581 = vld [vmem:[%s7569] ss:$64 sm:$0x40]
  %v7582 = vor.u32 %v7580, %v7581
  %v7583 = vld [vmem:[%s7569] ss:$64 sm:$0x80]
  %v7584 = vor.u32 %v7582, %v7583
  %s7585 = scalar_lea.vmem [#allocation3], 63
  %v7586 = vld [vmem:[%s7585] ss:$64 sm:$0x1]
  %v7587 = vld [vmem:[%s7585] ss:$64 sm:$0x2]
  %v7588 = vor.u32 %v7586, %v7587
  %v7589 = vld [vmem:[%s7585] ss:$64 sm:$0x4]
  %v7590 = vor.u32 %v7588, %v7589
  %v7591 = vld [vmem:[%s7585] ss:$64 sm:$0x8]
  %v7592 = vor.u32 %v7590, %v7591
  %v7593 = vld [vmem:[%s7585] ss:$64 sm:$0x10]
  %v7594 = vor.u32 %v7592, %v7593
  %v7595 = vld [vmem:[%s7585] ss:$64 sm:$0x20]
  %v7596 = vor.u32 %v7594, %v7595
  %v7597 = vld [vmem:[%s7585] ss:$64 sm:$0x40]
  %v7598 = vor.u32 %v7596, %v7597
  %v7599 = vld [vmem:[%s7585] ss:$64 sm:$0x80]
  %v7600 = vor.u32 %v7598, %v7599
  %v7601 = vmax.f32 %v7584, %v7600
  %7603 = vrot.lane.b32.xlu0 %v6611, 32
  %v7604 = vpop.permute.xlu0 %7603
  %7607 = vrot.lane.b32.xlu0 %v6644, 64
  %v7608 = vpop.permute.xlu0 %7607
  %7611 = vrot.lane.b32.xlu0 %v6677, 96
  %v7612 = vpop.permute.xlu0 %7611
  %7615 = vrot.lane.b32.xlu0 %v6743, 32
  %v7616 = vpop.permute.xlu0 %7615
  %7619 = vrot.lane.b32.xlu0 %v6776, 64
  %v7620 = vpop.permute.xlu0 %7619
  %7623 = vrot.lane.b32.xlu0 %v6809, 96
  %v7624 = vpop.permute.xlu0 %7623
  %7627 = vrot.lane.b32.xlu0 %v6875, 32
  %v7628 = vpop.permute.xlu0 %7627
  %7631 = vrot.lane.b32.xlu0 %v6908, 64
  %v7632 = vpop.permute.xlu0 %7631
  %7635 = vrot.lane.b32.xlu0 %v6941, 96
  %v7636 = vpop.permute.xlu0 %7635
  %7639 = vrot.lane.b32.xlu0 %v7007, 32
  %v7640 = vpop.permute.xlu0 %7639
  %7643 = vrot.lane.b32.xlu0 %v7040, 64
  %v7644 = vpop.permute.xlu0 %7643
  %7647 = vrot.lane.b32.xlu0 %v7073, 96
  %v7648 = vpop.permute.xlu0 %7647
  %v7650 = vsel %vm5763, %v6578, %v7604
  %vm7651 = vcmask 523264
  %v7652 = vsel %vm7651, %v7650, %v7608
  %vm7653 = vcmask 785408
  %v7654 = vsel %vm7653, %v7652, %v7612
  %v7655 = vsel %vm5763, %v6710, %v7616
  %v7656 = vsel %vm7651, %v7655, %v7620
  %v7657 = vsel %vm7653, %v7656, %v7624
  %v7658 = vsel %vm5763, %v6842, %v7628
  %v7659 = vsel %vm7651, %v7658, %v7632
  %v7660 = vsel %vm7653, %v7659, %v7636
  %v7661 = vsel %vm5763, %v6974, %v7640
  %v7662 = vsel %vm7651, %v7661, %v7644
  %v7663 = vsel %vm7653, %v7662, %v7648
  %7665 = vrot.lane.b32.xlu0 %v7139, 32
  %v7666 = vpop.permute.xlu0 %7665
  %7669 = vrot.lane.b32.xlu0 %v7172, 64
  %v7670 = vpop.permute.xlu0 %7669
  %7673 = vrot.lane.b32.xlu0 %v7205, 96
  %v7674 = vpop.permute.xlu0 %7673
  %7677 = vrot.lane.b32.xlu0 %v7271, 32
  %v7678 = vpop.permute.xlu0 %7677
  %7681 = vrot.lane.b32.xlu0 %v7304, 64
  %v7682 = vpop.permute.xlu0 %7681
  %7685 = vrot.lane.b32.xlu0 %v7337, 96
  %v7686 = vpop.permute.xlu0 %7685
  %7689 = vrot.lane.b32.xlu0 %v7403, 32
  %v7690 = vpop.permute.xlu0 %7689
  %7693 = vrot.lane.b32.xlu0 %v7436, 64
  %v7694 = vpop.permute.xlu0 %7693
  %7697 = vrot.lane.b32.xlu0 %v7469, 96
  %v7698 = vpop.permute.xlu0 %7697
  %7701 = vrot.lane.b32.xlu0 %v7535, 32
  %v7702 = vpop.permute.xlu0 %7701
  %7705 = vrot.lane.b32.xlu0 %v7568, 64
  %v7706 = vpop.permute.xlu0 %7705
  %7709 = vrot.lane.b32.xlu0 %v7601, 96
  %v7710 = vpop.permute.xlu0 %7709
  %v7712 = vsel %vm5763, %v7106, %v7666
  %v7713 = vsel %vm7651, %v7712, %v7670
  %v7714 = vsel %vm7653, %v7713, %v7674
  %v7715 = vsel %vm5763, %v7238, %v7678
  %v7716 = vsel %vm7651, %v7715, %v7682
  %v7717 = vsel %vm7653, %v7716, %v7686
  %v7718 = vsel %vm5763, %v7370, %v7690
  %v7719 = vsel %vm7651, %v7718, %v7694
  %v7720 = vsel %vm7653, %v7719, %v7698
  %v7721 = vsel %vm5763, %v7502, %v7702
  %v7722 = vsel %vm7651, %v7721, %v7706
  %v7723 = vsel %vm7653, %v7722, %v7710
  %v7724 = vld [vmem:[%s6] sm:$0xff]
  %v7725 = vld [vmem:[%s6 + $0x8] sm:$0xff]
  %v7726 = vld [vmem:[%s6 + $0x10] sm:$0xff]
  %v7727 = vld [vmem:[%s6 + $0x18] sm:$0xff]
  %v7728 = vld [vmem:[%s6 + $0x20] sm:$0xff]
  %v7729 = vld [vmem:[%s6 + $0x28] sm:$0xff]
  %v7730 = vld [vmem:[%s6 + $0x30] sm:$0xff]
  %v7731 = vld [vmem:[%s6 + $0x38] sm:$0xff]
  %v7732 = vld [vmem:[%s6 + $0x40] sm:$0xff]
  %v7733 = vld [vmem:[%s6 + $0x48] sm:$0xff]
  %v7734 = vld [vmem:[%s6 + $0x50] sm:$0xff]
  %v7735 = vld [vmem:[%s6 + $0x58] sm:$0xff]
  %v7736 = vld [vmem:[%s6 + $0x60] sm:$0xff]
  %v7737 = vld [vmem:[%s6 + $0x68] sm:$0xff]
  %v7738 = vld [vmem:[%s6 + $0x70] sm:$0xff]
  %v7739 = vld [vmem:[%s6 + $0x78] sm:$0xff]
  %v7740 = vld [vmem:[%s6 + $0x80] sm:$0xff]
  %v7741 = vld [vmem:[%s6 + $0x88] sm:$0xff]
  %v7742 = vld [vmem:[%s6 + $0x90] sm:$0xff]
  %v7743 = vld [vmem:[%s6 + $0x98] sm:$0xff]
  %v7744 = vld [vmem:[%s6 + $0xa0] sm:$0xff]
  %v7745 = vld [vmem:[%s6 + $0xa8] sm:$0xff]
  %v7746 = vld [vmem:[%s6 + $0xb0] sm:$0xff]
  %v7747 = vld [vmem:[%s6 + $0xb8] sm:$0xff]
  %v7748 = vld [vmem:[%s6 + $0xc0] sm:$0xff]
  %v7749 = vld [vmem:[%s6 + $0xc8] sm:$0xff]
  %v7750 = vld [vmem:[%s6 + $0xd0] sm:$0xff]
  %v7751 = vld [vmem:[%s6 + $0xd8] sm:$0xff]
  %v7752 = vld [vmem:[%s6 + $0xe0] sm:$0xff]
  %v7753 = vld [vmem:[%s6 + $0xe8] sm:$0xff]
  %v7754 = vld [vmem:[%s6 + $0xf0] sm:$0xff]
  %v7755 = vld [vmem:[%s6 + $0xf8] sm:$0xff]
  %v7756 = vld [vmem:[%s6 + $0x100] sm:$0xff]
  %v7757 = vld [vmem:[%s6 + $0x108] sm:$0xff]
  %v7758 = vld [vmem:[%s6 + $0x110] sm:$0xff]
  %v7759 = vld [vmem:[%s6 + $0x118] sm:$0xff]
  %v7760 = vld [vmem:[%s6 + $0x120] sm:$0xff]
  %v7761 = vld [vmem:[%s6 + $0x128] sm:$0xff]
  %v7762 = vld [vmem:[%s6 + $0x130] sm:$0xff]
  %v7763 = vld [vmem:[%s6 + $0x138] sm:$0xff]
  %v7764 = vld [vmem:[%s6 + $0x140] sm:$0xff]
  %v7765 = vld [vmem:[%s6 + $0x148] sm:$0xff]
  %v7766 = vld [vmem:[%s6 + $0x150] sm:$0xff]
  %v7767 = vld [vmem:[%s6 + $0x158] sm:$0xff]
  %v7768 = vld [vmem:[%s6 + $0x160] sm:$0xff]
  %v7769 = vld [vmem:[%s6 + $0x168] sm:$0xff]
  %v7770 = vld [vmem:[%s6 + $0x170] sm:$0xff]
  %v7771 = vld [vmem:[%s6 + $0x178] sm:$0xff]
  %v7772 = vld [vmem:[%s6 + $0x180] sm:$0xff]
  %v7773 = vld [vmem:[%s6 + $0x188] sm:$0xff]
  %v7774 = vld [vmem:[%s6 + $0x190] sm:$0xff]
  %v7775 = vld [vmem:[%s6 + $0x198] sm:$0xff]
  %v7776 = vld [vmem:[%s6 + $0x1a0] sm:$0xff]
  %v7777 = vld [vmem:[%s6 + $0x1a8] sm:$0xff]
  %v7778 = vld [vmem:[%s6 + $0x1b0] sm:$0xff]
  %v7779 = vld [vmem:[%s6 + $0x1b8] sm:$0xff]
  %v7780 = vld [vmem:[%s6 + $0x1c0] sm:$0xff]
  %v7781 = vld [vmem:[%s6 + $0x1c8] sm:$0xff]
  %v7782 = vld [vmem:[%s6 + $0x1d0] sm:$0xff]
  %v7783 = vld [vmem:[%s6 + $0x1d8] sm:$0xff]
  %v7784 = vld [vmem:[%s6 + $0x1e0] sm:$0xff]
  %v7785 = vld [vmem:[%s6 + $0x1e8] sm:$0xff]
  %v7786 = vld [vmem:[%s6 + $0x1f0] sm:$0xff]
  %v7787 = vld [vmem:[%s6 + $0x1f8] sm:$0xff]
  %v7788 = vld [vmem:[%s6 + $0x200] sm:$0xff]
  %v7789 = vld [vmem:[%s6 + $0x208] sm:$0xff]
  %v7790 = vld [vmem:[%s6 + $0x210] sm:$0xff]
  %v7791 = vld [vmem:[%s6 + $0x218] sm:$0xff]
  %v7792 = vld [vmem:[%s6 + $0x220] sm:$0xff]
  %v7793 = vld [vmem:[%s6 + $0x228] sm:$0xff]
  %v7794 = vld [vmem:[%s6 + $0x230] sm:$0xff]
  %v7795 = vld [vmem:[%s6 + $0x238] sm:$0xff]
  %v7796 = vld [vmem:[%s6 + $0x240] sm:$0xff]
  %v7797 = vld [vmem:[%s6 + $0x248] sm:$0xff]
  %v7798 = vld [vmem:[%s6 + $0x250] sm:$0xff]
  %v7799 = vld [vmem:[%s6 + $0x258] sm:$0xff]
  %v7800 = vld [vmem:[%s6 + $0x260] sm:$0xff]
  %v7801 = vld [vmem:[%s6 + $0x268] sm:$0xff]
  %v7802 = vld [vmem:[%s6 + $0x270] sm:$0xff]
  %v7803 = vld [vmem:[%s6 + $0x278] sm:$0xff]
  %v7804 = vld [vmem:[%s6 + $0x280] sm:$0xff]
  %v7805 = vld [vmem:[%s6 + $0x288] sm:$0xff]
  %v7806 = vld [vmem:[%s6 + $0x290] sm:$0xff]
  %v7807 = vld [vmem:[%s6 + $0x298] sm:$0xff]
  %v7808 = vld [vmem:[%s6 + $0x2a0] sm:$0xff]
  %v7809 = vld [vmem:[%s6 + $0x2a8] sm:$0xff]
  %v7810 = vld [vmem:[%s6 + $0x2b0] sm:$0xff]
  %v7811 = vld [vmem:[%s6 + $0x2b8] sm:$0xff]
  %v7812 = vld [vmem:[%s6 + $0x2c0] sm:$0xff]
  %v7813 = vld [vmem:[%s6 + $0x2c8] sm:$0xff]
  %v7814 = vld [vmem:[%s6 + $0x2d0] sm:$0xff]
  %v7815 = vld [vmem:[%s6 + $0x2d8] sm:$0xff]
  %v7816 = vld [vmem:[%s6 + $0x2e0] sm:$0xff]
  %v7817 = vld [vmem:[%s6 + $0x2e8] sm:$0xff]
  %v7818 = vld [vmem:[%s6 + $0x2f0] sm:$0xff]
  %v7819 = vld [vmem:[%s6 + $0x2f8] sm:$0xff]
  %v7820 = vld [vmem:[%s6 + $0x300] sm:$0xff]
  %v7821 = vld [vmem:[%s6 + $0x308] sm:$0xff]
  %v7822 = vld [vmem:[%s6 + $0x310] sm:$0xff]
  %v7823 = vld [vmem:[%s6 + $0x318] sm:$0xff]
  %v7824 = vld [vmem:[%s6 + $0x320] sm:$0xff]
  %v7825 = vld [vmem:[%s6 + $0x328] sm:$0xff]
  %v7826 = vld [vmem:[%s6 + $0x330] sm:$0xff]
  %v7827 = vld [vmem:[%s6 + $0x338] sm:$0xff]
  %v7828 = vld [vmem:[%s6 + $0x340] sm:$0xff]
  %v7829 = vld [vmem:[%s6 + $0x348] sm:$0xff]
  %v7830 = vld [vmem:[%s6 + $0x350] sm:$0xff]
  %v7831 = vld [vmem:[%s6 + $0x358] sm:$0xff]
  %v7832 = vld [vmem:[%s6 + $0x360] sm:$0xff]
  %v7833 = vld [vmem:[%s6 + $0x368] sm:$0xff]
  %v7834 = vld [vmem:[%s6 + $0x370] sm:$0xff]
  %v7835 = vld [vmem:[%s6 + $0x378] sm:$0xff]
  %v7836 = vld [vmem:[%s6 + $0x380] sm:$0xff]
  %v7837 = vld [vmem:[%s6 + $0x388] sm:$0xff]
  %v7838 = vld [vmem:[%s6 + $0x390] sm:$0xff]
  %v7839 = vld [vmem:[%s6 + $0x398] sm:$0xff]
  %v7840 = vld [vmem:[%s6 + $0x3a0] sm:$0xff]
  %v7841 = vld [vmem:[%s6 + $0x3a8] sm:$0xff]
  %v7842 = vld [vmem:[%s6 + $0x3b0] sm:$0xff]
  %v7843 = vld [vmem:[%s6 + $0x3b8] sm:$0xff]
  %v7844 = vld [vmem:[%s6 + $0x3c0] sm:$0xff]
  %v7845 = vld [vmem:[%s6 + $0x3c8] sm:$0xff]
  %v7846 = vld [vmem:[%s6 + $0x3d0] sm:$0xff]
  %v7847 = vld [vmem:[%s6 + $0x3d8] sm:$0xff]
  %v7848 = vld [vmem:[%s6 + $0x3e0] sm:$0xff]
  %v7849 = vld [vmem:[%s6 + $0x3e8] sm:$0xff]
  %v7850 = vld [vmem:[%s6 + $0x3f0] sm:$0xff]
  %v7851 = vld [vmem:[%s6 + $0x3f8] sm:$0xff]
  %v7852 = vld [vmem:[%s7] sm:$0x1]
  %v7854 = vlaneseq
  %v7855 = vshrl.u32 %v7854, 7
  %v7856 = vsub.s32 0, %v7855
  %v7857 = vrot.slane %v7852, %v7856
  %7859 = vmatprep.subr.mxu0 0.0
  %7860 = vmatpush1.msra.mxu0 %v7724
  %7861 = vmatprep.subr.mxu0 0.0
  %7862 = vmatpush1.msra.mxu0 %v7725
  %7863 = vmatprep.subr.mxu0 0.0
  %7864 = vmatpush1.msra.mxu0 %v7726
  %7865 = vmatprep.subr.mxu0 0.0
  %7866 = vmatpush1.msra.mxu0 %v7727
  %7867 = vmatprep.subr.mxu0 0.0
  %7868 = vmatpush1.msra.mxu0 %v7728
  %7869 = vmatprep.subr.mxu0 0.0
  %7870 = vmatpush1.msra.mxu0 %v7729
  %7871 = vmatprep.subr.mxu0 0.0
  %7872 = vmatpush1.msra.mxu0 %v7730
  %7873 = vmatprep.subr.mxu0 0.0
  %7874 = vmatpush1.msra.mxu0 %v7731
  %7875 = vmatprep.subr.mxu0 0.0
  %7876 = vmatpush1.msra.mxu0 %v7732
  %7877 = vmatprep.subr.mxu0 0.0
  %7878 = vmatpush1.msra.mxu0 %v7733
  %7879 = vmatprep.subr.mxu0 0.0
  %7880 = vmatpush1.msra.mxu0 %v7734
  %7881 = vmatprep.subr.mxu0 0.0
  %7882 = vmatpush1.msra.mxu0 %v7735
  %7883 = vmatprep.subr.mxu0 0.0
  %7884 = vmatpush1.msra.mxu0 %v7736
  %7885 = vmatprep.subr.mxu0 0.0
  %7886 = vmatpush1.msra.mxu0 %v7737
  %7887 = vmatprep.subr.mxu0 0.0
  %7888 = vmatpush1.msra.mxu0 %v7738
  %7889 = vmatprep.subr.mxu0 0.0
  %7890 = vmatpush1.msra.mxu0 %v7739
  %7891 = vmatprep.subr.mxu0 0.0
  %7892 = vmatpush1.msra.mxu0 %v7740
  %7893 = vmatprep.subr.mxu0 0.0
  %7894 = vmatpush1.msra.mxu0 %v7741
  %7895 = vmatprep.subr.mxu0 0.0
  %7896 = vmatpush1.msra.mxu0 %v7742
  %7897 = vmatprep.subr.mxu0 0.0
  %7898 = vmatpush1.msra.mxu0 %v7743
  %7899 = vmatprep.subr.mxu0 0.0
  %7900 = vmatpush1.msra.mxu0 %v7744
  %7901 = vmatprep.subr.mxu0 0.0
  %7902 = vmatpush1.msra.mxu0 %v7745
  %7903 = vmatprep.subr.mxu0 0.0
  %7904 = vmatpush1.msra.mxu0 %v7746
  %7905 = vmatprep.subr.mxu0 0.0
  %7906 = vmatpush1.msra.mxu0 %v7747
  %7907 = vmatprep.subr.mxu0 0.0
  %7908 = vmatpush1.msra.mxu0 %v7748
  %7909 = vmatprep.subr.mxu0 0.0
  %7910 = vmatpush1.msra.mxu0 %v7749
  %7911 = vmatprep.subr.mxu0 0.0
  %7912 = vmatpush1.msra.mxu0 %v7750
  %7913 = vmatprep.subr.mxu0 0.0
  %7914 = vmatpush1.msra.mxu0 %v7751
  %7915 = vmatprep.subr.mxu0 0.0
  %7916 = vmatpush1.msra.mxu0 %v7752
  %7917 = vmatprep.subr.mxu0 0.0
  %7918 = vmatpush1.msra.mxu0 %v7753
  %7919 = vmatprep.subr.mxu0 0.0
  %7920 = vmatpush1.msra.mxu0 %v7754
  %7921 = vmatprep.subr.mxu0 0.0
  %7922 = vmatpush1.msra.mxu0 %v7755
  %7923 = vmatprep.mubr.f32.mxu0 %v7657
  %7924 = vmatmul.mubr.f32.gmra.mrb[0].mxu0 %v7654
  %v7925 = vpop.f32.mrb[0].mxu0
  %v7926 = vadd.f32 %v7857, %v7925
  %v7927 = vpop.f32.mrb[0].mxu0
  %7928 = vdwg.mxu0
  %7929 = vmatprep.subr.mxu0 0.0
  %7930 = vmatpush1.msra.mxu0 %v7756
  %7931 = vmatprep.subr.mxu0 0.0
  %7932 = vmatpush1.msra.mxu0 %v7757
  %7933 = vmatprep.subr.mxu0 0.0
  %7934 = vmatpush1.msra.mxu0 %v7758
  %7935 = vmatprep.subr.mxu0 0.0
  %7936 = vmatpush1.msra.mxu0 %v7759
  %7937 = vmatprep.subr.mxu0 0.0
  %7938 = vmatpush1.msra.mxu0 %v7760
  %7939 = vmatprep.subr.mxu0 0.0
  %7940 = vmatpush1.msra.mxu0 %v7761
  %7941 = vmatprep.subr.mxu0 0.0
  %7942 = vmatpush1.msra.mxu0 %v7762
  %7943 = vmatprep.subr.mxu0 0.0
  %7944 = vmatpush1.msra.mxu0 %v7763
  %7945 = vmatprep.subr.mxu0 0.0
  %7946 = vmatpush1.msra.mxu0 %v7764
  %7947 = vmatprep.subr.mxu0 0.0
  %7948 = vmatpush1.msra.mxu0 %v7765
  %7949 = vmatprep.subr.mxu0 0.0
  %7950 = vmatpush1.msra.mxu0 %v7766
  %7951 = vmatprep.subr.mxu0 0.0
  %7952 = vmatpush1.msra.mxu0 %v7767
  %7953 = vmatprep.subr.mxu0 0.0
  %7954 = vmatpush1.msra.mxu0 %v7768
  %7955 = vmatprep.subr.mxu0 0.0
  %7956 = vmatpush1.msra.mxu0 %v7769
  %7957 = vmatprep.subr.mxu0 0.0
  %7958 = vmatpush1.msra.mxu0 %v7770
  %7959 = vmatprep.subr.mxu0 0.0
  %7960 = vmatpush1.msra.mxu0 %v7771
  %7961 = vmatprep.subr.mxu0 0.0
  %7962 = vmatpush1.msra.mxu0 %v7772
  %7963 = vmatprep.subr.mxu0 0.0
  %7964 = vmatpush1.msra.mxu0 %v7773
  %7965 = vmatprep.subr.mxu0 0.0
  %7966 = vmatpush1.msra.mxu0 %v7774
  %7967 = vmatprep.subr.mxu0 0.0
  %7968 = vmatpush1.msra.mxu0 %v7775
  %7969 = vmatprep.subr.mxu0 0.0
  %7970 = vmatpush1.msra.mxu0 %v7776
  %7971 = vmatprep.subr.mxu0 0.0
  %7972 = vmatpush1.msra.mxu0 %v7777
  %7973 = vmatprep.subr.mxu0 0.0
  %7974 = vmatpush1.msra.mxu0 %v7778
  %7975 = vmatprep.subr.mxu0 0.0
  %7976 = vmatpush1.msra.mxu0 %v7779
  %7977 = vmatprep.subr.mxu0 0.0
  %7978 = vmatpush1.msra.mxu0 %v7780
  %7979 = vmatprep.subr.mxu0 0.0
  %7980 = vmatpush1.msra.mxu0 %v7781
  %7981 = vmatprep.subr.mxu0 0.0
  %7982 = vmatpush1.msra.mxu0 %v7782
  %7983 = vmatprep.subr.mxu0 0.0
  %7984 = vmatpush1.msra.mxu0 %v7783
  %7985 = vmatprep.subr.mxu0 0.0
  %7986 = vmatpush1.msra.mxu0 %v7784
  %7987 = vmatprep.subr.mxu0 0.0
  %7988 = vmatpush1.msra.mxu0 %v7785
  %7989 = vmatprep.subr.mxu0 0.0
  %7990 = vmatpush1.msra.mxu0 %v7786
  %7991 = vmatprep.subr.mxu0 0.0
  %7992 = vmatpush1.msra.mxu0 %v7787
  %7993 = vmatprep.mubr.f32.mxu0 %v7663
  %7994 = vmatmul.mubr.f32.gmra.mrb[0].mxu0 %v7660
  %v7995 = vpop.f32.mrb[0].mxu0
  %v7996 = vadd.f32 %v7926, %v7995
  %v7997 = vpop.f32.mrb[0].mxu0
  %7998 = vdwg.mxu0
  %7999 = vmatprep.subr.mxu0 0.0
  %8000 = vmatpush1.msra.mxu0 %v7788
  %8001 = vmatprep.subr.mxu0 0.0
  %8002 = vmatpush1.msra.mxu0 %v7789
  %8003 = vmatprep.subr.mxu0 0.0
  %8004 = vmatpush1.msra.mxu0 %v7790
  %8005 = vmatprep.subr.mxu0 0.0
  %8006 = vmatpush1.msra.mxu0 %v7791
  %8007 = vmatprep.subr.mxu0 0.0
  %8008 = vmatpush1.msra.mxu0 %v7792
  %8009 = vmatprep.subr.mxu0 0.0
  %8010 = vmatpush1.msra.mxu0 %v7793
  %8011 = vmatprep.subr.mxu0 0.0
  %8012 = vmatpush1.msra.mxu0 %v7794
  %8013 = vmatprep.subr.mxu0 0.0
  %8014 = vmatpush1.msra.mxu0 %v7795
  %8015 = vmatprep.subr.mxu0 0.0
  %8016 = vmatpush1.msra.mxu0 %v7796
  %8017 = vmatprep.subr.mxu0 0.0
  %8018 = vmatpush1.msra.mxu0 %v7797
  %8019 = vmatprep.subr.mxu0 0.0
  %8020 = vmatpush1.msra.mxu0 %v7798
  %8021 = vmatprep.subr.mxu0 0.0
  %8022 = vmatpush1.msra.mxu0 %v7799
  %8023 = vmatprep.subr.mxu0 0.0
  %8024 = vmatpush1.msra.mxu0 %v7800
  %8025 = vmatprep.subr.mxu0 0.0
  %8026 = vmatpush1.msra.mxu0 %v7801
  %8027 = vmatprep.subr.mxu0 0.0
  %8028 = vmatpush1.msra.mxu0 %v7802
  %8029 = vmatprep.subr.mxu0 0.0
  %8030 = vmatpush1.msra.mxu0 %v7803
  %8031 = vmatprep.subr.mxu0 0.0
  %8032 = vmatpush1.msra.mxu0 %v7804
  %8033 = vmatprep.subr.mxu0 0.0
  %8034 = vmatpush1.msra.mxu0 %v7805
  %8035 = vmatprep.subr.mxu0 0.0
  %8036 = vmatpush1.msra.mxu0 %v7806
  %8037 = vmatprep.subr.mxu0 0.0
  %8038 = vmatpush1.msra.mxu0 %v7807
  %8039 = vmatprep.subr.mxu0 0.0
  %8040 = vmatpush1.msra.mxu0 %v7808
  %8041 = vmatprep.subr.mxu0 0.0
  %8042 = vmatpush1.msra.mxu0 %v7809
  %8043 = vmatprep.subr.mxu0 0.0
  %8044 = vmatpush1.msra.mxu0 %v7810
  %8045 = vmatprep.subr.mxu0 0.0
  %8046 = vmatpush1.msra.mxu0 %v7811
  %8047 = vmatprep.subr.mxu0 0.0
  %8048 = vmatpush1.msra.mxu0 %v7812
  %8049 = vmatprep.subr.mxu0 0.0
  %8050 = vmatpush1.msra.mxu0 %v7813
  %8051 = vmatprep.subr.mxu0 0.0
  %8052 = vmatpush1.msra.mxu0 %v7814
  %8053 = vmatprep.subr.mxu0 0.0
  %8054 = vmatpush1.msra.mxu0 %v7815
  %8055 = vmatprep.subr.mxu0 0.0
  %8056 = vmatpush1.msra.mxu0 %v7816
  %8057 = vmatprep.subr.mxu0 0.0
  %8058 = vmatpush1.msra.mxu0 %v7817
  %8059 = vmatprep.subr.mxu0 0.0
  %8060 = vmatpush1.msra.mxu0 %v7818
  %8061 = vmatprep.subr.mxu0 0.0
  %8062 = vmatpush1.msra.mxu0 %v7819
  %8063 = vmatprep.mubr.f32.mxu0 %v7717
  %8064 = vmatmul.mubr.f32.gmra.mrb[0].mxu0 %v7714
  %v8065 = vpop.f32.mrb[0].mxu0
  %v8066 = vadd.f32 %v7996, %v8065
  %v8067 = vpop.f32.mrb[0].mxu0
  %8068 = vdwg.mxu0
  %8069 = vmatprep.subr.mxu0 0.0
  %8070 = vmatpush1.msra.mxu0 %v7820
  %8071 = vmatprep.subr.mxu0 0.0
  %8072 = vmatpush1.msra.mxu0 %v7821
  %8073 = vmatprep.subr.mxu0 0.0
  %8074 = vmatpush1.msra.mxu0 %v7822
  %8075 = vmatprep.subr.mxu0 0.0
  %8076 = vmatpush1.msra.mxu0 %v7823
  %8077 = vmatprep.subr.mxu0 0.0
  %8078 = vmatpush1.msra.mxu0 %v7824
  %8079 = vmatprep.subr.mxu0 0.0
  %8080 = vmatpush1.msra.mxu0 %v7825
  %8081 = vmatprep.subr.mxu0 0.0
  %8082 = vmatpush1.msra.mxu0 %v7826
  %8083 = vmatprep.subr.mxu0 0.0
  %8084 = vmatpush1.msra.mxu0 %v7827
  %8085 = vmatprep.subr.mxu0 0.0
  %8086 = vmatpush1.msra.mxu0 %v7828
  %8087 = vmatprep.subr.mxu0 0.0
  %8088 = vmatpush1.msra.mxu0 %v7829
  %8089 = vmatprep.subr.mxu0 0.0
  %8090 = vmatpush1.msra.mxu0 %v7830
  %8091 = vmatprep.subr.mxu0 0.0
  %8092 = vmatpush1.msra.mxu0 %v7831
  %8093 = vmatprep.subr.mxu0 0.0
  %8094 = vmatpush1.msra.mxu0 %v7832
  %8095 = vmatprep.subr.mxu0 0.0
  %8096 = vmatpush1.msra.mxu0 %v7833
  %8097 = vmatprep.subr.mxu0 0.0
  %8098 = vmatpush1.msra.mxu0 %v7834
  %8099 = vmatprep.subr.mxu0 0.0
  %8100 = vmatpush1.msra.mxu0 %v7835
  %8101 = vmatprep.subr.mxu0 0.0
  %8102 = vmatpush1.msra.mxu0 %v7836
  %8103 = vmatprep.subr.mxu0 0.0
  %8104 = vmatpush1.msra.mxu0 %v7837
  %8105 = vmatprep.subr.mxu0 0.0
  %8106 = vmatpush1.msra.mxu0 %v7838
  %8107 = vmatprep.subr.mxu0 0.0
  %8108 = vmatpush1.msra.mxu0 %v7839
  %8109 = vmatprep.subr.mxu0 0.0
  %8110 = vmatpush1.msra.mxu0 %v7840
  %8111 = vmatprep.subr.mxu0 0.0
  %8112 = vmatpush1.msra.mxu0 %v7841
  %8113 = vmatprep.subr.mxu0 0.0
  %8114 = vmatpush1.msra.mxu0 %v7842
  %8115 = vmatprep.subr.mxu0 0.0
  %8116 = vmatpush1.msra.mxu0 %v7843
  %8117 = vmatprep.subr.mxu0 0.0
  %8118 = vmatpush1.msra.mxu0 %v7844
  %8119 = vmatprep.subr.mxu0 0.0
  %8120 = vmatpush1.msra.mxu0 %v7845
  %8121 = vmatprep.subr.mxu0 0.0
  %8122 = vmatpush1.msra.mxu0 %v7846
  %8123 = vmatprep.subr.mxu0 0.0
  %8124 = vmatpush1.msra.mxu0 %v7847
  %8125 = vmatprep.subr.mxu0 0.0
  %8126 = vmatpush1.msra.mxu0 %v7848
  %8127 = vmatprep.subr.mxu0 0.0
  %8128 = vmatpush1.msra.mxu0 %v7849
  %8129 = vmatprep.subr.mxu0 0.0
  %8130 = vmatpush1.msra.mxu0 %v7850
  %8131 = vmatprep.subr.mxu0 0.0
  %8132 = vmatpush1.msra.mxu0 %v7851
  %8133 = vmatprep.mubr.f32.mxu0 %v7723
  %8134 = vmatmul.mubr.f32.gmra.mrb[0].mxu0 %v7720
  %v8135 = vpop.f32.mrb[0].mxu0
  %v8136 = vadd.f32 %v8066, %v8135
  %v8137 = vpop.f32.mrb[0].mxu0
  %8138 = vdwg.mxu0
  %v8139 = vmax.f32 %v8136, 0.0
  %v8140 = vld [vmem:[%s8] sm:$0xff]
  %v8141 = vld [vmem:[%s8 + $0x8] sm:$0xff]
  %v8142 = vld [vmem:[%s8 + $0x10] sm:$0xff]
  %v8143 = vld [vmem:[%s8 + $0x18] sm:$0xff]
  %v8144 = vld [vmem:[%s8 + $0x20] sm:$0xff]
  %v8145 = vld [vmem:[%s8 + $0x28] sm:$0xff]
  %v8146 = vld [vmem:[%s8 + $0x30] sm:$0xff]
  %v8147 = vld [vmem:[%s8 + $0x38] sm:$0xff]
  %v8148 = vld [vmem:[#allocation4] sm:$0x1]
  %v8150 = vlaneseq
  %v8151 = vshrl.u32 %v8150, 7
  %v8152 = vsub.s32 0, %v8151
  %v8153 = vrot.slane %v8148, %v8152
  %v8156 = vsel %vm7651, %v8139, 0
  %8158 = vmatprep.subr.mxu0 0.0
  %8159 = vmatpush1.msra.mxu0 %v8140
  %8160 = vmatprep.subr.mxu0 0.0
  %8161 = vmatpush1.msra.mxu0 %v8141
  %8162 = vmatprep.subr.mxu0 0.0
  %8163 = vmatpush1.msra.mxu0 %v8142
  %8164 = vmatprep.subr.mxu0 0.0
  %8165 = vmatpush1.msra.mxu0 %v8143
  %8166 = vmatprep.subr.mxu0 0.0
  %8167 = vmatpush1.msra.mxu0 %v8144
  %8168 = vmatprep.subr.mxu0 0.0
  %8169 = vmatpush1.msra.mxu0 %v8145
  %8170 = vmatprep.subr.mxu0 0.0
  %8171 = vmatpush1.msra.mxu0 %v8146
  %8172 = vmatprep.subr.mxu0 0.0
  %8173 = vmatpush1.msra.mxu0 %v8147
  %8174 = vmatprep.subr.mxu0 0.0
  %8175 = vmatpush1.msra.mxu0 0.0
  %8176 = vmatprep.subr.mxu0 0.0
  %8177 = vmatpush1.msra.mxu0 0.0
  %8178 = vmatprep.subr.mxu0 0.0
  %8179 = vmatpush1.msra.mxu0 0.0
  %8180 = vmatprep.subr.mxu0 0.0
  %8181 = vmatpush1.msra.mxu0 0.0
  %8182 = vmatprep.subr.mxu0 0.0
  %8183 = vmatpush1.msra.mxu0 0.0
  %8184 = vmatprep.subr.mxu0 0.0
  %8185 = vmatpush1.msra.mxu0 0.0
  %8186 = vmatprep.subr.mxu0 0.0
  %8187 = vmatpush1.msra.mxu0 0.0
  %8188 = vmatprep.subr.mxu0 0.0
  %8189 = vmatpush1.msra.mxu0 0.0
  %8190 = vmatprep.subr.mxu0 0.0
  %8191 = vmatpush1.msra.mxu0 0.0
  %8192 = vmatprep.subr.mxu0 0.0
  %8193 = vmatpush1.msra.mxu0 0.0
  %8194 = vmatprep.subr.mxu0 0.0
  %8195 = vmatpush1.msra.mxu0 0.0
  %8196 = vmatprep.subr.mxu0 0.0
  %8197 = vmatpush1.msra.mxu0 0.0
  %8198 = vmatprep.subr.mxu0 0.0
  %8199 = vmatpush1.msra.mxu0 0.0
  %8200 = vmatprep.subr.mxu0 0.0
  %8201 = vmatpush1.msra.mxu0 0.0
  %8202 = vmatprep.subr.mxu0 0.0
  %8203 = vmatpush1.msra.mxu0 0.0
  %8204 = vmatprep.subr.mxu0 0.0
  %8205 = vmatpush1.msra.mxu0 0.0
  %8206 = vmatprep.subr.mxu0 0.0
  %8207 = vmatpush1.msra.mxu0 0.0
  %8208 = vmatprep.subr.mxu0 0.0
  %8209 = vmatpush1.msra.mxu0 0.0
  %8210 = vmatprep.subr.mxu0 0.0
  %8211 = vmatpush1.msra.mxu0 0.0
  %8212 = vmatprep.subr.mxu0 0.0
  %8213 = vmatpush1.msra.mxu0 0.0
  %8214 = vmatprep.subr.mxu0 0.0
  %8215 = vmatpush1.msra.mxu0 0.0
  %8216 = vmatprep.subr.mxu0 0.0
  %8217 = vmatpush1.msra.mxu0 0.0
  %8218 = vmatprep.subr.mxu0 0.0
  %8219 = vmatpush1.msra.mxu0 0.0
  %8220 = vmatprep.subr.mxu0 0.0
  %8221 = vmatpush1.msra.mxu0 0.0
  %8222 = vmatprep.mubr.f32.mxu0 0.0
  %8223 = vmatmul.mubr.f32.gmra.mrb[0].mxu0 %v8156
  %v8224 = vpop.f32.mrb[0].mxu0
  %v8225 = vadd.f32 %v8153, %v8224
  %v8226 = vpop.f32.mrb[0].mxu0
  %8227 = vdwg.mxu0
  %v8228 = vmul.f32 %v8225, 0.5
  %v8229 = vtanh.pop %v8228
  %v8230 = vadd.f32 %v8229, 1.0
  %v8231 = vmul.f32 %v8230, 0.5
  %8232 = vst.msk [vmem:[%s10] sm:$0xff] %vm412, %v8231
  // Predicated region
  $region42: #{simple_1d_cnn_v2_forward.1} parent=0 // pred_check
    _
  $region43: #{simple_1d_cnn_v2_forward.1} parent=0 // pred_check_branch
    %8234 = sbr.rel (0) target = $region45
  $region44: #{simple_1d_cnn_v2_forward.1} parent=0 // pred_region
    _
  $region45: #{simple_1d_cnn_v2_forward.1} parent=0 // pred_fallthru
    _
  // Predicated region
  $region46: #{simple_1d_cnn_v2_forward.1} parent=0 // pred_check
    _
  $region47: #{simple_1d_cnn_v2_forward.1} parent=0 // pred_check_branch
    %8236 = sbr.rel (0) target = $region49
  $region48: #{simple_1d_cnn_v2_forward.1} parent=0 // pred_region
    _
  $region49: #{simple_1d_cnn_v2_forward.1} parent=0 // pred_fallthru
    _

</llo_original>
